<compile_context>
chip_gen: v5e
topology: v5e:2x2
jax: 0.10.0
libtpu: 0.0.40
codegen_flags: <defaults>
</compile_context>

<pallas_src>
import jax
import jax.numpy as jnp
from jax.experimental import pallas as pl
from jax.experimental.pallas import tpu as pltpu

# ----------------------------- config (small DenseNet) -----------------------
GROWTH = 8
BLOCK_CONFIG = (2, 2)
NUM_INIT = 16
BN_SIZE = 2
NUM_CLASSES = 10
EPS = 1e-5
CMID = BN_SIZE * GROWTH          # 16 bottleneck channels
CMAX = 32                        # widest feature count anywhere in the net


# ----------------------------- the fused whole-network kernel ----------------
def _densenet_kernel(patches_ref, w0_ref, bn_ref, w1_ref, w2_ref, wt_ref,
                     clsw_ref, clsb_ref, out_ref,
                     xr_ref, mp_ref, slab1_ref, slab2_ref, pad3_ref, col_ref,
                     tr_ref):
    f32, bf16 = jnp.float32, jnp.bfloat16

    def bn(i, c):
        # folded BatchNorm scale / shift, (1, c) each
        return bn_ref[i, 0:1, 0:c], bn_ref[i, 1:2, 0:c]

    # ---------------- stem: conv0 (7x7/s2 as one matmul) + norm0 + relu0 ------
    s0, b0 = bn(0, NUM_INIT)
    y0 = jnp.dot(patches_ref[0], w0_ref[...],
                 preferred_element_type=f32)                    # (256, 16)
    r0 = jnp.maximum(y0 * s0 + b0, 0.0)

    # ---------------- pool0: maxpool 3x3 / s2 / p1, 16x16 -> 8x8 --------------
    # Parity-factored layout: input row 2m+pr, col 2mc+pc -> xr[m, pr, mc, pc].
    # Padded grid row 2u+v (18 rows) -> mp[u, v, ...].  Zero padding is valid
    # because all pooled values are ReLU outputs (>= 0).
    xr_ref[...] = r0.reshape(8, 2, 8, 2, NUM_INIT)
    mp_ref[...] = jnp.zeros_like(mp_ref)
    mp_ref[0:8, 1:2, 0:8, 1:2, :] = xr_ref[:, 0:1, :, 0:1, :]   # even rows, even cols
    mp_ref[0:8, 1:2, 1:9, 0:1, :] = xr_ref[:, 0:1, :, 1:2, :]   # even rows, odd  cols
    mp_ref[1:9, 0:1, 0:8, 1:2, :] = xr_ref[:, 1:2, :, 0:1, :]   # odd  rows, even cols
    mp_ref[1:9, 0:1, 1:9, 0:1, :] = xr_ref[:, 1:2, :, 1:2, :]   # odd  rows, odd  cols
    # output (i, j) covers padded rows {2i, 2i+1, 2i+2} x cols {2j, 2j+1, 2j+2}
    taps = ((0, 0), (0, 1), (1, 0))
    pool = None
    for (ru, rv) in taps:
        for (cu, cv) in taps:
            t = mp_ref[ru:ru + 8, rv:rv + 1, cu:cu + 8, cv:cv + 1, :]
            pool = t if pool is None else jnp.maximum(pool, t)
    x1 = pool.reshape(64, NUM_INIT)                             # 8x8 spatial, 16 ch

    # ---------------- dense layer: BN->ReLU->1x1->BN->ReLU->3x3->append -------
    def dense_layer(slab_ref, H, W, nvalid, bn1, bn2, wi):
        HW = H * W
        s1, b1 = bn(bn1, CMAX)
        h = jnp.maximum(slab_ref[...] * s1 + b1, 0.0)           # (HW, 32)
        mid = jnp.dot(h.astype(bf16), w1_ref[wi],
                      preferred_element_type=f32)               # (HW, 16)
        s2, b2 = bn(bn2, CMID)
        mid = jnp.maximum(mid * s2 + b2, 0.0)
        # 3x3 conv (pad 1): build the (HW, 9*16) im2col tile in VMEM and run a
        # single K=144 matmul instead of 9 shifted K=16 micro-matmuls.
        pad3_ref[...] = jnp.zeros_like(pad3_ref)                # zero "same" padding
        pad3_ref[1:H + 1, 1:W + 1, :] = mid.reshape(H, W, CMID).astype(bf16)
        for k in range(9):
            dy, dx = k // 3, k % 3
            col_ref[0:HW, k * CMID:(k + 1) * CMID] = (
                pad3_ref[dy:dy + H, dx:dx + W, :].reshape(HW, CMID))
        new = jnp.dot(col_ref[0:HW, :], w2_ref[wi],
                      preferred_element_type=f32)               # (HW, 8)
        # DenseNet concat: append the new GROWTH channels to the VMEM slab
        # (slab never leaves VMEM, so no HBM re-copy of earlier features).
        slab_ref[:, nvalid:nvalid + GROWTH] = new

    # ---------------- dense block 1 (8x8, 16 -> 32 channels) ------------------
    slab1_ref[...] = jnp.zeros_like(slab1_ref)                  # pad channels = 0
    slab1_ref[:, 0:NUM_INIT] = x1
    dense_layer(slab1_ref, 8, 8, 16, bn1=1, bn2=2, wi=0)
    dense_layer(slab1_ref, 8, 8, 24, bn1=3, bn2=4, wi=1)

    # ---------------- transition: norm+relu -> 1x1 conv -> avgpool(2) ---------
    # AvgPool(2x2) commutes with the 1x1 conv (even H, W), so average the four
    # pool taps of relu(bn(x)) and run one 4x-smaller matmul.
    st, bt = bn(5, CMAX)
    t1 = jnp.maximum(slab1_ref[...] * st + bt, 0.0)             # (64, 32)
    tr_ref[...] = t1.reshape(4, 2, 4, 2, CMAX)
    avg = 0.25 * (tr_ref[:, 0:1, :, 0:1, :] + tr_ref[:, 0:1, :, 1:2, :]
                  + tr_ref[:, 1:2, :, 0:1, :] + tr_ref[:, 1:2, :, 1:2, :])
    x2 = jnp.dot(avg.reshape(16, CMAX).astype(bf16), wt_ref[...],
                 preferred_element_type=f32)                    # (16, 16) = 4x4x16

    # ---------------- dense block 2 (4x4, 16 -> 32 channels) ------------------
    slab2_ref[...] = jnp.zeros_like(slab2_ref)
    slab2_ref[:, 0:16] = x2
    dense_layer(slab2_ref, 4, 4, 16, bn1=6, bn2=7, wi=2)
    dense_layer(slab2_ref, 4, 4, 24, bn1=8, bn2=9, wi=3)

    # ---------------- head: norm5 + relu + global avg pool + linear -----------
    s5, b5 = bn(10, CMAX)
    h5 = jnp.maximum(slab2_ref[...] * s5 + b5, 0.0)             # (16, 32)
    gap = jnp.mean(h5, axis=0, keepdims=True)                   # (1, 32)
    logits = jnp.dot(gap, clsw_ref[...],
                     preferred_element_type=f32) + clsb_ref[...]
    out_ref[...] = logits.reshape(1, 1, NUM_CLASSES)


# ----------------------------- host-side stem im2col -------------------------
def im2col(x, kh, kw, stride, pad):
    """x: NHWC -> patches (N, Ho*Wo, kh*kw*C), tap-major / channel-minor K."""
    N, H, W, C = x.shape
    xp = jnp.pad(x, ((0, 0), (pad, pad), (pad, pad), (0, 0)))
    Ho = (H + 2 * pad - kh) // stride + 1
    Wo = (W + 2 * pad - kw) // stride + 1
    cols = [xp[:, i:i + stride * Ho:stride, j:j + stride * Wo:stride, :]
            for i in range(kh) for j in range(kw)]
    patches = jnp.stack(cols, axis=3)                           # (N,Ho,Wo,kh*kw,C)
    return patches.reshape(N, Ho * Wo, kh * kw * C), (Ho, Wo)


# ----------------------------- forward ----------------------------------------
def densenet_forward(x_nchw, params):
    N = x_nchw.shape[0]
    x = jnp.transpose(x_nchw, (0, 2, 3, 1))                     # NCHW -> NHWC
    patches, (Ho, Wo) = im2col(x, 7, 7, 2, 3)                   # (N, 256, 147)
    assert (Ho, Wo) == (16, 16), "kernel is specialized for 32x32 inputs"
    patches = patches.astype(jnp.bfloat16)

    out = pl.pallas_call(
        _densenet_kernel,
        out_shape=jax.ShapeDtypeStruct((N, 1, NUM_CLASSES), jnp.float32),
        grid=(N,),
        in_specs=[
            pl.BlockSpec((1, 256, 147), lambda n: (n, 0, 0)),        # stem patches
            pl.BlockSpec((147, NUM_INIT), lambda n: (0, 0)),         # conv0 weight
            pl.BlockSpec((11, 2, CMAX), lambda n: (0, 0, 0)),        # packed BN scale/shift
            pl.BlockSpec((4, CMAX, CMID), lambda n: (0, 0, 0)),      # packed 1x1 weights
            pl.BlockSpec((4, 9 * CMID, GROWTH), lambda n: (0, 0, 0)),  # packed 3x3 weights
            pl.BlockSpec((CMAX, 16), lambda n: (0, 0)),              # transition weight
            pl.BlockSpec((CMAX, NUM_CLASSES), lambda n: (0, 0)),     # classifier weight
            pl.BlockSpec((1, NUM_CLASSES), lambda n: (0, 0)),        # classifier bias
        ],
        out_specs=pl.BlockSpec((1, 1, NUM_CLASSES), lambda n: (n, 0, 0)),
        scratch_shapes=[
            pltpu.VMEM((8, 2, 8, 2, NUM_INIT), jnp.float32),   # stem out, parity-factored
            pltpu.VMEM((9, 2, 9, 2, NUM_INIT), jnp.float32),   # zero-padded maxpool grid
            pltpu.VMEM((64, CMAX), jnp.float32),               # block-1 concat slab (8x8)
            pltpu.VMEM((16, CMAX), jnp.float32),               # block-2 concat slab (4x4)
            pltpu.VMEM((10, 10, CMID), jnp.bfloat16),          # shared 3x3 zero-pad buffer
            pltpu.VMEM((64, 9 * CMID), jnp.bfloat16),          # shared im2col tile
            pltpu.VMEM((4, 2, 4, 2, CMAX), jnp.float32),       # transition pool taps
        ],
        compiler_params=pltpu.CompilerParams(
            dimension_semantics=("parallel",)),
    )(patches, params["conv0m"], params["bn_ss"], params["w1_stack"],
      params["w2_stack"], params["trans_w"], params["cls_w"], params["cls_b"])
    return out.reshape(N, NUM_CLASSES)


# ----------------------------- deterministic init ----------------------------
def _bn_scale_shift(key, c):
    k1, k2, k3, k4 = jax.random.split(key, 4)
    gamma = 1.0 + 0.1 * jax.random.normal(k1, (c,), jnp.float32)
    beta = 0.1 * jax.random.normal(k2, (c,), jnp.float32)
    mean = 0.1 * jax.random.normal(k3, (c,), jnp.float32)
    var = jax.random.uniform(k4, (c,), jnp.float32, minval=0.5, maxval=1.5)
    scale = gamma / jnp.sqrt(var + EPS)
    shift = beta - mean * scale
    return scale, shift


def _conv_w(key, cout, cin, kh, kw):
    fan_in = cin * kh * kw
    std = (2.0 / fan_in) ** 0.5                                 # kaiming normal
    return std * jax.random.normal(key, (cout, cin, kh, kw), jnp.float32)


def init_params(key):
    keys = iter(jax.random.split(key, 64))

    def pad_c(v):
        return jnp.pad(v, (0, CMAX - v.shape[0]))

    bn_rows = []                                                # each (2, CMAX)

    def add_bn(k, c):
        s, b = _bn_scale_shift(k, c)
        bn_rows.append(jnp.stack([pad_c(s), pad_c(b)], 0))

    # stem: conv0 (torch layout Cout,Cin,kh,kw) -> (kh*kw*Cin, Cout) matmul
    w0 = _conv_w(next(keys), NUM_INIT, 3, 7, 7)
    conv0m = jnp.transpose(w0, (2, 3, 1, 0)).reshape(7 * 7 * 3, NUM_INIT)
    add_bn(next(keys), NUM_INIT)                                # idx 0: norm0

    num_features = NUM_INIT
    w1_list, w2_list = [], []
    trans_w = None
    for bi, num_layers in enumerate(BLOCK_CONFIG):
        for li in range(num_layers):
            cin = num_features + li * GROWTH
            add_bn(next(keys), cin)                             # norm1
            w1 = _conv_w(next(keys), CMID, cin, 1, 1).reshape(CMID, cin).T
            w1_list.append(jnp.pad(w1, ((0, CMAX - cin), (0, 0))))   # (32, 16)
            add_bn(next(keys), CMID)                            # norm2
            w2 = _conv_w(next(keys), GROWTH, CMID, 3, 3)
            # tap-major / channel-minor rows to match the in-kernel im2col build
            w2_list.append(jnp.transpose(w2, (2, 3, 1, 0)).reshape(9 * CMID, GROWTH))
        num_features += num_layers * GROWTH
        if bi != len(BLOCK_CONFIG) - 1:
            add_bn(next(keys), num_features)                    # transition norm
            wt = _conv_w(next(keys), num_features // 2, num_features, 1, 1)
            trans_w = wt.reshape(num_features // 2, num_features).T
            num_features //= 2
    add_bn(next(keys), num_features)                            # norm5

    w_lin = 0.05 * jax.random.normal(next(keys), (NUM_CLASSES, num_features),
                                     jnp.float32)
    return dict(
        conv0m=conv0m.astype(jnp.bfloat16),                     # (147, 16)
        bn_ss=jnp.stack(bn_rows, 0),                            # (11, 2, 32) f32
        w1_stack=jnp.stack(w1_list, 0).astype(jnp.bfloat16),    # (4, 32, 16)
        w2_stack=jnp.stack(w2_list, 0).astype(jnp.bfloat16),    # (4, 144, 8)
        trans_w=trans_w.astype(jnp.bfloat16),                   # (32, 16)
        cls_w=w_lin.T,                                          # (32, 10) f32
        cls_b=jnp.zeros((1, NUM_CLASSES), jnp.float32),         # init.constant_(bias, 0)
    )


# ----------------------------- main -------------------------------------------
if __name__ == "__main__":
    key = jax.random.PRNGKey(0)
    k_x, k_p = jax.random.split(key)
    x = jax.random.normal(k_x, (2, 3, 32, 32), jnp.float32)     # NCHW like PyTorch
    params = init_params(k_p)

    fwd = jax.jit(densenet_forward)
    out = fwd(x, params)
    jax.block_until_ready(out)
    assert out.shape == (2, NUM_CLASSES) and out.dtype == jnp.float32
    assert bool(jnp.all(jnp.isfinite(out)))
    print("KERNEL_OK")
</pallas_src>

<mosaic_0001>
module attributes {stable_mosaic.version = 11 : i64} {
  func.func @_densenet_kernel(%arg0: i32, %arg1: memref<1x256x147xbf16, #tpu.memory_space<vmem>>, %arg2: memref<147x16xbf16, #tpu.memory_space<vmem>>, %arg3: memref<11x2x32xf32, #tpu.memory_space<vmem>>, %arg4: memref<4x32x16xbf16, #tpu.memory_space<vmem>>, %arg5: memref<4x144x8xbf16, #tpu.memory_space<vmem>>, %arg6: memref<32x16xbf16, #tpu.memory_space<vmem>>, %arg7: memref<32x10xf32, #tpu.memory_space<vmem>>, %arg8: memref<1x10xf32, #tpu.memory_space<vmem>>, %arg9: memref<1x1x10xf32, #tpu.memory_space<vmem>>, %arg10: memref<8x2x8x2x16xf32, #tpu.memory_space<vmem>>, %arg11: memref<9x2x9x2x16xf32, #tpu.memory_space<vmem>>, %arg12: memref<64x32xf32, #tpu.memory_space<vmem>>, %arg13: memref<16x32xf32, #tpu.memory_space<vmem>>, %arg14: memref<10x10x16xbf16, #tpu.memory_space<vmem>>, %arg15: memref<64x144xbf16, #tpu.memory_space<vmem>>, %arg16: memref<4x2x4x2x32xf32, #tpu.memory_space<vmem>>) attributes {dimension_semantics = [#tpu.dimension_semantics<parallel>], iteration_bounds = array<i64: 2>, scalar_prefetch = 0 : i64, scratch_operands = 7 : i64, tpu.core_type = #tpu.core_type<tc>, window_params = [{transform_indices = @transform_0, window_bounds = array<i64: 1, 256, 147>}, {pipeline_mode = #tpu.pipeline_mode<synchronous>, transform_indices = @transform_1, window_bounds = array<i64: 147, 16>}, {pipeline_mode = #tpu.pipeline_mode<synchronous>, transform_indices = @transform_2, window_bounds = array<i64: 11, 2, 32>}, {pipeline_mode = #tpu.pipeline_mode<synchronous>, transform_indices = @transform_3, window_bounds = array<i64: 4, 32, 16>}, {pipeline_mode = #tpu.pipeline_mode<synchronous>, transform_indices = @transform_4, window_bounds = array<i64: 4, 144, 8>}, {pipeline_mode = #tpu.pipeline_mode<synchronous>, transform_indices = @transform_5, window_bounds = array<i64: 32, 16>}, {pipeline_mode = #tpu.pipeline_mode<synchronous>, transform_indices = @transform_6, window_bounds = array<i64: 32, 10>}, {pipeline_mode = #tpu.pipeline_mode<synchronous>, transform_indices = @transform_7, window_bounds = array<i64: 1, 10>}, {transform_indices = @transform_8, window_bounds = array<i64: 1, 1, 10>}]} {
    %c0 = arith.constant 0 : index
    %c0_0 = arith.constant 0 : index
    %c0_1 = arith.constant 0 : index
    %0 = vector.load %arg3[%c0, %c0_0, %c0_1] : memref<11x2x32xf32, #tpu.memory_space<vmem>>, vector<1x1x16xf32>
    %1 = vector.shape_cast %0 : vector<1x1x16xf32> to vector<1x16xf32>
    %c0_2 = arith.constant 0 : index
    %c1 = arith.constant 1 : index
    %c0_3 = arith.constant 0 : index
    %2 = vector.load %arg3[%c0_2, %c1, %c0_3] : memref<11x2x32xf32, #tpu.memory_space<vmem>>, vector<1x1x16xf32>
    %3 = vector.shape_cast %2 : vector<1x1x16xf32> to vector<1x16xf32>
    %c0_4 = arith.constant 0 : index
    %c0_5 = arith.constant 0 : index
    %c0_6 = arith.constant 0 : index
    %4 = vector.load %arg1[%c0_4, %c0_5, %c0_6] : memref<1x256x147xbf16, #tpu.memory_space<vmem>>, vector<1x256x147xbf16>
    %5 = vector.shape_cast %4 : vector<1x256x147xbf16> to vector<256x147xbf16>
    %c0_7 = arith.constant 0 : index
    %c0_8 = arith.constant 0 : index
    %6 = vector.load %arg2[%c0_7, %c0_8] : memref<147x16xbf16, #tpu.memory_space<vmem>>, vector<147x16xbf16>
    %cst = arith.constant dense<0.000000e+00> : vector<256x16xf32>
    %7 = tpu.matmul %5, %6, %cst {dimension_numbers = #tpu.dot_dimension_numbers<[1], [0], [0], [1], [0, 0, 1, 1], [], []>} : vector<256x147xbf16>, vector<147x16xbf16>, vector<256x16xf32> -> vector<256x16xf32>
    %8 = vector.broadcast %1 : vector<1x16xf32> to vector<256x16xf32>
    %9 = arith.mulf %7, %8 : vector<256x16xf32>
    %10 = vector.broadcast %3 : vector<1x16xf32> to vector<256x16xf32>
    %11 = arith.addf %9, %10 : vector<256x16xf32>
    %cst_9 = arith.constant 0.000000e+00 : f32
    %12 = vector.broadcast %cst_9 : f32 to vector<256x16xf32>
    %13 = arith.maximumf %11, %12 : vector<256x16xf32>
    %14 = vector.shape_cast %13 : vector<256x16xf32> to vector<8x2x8x2x16xf32>
    %c0_10 = arith.constant 0 : index
    %c0_11 = arith.constant 0 : index
    %c0_12 = arith.constant 0 : index
    %c0_13 = arith.constant 0 : index
    %c0_14 = arith.constant 0 : index
    %15 = vector.load %arg10[%c0_10, %c0_11, %c0_12, %c0_13, %c0_14] : memref<8x2x8x2x16xf32, #tpu.memory_space<vmem>>, vector<8x2x8x2x16xf32>
    tpu.vector_store %arg10[%c0_10, %c0_11, %c0_12, %c0_13, %c0_14], %14 {strides = array<i32>} : memref<8x2x8x2x16xf32, #tpu.memory_space<vmem>>, vector<8x2x8x2x16xf32>,
    %cst_15 = arith.constant 0.000000e+00 : f32
    %16 = vector.broadcast %cst_15 : f32 to vector<9x2x9x2x16xf32>
    %c0_16 = arith.constant 0 : index
    %c0_17 = arith.constant 0 : index
    %c0_18 = arith.constant 0 : index
    %c0_19 = arith.constant 0 : index
    %c0_20 = arith.constant 0 : index
    %17 = vector.load %arg11[%c0_16, %c0_17, %c0_18, %c0_19, %c0_20] : memref<9x2x9x2x16xf32, #tpu.memory_space<vmem>>, vector<9x2x9x2x16xf32>
    tpu.vector_store %arg11[%c0_16, %c0_17, %c0_18, %c0_19, %c0_20], %16 {strides = array<i32>} : memref<9x2x9x2x16xf32, #tpu.memory_space<vmem>>, vector<9x2x9x2x16xf32>,
    %c0_21 = arith.constant 0 : index
    %c0_22 = arith.constant 0 : index
    %c0_23 = arith.constant 0 : index
    %c0_24 = arith.constant 0 : index
    %c0_25 = arith.constant 0 : index
    %18 = vector.load %arg10[%c0_21, %c0_22, %c0_23, %c0_24, %c0_25] : memref<8x2x8x2x16xf32, #tpu.memory_space<vmem>>, vector<8x1x8x1x16xf32>
    %c0_26 = arith.constant 0 : index
    %c1_27 = arith.constant 1 : index
    %c0_28 = arith.constant 0 : index
    %c1_29 = arith.constant 1 : index
    %c0_30 = arith.constant 0 : index
    %19 = vector.load %arg11[%c0_26, %c1_27, %c0_28, %c1_29, %c0_30] : memref<9x2x9x2x16xf32, #tpu.memory_space<vmem>>, vector<8x1x8x1x16xf32>
    tpu.vector_store %arg11[%c0_26, %c1_27, %c0_28, %c1_29, %c0_30], %18 {strides = array<i32>} : memref<9x2x9x2x16xf32, #tpu.memory_space<vmem>>, vector<8x1x8x1x16xf32>,
    %c0_31 = arith.constant 0 : index
    %c0_32 = arith.constant 0 : index
    %c0_33 = arith.constant 0 : index
    %c1_34 = arith.constant 1 : index
    %c0_35 = arith.constant 0 : index
    %20 = vector.load %arg10[%c0_31, %c0_32, %c0_33, %c1_34, %c0_35] : memref<8x2x8x2x16xf32, #tpu.memory_space<vmem>>, vector<8x1x8x1x16xf32>
    %c0_36 = arith.constant 0 : index
    %c1_37 = arith.constant 1 : index
    %c1_38 = arith.constant 1 : index
    %c0_39 = arith.constant 0 : index
    %c0_40 = arith.constant 0 : index
    %21 = vector.load %arg11[%c0_36, %c1_37, %c1_38, %c0_39, %c0_40] : memref<9x2x9x2x16xf32, #tpu.memory_space<vmem>>, vector<8x1x8x1x16xf32>
    tpu.vector_store %arg11[%c0_36, %c1_37, %c1_38, %c0_39, %c0_40], %20 {strides = array<i32>} : memref<9x2x9x2x16xf32, #tpu.memory_space<vmem>>, vector<8x1x8x1x16xf32>,
    %c0_41 = arith.constant 0 : index
    %c1_42 = arith.constant 1 : index
    %c0_43 = arith.constant 0 : index
    %c0_44 = arith.constant 0 : index
    %c0_45 = arith.constant 0 : index
    %22 = vector.load %arg10[%c0_41, %c1_42, %c0_43, %c0_44, %c0_45] : memref<8x2x8x2x16xf32, #tpu.memory_space<vmem>>, vector<8x1x8x1x16xf32>
    %c1_46 = arith.constant 1 : index
    %c0_47 = arith.constant 0 : index
    %c0_48 = arith.constant 0 : index
    %c1_49 = arith.constant 1 : index
    %c0_50 = arith.constant 0 : index
    %23 = vector.load %arg11[%c1_46, %c0_47, %c0_48, %c1_49, %c0_50] : memref<9x2x9x2x16xf32, #tpu.memory_space<vmem>>, vector<8x1x8x1x16xf32>
    tpu.vector_store %arg11[%c1_46, %c0_47, %c0_48, %c1_49, %c0_50], %22 {strides = array<i32>} : memref<9x2x9x2x16xf32, #tpu.memory_space<vmem>>, vector<8x1x8x1x16xf32>,
    %c0_51 = arith.constant 0 : index
    %c1_52 = arith.constant 1 : index
    %c0_53 = arith.constant 0 : index
    %c1_54 = arith.constant 1 : index
    %c0_55 = arith.constant 0 : index
    %24 = vector.load %arg10[%c0_51, %c1_52, %c0_53, %c1_54, %c0_55] : memref<8x2x8x2x16xf32, #tpu.memory_space<vmem>>, vector<8x1x8x1x16xf32>
    %c1_56 = arith.constant 1 : index
    %c0_57 = arith.constant 0 : index
    %c1_58 = arith.constant 1 : index
    %c0_59 = arith.constant 0 : index
    %c0_60 = arith.constant 0 : index
    %25 = vector.load %arg11[%c1_56, %c0_57, %c1_58, %c0_59, %c0_60] : memref<9x2x9x2x16xf32, #tpu.memory_space<vmem>>, vector<8x1x8x1x16xf32>
    tpu.vector_store %arg11[%c1_56, %c0_57, %c1_58, %c0_59, %c0_60], %24 {strides = array<i32>} : memref<9x2x9x2x16xf32, #tpu.memory_space<vmem>>, vector<8x1x8x1x16xf32>,
    %c0_61 = arith.constant 0 : index
    %c0_62 = arith.constant 0 : index
    %c0_63 = arith.constant 0 : index
    %c0_64 = arith.constant 0 : index
    %c0_65 = arith.constant 0 : index
    %26 = vector.load %arg11[%c0_61, %c0_62, %c0_63, %c0_64, %c0_65] : memref<9x2x9x2x16xf32, #tpu.memory_space<vmem>>, vector<8x1x8x1x16xf32>
    %c0_66 = arith.constant 0 : index
    %c0_67 = arith.constant 0 : index
    %c0_68 = arith.constant 0 : index
    %c1_69 = arith.constant 1 : index
    %c0_70 = arith.constant 0 : index
    %27 = vector.load %arg11[%c0_66, %c0_67, %c0_68, %c1_69, %c0_70] : memref<9x2x9x2x16xf32, #tpu.memory_space<vmem>>, vector<8x1x8x1x16xf32>
    %28 = arith.maximumf %26, %27 : vector<8x1x8x1x16xf32>
    %c0_71 = arith.constant 0 : index
    %c0_72 = arith.constant 0 : index
    %c1_73 = arith.constant 1 : index
    %c0_74 = arith.constant 0 : index
    %c0_75 = arith.constant 0 : index
    %29 = vector.load %arg11[%c0_71, %c0_72, %c1_73, %c0_74, %c0_75] : memref<9x2x9x2x16xf32, #tpu.memory_space<vmem>>, vector<8x1x8x1x16xf32>
    %30 = arith.maximumf %28, %29 : vector<8x1x8x1x16xf32>
    %c0_76 = arith.constant 0 : index
    %c1_77 = arith.constant 1 : index
    %c0_78 = arith.constant 0 : index
    %c0_79 = arith.constant 0 : index
    %c0_80 = arith.constant 0 : index
    %31 = vector.load %arg11[%c0_76, %c1_77, %c0_78, %c0_79, %c0_80] : memref<9x2x9x2x16xf32, #tpu.memory_space<vmem>>, vector<8x1x8x1x16xf32>
    %32 = arith.maximumf %30, %31 : vector<8x1x8x1x16xf32>
    %c0_81 = arith.constant 0 : index
    %c1_82 = arith.constant 1 : index
    %c0_83 = arith.constant 0 : index
    %c1_84 = arith.constant 1 : index
    %c0_85 = arith.constant 0 : index
    %33 = vector.load %arg11[%c0_81, %c1_82, %c0_83, %c1_84, %c0_85] : memref<9x2x9x2x16xf32, #tpu.memory_space<vmem>>, vector<8x1x8x1x16xf32>
    %34 = arith.maximumf %32, %33 : vector<8x1x8x1x16xf32>
    %c0_86 = arith.constant 0 : index
    %c1_87 = arith.constant 1 : index
    %c1_88 = arith.constant 1 : index
    %c0_89 = arith.constant 0 : index
    %c0_90 = arith.constant 0 : index
    %35 = vector.load %arg11[%c0_86, %c1_87, %c1_88, %c0_89, %c0_90] : memref<9x2x9x2x16xf32, #tpu.memory_space<vmem>>, vector<8x1x8x1x16xf32>
    %36 = arith.maximumf %34, %35 : vector<8x1x8x1x16xf32>
    %c1_91 = arith.constant 1 : index
    %c0_92 = arith.constant 0 : index
    %c0_93 = arith.constant 0 : index
    %c0_94 = arith.constant 0 : index
    %c0_95 = arith.constant 0 : index
    %37 = vector.load %arg11[%c1_91, %c0_92, %c0_93, %c0_94, %c0_95] : memref<9x2x9x2x16xf32, #tpu.memory_space<vmem>>, vector<8x1x8x1x16xf32>
    %38 = arith.maximumf %36, %37 : vector<8x1x8x1x16xf32>
    %c1_96 = arith.constant 1 : index
    %c0_97 = arith.constant 0 : index
    %c0_98 = arith.constant 0 : index
    %c1_99 = arith.constant 1 : index
    %c0_100 = arith.constant 0 : index
    %39 = vector.load %arg11[%c1_96, %c0_97, %c0_98, %c1_99, %c0_100] : memref<9x2x9x2x16xf32, #tpu.memory_space<vmem>>, vector<8x1x8x1x16xf32>
    %40 = arith.maximumf %38, %39 : vector<8x1x8x1x16xf32>
    %c1_101 = arith.constant 1 : index
    %c0_102 = arith.constant 0 : index
    %c1_103 = arith.constant 1 : index
    %c0_104 = arith.constant 0 : index
    %c0_105 = arith.constant 0 : index
    %41 = vector.load %arg11[%c1_101, %c0_102, %c1_103, %c0_104, %c0_105] : memref<9x2x9x2x16xf32, #tpu.memory_space<vmem>>, vector<8x1x8x1x16xf32>
    %42 = arith.maximumf %40, %41 : vector<8x1x8x1x16xf32>
    %43 = vector.shape_cast %42 : vector<8x1x8x1x16xf32> to vector<64x16xf32>
    %cst_106 = arith.constant 0.000000e+00 : f32
    %44 = vector.broadcast %cst_106 : f32 to vector<64x32xf32>
    %c0_107 = arith.constant 0 : index
    %c0_108 = arith.constant 0 : index
    %45 = vector.load %arg12[%c0_107, %c0_108] : memref<64x32xf32, #tpu.memory_space<vmem>>, vector<64x32xf32>
    tpu.vector_store %arg12[%c0_107, %c0_108], %44 {strides = array<i32>} : memref<64x32xf32, #tpu.memory_space<vmem>>, vector<64x32xf32>,
    %c0_109 = arith.constant 0 : index
    %c0_110 = arith.constant 0 : index
    %46 = vector.load %arg12[%c0_109, %c0_110] : memref<64x32xf32, #tpu.memory_space<vmem>>, vector<64x16xf32>
    tpu.vector_store %arg12[%c0_109, %c0_110], %43 {strides = array<i32>} : memref<64x32xf32, #tpu.memory_space<vmem>>, vector<64x16xf32>,
    %c1_111 = arith.constant 1 : index
    %c0_112 = arith.constant 0 : index
    %c0_113 = arith.constant 0 : index
    %47 = vector.load %arg3[%c1_111, %c0_112, %c0_113] : memref<11x2x32xf32, #tpu.memory_space<vmem>>, vector<1x1x32xf32>
    %48 = vector.shape_cast %47 : vector<1x1x32xf32> to vector<1x32xf32>
    %c1_114 = arith.constant 1 : index
    %c1_115 = arith.constant 1 : index
    %c0_116 = arith.constant 0 : index
    %49 = vector.load %arg3[%c1_114, %c1_115, %c0_116] : memref<11x2x32xf32, #tpu.memory_space<vmem>>, vector<1x1x32xf32>
    %50 = vector.shape_cast %49 : vector<1x1x32xf32> to vector<1x32xf32>
    %c0_117 = arith.constant 0 : index
    %c0_118 = arith.constant 0 : index
    %51 = vector.load %arg12[%c0_117, %c0_118] : memref<64x32xf32, #tpu.memory_space<vmem>>, vector<64x32xf32>
    %52 = vector.broadcast %48 : vector<1x32xf32> to vector<64x32xf32>
    %53 = arith.mulf %51, %52 : vector<64x32xf32>
    %54 = vector.broadcast %50 : vector<1x32xf32> to vector<64x32xf32>
    %55 = arith.addf %53, %54 : vector<64x32xf32>
    %cst_119 = arith.constant 0.000000e+00 : f32
    %56 = vector.broadcast %cst_119 : f32 to vector<64x32xf32>
    %57 = arith.maximumf %55, %56 : vector<64x32xf32>
    %58 = arith.truncf %57 : vector<64x32xf32> to vector<64x32xbf16>
    %c0_120 = arith.constant 0 : index
    %c0_121 = arith.constant 0 : index
    %c0_122 = arith.constant 0 : index
    %59 = vector.load %arg4[%c0_120, %c0_121, %c0_122] : memref<4x32x16xbf16, #tpu.memory_space<vmem>>, vector<1x32x16xbf16>
    %60 = vector.shape_cast %59 : vector<1x32x16xbf16> to vector<32x16xbf16>
    %cst_123 = arith.constant dense<0.000000e+00> : vector<64x16xf32>
    %61 = tpu.matmul %58, %60, %cst_123 {dimension_numbers = #tpu.dot_dimension_numbers<[1], [0], [0], [1], [0, 0, 1, 1], [], []>} : vector<64x32xbf16>, vector<32x16xbf16>, vector<64x16xf32> -> vector<64x16xf32>
    %c2 = arith.constant 2 : index
    %c0_124 = arith.constant 0 : index
    %c0_125 = arith.constant 0 : index
    %62 = vector.load %arg3[%c2, %c0_124, %c0_125] : memref<11x2x32xf32, #tpu.memory_space<vmem>>, vector<1x1x16xf32>
    %63 = vector.shape_cast %62 : vector<1x1x16xf32> to vector<1x16xf32>
    %c2_126 = arith.constant 2 : index
    %c1_127 = arith.constant 1 : index
    %c0_128 = arith.constant 0 : index
    %64 = vector.load %arg3[%c2_126, %c1_127, %c0_128] : memref<11x2x32xf32, #tpu.memory_space<vmem>>, vector<1x1x16xf32>
    %65 = vector.shape_cast %64 : vector<1x1x16xf32> to vector<1x16xf32>
    %66 = vector.broadcast %63 : vector<1x16xf32> to vector<64x16xf32>
    %67 = arith.mulf %61, %66 : vector<64x16xf32>
    %68 = vector.broadcast %65 : vector<1x16xf32> to vector<64x16xf32>
    %69 = arith.addf %67, %68 : vector<64x16xf32>
    %cst_129 = arith.constant 0.000000e+00 : f32
    %70 = vector.broadcast %cst_129 : f32 to vector<64x16xf32>
    %71 = arith.maximumf %69, %70 : vector<64x16xf32>
    %cst_130 = arith.constant 0.000000e+00 : bf16
    %72 = vector.broadcast %cst_130 : bf16 to vector<10x10x16xbf16>
    %c0_131 = arith.constant 0 : index
    %c0_132 = arith.constant 0 : index
    %c0_133 = arith.constant 0 : index
    %73 = vector.load %arg14[%c0_131, %c0_132, %c0_133] : memref<10x10x16xbf16, #tpu.memory_space<vmem>>, vector<10x10x16xbf16>
    tpu.vector_store %arg14[%c0_131, %c0_132, %c0_133], %72 {strides = array<i32>} : memref<10x10x16xbf16, #tpu.memory_space<vmem>>, vector<10x10x16xbf16>,
    %74 = vector.shape_cast %71 : vector<64x16xf32> to vector<8x8x16xf32>
    %75 = arith.truncf %74 : vector<8x8x16xf32> to vector<8x8x16xbf16>
    %c1_134 = arith.constant 1 : index
    %c1_135 = arith.constant 1 : index
    %c0_136 = arith.constant 0 : index
    %76 = vector.load %arg14[%c1_134, %c1_135, %c0_136] : memref<10x10x16xbf16, #tpu.memory_space<vmem>>, vector<8x8x16xbf16>
    tpu.vector_store %arg14[%c1_134, %c1_135, %c0_136], %75 {strides = array<i32>} : memref<10x10x16xbf16, #tpu.memory_space<vmem>>, vector<8x8x16xbf16>,
    %c0_137 = arith.constant 0 : index
    %c0_138 = arith.constant 0 : index
    %c0_139 = arith.constant 0 : index
    %77 = vector.load %arg14[%c0_137, %c0_138, %c0_139] : memref<10x10x16xbf16, #tpu.memory_space<vmem>>, vector<8x8x16xbf16>
    %78 = vector.shape_cast %77 : vector<8x8x16xbf16> to vector<64x16xbf16>
    %c0_140 = arith.constant 0 : index
    %c0_141 = arith.constant 0 : index
    %79 = vector.load %arg15[%c0_140, %c0_141] : memref<64x144xbf16, #tpu.memory_space<vmem>>, vector<64x16xbf16>
    tpu.vector_store %arg15[%c0_140, %c0_141], %78 {strides = array<i32>} : memref<64x144xbf16, #tpu.memory_space<vmem>>, vector<64x16xbf16>,
    %c0_142 = arith.constant 0 : index
    %c1_143 = arith.constant 1 : index
    %c0_144 = arith.constant 0 : index
    %80 = vector.load %arg14[%c0_142, %c1_143, %c0_144] : memref<10x10x16xbf16, #tpu.memory_space<vmem>>, vector<8x8x16xbf16>
    %81 = vector.shape_cast %80 : vector<8x8x16xbf16> to vector<64x16xbf16>
    %c0_145 = arith.constant 0 : index
    %c16 = arith.constant 16 : index
    %82 = vector.load %arg15[%c0_145, %c16] : memref<64x144xbf16, #tpu.memory_space<vmem>>, vector<64x16xbf16>
    tpu.vector_store %arg15[%c0_145, %c16], %81 {strides = array<i32>} : memref<64x144xbf16, #tpu.memory_space<vmem>>, vector<64x16xbf16>,
    %c0_146 = arith.constant 0 : index
    %c2_147 = arith.constant 2 : index
    %c0_148 = arith.constant 0 : index
    %83 = vector.load %arg14[%c0_146, %c2_147, %c0_148] : memref<10x10x16xbf16, #tpu.memory_space<vmem>>, vector<8x8x16xbf16>
    %84 = vector.shape_cast %83 : vector<8x8x16xbf16> to vector<64x16xbf16>
    %c0_149 = arith.constant 0 : index
    %c32 = arith.constant 32 : index
    %85 = vector.load %arg15[%c0_149, %c32] : memref<64x144xbf16, #tpu.memory_space<vmem>>, vector<64x16xbf16>
    tpu.vector_store %arg15[%c0_149, %c32], %84 {strides = array<i32>} : memref<64x144xbf16, #tpu.memory_space<vmem>>, vector<64x16xbf16>,
    %c1_150 = arith.constant 1 : index
    %c0_151 = arith.constant 0 : index
    %c0_152 = arith.constant 0 : index
    %86 = vector.load %arg14[%c1_150, %c0_151, %c0_152] : memref<10x10x16xbf16, #tpu.memory_space<vmem>>, vector<8x8x16xbf16>
    %87 = vector.shape_cast %86 : vector<8x8x16xbf16> to vector<64x16xbf16>
    %c0_153 = arith.constant 0 : index
    %c48 = arith.constant 48 : index
    %88 = vector.load %arg15[%c0_153, %c48] : memref<64x144xbf16, #tpu.memory_space<vmem>>, vector<64x16xbf16>
    tpu.vector_store %arg15[%c0_153, %c48], %87 {strides = array<i32>} : memref<64x144xbf16, #tpu.memory_space<vmem>>, vector<64x16xbf16>,
    %c1_154 = arith.constant 1 : index
    %c1_155 = arith.constant 1 : index
    %c0_156 = arith.constant 0 : index
    %89 = vector.load %arg14[%c1_154, %c1_155, %c0_156] : memref<10x10x16xbf16, #tpu.memory_space<vmem>>, vector<8x8x16xbf16>
    %90 = vector.shape_cast %89 : vector<8x8x16xbf16> to vector<64x16xbf16>
    %c0_157 = arith.constant 0 : index
    %c64 = arith.constant 64 : index
    %91 = vector.load %arg15[%c0_157, %c64] : memref<64x144xbf16, #tpu.memory_space<vmem>>, vector<64x16xbf16>
    tpu.vector_store %arg15[%c0_157, %c64], %90 {strides = array<i32>} : memref<64x144xbf16, #tpu.memory_space<vmem>>, vector<64x16xbf16>,
    %c1_158 = arith.constant 1 : index
    %c2_159 = arith.constant 2 : index
    %c0_160 = arith.constant 0 : index
    %92 = vector.load %arg14[%c1_158, %c2_159, %c0_160] : memref<10x10x16xbf16, #tpu.memory_space<vmem>>, vector<8x8x16xbf16>
    %93 = vector.shape_cast %92 : vector<8x8x16xbf16> to vector<64x16xbf16>
    %c0_161 = arith.constant 0 : index
    %c80 = arith.constant 80 : index
    %94 = vector.load %arg15[%c0_161, %c80] : memref<64x144xbf16, #tpu.memory_space<vmem>>, vector<64x16xbf16>
    tpu.vector_store %arg15[%c0_161, %c80], %93 {strides = array<i32>} : memref<64x144xbf16, #tpu.memory_space<vmem>>, vector<64x16xbf16>,
    %c2_162 = arith.constant 2 : index
    %c0_163 = arith.constant 0 : index
    %c0_164 = arith.constant 0 : index
    %95 = vector.load %arg14[%c2_162, %c0_163, %c0_164] : memref<10x10x16xbf16, #tpu.memory_space<vmem>>, vector<8x8x16xbf16>
    %96 = vector.shape_cast %95 : vector<8x8x16xbf16> to vector<64x16xbf16>
    %c0_165 = arith.constant 0 : index
    %c96 = arith.constant 96 : index
    %97 = vector.load %arg15[%c0_165, %c96] : memref<64x144xbf16, #tpu.memory_space<vmem>>, vector<64x16xbf16>
    tpu.vector_store %arg15[%c0_165, %c96], %96 {strides = array<i32>} : memref<64x144xbf16, #tpu.memory_space<vmem>>, vector<64x16xbf16>,
    %c2_166 = arith.constant 2 : index
    %c1_167 = arith.constant 1 : index
    %c0_168 = arith.constant 0 : index
    %98 = vector.load %arg14[%c2_166, %c1_167, %c0_168] : memref<10x10x16xbf16, #tpu.memory_space<vmem>>, vector<8x8x16xbf16>
    %99 = vector.shape_cast %98 : vector<8x8x16xbf16> to vector<64x16xbf16>
    %c0_169 = arith.constant 0 : index
    %c112 = arith.constant 112 : index
    %100 = vector.load %arg15[%c0_169, %c112] : memref<64x144xbf16, #tpu.memory_space<vmem>>, vector<64x16xbf16>
    tpu.vector_store %arg15[%c0_169, %c112], %99 {strides = array<i32>} : memref<64x144xbf16, #tpu.memory_space<vmem>>, vector<64x16xbf16>,
    %c2_170 = arith.constant 2 : index
    %c2_171 = arith.constant 2 : index
    %c0_172 = arith.constant 0 : index
    %101 = vector.load %arg14[%c2_170, %c2_171, %c0_172] : memref<10x10x16xbf16, #tpu.memory_space<vmem>>, vector<8x8x16xbf16>
    %102 = vector.shape_cast %101 : vector<8x8x16xbf16> to vector<64x16xbf16>
    %c0_173 = arith.constant 0 : index
    %c128 = arith.constant 128 : index
    %103 = vector.load %arg15[%c0_173, %c128] : memref<64x144xbf16, #tpu.memory_space<vmem>>, vector<64x16xbf16>
    tpu.vector_store %arg15[%c0_173, %c128], %102 {strides = array<i32>} : memref<64x144xbf16, #tpu.memory_space<vmem>>, vector<64x16xbf16>,
    %c0_174 = arith.constant 0 : index
    %c0_175 = arith.constant 0 : index
    %104 = vector.load %arg15[%c0_174, %c0_175] : memref<64x144xbf16, #tpu.memory_space<vmem>>, vector<64x144xbf16>
    %c0_176 = arith.constant 0 : index
    %c0_177 = arith.constant 0 : index
    %c0_178 = arith.constant 0 : index
    %105 = vector.load %arg5[%c0_176, %c0_177, %c0_178] : memref<4x144x8xbf16, #tpu.memory_space<vmem>>, vector<1x144x8xbf16>
    %106 = vector.shape_cast %105 : vector<1x144x8xbf16> to vector<144x8xbf16>
    %cst_179 = arith.constant dense<0.000000e+00> : vector<64x8xf32>
    %107 = tpu.matmul %104, %106, %cst_179 {dimension_numbers = #tpu.dot_dimension_numbers<[1], [0], [0], [1], [0, 0, 1, 1], [], []>} : vector<64x144xbf16>, vector<144x8xbf16>, vector<64x8xf32> -> vector<64x8xf32>
    %c0_180 = arith.constant 0 : index
    %c16_181 = arith.constant 16 : index
    %108 = vector.load %arg12[%c0_180, %c16_181] : memref<64x32xf32, #tpu.memory_space<vmem>>, vector<64x8xf32>
    tpu.vector_store %arg12[%c0_180, %c16_181], %107 {strides = array<i32>} : memref<64x32xf32, #tpu.memory_space<vmem>>, vector<64x8xf32>,
    %c3 = arith.constant 3 : index
    %c0_182 = arith.constant 0 : index
    %c0_183 = arith.constant 0 : index
    %109 = vector.load %arg3[%c3, %c0_182, %c0_183] : memref<11x2x32xf32, #tpu.memory_space<vmem>>, vector<1x1x32xf32>
    %110 = vector.shape_cast %109 : vector<1x1x32xf32> to vector<1x32xf32>
    %c3_184 = arith.constant 3 : index
    %c1_185 = arith.constant 1 : index
    %c0_186 = arith.constant 0 : index
    %111 = vector.load %arg3[%c3_184, %c1_185, %c0_186] : memref<11x2x32xf32, #tpu.memory_space<vmem>>, vector<1x1x32xf32>
    %112 = vector.shape_cast %111 : vector<1x1x32xf32> to vector<1x32xf32>
    %c0_187 = arith.constant 0 : index
    %c0_188 = arith.constant 0 : index
    %113 = vector.load %arg12[%c0_187, %c0_188] : memref<64x32xf32, #tpu.memory_space<vmem>>, vector<64x32xf32>
    %114 = vector.broadcast %110 : vector<1x32xf32> to vector<64x32xf32>
    %115 = arith.mulf %113, %114 : vector<64x32xf32>
    %116 = vector.broadcast %112 : vector<1x32xf32> to vector<64x32xf32>
    %117 = arith.addf %115, %116 : vector<64x32xf32>
    %cst_189 = arith.constant 0.000000e+00 : f32
    %118 = vector.broadcast %cst_189 : f32 to vector<64x32xf32>
    %119 = arith.maximumf %117, %118 : vector<64x32xf32>
    %120 = arith.truncf %119 : vector<64x32xf32> to vector<64x32xbf16>
    %c1_190 = arith.constant 1 : index
    %c0_191 = arith.constant 0 : index
    %c0_192 = arith.constant 0 : index
    %121 = vector.load %arg4[%c1_190, %c0_191, %c0_192] : memref<4x32x16xbf16, #tpu.memory_space<vmem>>, vector<1x32x16xbf16>
    %122 = vector.shape_cast %121 : vector<1x32x16xbf16> to vector<32x16xbf16>
    %cst_193 = arith.constant dense<0.000000e+00> : vector<64x16xf32>
    %123 = tpu.matmul %120, %122, %cst_193 {dimension_numbers = #tpu.dot_dimension_numbers<[1], [0], [0], [1], [0, 0, 1, 1], [], []>} : vector<64x32xbf16>, vector<32x16xbf16>, vector<64x16xf32> -> vector<64x16xf32>
    %c4 = arith.constant 4 : index
    %c0_194 = arith.constant 0 : index
    %c0_195 = arith.constant 0 : index
    %124 = vector.load %arg3[%c4, %c0_194, %c0_195] : memref<11x2x32xf32, #tpu.memory_space<vmem>>, vector<1x1x16xf32>
    %125 = vector.shape_cast %124 : vector<1x1x16xf32> to vector<1x16xf32>
    %c4_196 = arith.constant 4 : index
    %c1_197 = arith.constant 1 : index
    %c0_198 = arith.constant 0 : index
    %126 = vector.load %arg3[%c4_196, %c1_197, %c0_198] : memref<11x2x32xf32, #tpu.memory_space<vmem>>, vector<1x1x16xf32>
    %127 = vector.shape_cast %126 : vector<1x1x16xf32> to vector<1x16xf32>
    %128 = vector.broadcast %125 : vector<1x16xf32> to vector<64x16xf32>
    %129 = arith.mulf %123, %128 : vector<64x16xf32>
    %130 = vector.broadcast %127 : vector<1x16xf32> to vector<64x16xf32>
    %131 = arith.addf %129, %130 : vector<64x16xf32>
    %cst_199 = arith.constant 0.000000e+00 : f32
    %132 = vector.broadcast %cst_199 : f32 to vector<64x16xf32>
    %133 = arith.maximumf %131, %132 : vector<64x16xf32>
    %cst_200 = arith.constant 0.000000e+00 : bf16
    %134 = vector.broadcast %cst_200 : bf16 to vector<10x10x16xbf16>
    %c0_201 = arith.constant 0 : index
    %c0_202 = arith.constant 0 : index
    %c0_203 = arith.constant 0 : index
    %135 = vector.load %arg14[%c0_201, %c0_202, %c0_203] : memref<10x10x16xbf16, #tpu.memory_space<vmem>>, vector<10x10x16xbf16>
    tpu.vector_store %arg14[%c0_201, %c0_202, %c0_203], %134 {strides = array<i32>} : memref<10x10x16xbf16, #tpu.memory_space<vmem>>, vector<10x10x16xbf16>,
    %136 = vector.shape_cast %133 : vector<64x16xf32> to vector<8x8x16xf32>
    %137 = arith.truncf %136 : vector<8x8x16xf32> to vector<8x8x16xbf16>
    %c1_204 = arith.constant 1 : index
    %c1_205 = arith.constant 1 : index
    %c0_206 = arith.constant 0 : index
    %138 = vector.load %arg14[%c1_204, %c1_205, %c0_206] : memref<10x10x16xbf16, #tpu.memory_space<vmem>>, vector<8x8x16xbf16>
    tpu.vector_store %arg14[%c1_204, %c1_205, %c0_206], %137 {strides = array<i32>} : memref<10x10x16xbf16, #tpu.memory_space<vmem>>, vector<8x8x16xbf16>,
    %c0_207 = arith.constant 0 : index
    %c0_208 = arith.constant 0 : index
    %c0_209 = arith.constant 0 : index
    %139 = vector.load %arg14[%c0_207, %c0_208, %c0_209] : memref<10x10x16xbf16, #tpu.memory_space<vmem>>, vector<8x8x16xbf16>
    %140 = vector.shape_cast %139 : vector<8x8x16xbf16> to vector<64x16xbf16>
    %c0_210 = arith.constant 0 : index
    %c0_211 = arith.constant 0 : index
    %141 = vector.load %arg15[%c0_210, %c0_211] : memref<64x144xbf16, #tpu.memory_space<vmem>>, vector<64x16xbf16>
    tpu.vector_store %arg15[%c0_210, %c0_211], %140 {strides = array<i32>} : memref<64x144xbf16, #tpu.memory_space<vmem>>, vector<64x16xbf16>,
    %c0_212 = arith.constant 0 : index
    %c1_213 = arith.constant 1 : index
    %c0_214 = arith.constant 0 : index
    %142 = vector.load %arg14[%c0_212, %c1_213, %c0_214] : memref<10x10x16xbf16, #tpu.memory_space<vmem>>, vector<8x8x16xbf16>
    %143 = vector.shape_cast %142 : vector<8x8x16xbf16> to vector<64x16xbf16>
    %c0_215 = arith.constant 0 : index
    %c16_216 = arith.constant 16 : index
    %144 = vector.load %arg15[%c0_215, %c16_216] : memref<64x144xbf16, #tpu.memory_space<vmem>>, vector<64x16xbf16>
    tpu.vector_store %arg15[%c0_215, %c16_216], %143 {strides = array<i32>} : memref<64x144xbf16, #tpu.memory_space<vmem>>, vector<64x16xbf16>,
    %c0_217 = arith.constant 0 : index
    %c2_218 = arith.constant 2 : index
    %c0_219 = arith.constant 0 : index
    %145 = vector.load %arg14[%c0_217, %c2_218, %c0_219] : memref<10x10x16xbf16, #tpu.memory_space<vmem>>, vector<8x8x16xbf16>
    %146 = vector.shape_cast %145 : vector<8x8x16xbf16> to vector<64x16xbf16>
    %c0_220 = arith.constant 0 : index
    %c32_221 = arith.constant 32 : index
    %147 = vector.load %arg15[%c0_220, %c32_221] : memref<64x144xbf16, #tpu.memory_space<vmem>>, vector<64x16xbf16>
    tpu.vector_store %arg15[%c0_220, %c32_221], %146 {strides = array<i32>} : memref<64x144xbf16, #tpu.memory_space<vmem>>, vector<64x16xbf16>,
    %c1_222 = arith.constant 1 : index
    %c0_223 = arith.constant 0 : index
    %c0_224 = arith.constant 0 : index
    %148 = vector.load %arg14[%c1_222, %c0_223, %c0_224] : memref<10x10x16xbf16, #tpu.memory_space<vmem>>, vector<8x8x16xbf16>
    %149 = vector.shape_cast %148 : vector<8x8x16xbf16> to vector<64x16xbf16>
    %c0_225 = arith.constant 0 : index
    %c48_226 = arith.constant 48 : index
    %150 = vector.load %arg15[%c0_225, %c48_226] : memref<64x144xbf16, #tpu.memory_space<vmem>>, vector<64x16xbf16>
    tpu.vector_store %arg15[%c0_225, %c48_226], %149 {strides = array<i32>} : memref<64x144xbf16, #tpu.memory_space<vmem>>, vector<64x16xbf16>,
    %c1_227 = arith.constant 1 : index
    %c1_228 = arith.constant 1 : index
    %c0_229 = arith.constant 0 : index
    %151 = vector.load %arg14[%c1_227, %c1_228, %c0_229] : memref<10x10x16xbf16, #tpu.memory_space<vmem>>, vector<8x8x16xbf16>
    %152 = vector.shape_cast %151 : vector<8x8x16xbf16> to vector<64x16xbf16>
    %c0_230 = arith.constant 0 : index
    %c64_231 = arith.constant 64 : index
    %153 = vector.load %arg15[%c0_230, %c64_231] : memref<64x144xbf16, #tpu.memory_space<vmem>>, vector<64x16xbf16>
    tpu.vector_store %arg15[%c0_230, %c64_231], %152 {strides = array<i32>} : memref<64x144xbf16, #tpu.memory_space<vmem>>, vector<64x16xbf16>,
    %c1_232 = arith.constant 1 : index
    %c2_233 = arith.constant 2 : index
    %c0_234 = arith.constant 0 : index
    %154 = vector.load %arg14[%c1_232, %c2_233, %c0_234] : memref<10x10x16xbf16, #tpu.memory_space<vmem>>, vector<8x8x16xbf16>
    %155 = vector.shape_cast %154 : vector<8x8x16xbf16> to vector<64x16xbf16>
    %c0_235 = arith.constant 0 : index
    %c80_236 = arith.constant 80 : index
    %156 = vector.load %arg15[%c0_235, %c80_236] : memref<64x144xbf16, #tpu.memory_space<vmem>>, vector<64x16xbf16>
    tpu.vector_store %arg15[%c0_235, %c80_236], %155 {strides = array<i32>} : memref<64x144xbf16, #tpu.memory_space<vmem>>, vector<64x16xbf16>,
    %c2_237 = arith.constant 2 : index
    %c0_238 = arith.constant 0 : index
    %c0_239 = arith.constant 0 : index
    %157 = vector.load %arg14[%c2_237, %c0_238, %c0_239] : memref<10x10x16xbf16, #tpu.memory_space<vmem>>, vector<8x8x16xbf16>
    %158 = vector.shape_cast %157 : vector<8x8x16xbf16> to vector<64x16xbf16>
    %c0_240 = arith.constant 0 : index
    %c96_241 = arith.constant 96 : index
    %159 = vector.load %arg15[%c0_240, %c96_241] : memref<64x144xbf16, #tpu.memory_space<vmem>>, vector<64x16xbf16>
    tpu.vector_store %arg15[%c0_240, %c96_241], %158 {strides = array<i32>} : memref<64x144xbf16, #tpu.memory_space<vmem>>, vector<64x16xbf16>,
    %c2_242 = arith.constant 2 : index
    %c1_243 = arith.constant 1 : index
    %c0_244 = arith.constant 0 : index
    %160 = vector.load %arg14[%c2_242, %c1_243, %c0_244] : memref<10x10x16xbf16, #tpu.memory_space<vmem>>, vector<8x8x16xbf16>
    %161 = vector.shape_cast %160 : vector<8x8x16xbf16> to vector<64x16xbf16>
    %c0_245 = arith.constant 0 : index
    %c112_246 = arith.constant 112 : index
    %162 = vector.load %arg15[%c0_245, %c112_246] : memref<64x144xbf16, #tpu.memory_space<vmem>>, vector<64x16xbf16>
    tpu.vector_store %arg15[%c0_245, %c112_246], %161 {strides = array<i32>} : memref<64x144xbf16, #tpu.memory_space<vmem>>, vector<64x16xbf16>,
    %c2_247 = arith.constant 2 : index
    %c2_248 = arith.constant 2 : index
    %c0_249 = arith.constant 0 : index
    %163 = vector.load %arg14[%c2_247, %c2_248, %c0_249] : memref<10x10x16xbf16, #tpu.memory_space<vmem>>, vector<8x8x16xbf16>
    %164 = vector.shape_cast %163 : vector<8x8x16xbf16> to vector<64x16xbf16>
    %c0_250 = arith.constant 0 : index
    %c128_251 = arith.constant 128 : index
    %165 = vector.load %arg15[%c0_250, %c128_251] : memref<64x144xbf16, #tpu.memory_space<vmem>>, vector<64x16xbf16>
    tpu.vector_store %arg15[%c0_250, %c128_251], %164 {strides = array<i32>} : memref<64x144xbf16, #tpu.memory_space<vmem>>, vector<64x16xbf16>,
    %c0_252 = arith.constant 0 : index
    %c0_253 = arith.constant 0 : index
    %166 = vector.load %arg15[%c0_252, %c0_253] : memref<64x144xbf16, #tpu.memory_space<vmem>>, vector<64x144xbf16>
    %c1_254 = arith.constant 1 : index
    %c0_255 = arith.constant 0 : index
    %c0_256 = arith.constant 0 : index
    %167 = vector.load %arg5[%c1_254, %c0_255, %c0_256] : memref<4x144x8xbf16, #tpu.memory_space<vmem>>, vector<1x144x8xbf16>
    %168 = vector.shape_cast %167 : vector<1x144x8xbf16> to vector<144x8xbf16>
    %cst_257 = arith.constant dense<0.000000e+00> : vector<64x8xf32>
    %169 = tpu.matmul %166, %168, %cst_257 {dimension_numbers = #tpu.dot_dimension_numbers<[1], [0], [0], [1], [0, 0, 1, 1], [], []>} : vector<64x144xbf16>, vector<144x8xbf16>, vector<64x8xf32> -> vector<64x8xf32>
    %c0_258 = arith.constant 0 : index
    %c24 = arith.constant 24 : index
    %170 = vector.load %arg12[%c0_258, %c24] : memref<64x32xf32, #tpu.memory_space<vmem>>, vector<64x8xf32>
    tpu.vector_store %arg12[%c0_258, %c24], %169 {strides = array<i32>} : memref<64x32xf32, #tpu.memory_space<vmem>>, vector<64x8xf32>,
    %c5 = arith.constant 5 : index
    %c0_259 = arith.constant 0 : index
    %c0_260 = arith.constant 0 : index
    %171 = vector.load %arg3[%c5, %c0_259, %c0_260] : memref<11x2x32xf32, #tpu.memory_space<vmem>>, vector<1x1x32xf32>
    %172 = vector.shape_cast %171 : vector<1x1x32xf32> to vector<1x32xf32>
    %c5_261 = arith.constant 5 : index
    %c1_262 = arith.constant 1 : index
    %c0_263 = arith.constant 0 : index
    %173 = vector.load %arg3[%c5_261, %c1_262, %c0_263] : memref<11x2x32xf32, #tpu.memory_space<vmem>>, vector<1x1x32xf32>
    %174 = vector.shape_cast %173 : vector<1x1x32xf32> to vector<1x32xf32>
    %c0_264 = arith.constant 0 : index
    %c0_265 = arith.constant 0 : index
    %175 = vector.load %arg12[%c0_264, %c0_265] : memref<64x32xf32, #tpu.memory_space<vmem>>, vector<64x32xf32>
    %176 = vector.broadcast %172 : vector<1x32xf32> to vector<64x32xf32>
    %177 = arith.mulf %175, %176 : vector<64x32xf32>
    %178 = vector.broadcast %174 : vector<1x32xf32> to vector<64x32xf32>
    %179 = arith.addf %177, %178 : vector<64x32xf32>
    %cst_266 = arith.constant 0.000000e+00 : f32
    %180 = vector.broadcast %cst_266 : f32 to vector<64x32xf32>
    %181 = arith.maximumf %179, %180 : vector<64x32xf32>
    %182 = vector.shape_cast %181 : vector<64x32xf32> to vector<4x2x4x2x32xf32>
    %c0_267 = arith.constant 0 : index
    %c0_268 = arith.constant 0 : index
    %c0_269 = arith.constant 0 : index
    %c0_270 = arith.constant 0 : index
    %c0_271 = arith.constant 0 : index
    %183 = vector.load %arg16[%c0_267, %c0_268, %c0_269, %c0_270, %c0_271] : memref<4x2x4x2x32xf32, #tpu.memory_space<vmem>>, vector<4x2x4x2x32xf32>
    tpu.vector_store %arg16[%c0_267, %c0_268, %c0_269, %c0_270, %c0_271], %182 {strides = array<i32>} : memref<4x2x4x2x32xf32, #tpu.memory_space<vmem>>, vector<4x2x4x2x32xf32>,
    %c0_272 = arith.constant 0 : index
    %c0_273 = arith.constant 0 : index
    %c0_274 = arith.constant 0 : index
    %c0_275 = arith.constant 0 : index
    %c0_276 = arith.constant 0 : index
    %184 = vector.load %arg16[%c0_272, %c0_273, %c0_274, %c0_275, %c0_276] : memref<4x2x4x2x32xf32, #tpu.memory_space<vmem>>, vector<4x1x4x1x32xf32>
    %c0_277 = arith.constant 0 : index
    %c0_278 = arith.constant 0 : index
    %c0_279 = arith.constant 0 : index
    %c1_280 = arith.constant 1 : index
    %c0_281 = arith.constant 0 : index
    %185 = vector.load %arg16[%c0_277, %c0_278, %c0_279, %c1_280, %c0_281] : memref<4x2x4x2x32xf32, #tpu.memory_space<vmem>>, vector<4x1x4x1x32xf32>
    %186 = arith.addf %184, %185 : vector<4x1x4x1x32xf32>
    %c0_282 = arith.constant 0 : index
    %c1_283 = arith.constant 1 : index
    %c0_284 = arith.constant 0 : index
    %c0_285 = arith.constant 0 : index
    %c0_286 = arith.constant 0 : index
    %187 = vector.load %arg16[%c0_282, %c1_283, %c0_284, %c0_285, %c0_286] : memref<4x2x4x2x32xf32, #tpu.memory_space<vmem>>, vector<4x1x4x1x32xf32>
    %188 = arith.addf %186, %187 : vector<4x1x4x1x32xf32>
    %c0_287 = arith.constant 0 : index
    %c1_288 = arith.constant 1 : index
    %c0_289 = arith.constant 0 : index
    %c1_290 = arith.constant 1 : index
    %c0_291 = arith.constant 0 : index
    %189 = vector.load %arg16[%c0_287, %c1_288, %c0_289, %c1_290, %c0_291] : memref<4x2x4x2x32xf32, #tpu.memory_space<vmem>>, vector<4x1x4x1x32xf32>
    %190 = arith.addf %188, %189 : vector<4x1x4x1x32xf32>
    %cst_292 = arith.constant 2.500000e-01 : f32
    %191 = vector.broadcast %cst_292 : f32 to vector<4x1x4x1x32xf32>
    %192 = arith.mulf %191, %190 : vector<4x1x4x1x32xf32>
    %193 = vector.shape_cast %192 : vector<4x1x4x1x32xf32> to vector<16x32xf32>
    %194 = arith.truncf %193 : vector<16x32xf32> to vector<16x32xbf16>
    %c0_293 = arith.constant 0 : index
    %c0_294 = arith.constant 0 : index
    %195 = vector.load %arg6[%c0_293, %c0_294] : memref<32x16xbf16, #tpu.memory_space<vmem>>, vector<32x16xbf16>
    %cst_295 = arith.constant dense<0.000000e+00> : vector<16x16xf32>
    %196 = tpu.matmul %194, %195, %cst_295 {dimension_numbers = #tpu.dot_dimension_numbers<[1], [0], [0], [1], [0, 0, 1, 1], [], []>} : vector<16x32xbf16>, vector<32x16xbf16>, vector<16x16xf32> -> vector<16x16xf32>
    %cst_296 = arith.constant 0.000000e+00 : f32
    %197 = vector.broadcast %cst_296 : f32 to vector<16x32xf32>
    %c0_297 = arith.constant 0 : index
    %c0_298 = arith.constant 0 : index
    %198 = vector.load %arg13[%c0_297, %c0_298] : memref<16x32xf32, #tpu.memory_space<vmem>>, vector<16x32xf32>
    tpu.vector_store %arg13[%c0_297, %c0_298], %197 {strides = array<i32>} : memref<16x32xf32, #tpu.memory_space<vmem>>, vector<16x32xf32>,
    %c0_299 = arith.constant 0 : index
    %c0_300 = arith.constant 0 : index
    %199 = vector.load %arg13[%c0_299, %c0_300] : memref<16x32xf32, #tpu.memory_space<vmem>>, vector<16x16xf32>
    tpu.vector_store %arg13[%c0_299, %c0_300], %196 {strides = array<i32>} : memref<16x32xf32, #tpu.memory_space<vmem>>, vector<16x16xf32>,
    %c6 = arith.constant 6 : index
    %c0_301 = arith.constant 0 : index
    %c0_302 = arith.constant 0 : index
    %200 = vector.load %arg3[%c6, %c0_301, %c0_302] : memref<11x2x32xf32, #tpu.memory_space<vmem>>, vector<1x1x32xf32>
    %201 = vector.shape_cast %200 : vector<1x1x32xf32> to vector<1x32xf32>
    %c6_303 = arith.constant 6 : index
    %c1_304 = arith.constant 1 : index
    %c0_305 = arith.constant 0 : index
    %202 = vector.load %arg3[%c6_303, %c1_304, %c0_305] : memref<11x2x32xf32, #tpu.memory_space<vmem>>, vector<1x1x32xf32>
    %203 = vector.shape_cast %202 : vector<1x1x32xf32> to vector<1x32xf32>
    %c0_306 = arith.constant 0 : index
    %c0_307 = arith.constant 0 : index
    %204 = vector.load %arg13[%c0_306, %c0_307] : memref<16x32xf32, #tpu.memory_space<vmem>>, vector<16x32xf32>
    %205 = vector.broadcast %201 : vector<1x32xf32> to vector<16x32xf32>
    %206 = arith.mulf %204, %205 : vector<16x32xf32>
    %207 = vector.broadcast %203 : vector<1x32xf32> to vector<16x32xf32>
    %208 = arith.addf %206, %207 : vector<16x32xf32>
    %cst_308 = arith.constant 0.000000e+00 : f32
    %209 = vector.broadcast %cst_308 : f32 to vector<16x32xf32>
    %210 = arith.maximumf %208, %209 : vector<16x32xf32>
    %211 = arith.truncf %210 : vector<16x32xf32> to vector<16x32xbf16>
    %c2_309 = arith.constant 2 : index
    %c0_310 = arith.constant 0 : index
    %c0_311 = arith.constant 0 : index
    %212 = vector.load %arg4[%c2_309, %c0_310, %c0_311] : memref<4x32x16xbf16, #tpu.memory_space<vmem>>, vector<1x32x16xbf16>
    %213 = vector.shape_cast %212 : vector<1x32x16xbf16> to vector<32x16xbf16>
    %cst_312 = arith.constant dense<0.000000e+00> : vector<16x16xf32>
    %214 = tpu.matmul %211, %213, %cst_312 {dimension_numbers = #tpu.dot_dimension_numbers<[1], [0], [0], [1], [0, 0, 1, 1], [], []>} : vector<16x32xbf16>, vector<32x16xbf16>, vector<16x16xf32> -> vector<16x16xf32>
    %c7 = arith.constant 7 : index
    %c0_313 = arith.constant 0 : index
    %c0_314 = arith.constant 0 : index
    %215 = vector.load %arg3[%c7, %c0_313, %c0_314] : memref<11x2x32xf32, #tpu.memory_space<vmem>>, vector<1x1x16xf32>
    %216 = vector.shape_cast %215 : vector<1x1x16xf32> to vector<1x16xf32>
    %c7_315 = arith.constant 7 : index
    %c1_316 = arith.constant 1 : index
    %c0_317 = arith.constant 0 : index
    %217 = vector.load %arg3[%c7_315, %c1_316, %c0_317] : memref<11x2x32xf32, #tpu.memory_space<vmem>>, vector<1x1x16xf32>
    %218 = vector.shape_cast %217 : vector<1x1x16xf32> to vector<1x16xf32>
    %219 = vector.broadcast %216 : vector<1x16xf32> to vector<16x16xf32>
    %220 = arith.mulf %214, %219 : vector<16x16xf32>
    %221 = vector.broadcast %218 : vector<1x16xf32> to vector<16x16xf32>
    %222 = arith.addf %220, %221 : vector<16x16xf32>
    %cst_318 = arith.constant 0.000000e+00 : f32
    %223 = vector.broadcast %cst_318 : f32 to vector<16x16xf32>
    %224 = arith.maximumf %222, %223 : vector<16x16xf32>
    %cst_319 = arith.constant 0.000000e+00 : bf16
    %225 = vector.broadcast %cst_319 : bf16 to vector<10x10x16xbf16>
    %c0_320 = arith.constant 0 : index
    %c0_321 = arith.constant 0 : index
    %c0_322 = arith.constant 0 : index
    %226 = vector.load %arg14[%c0_320, %c0_321, %c0_322] : memref<10x10x16xbf16, #tpu.memory_space<vmem>>, vector<10x10x16xbf16>
    tpu.vector_store %arg14[%c0_320, %c0_321, %c0_322], %225 {strides = array<i32>} : memref<10x10x16xbf16, #tpu.memory_space<vmem>>, vector<10x10x16xbf16>,
    %227 = vector.shape_cast %224 : vector<16x16xf32> to vector<4x4x16xf32>
    %228 = arith.truncf %227 : vector<4x4x16xf32> to vector<4x4x16xbf16>
    %c1_323 = arith.constant 1 : index
    %c1_324 = arith.constant 1 : index
    %c0_325 = arith.constant 0 : index
    %229 = vector.load %arg14[%c1_323, %c1_324, %c0_325] : memref<10x10x16xbf16, #tpu.memory_space<vmem>>, vector<4x4x16xbf16>
    tpu.vector_store %arg14[%c1_323, %c1_324, %c0_325], %228 {strides = array<i32>} : memref<10x10x16xbf16, #tpu.memory_space<vmem>>, vector<4x4x16xbf16>,
    %c0_326 = arith.constant 0 : index
    %c0_327 = arith.constant 0 : index
    %c0_328 = arith.constant 0 : index
    %230 = vector.load %arg14[%c0_326, %c0_327, %c0_328] : memref<10x10x16xbf16, #tpu.memory_space<vmem>>, vector<4x4x16xbf16>
    %231 = vector.shape_cast %230 : vector<4x4x16xbf16> to vector<16x16xbf16>
    %c0_329 = arith.constant 0 : index
    %c0_330 = arith.constant 0 : index
    %232 = vector.load %arg15[%c0_329, %c0_330] : memref<64x144xbf16, #tpu.memory_space<vmem>>, vector<16x16xbf16>
    tpu.vector_store %arg15[%c0_329, %c0_330], %231 {strides = array<i32>} : memref<64x144xbf16, #tpu.memory_space<vmem>>, vector<16x16xbf16>,
    %c0_331 = arith.constant 0 : index
    %c1_332 = arith.constant 1 : index
    %c0_333 = arith.constant 0 : index
    %233 = vector.load %arg14[%c0_331, %c1_332, %c0_333] : memref<10x10x16xbf16, #tpu.memory_space<vmem>>, vector<4x4x16xbf16>
    %234 = vector.shape_cast %233 : vector<4x4x16xbf16> to vector<16x16xbf16>
    %c0_334 = arith.constant 0 : index
    %c16_335 = arith.constant 16 : index
    %235 = vector.load %arg15[%c0_334, %c16_335] : memref<64x144xbf16, #tpu.memory_space<vmem>>, vector<16x16xbf16>
    tpu.vector_store %arg15[%c0_334, %c16_335], %234 {strides = array<i32>} : memref<64x144xbf16, #tpu.memory_space<vmem>>, vector<16x16xbf16>,
    %c0_336 = arith.constant 0 : index
    %c2_337 = arith.constant 2 : index
    %c0_338 = arith.constant 0 : index
    %236 = vector.load %arg14[%c0_336, %c2_337, %c0_338] : memref<10x10x16xbf16, #tpu.memory_space<vmem>>, vector<4x4x16xbf16>
    %237 = vector.shape_cast %236 : vector<4x4x16xbf16> to vector<16x16xbf16>
    %c0_339 = arith.constant 0 : index
    %c32_340 = arith.constant 32 : index
    %238 = vector.load %arg15[%c0_339, %c32_340] : memref<64x144xbf16, #tpu.memory_space<vmem>>, vector<16x16xbf16>
    tpu.vector_store %arg15[%c0_339, %c32_340], %237 {strides = array<i32>} : memref<64x144xbf16, #tpu.memory_space<vmem>>, vector<16x16xbf16>,
    %c1_341 = arith.constant 1 : index
    %c0_342 = arith.constant 0 : index
    %c0_343 = arith.constant 0 : index
    %239 = vector.load %arg14[%c1_341, %c0_342, %c0_343] : memref<10x10x16xbf16, #tpu.memory_space<vmem>>, vector<4x4x16xbf16>
    %240 = vector.shape_cast %239 : vector<4x4x16xbf16> to vector<16x16xbf16>
    %c0_344 = arith.constant 0 : index
    %c48_345 = arith.constant 48 : index
    %241 = vector.load %arg15[%c0_344, %c48_345] : memref<64x144xbf16, #tpu.memory_space<vmem>>, vector<16x16xbf16>
    tpu.vector_store %arg15[%c0_344, %c48_345], %240 {strides = array<i32>} : memref<64x144xbf16, #tpu.memory_space<vmem>>, vector<16x16xbf16>,
    %c1_346 = arith.constant 1 : index
    %c1_347 = arith.constant 1 : index
    %c0_348 = arith.constant 0 : index
    %242 = vector.load %arg14[%c1_346, %c1_347, %c0_348] : memref<10x10x16xbf16, #tpu.memory_space<vmem>>, vector<4x4x16xbf16>
    %243 = vector.shape_cast %242 : vector<4x4x16xbf16> to vector<16x16xbf16>
    %c0_349 = arith.constant 0 : index
    %c64_350 = arith.constant 64 : index
    %244 = vector.load %arg15[%c0_349, %c64_350] : memref<64x144xbf16, #tpu.memory_space<vmem>>, vector<16x16xbf16>
    tpu.vector_store %arg15[%c0_349, %c64_350], %243 {strides = array<i32>} : memref<64x144xbf16, #tpu.memory_space<vmem>>, vector<16x16xbf16>,
    %c1_351 = arith.constant 1 : index
    %c2_352 = arith.constant 2 : index
    %c0_353 = arith.constant 0 : index
    %245 = vector.load %arg14[%c1_351, %c2_352, %c0_353] : memref<10x10x16xbf16, #tpu.memory_space<vmem>>, vector<4x4x16xbf16>
    %246 = vector.shape_cast %245 : vector<4x4x16xbf16> to vector<16x16xbf16>
    %c0_354 = arith.constant 0 : index
    %c80_355 = arith.constant 80 : index
    %247 = vector.load %arg15[%c0_354, %c80_355] : memref<64x144xbf16, #tpu.memory_space<vmem>>, vector<16x16xbf16>
    tpu.vector_store %arg15[%c0_354, %c80_355], %246 {strides = array<i32>} : memref<64x144xbf16, #tpu.memory_space<vmem>>, vector<16x16xbf16>,
    %c2_356 = arith.constant 2 : index
    %c0_357 = arith.constant 0 : index
    %c0_358 = arith.constant 0 : index
    %248 = vector.load %arg14[%c2_356, %c0_357, %c0_358] : memref<10x10x16xbf16, #tpu.memory_space<vmem>>, vector<4x4x16xbf16>
    %249 = vector.shape_cast %248 : vector<4x4x16xbf16> to vector<16x16xbf16>
    %c0_359 = arith.constant 0 : index
    %c96_360 = arith.constant 96 : index
    %250 = vector.load %arg15[%c0_359, %c96_360] : memref<64x144xbf16, #tpu.memory_space<vmem>>, vector<16x16xbf16>
    tpu.vector_store %arg15[%c0_359, %c96_360], %249 {strides = array<i32>} : memref<64x144xbf16, #tpu.memory_space<vmem>>, vector<16x16xbf16>,
    %c2_361 = arith.constant 2 : index
    %c1_362 = arith.constant 1 : index
    %c0_363 = arith.constant 0 : index
    %251 = vector.load %arg14[%c2_361, %c1_362, %c0_363] : memref<10x10x16xbf16, #tpu.memory_space<vmem>>, vector<4x4x16xbf16>
    %252 = vector.shape_cast %251 : vector<4x4x16xbf16> to vector<16x16xbf16>
    %c0_364 = arith.constant 0 : index
    %c112_365 = arith.constant 112 : index
    %253 = vector.load %arg15[%c0_364, %c112_365] : memref<64x144xbf16, #tpu.memory_space<vmem>>, vector<16x16xbf16>
    tpu.vector_store %arg15[%c0_364, %c112_365], %252 {strides = array<i32>} : memref<64x144xbf16, #tpu.memory_space<vmem>>, vector<16x16xbf16>,
    %c2_366 = arith.constant 2 : index
    %c2_367 = arith.constant 2 : index
    %c0_368 = arith.constant 0 : index
    %254 = vector.load %arg14[%c2_366, %c2_367, %c0_368] : memref<10x10x16xbf16, #tpu.memory_space<vmem>>, vector<4x4x16xbf16>
    %255 = vector.shape_cast %254 : vector<4x4x16xbf16> to vector<16x16xbf16>
    %c0_369 = arith.constant 0 : index
    %c128_370 = arith.constant 128 : index
    %256 = vector.load %arg15[%c0_369, %c128_370] : memref<64x144xbf16, #tpu.memory_space<vmem>>, vector<16x16xbf16>
    tpu.vector_store %arg15[%c0_369, %c128_370], %255 {strides = array<i32>} : memref<64x144xbf16, #tpu.memory_space<vmem>>, vector<16x16xbf16>,
    %c0_371 = arith.constant 0 : index
    %c0_372 = arith.constant 0 : index
    %257 = vector.load %arg15[%c0_371, %c0_372] : memref<64x144xbf16, #tpu.memory_space<vmem>>, vector<16x144xbf16>
    %c2_373 = arith.constant 2 : index
    %c0_374 = arith.constant 0 : index
    %c0_375 = arith.constant 0 : index
    %258 = vector.load %arg5[%c2_373, %c0_374, %c0_375] : memref<4x144x8xbf16, #tpu.memory_space<vmem>>, vector<1x144x8xbf16>
    %259 = vector.shape_cast %258 : vector<1x144x8xbf16> to vector<144x8xbf16>
    %cst_376 = arith.constant dense<0.000000e+00> : vector<16x8xf32>
    %260 = tpu.matmul %257, %259, %cst_376 {dimension_numbers = #tpu.dot_dimension_numbers<[1], [0], [0], [1], [0, 0, 1, 1], [], []>} : vector<16x144xbf16>, vector<144x8xbf16>, vector<16x8xf32> -> vector<16x8xf32>
    %c0_377 = arith.constant 0 : index
    %c16_378 = arith.constant 16 : index
    %261 = vector.load %arg13[%c0_377, %c16_378] : memref<16x32xf32, #tpu.memory_space<vmem>>, vector<16x8xf32>
    tpu.vector_store %arg13[%c0_377, %c16_378], %260 {strides = array<i32>} : memref<16x32xf32, #tpu.memory_space<vmem>>, vector<16x8xf32>,
    %c8 = arith.constant 8 : index
    %c0_379 = arith.constant 0 : index
    %c0_380 = arith.constant 0 : index
    %262 = vector.load %arg3[%c8, %c0_379, %c0_380] : memref<11x2x32xf32, #tpu.memory_space<vmem>>, vector<1x1x32xf32>
    %263 = vector.shape_cast %262 : vector<1x1x32xf32> to vector<1x32xf32>
    %c8_381 = arith.constant 8 : index
    %c1_382 = arith.constant 1 : index
    %c0_383 = arith.constant 0 : index
    %264 = vector.load %arg3[%c8_381, %c1_382, %c0_383] : memref<11x2x32xf32, #tpu.memory_space<vmem>>, vector<1x1x32xf32>
    %265 = vector.shape_cast %264 : vector<1x1x32xf32> to vector<1x32xf32>
    %c0_384 = arith.constant 0 : index
    %c0_385 = arith.constant 0 : index
    %266 = vector.load %arg13[%c0_384, %c0_385] : memref<16x32xf32, #tpu.memory_space<vmem>>, vector<16x32xf32>
    %267 = vector.broadcast %263 : vector<1x32xf32> to vector<16x32xf32>
    %268 = arith.mulf %266, %267 : vector<16x32xf32>
    %269 = vector.broadcast %265 : vector<1x32xf32> to vector<16x32xf32>
    %270 = arith.addf %268, %269 : vector<16x32xf32>
    %cst_386 = arith.constant 0.000000e+00 : f32
    %271 = vector.broadcast %cst_386 : f32 to vector<16x32xf32>
    %272 = arith.maximumf %270, %271 : vector<16x32xf32>
    %273 = arith.truncf %272 : vector<16x32xf32> to vector<16x32xbf16>
    %c3_387 = arith.constant 3 : index
    %c0_388 = arith.constant 0 : index
    %c0_389 = arith.constant 0 : index
    %274 = vector.load %arg4[%c3_387, %c0_388, %c0_389] : memref<4x32x16xbf16, #tpu.memory_space<vmem>>, vector<1x32x16xbf16>
    %275 = vector.shape_cast %274 : vector<1x32x16xbf16> to vector<32x16xbf16>
    %cst_390 = arith.constant dense<0.000000e+00> : vector<16x16xf32>
    %276 = tpu.matmul %273, %275, %cst_390 {dimension_numbers = #tpu.dot_dimension_numbers<[1], [0], [0], [1], [0, 0, 1, 1], [], []>} : vector<16x32xbf16>, vector<32x16xbf16>, vector<16x16xf32> -> vector<16x16xf32>
    %c9 = arith.constant 9 : index
    %c0_391 = arith.constant 0 : index
    %c0_392 = arith.constant 0 : index
    %277 = vector.load %arg3[%c9, %c0_391, %c0_392] : memref<11x2x32xf32, #tpu.memory_space<vmem>>, vector<1x1x16xf32>
    %278 = vector.shape_cast %277 : vector<1x1x16xf32> to vector<1x16xf32>
    %c9_393 = arith.constant 9 : index
    %c1_394 = arith.constant 1 : index
    %c0_395 = arith.constant 0 : index
    %279 = vector.load %arg3[%c9_393, %c1_394, %c0_395] : memref<11x2x32xf32, #tpu.memory_space<vmem>>, vector<1x1x16xf32>
    %280 = vector.shape_cast %279 : vector<1x1x16xf32> to vector<1x16xf32>
    %281 = vector.broadcast %278 : vector<1x16xf32> to vector<16x16xf32>
    %282 = arith.mulf %276, %281 : vector<16x16xf32>
    %283 = vector.broadcast %280 : vector<1x16xf32> to vector<16x16xf32>
    %284 = arith.addf %282, %283 : vector<16x16xf32>
    %cst_396 = arith.constant 0.000000e+00 : f32
    %285 = vector.broadcast %cst_396 : f32 to vector<16x16xf32>
    %286 = arith.maximumf %284, %285 : vector<16x16xf32>
    %cst_397 = arith.constant 0.000000e+00 : bf16
    %287 = vector.broadcast %cst_397 : bf16 to vector<10x10x16xbf16>
    %c0_398 = arith.constant 0 : index
    %c0_399 = arith.constant 0 : index
    %c0_400 = arith.constant 0 : index
    %288 = vector.load %arg14[%c0_398, %c0_399, %c0_400] : memref<10x10x16xbf16, #tpu.memory_space<vmem>>, vector<10x10x16xbf16>
    tpu.vector_store %arg14[%c0_398, %c0_399, %c0_400], %287 {strides = array<i32>} : memref<10x10x16xbf16, #tpu.memory_space<vmem>>, vector<10x10x16xbf16>,
    %289 = vector.shape_cast %286 : vector<16x16xf32> to vector<4x4x16xf32>
    %290 = arith.truncf %289 : vector<4x4x16xf32> to vector<4x4x16xbf16>
    %c1_401 = arith.constant 1 : index
    %c1_402 = arith.constant 1 : index
    %c0_403 = arith.constant 0 : index
    %291 = vector.load %arg14[%c1_401, %c1_402, %c0_403] : memref<10x10x16xbf16, #tpu.memory_space<vmem>>, vector<4x4x16xbf16>
    tpu.vector_store %arg14[%c1_401, %c1_402, %c0_403], %290 {strides = array<i32>} : memref<10x10x16xbf16, #tpu.memory_space<vmem>>, vector<4x4x16xbf16>,
    %c0_404 = arith.constant 0 : index
    %c0_405 = arith.constant 0 : index
    %c0_406 = arith.constant 0 : index
    %292 = vector.load %arg14[%c0_404, %c0_405, %c0_406] : memref<10x10x16xbf16, #tpu.memory_space<vmem>>, vector<4x4x16xbf16>
    %293 = vector.shape_cast %292 : vector<4x4x16xbf16> to vector<16x16xbf16>
    %c0_407 = arith.constant 0 : index
    %c0_408 = arith.constant 0 : index
    %294 = vector.load %arg15[%c0_407, %c0_408] : memref<64x144xbf16, #tpu.memory_space<vmem>>, vector<16x16xbf16>
    tpu.vector_store %arg15[%c0_407, %c0_408], %293 {strides = array<i32>} : memref<64x144xbf16, #tpu.memory_space<vmem>>, vector<16x16xbf16>,
    %c0_409 = arith.constant 0 : index
    %c1_410 = arith.constant 1 : index
    %c0_411 = arith.constant 0 : index
    %295 = vector.load %arg14[%c0_409, %c1_410, %c0_411] : memref<10x10x16xbf16, #tpu.memory_space<vmem>>, vector<4x4x16xbf16>
    %296 = vector.shape_cast %295 : vector<4x4x16xbf16> to vector<16x16xbf16>
    %c0_412 = arith.constant 0 : index
    %c16_413 = arith.constant 16 : index
    %297 = vector.load %arg15[%c0_412, %c16_413] : memref<64x144xbf16, #tpu.memory_space<vmem>>, vector<16x16xbf16>
    tpu.vector_store %arg15[%c0_412, %c16_413], %296 {strides = array<i32>} : memref<64x144xbf16, #tpu.memory_space<vmem>>, vector<16x16xbf16>,
    %c0_414 = arith.constant 0 : index
    %c2_415 = arith.constant 2 : index
    %c0_416 = arith.constant 0 : index
    %298 = vector.load %arg14[%c0_414, %c2_415, %c0_416] : memref<10x10x16xbf16, #tpu.memory_space<vmem>>, vector<4x4x16xbf16>
    %299 = vector.shape_cast %298 : vector<4x4x16xbf16> to vector<16x16xbf16>
    %c0_417 = arith.constant 0 : index
    %c32_418 = arith.constant 32 : index
    %300 = vector.load %arg15[%c0_417, %c32_418] : memref<64x144xbf16, #tpu.memory_space<vmem>>, vector<16x16xbf16>
    tpu.vector_store %arg15[%c0_417, %c32_418], %299 {strides = array<i32>} : memref<64x144xbf16, #tpu.memory_space<vmem>>, vector<16x16xbf16>,
    %c1_419 = arith.constant 1 : index
    %c0_420 = arith.constant 0 : index
    %c0_421 = arith.constant 0 : index
    %301 = vector.load %arg14[%c1_419, %c0_420, %c0_421] : memref<10x10x16xbf16, #tpu.memory_space<vmem>>, vector<4x4x16xbf16>
    %302 = vector.shape_cast %301 : vector<4x4x16xbf16> to vector<16x16xbf16>
    %c0_422 = arith.constant 0 : index
    %c48_423 = arith.constant 48 : index
    %303 = vector.load %arg15[%c0_422, %c48_423] : memref<64x144xbf16, #tpu.memory_space<vmem>>, vector<16x16xbf16>
    tpu.vector_store %arg15[%c0_422, %c48_423], %302 {strides = array<i32>} : memref<64x144xbf16, #tpu.memory_space<vmem>>, vector<16x16xbf16>,
    %c1_424 = arith.constant 1 : index
    %c1_425 = arith.constant 1 : index
    %c0_426 = arith.constant 0 : index
    %304 = vector.load %arg14[%c1_424, %c1_425, %c0_426] : memref<10x10x16xbf16, #tpu.memory_space<vmem>>, vector<4x4x16xbf16>
    %305 = vector.shape_cast %304 : vector<4x4x16xbf16> to vector<16x16xbf16>
    %c0_427 = arith.constant 0 : index
    %c64_428 = arith.constant 64 : index
    %306 = vector.load %arg15[%c0_427, %c64_428] : memref<64x144xbf16, #tpu.memory_space<vmem>>, vector<16x16xbf16>
    tpu.vector_store %arg15[%c0_427, %c64_428], %305 {strides = array<i32>} : memref<64x144xbf16, #tpu.memory_space<vmem>>, vector<16x16xbf16>,
    %c1_429 = arith.constant 1 : index
    %c2_430 = arith.constant 2 : index
    %c0_431 = arith.constant 0 : index
    %307 = vector.load %arg14[%c1_429, %c2_430, %c0_431] : memref<10x10x16xbf16, #tpu.memory_space<vmem>>, vector<4x4x16xbf16>
    %308 = vector.shape_cast %307 : vector<4x4x16xbf16> to vector<16x16xbf16>
    %c0_432 = arith.constant 0 : index
    %c80_433 = arith.constant 80 : index
    %309 = vector.load %arg15[%c0_432, %c80_433] : memref<64x144xbf16, #tpu.memory_space<vmem>>, vector<16x16xbf16>
    tpu.vector_store %arg15[%c0_432, %c80_433], %308 {strides = array<i32>} : memref<64x144xbf16, #tpu.memory_space<vmem>>, vector<16x16xbf16>,
    %c2_434 = arith.constant 2 : index
    %c0_435 = arith.constant 0 : index
    %c0_436 = arith.constant 0 : index
    %310 = vector.load %arg14[%c2_434, %c0_435, %c0_436] : memref<10x10x16xbf16, #tpu.memory_space<vmem>>, vector<4x4x16xbf16>
    %311 = vector.shape_cast %310 : vector<4x4x16xbf16> to vector<16x16xbf16>
    %c0_437 = arith.constant 0 : index
    %c96_438 = arith.constant 96 : index
    %312 = vector.load %arg15[%c0_437, %c96_438] : memref<64x144xbf16, #tpu.memory_space<vmem>>, vector<16x16xbf16>
    tpu.vector_store %arg15[%c0_437, %c96_438], %311 {strides = array<i32>} : memref<64x144xbf16, #tpu.memory_space<vmem>>, vector<16x16xbf16>,
    %c2_439 = arith.constant 2 : index
    %c1_440 = arith.constant 1 : index
    %c0_441 = arith.constant 0 : index
    %313 = vector.load %arg14[%c2_439, %c1_440, %c0_441] : memref<10x10x16xbf16, #tpu.memory_space<vmem>>, vector<4x4x16xbf16>
    %314 = vector.shape_cast %313 : vector<4x4x16xbf16> to vector<16x16xbf16>
    %c0_442 = arith.constant 0 : index
    %c112_443 = arith.constant 112 : index
    %315 = vector.load %arg15[%c0_442, %c112_443] : memref<64x144xbf16, #tpu.memory_space<vmem>>, vector<16x16xbf16>
    tpu.vector_store %arg15[%c0_442, %c112_443], %314 {strides = array<i32>} : memref<64x144xbf16, #tpu.memory_space<vmem>>, vector<16x16xbf16>,
    %c2_444 = arith.constant 2 : index
    %c2_445 = arith.constant 2 : index
    %c0_446 = arith.constant 0 : index
    %316 = vector.load %arg14[%c2_444, %c2_445, %c0_446] : memref<10x10x16xbf16, #tpu.memory_space<vmem>>, vector<4x4x16xbf16>
    %317 = vector.shape_cast %316 : vector<4x4x16xbf16> to vector<16x16xbf16>
    %c0_447 = arith.constant 0 : index
    %c128_448 = arith.constant 128 : index
    %318 = vector.load %arg15[%c0_447, %c128_448] : memref<64x144xbf16, #tpu.memory_space<vmem>>, vector<16x16xbf16>
    tpu.vector_store %arg15[%c0_447, %c128_448], %317 {strides = array<i32>} : memref<64x144xbf16, #tpu.memory_space<vmem>>, vector<16x16xbf16>,
    %c0_449 = arith.constant 0 : index
    %c0_450 = arith.constant 0 : index
    %319 = vector.load %arg15[%c0_449, %c0_450] : memref<64x144xbf16, #tpu.memory_space<vmem>>, vector<16x144xbf16>
    %c3_451 = arith.constant 3 : index
    %c0_452 = arith.constant 0 : index
    %c0_453 = arith.constant 0 : index
    %320 = vector.load %arg5[%c3_451, %c0_452, %c0_453] : memref<4x144x8xbf16, #tpu.memory_space<vmem>>, vector<1x144x8xbf16>
    %321 = vector.shape_cast %320 : vector<1x144x8xbf16> to vector<144x8xbf16>
    %cst_454 = arith.constant dense<0.000000e+00> : vector<16x8xf32>
    %322 = tpu.matmul %319, %321, %cst_454 {dimension_numbers = #tpu.dot_dimension_numbers<[1], [0], [0], [1], [0, 0, 1, 1], [], []>} : vector<16x144xbf16>, vector<144x8xbf16>, vector<16x8xf32> -> vector<16x8xf32>
    %c0_455 = arith.constant 0 : index
    %c24_456 = arith.constant 24 : index
    %323 = vector.load %arg13[%c0_455, %c24_456] : memref<16x32xf32, #tpu.memory_space<vmem>>, vector<16x8xf32>
    tpu.vector_store %arg13[%c0_455, %c24_456], %322 {strides = array<i32>} : memref<16x32xf32, #tpu.memory_space<vmem>>, vector<16x8xf32>,
    %c10 = arith.constant 10 : index
    %c0_457 = arith.constant 0 : index
    %c0_458 = arith.constant 0 : index
    %324 = vector.load %arg3[%c10, %c0_457, %c0_458] : memref<11x2x32xf32, #tpu.memory_space<vmem>>, vector<1x1x32xf32>
    %325 = vector.shape_cast %324 : vector<1x1x32xf32> to vector<1x32xf32>
    %c10_459 = arith.constant 10 : index
    %c1_460 = arith.constant 1 : index
    %c0_461 = arith.constant 0 : index
    %326 = vector.load %arg3[%c10_459, %c1_460, %c0_461] : memref<11x2x32xf32, #tpu.memory_space<vmem>>, vector<1x1x32xf32>
    %327 = vector.shape_cast %326 : vector<1x1x32xf32> to vector<1x32xf32>
    %c0_462 = arith.constant 0 : index
    %c0_463 = arith.constant 0 : index
    %328 = vector.load %arg13[%c0_462, %c0_463] : memref<16x32xf32, #tpu.memory_space<vmem>>, vector<16x32xf32>
    %329 = vector.broadcast %325 : vector<1x32xf32> to vector<16x32xf32>
    %330 = arith.mulf %328, %329 : vector<16x32xf32>
    %331 = vector.broadcast %327 : vector<1x32xf32> to vector<16x32xf32>
    %332 = arith.addf %330, %331 : vector<16x32xf32>
    %cst_464 = arith.constant 0.000000e+00 : f32
    %333 = vector.broadcast %cst_464 : f32 to vector<16x32xf32>
    %334 = arith.maximumf %332, %333 : vector<16x32xf32>
    %cst_465 = arith.constant dense<0.000000e+00> : vector<32xf32>
    %335 = vector.multi_reduction <add>, %334, %cst_465 [0] : vector<16x32xf32> to vector<32xf32>
    %336 = vector.shape_cast %335 : vector<32xf32> to vector<1x32xf32>
    %cst_466 = arith.constant 1.600000e+01 : f32
    %337 = vector.broadcast %cst_466 : f32 to vector<1x32xf32>
    %338 = arith.divf %336, %337 : vector<1x32xf32>
    %c0_467 = arith.constant 0 : index
    %c0_468 = arith.constant 0 : index
    %339 = vector.load %arg7[%c0_467, %c0_468] : memref<32x10xf32, #tpu.memory_space<vmem>>, vector<32x10xf32>
    %cst_469 = arith.constant dense<0.000000e+00> : vector<1x10xf32>
    %340 = tpu.matmul %338, %339, %cst_469 {dimension_numbers = #tpu.dot_dimension_numbers<[1], [0], [0], [1], [0, 0, 1, 1], [], []>} : vector<1x32xf32>, vector<32x10xf32>, vector<1x10xf32> -> vector<1x10xf32>
    %c0_470 = arith.constant 0 : index
    %c0_471 = arith.constant 0 : index
    %341 = vector.load %arg8[%c0_470, %c0_471] : memref<1x10xf32, #tpu.memory_space<vmem>>, vector<1x10xf32>
    %342 = arith.addf %340, %341 : vector<1x10xf32>
    %343 = vector.shape_cast %342 : vector<1x10xf32> to vector<1x1x10xf32>
    %c0_472 = arith.constant 0 : index
    %c0_473 = arith.constant 0 : index
    %c0_474 = arith.constant 0 : index
    %344 = vector.load %arg9[%c0_472, %c0_473, %c0_474] : memref<1x1x10xf32, #tpu.memory_space<vmem>>, vector<1x1x10xf32>
    tpu.vector_store %arg9[%c0_472, %c0_473, %c0_474], %343 {strides = array<i32>} : memref<1x1x10xf32, #tpu.memory_space<vmem>>, vector<1x1x10xf32>,
    return
  }
  func.func @transform_0(%arg0: i32) -> (i32, i32, i32) {
    %c0_i32 = arith.constant 0 : i32
    %c0_i32_0 = arith.constant 0 : i32
    %c0_i32_1 = arith.constant 0 : i32
    return %arg0, %c0_i32, %c0_i32_0 : i32, i32, i32
  }
  func.func @transform_1(%arg0: i32) -> (i32, i32) {
    %c0_i32 = arith.constant 0 : i32
    %c0_i32_0 = arith.constant 0 : i32
    %c0_i32_1 = arith.constant 0 : i32
    return %c0_i32, %c0_i32_0 : i32, i32
  }
  func.func @transform_2(%arg0: i32) -> (i32, i32, i32) {
    %c0_i32 = arith.constant 0 : i32
    %c0_i32_0 = arith.constant 0 : i32
    %c0_i32_1 = arith.constant 0 : i32
    %c0_i32_2 = arith.constant 0 : i32
    return %c0_i32, %c0_i32_0, %c0_i32_1 : i32, i32, i32
  }
  func.func @transform_3(%arg0: i32) -> (i32, i32, i32) {
    %c0_i32 = arith.constant 0 : i32
    %c0_i32_0 = arith.constant 0 : i32
    %c0_i32_1 = arith.constant 0 : i32
    %c0_i32_2 = arith.constant 0 : i32
    return %c0_i32, %c0_i32_0, %c0_i32_1 : i32, i32, i32
  }
  func.func @transform_4(%arg0: i32) -> (i32, i32, i32) {
    %c0_i32 = arith.constant 0 : i32
    %c0_i32_0 = arith.constant 0 : i32
    %c0_i32_1 = arith.constant 0 : i32
    %c0_i32_2 = arith.constant 0 : i32
    return %c0_i32, %c0_i32_0, %c0_i32_1 : i32, i32, i32
  }
  func.func @transform_5(%arg0: i32) -> (i32, i32) {
    %c0_i32 = arith.constant 0 : i32
    %c0_i32_0 = arith.constant 0 : i32
    %c0_i32_1 = arith.constant 0 : i32
    return %c0_i32, %c0_i32_0 : i32, i32
  }
  func.func @transform_6(%arg0: i32) -> (i32, i32) {
    %c0_i32 = arith.constant 0 : i32
    %c0_i32_0 = arith.constant 0 : i32
    %c0_i32_1 = arith.constant 0 : i32
    return %c0_i32, %c0_i32_0 : i32, i32
  }
  func.func @transform_7(%arg0: i32) -> (i32, i32) {
    %c0_i32 = arith.constant 0 : i32
    %c0_i32_0 = arith.constant 0 : i32
    %c0_i32_1 = arith.constant 0 : i32
    return %c0_i32, %c0_i32_0 : i32, i32
  }
  func.func @transform_8(%arg0: i32) -> (i32, i32, i32) {
    %c0_i32 = arith.constant 0 : i32
    %c0_i32_0 = arith.constant 0 : i32
    %c0_i32_1 = arith.constant 0 : i32
    return %arg0, %c0_i32, %c0_i32_0 : i32, i32, i32
  }
}

</mosaic_0001>

<llo_original>
// kernel: densenet_forward.1
$region0: #{densenet_forward.1}
  #allocation0 [shape = 'u32[]', space=smem, size = 0x4, offset = 0x4, fixed_abs, tag = 'smem constant byte address 0x4 - core index']
  #allocation1 [shape = 'u32[72,128]{1,0:T(1,128)}', space=vmem, size = 0x9000, scoped, tag = 'internal scratch']
  #allocation2 [shape = 'f32[8,2,8,2,16]{4,3,2,1,0:T(2,128)}', space=vmem, size = 0x20000, scoped, tag = 'scratch operand']
  #allocation3 [shape = 'f32[9,2,9,2,16]{4,3,2,1,0:T(2,128)}', space=vmem, size = 0x28800, scoped, tag = 'scratch operand']
  #allocation4 [shape = 'f32[64,32]{1,0:T(8,128)}', space=vmem, size = 0x8000, scoped, tag = 'scratch operand']
  #allocation5 [shape = 'f32[16,32]{1,0:T(8,128)}', space=vmem, size = 0x2000, scoped, tag = 'scratch operand']
  #allocation6 [shape = 'bf16[10,10,16]{2,1,0:T(8,128)(2,1)}', space=vmem, size = 0xa000, scoped, tag = 'scratch operand']
  #allocation7 [shape = 'bf16[64,144]{1,0:T(8,128)(2,1)}', space=vmem, size = 0x8000, scoped, tag = 'scratch operand']
  #allocation8 [shape = 'f32[4,2,4,2,32]{4,3,2,1,0:T(2,128)}', space=vmem, size = 0x8000, scoped, tag = 'scratch operand']
  %s0 = inlined_call_operand.vmem [shape: bf16[2,256,147], index: 0, kind: input, shape index: {}]
  %s1 = inlined_call_operand.vmem [shape: bf16[147,16], index: 1, kind: input, shape index: {}]
  %s2 = inlined_call_operand.vmem [shape: f32[11,2,32], index: 2, kind: input, shape index: {}]
  %s3 = inlined_call_operand.vmem [shape: bf16[4,32,16], index: 3, kind: input, shape index: {}]
  %s4 = inlined_call_operand.vmem [shape: bf16[4,144,8], index: 4, kind: input, shape index: {}]
  %s5 = inlined_call_operand.vmem [shape: bf16[32,16], index: 5, kind: input, shape index: {}]
  %s6 = inlined_call_operand.vmem [shape: f32[32,10], index: 6, kind: input, shape index: {}]
  %s7 = inlined_call_operand.vmem [shape: f32[1,10], index: 7, kind: input, shape index: {}]
  %s8 = inlined_call_operand.hbm [shape: f32[2,1,10], index: 8, kind: output, shape index: {}]
  %s9 = sld [smem:[#allocation0]]
  $region65: #{densenet_forward.1} parent=0
    _
  %s11 = ssub.s32 1, %s9
  %s12 = scalar_select 0, %s11, %s9
  $region1: #{densenet_forward.1} parent=0
    #allocation9 [shape = 'u8[1024]{0}', space=vmem, size = 0x400, scoped, tag = 'output window, operand 0']
    #allocation10 [shape = 's32[2]{0}', space=sflag, size = 0x8, scoped, tag = 'scoped memory for densenet_forward.1']
    %13 = vsyncpa [#allocation10], 0
    %s14 = scalar_lea.sflag [#allocation10], 1
    %15 = vsyncpa %s14, 0
    loop: start=0, step=1, limit=4
    $region2: #{densenet_forward.1} parent=1 // loop_pre_header
      _
    $region3: #{densenet_forward.1} parent=1 // loop_header
      %s17 = sphi 0, %s21
      %p18 = scmp.ge.s32.totalorder %s17, 4
      %s27 = sphi 0, %s29
      %s30 = sphi 0, %s27
      %s31 = sphi 0, %s30
      %s47 = sphi 0, %s31
      %s51 = sphi 0, %s51
      %s53 = sphi 0, %s51
      %s54 = sphi 0, %s53
      %s68 = sphi 0, %s54
      %s72 = sphi 0, %s72
      %s74 = sphi 0, %s72
      %s75 = sphi 0, %s74
      %s89 = sphi 0, %s75
      %s93 = sphi 0, %s93
      %s95 = sphi 0, %s93
      %s96 = sphi 0, %s95
      %s110 = sphi 0, %s96
      %s114 = sphi 0, %s114
      %s116 = sphi 0, %s114
      %s117 = sphi 0, %s116
      %s131 = sphi 0, %s117
      %s135 = sphi 0, %s135
      %s137 = sphi 0, %s135
      %s138 = sphi 0, %s137
      %s152 = sphi 0, %s138
      %s156 = sphi 0, %s156
      %s158 = sphi 0, %s156
      %s159 = sphi 0, %s158
      %s173 = sphi 0, %s159
      %s177 = sphi 0, %s177
      %s179 = sphi 0, %s177
      %s180 = sphi 0, %s179
      %s194 = sphi 0, %s180
      %s200 = sphi 0, %s202
      %s203 = sphi 0, %s200
      %s204 = sphi 0, %s203
      %s220 = sphi 0, %s204
    $region4: #{densenet_forward.1} parent=1 // loop_header_branch
      %20 = sbr.rel (%p18) target = $region8
    $region5: #{densenet_forward.1} parent=1 // loop_body
      %s22 = ssub.s32 %s17, 1
      %s23 = ssub.s32 %s17, 2
      %s24 = sadd.s32 %s17, 1
      %s25 = ssub.s32 %s17, %s24
      %p26 = scmp.eq.s32.totalorder %s25, 0
      %s28 = sadd.s32 %s27, 1
      %s29 = scalar_select %p26, %s27, %s28
      %p32 = pneg %p26
      %p33 = scmp.eq.s32.totalorder %s17, 1
      %p34 = por %p32, %p33
      %p35 = scmp.ne.s32.totalorder %s27, %s30
      %p36 = scmp.eq.s32.totalorder %s17, 0
      %p37 = por %p35, %p36
      %p38 = scmp.ne.s32.totalorder %s27, %s30
      %p39 = scmp.eq.s32.totalorder %s22, 1
      %p40 = por %p38, %p39
      %p41 = scmp.ne.s32.totalorder %s30, %s31
      %p42 = scmp.eq.s32.totalorder %s22, 0
      %p43 = por %p41, %p42
      %p44 = scmp.ne.s32.totalorder %s30, %s31
      %p45 = scmp.eq.s32.totalorder %s23, 1
      %p46 = por %p44, %p45
      %p48 = scmp.ne.s32.totalorder %s31, %s47
      %p49 = scmp.eq.s32.totalorder %s23, 0
      %p50 = por %p48, %p49
      %s52 = sadd.s32 %s51, 1
      %p55 = scmp.eq.s32.totalorder %s17, 1
      %p56 = scmp.ne.s32.totalorder %s51, %s53
      %p57 = scmp.eq.s32.totalorder %s17, 0
      %p58 = por %p56, %p57
      %p59 = scmp.ne.s32.totalorder %s51, %s53
      %p60 = scmp.eq.s32.totalorder %s22, 1
      %p61 = por %p59, %p60
      %p62 = scmp.ne.s32.totalorder %s53, %s54
      %p63 = scmp.eq.s32.totalorder %s22, 0
      %p64 = por %p62, %p63
      %p65 = scmp.ne.s32.totalorder %s53, %s54
      %p66 = scmp.eq.s32.totalorder %s23, 1
      %p67 = por %p65, %p66
      %p69 = scmp.ne.s32.totalorder %s54, %s68
      %p70 = scmp.eq.s32.totalorder %s23, 0
      %p71 = por %p69, %p70
      %s73 = sadd.s32 %s72, 1
      %p76 = scmp.eq.s32.totalorder %s17, 1
      %p77 = scmp.ne.s32.totalorder %s72, %s74
      %p78 = scmp.eq.s32.totalorder %s17, 0
      %p79 = por %p77, %p78
      %p80 = scmp.ne.s32.totalorder %s72, %s74
      %p81 = scmp.eq.s32.totalorder %s22, 1
      %p82 = por %p80, %p81
      %p83 = scmp.ne.s32.totalorder %s74, %s75
      %p84 = scmp.eq.s32.totalorder %s22, 0
      %p85 = por %p83, %p84
      %p86 = scmp.ne.s32.totalorder %s74, %s75
      %p87 = scmp.eq.s32.totalorder %s23, 1
      %p88 = por %p86, %p87
      %p90 = scmp.ne.s32.totalorder %s75, %s89
      %p91 = scmp.eq.s32.totalorder %s23, 0
      %p92 = por %p90, %p91
      %s94 = sadd.s32 %s93, 1
      %p97 = scmp.eq.s32.totalorder %s17, 1
      %p98 = scmp.ne.s32.totalorder %s93, %s95
      %p99 = scmp.eq.s32.totalorder %s17, 0
      %p100 = por %p98, %p99
      %p101 = scmp.ne.s32.totalorder %s93, %s95
      %p102 = scmp.eq.s32.totalorder %s22, 1
      %p103 = por %p101, %p102
      %p104 = scmp.ne.s32.totalorder %s95, %s96
      %p105 = scmp.eq.s32.totalorder %s22, 0
      %p106 = por %p104, %p105
      %p107 = scmp.ne.s32.totalorder %s95, %s96
      %p108 = scmp.eq.s32.totalorder %s23, 1
      %p109 = por %p107, %p108
      %p111 = scmp.ne.s32.totalorder %s96, %s110
      %p112 = scmp.eq.s32.totalorder %s23, 0
      %p113 = por %p111, %p112
      %s115 = sadd.s32 %s114, 1
      %p118 = scmp.eq.s32.totalorder %s17, 1
      %p119 = scmp.ne.s32.totalorder %s114, %s116
      %p120 = scmp.eq.s32.totalorder %s17, 0
      %p121 = por %p119, %p120
      %p122 = scmp.ne.s32.totalorder %s114, %s116
      %p123 = scmp.eq.s32.totalorder %s22, 1
      %p124 = por %p122, %p123
      %p125 = scmp.ne.s32.totalorder %s116, %s117
      %p126 = scmp.eq.s32.totalorder %s22, 0
      %p127 = por %p125, %p126
      %p128 = scmp.ne.s32.totalorder %s116, %s117
      %p129 = scmp.eq.s32.totalorder %s23, 1
      %p130 = por %p128, %p129
      %p132 = scmp.ne.s32.totalorder %s117, %s131
      %p133 = scmp.eq.s32.totalorder %s23, 0
      %p134 = por %p132, %p133
      %s136 = sadd.s32 %s135, 1
      %p139 = scmp.eq.s32.totalorder %s17, 1
      %p140 = scmp.ne.s32.totalorder %s135, %s137
      %p141 = scmp.eq.s32.totalorder %s17, 0
      %p142 = por %p140, %p141
      %p143 = scmp.ne.s32.totalorder %s135, %s137
      %p144 = scmp.eq.s32.totalorder %s22, 1
      %p145 = por %p143, %p144
      %p146 = scmp.ne.s32.totalorder %s137, %s138
      %p147 = scmp.eq.s32.totalorder %s22, 0
      %p148 = por %p146, %p147
      %p149 = scmp.ne.s32.totalorder %s137, %s138
      %p150 = scmp.eq.s32.totalorder %s23, 1
      %p151 = por %p149, %p150
      %p153 = scmp.ne.s32.totalorder %s138, %s152
      %p154 = scmp.eq.s32.totalorder %s23, 0
      %p155 = por %p153, %p154
      %s157 = sadd.s32 %s156, 1
      %p160 = scmp.eq.s32.totalorder %s17, 1
      %p161 = scmp.ne.s32.totalorder %s156, %s158
      %p162 = scmp.eq.s32.totalorder %s17, 0
      %p163 = por %p161, %p162
      %p164 = scmp.ne.s32.totalorder %s156, %s158
      %p165 = scmp.eq.s32.totalorder %s22, 1
      %p166 = por %p164, %p165
      %p167 = scmp.ne.s32.totalorder %s158, %s159
      %p168 = scmp.eq.s32.totalorder %s22, 0
      %p169 = por %p167, %p168
      %p170 = scmp.ne.s32.totalorder %s158, %s159
      %p171 = scmp.eq.s32.totalorder %s23, 1
      %p172 = por %p170, %p171
      %p174 = scmp.ne.s32.totalorder %s159, %s173
      %p175 = scmp.eq.s32.totalorder %s23, 0
      %p176 = por %p174, %p175
      %s178 = sadd.s32 %s177, 1
      %p181 = scmp.eq.s32.totalorder %s17, 1
      %p182 = scmp.ne.s32.totalorder %s177, %s179
      %p183 = scmp.eq.s32.totalorder %s17, 0
      %p184 = por %p182, %p183
      %p185 = scmp.ne.s32.totalorder %s177, %s179
      %p186 = scmp.eq.s32.totalorder %s22, 1
      %p187 = por %p185, %p186
      %p188 = scmp.ne.s32.totalorder %s179, %s180
      %p189 = scmp.eq.s32.totalorder %s22, 0
      %p190 = por %p188, %p189
      %p191 = scmp.ne.s32.totalorder %s179, %s180
      %p192 = scmp.eq.s32.totalorder %s23, 1
      %p193 = por %p191, %p192
      %p195 = scmp.ne.s32.totalorder %s180, %s194
      %p196 = scmp.eq.s32.totalorder %s23, 0
      %p197 = por %p195, %p196
      %s198 = ssub.s32 %s17, %s24
      %p199 = scmp.eq.s32.totalorder %s198, 0
      %s201 = sadd.s32 %s200, 1
      %s202 = scalar_select %p199, %s200, %s201
      %p205 = pneg %p199
      %p206 = scmp.eq.s32.totalorder %s17, 1
      %p207 = por %p205, %p206
      %p208 = scmp.ne.s32.totalorder %s200, %s203
      %p209 = scmp.eq.s32.totalorder %s17, 0
      %p210 = por %p208, %p209
      %p211 = scmp.ne.s32.totalorder %s200, %s203
      %p212 = scmp.eq.s32.totalorder %s22, 1
      %p213 = por %p211, %p212
      %p214 = scmp.ne.s32.totalorder %s203, %s204
      %p215 = scmp.eq.s32.totalorder %s22, 0
      %p216 = por %p214, %p215
      %p217 = scmp.ne.s32.totalorder %s203, %s204
      %p218 = scmp.eq.s32.totalorder %s23, 1
      %p219 = por %p217, %p218
      %p221 = scmp.ne.s32.totalorder %s204, %s220
      %p222 = scmp.eq.s32.totalorder %s23, 0
      %p223 = por %p221, %p222
      %p224 = scmp.le.s32.totalorder 1, %s17
      %p225 = scmp.lt.s32.totalorder %s17, 3
      %p226 = pnand %p224, %p225
      %p227 = pneg %p226
      // Predicated region
      $region9: #{densenet_forward.1} parent=5 // pred_check
        _
      $region10: #{densenet_forward.1} parent=5 // pred_check_branch
        %229 = sbr.rel (%p226) target = $region12
      $region11: #{densenet_forward.1} parent=5 // pred_region
        %s230 = ssub.s32 %s17, 1
        // Predicated region
        $region13: #{densenet_forward.1} parent=11 // pred_check
          %p231 = pneg %p64
        $region14: #{densenet_forward.1} parent=11 // pred_check_branch
          %233 = sbr.rel (%p231) target = $region16
        $region15: #{densenet_forward.1} parent=11 // pred_region
          _
        $region16: #{densenet_forward.1} parent=11 // pred_fallthru
          _
        // Predicated region
        $region17: #{densenet_forward.1} parent=11 // pred_check
          %p234 = pneg %p85
        $region18: #{densenet_forward.1} parent=11 // pred_check_branch
          %236 = sbr.rel (%p234) target = $region20
        $region19: #{densenet_forward.1} parent=11 // pred_region
          _
        $region20: #{densenet_forward.1} parent=11 // pred_fallthru
          _
        // Predicated region
        $region21: #{densenet_forward.1} parent=11 // pred_check
          %p237 = pneg %p106
        $region22: #{densenet_forward.1} parent=11 // pred_check_branch
          %239 = sbr.rel (%p237) target = $region24
        $region23: #{densenet_forward.1} parent=11 // pred_region
          _
        $region24: #{densenet_forward.1} parent=11 // pred_fallthru
          _
        // Predicated region
        $region25: #{densenet_forward.1} parent=11 // pred_check
          %p240 = pneg %p127
        $region26: #{densenet_forward.1} parent=11 // pred_check_branch
          %242 = sbr.rel (%p240) target = $region28
        $region27: #{densenet_forward.1} parent=11 // pred_region
          _
        $region28: #{densenet_forward.1} parent=11 // pred_fallthru
          _
        // Predicated region
        $region29: #{densenet_forward.1} parent=11 // pred_check
          %p243 = pneg %p148
        $region30: #{densenet_forward.1} parent=11 // pred_check_branch
          %245 = sbr.rel (%p243) target = $region32
        $region31: #{densenet_forward.1} parent=11 // pred_region
          _
        $region32: #{densenet_forward.1} parent=11 // pred_fallthru
          _
        // Predicated region
        $region33: #{densenet_forward.1} parent=11 // pred_check
          %p246 = pneg %p169
        $region34: #{densenet_forward.1} parent=11 // pred_check_branch
          %248 = sbr.rel (%p246) target = $region36
        $region35: #{densenet_forward.1} parent=11 // pred_region
          _
        $region36: #{densenet_forward.1} parent=11 // pred_fallthru
          _
        // Predicated region
        $region37: #{densenet_forward.1} parent=11 // pred_check
          %p249 = pneg %p190
        $region38: #{densenet_forward.1} parent=11 // pred_check_branch
          %251 = sbr.rel (%p249) target = $region40
        $region39: #{densenet_forward.1} parent=11 // pred_region
          _
        $region40: #{densenet_forward.1} parent=11 // pred_fallthru
          _
      $region12: #{densenet_forward.1} parent=5 // pred_fallthru
        _
      %p252 = scmp.lt.s32.totalorder %s17, 2
      // Predicated region
      $region41: #{densenet_forward.1} parent=5 // pred_check
        %p253 = pneg %p252
      $region42: #{densenet_forward.1} parent=5 // pred_check_branch
        %255 = sbr.rel (%p253) target = $region44
      $region43: #{densenet_forward.1} parent=5 // pred_region
        // Predicated region
        $region45: #{densenet_forward.1} parent=43 // pred_check
          %p256 = pneg %p37
        $region46: #{densenet_forward.1} parent=43 // pred_check_branch
          %258 = sbr.rel (%p256) target = $region48
        $region47: #{densenet_forward.1} parent=43 // pred_region
          %p259 = scmp.lt.s32.totalorder %s17, 1
          %s260 = scalar_select %p259, %s17, 1
          %s261 = smul.addr %s260, 64
          %s262 = smul.addr %s261, 4
          %s263 = scalar_lea.vmem %s0, %s262
        $region48: #{densenet_forward.1} parent=43 // pred_fallthru
          _
      $region44: #{densenet_forward.1} parent=5 // pred_fallthru
        _
      %p264 = scmp.le.s32.totalorder 1, %s17
      %p265 = scmp.lt.s32.totalorder %s17, 3
      %p266 = pnand %p264, %p265
      %p267 = pneg %p266
      // Predicated region
      $region49: #{densenet_forward.1} parent=5 // pred_check
        _
      $region50: #{densenet_forward.1} parent=5 // pred_check_branch
        %269 = sbr.rel (%p266) target = $region52
      $region51: #{densenet_forward.1} parent=5 // pred_region
        %s270 = ssub.s32 %s17, 1
        %p271 = scmp.lt.s32.totalorder %s22, 1
        %s272 = scalar_select %p271, %s22, 1
        %s273 = smul.addr %s272, 64
        %s274 = smul.addr %s273, 4
        %s275 = scalar_lea.vmem %s0, %s274
        %p276 = pneg %p43
        %p277 = pneg %p40
        %p278 = pneg %p64
        %p279 = pneg %p61
        %p280 = pneg %p85
        %p281 = pneg %p82
        %p282 = pneg %p106
        %p283 = pneg %p103
        %p284 = pneg %p127
        %p285 = pneg %p124
        %p286 = pneg %p148
        %p287 = pneg %p145
        %p288 = pneg %p169
        %p289 = pneg %p166
        %p290 = pneg %p190
        %p291 = pneg %p187
        %p292 = pneg %p216
        %p293 = pneg %p213
        %s294 = sand.u32 %s203, 1
        %s295 = scalar_lea.sflag [#allocation10], %s294
        %s296 = sand.u32 %s203, 1
        %s297 = scalar_lea.vmem [#allocation9], %s296
        %p298 = scmp.lt.s32.totalorder %s22, 1
        %s299 = scalar_select %p298, %s22, 1
        %s300 = smul.addr %s299, 64
        %s301 = smul.addr %s300, 4
        %s302 = scalar_lea.vmem %s0, %s301
        %v304 = vld [vmem:[%s2] sm:$0x1]
        %v305 = vld [vmem:[%s2 + $0x1] sm:$0x1]
        %v306 = vld [vmem:[%s302] sm:$0xff]
        %v307 = vld [vmem:[%s302 + $0x8] sm:$0xff]
        %v308 = vld [vmem:[%s302 + $0x10] sm:$0xff]
        %v309 = vld [vmem:[%s302 + $0x18] sm:$0xff]
        %v310 = vld [vmem:[%s302 + $0x20] sm:$0xff]
        %v311 = vld [vmem:[%s302 + $0x28] sm:$0xff]
        %v312 = vld [vmem:[%s302 + $0x30] sm:$0xff]
        %v313 = vld [vmem:[%s302 + $0x38] sm:$0xff]
        %v314 = vld [vmem:[%s302 + $0x40] sm:$0xff]
        %v315 = vld [vmem:[%s302 + $0x48] sm:$0xff]
        %v316 = vld [vmem:[%s302 + $0x50] sm:$0xff]
        %v317 = vld [vmem:[%s302 + $0x58] sm:$0xff]
        %v318 = vld [vmem:[%s302 + $0x60] sm:$0xff]
        %v319 = vld [vmem:[%s302 + $0x68] sm:$0xff]
        %v320 = vld [vmem:[%s302 + $0x70] sm:$0xff]
        %v321 = vld [vmem:[%s302 + $0x78] sm:$0xff]
        %v322 = vld [vmem:[%s302 + $0x80] sm:$0xff]
        %v323 = vld [vmem:[%s302 + $0x88] sm:$0xff]
        %v324 = vld [vmem:[%s302 + $0x90] sm:$0xff]
        %v325 = vld [vmem:[%s302 + $0x98] sm:$0xff]
        %v326 = vld [vmem:[%s302 + $0xa0] sm:$0xff]
        %v327 = vld [vmem:[%s302 + $0xa8] sm:$0xff]
        %v328 = vld [vmem:[%s302 + $0xb0] sm:$0xff]
        %v329 = vld [vmem:[%s302 + $0xb8] sm:$0xff]
        %v330 = vld [vmem:[%s302 + $0xc0] sm:$0xff]
        %v331 = vld [vmem:[%s302 + $0xc8] sm:$0xff]
        %v332 = vld [vmem:[%s302 + $0xd0] sm:$0xff]
        %v333 = vld [vmem:[%s302 + $0xd8] sm:$0xff]
        %v334 = vld [vmem:[%s302 + $0xe0] sm:$0xff]
        %v335 = vld [vmem:[%s302 + $0xe8] sm:$0xff]
        %v336 = vld [vmem:[%s302 + $0xf0] sm:$0xff]
        %v337 = vld [vmem:[%s302 + $0xf8] sm:$0xff]
        %v338 = vld [vmem:[%s1] sm:$0xf]
        %v339 = vld [vmem:[%s1 + $0x4] sm:$0xf]
        %v340 = vld [vmem:[%s1 + $0x8] sm:$0xf]
        %v341 = vld [vmem:[%s1 + $0xc] sm:$0xf]
        %v342 = vld [vmem:[%s1 + $0x10] sm:$0xf]
        %v343 = vld [vmem:[%s1 + $0x14] sm:$0xf]
        %v344 = vld [vmem:[%s1 + $0x18] sm:$0xf]
        %v345 = vld [vmem:[%s1 + $0x1c] sm:$0xf]
        %v346 = vld [vmem:[%s1 + $0x20] sm:$0xf]
        %v347 = vld [vmem:[%s1 + $0x24] sm:$0xf]
        %v348 = vld [vmem:[%s1 + $0x28] sm:$0xf]
        %v349 = vld [vmem:[%s1 + $0x2c] sm:$0xf]
        %v350 = vld [vmem:[%s1 + $0x30] sm:$0xf]
        %v351 = vld [vmem:[%s1 + $0x34] sm:$0xf]
        %v352 = vld [vmem:[%s1 + $0x38] sm:$0xf]
        %v353 = vld [vmem:[%s1 + $0x3c] sm:$0xf]
        %v354 = vld [vmem:[%s1 + $0x40] sm:$0xf]
        %v355 = vld [vmem:[%s1 + $0x44] sm:$0xf]
        %v356 = vld [vmem:[%s1 + $0x48] sm:$0x3]
        %v389 = vunpack.c.l.b16 %v306
        %v390 = vunpack.c.h.b16 %v306
        %v391 = vunpack.c.l.b16 %v307
        %v392 = vunpack.c.h.b16 %v307
        %v393 = vunpack.c.l.b16 %v308
        %v394 = vunpack.c.h.b16 %v308
        %v395 = vunpack.c.l.b16 %v309
        %v396 = vunpack.c.h.b16 %v309
        %v397 = vunpack.c.l.b16 %v310
        %v398 = vunpack.c.h.b16 %v310
        %v399 = vunpack.c.l.b16 %v311
        %v400 = vunpack.c.h.b16 %v311
        %v401 = vunpack.c.l.b16 %v312
        %v402 = vunpack.c.h.b16 %v312
        %v403 = vunpack.c.l.b16 %v313
        %v404 = vunpack.c.h.b16 %v313
        %v405 = vunpack.c.l.b16 %v314
        %v406 = vunpack.c.h.b16 %v314
        %v407 = vunpack.c.l.b16 %v315
        %v408 = vunpack.c.h.b16 %v315
        %v409 = vunpack.c.l.b16 %v316
        %v410 = vunpack.c.h.b16 %v316
        %v411 = vunpack.c.l.b16 %v317
        %v412 = vunpack.c.h.b16 %v317
        %v413 = vunpack.c.l.b16 %v318
        %v414 = vunpack.c.h.b16 %v318
        %v415 = vunpack.c.l.b16 %v319
        %v416 = vunpack.c.h.b16 %v319
        %v417 = vunpack.c.l.b16 %v320
        %v418 = vunpack.c.h.b16 %v320
        %v419 = vunpack.c.l.b16 %v321
        %v420 = vunpack.c.h.b16 %v321
        %v421 = vunpack.c.l.b16 %v322
        %v422 = vunpack.c.h.b16 %v322
        %v423 = vunpack.c.l.b16 %v323
        %v424 = vunpack.c.h.b16 %v323
        %v425 = vunpack.c.l.b16 %v324
        %v426 = vunpack.c.h.b16 %v324
        %v427 = vunpack.c.l.b16 %v325
        %v428 = vunpack.c.h.b16 %v325
        %v429 = vunpack.c.l.b16 %v326
        %v430 = vunpack.c.h.b16 %v326
        %v431 = vunpack.c.l.b16 %v327
        %v432 = vunpack.c.h.b16 %v327
        %v433 = vunpack.c.l.b16 %v328
        %v434 = vunpack.c.h.b16 %v328
        %v435 = vunpack.c.l.b16 %v329
        %v436 = vunpack.c.h.b16 %v329
        %v437 = vunpack.c.l.b16 %v330
        %v438 = vunpack.c.h.b16 %v330
        %v439 = vunpack.c.l.b16 %v331
        %v440 = vunpack.c.h.b16 %v331
        %v441 = vunpack.c.l.b16 %v332
        %v442 = vunpack.c.h.b16 %v332
        %v443 = vunpack.c.l.b16 %v333
        %v444 = vunpack.c.h.b16 %v333
        %v445 = vunpack.c.l.b16 %v334
        %v446 = vunpack.c.h.b16 %v334
        %v447 = vunpack.c.l.b16 %v335
        %v448 = vunpack.c.h.b16 %v335
        %v449 = vunpack.c.l.b16 %v336
        %v450 = vunpack.c.h.b16 %v336
        %v451 = vunpack.c.l.b16 %v337
        %v452 = vunpack.c.h.b16 %v337
        %v453 = vpack.c.b16 %v391, %v389
        %v454 = vpack.c.b16 %v392, %v390
        %v455 = vpack.c.b16 %v395, %v393
        %v456 = vpack.c.b16 %v396, %v394
        %v457 = vpack.c.b16 %v399, %v397
        %v458 = vpack.c.b16 %v400, %v398
        %v459 = vpack.c.b16 %v403, %v401
        %v460 = vpack.c.b16 %v404, %v402
        %v461 = vpack.c.b16 %v407, %v405
        %v462 = vpack.c.b16 %v408, %v406
        %v463 = vpack.c.b16 %v411, %v409
        %v464 = vpack.c.b16 %v412, %v410
        %v465 = vpack.c.b16 %v415, %v413
        %v466 = vpack.c.b16 %v416, %v414
        %v467 = vpack.c.b16 %v419, %v417
        %v468 = vpack.c.b16 %v420, %v418
        %v469 = vpack.c.b16 %v423, %v421
        %v470 = vpack.c.b16 %v424, %v422
        %v471 = vpack.c.b16 %v427, %v425
        %v472 = vpack.c.b16 %v428, %v426
        %v473 = vpack.c.b16 %v431, %v429
        %v474 = vpack.c.b16 %v432, %v430
        %v475 = vpack.c.b16 %v435, %v433
        %v476 = vpack.c.b16 %v436, %v434
        %v477 = vpack.c.b16 %v439, %v437
        %v478 = vpack.c.b16 %v440, %v438
        %v479 = vpack.c.b16 %v443, %v441
        %v480 = vpack.c.b16 %v444, %v442
        %v481 = vpack.c.b16 %v447, %v445
        %v482 = vpack.c.b16 %v448, %v446
        %v483 = vpack.c.b16 %v451, %v449
        %v484 = vpack.c.b16 %v452, %v450
        %v520 = vunpack.c.l.b16 %v338
        %v521 = vunpack.c.l.b16 %v339
        %v522 = vunpack.c.l.b16 %v340
        %v523 = vunpack.c.l.b16 %v341
        %v524 = vunpack.c.l.b16 %v342
        %v525 = vunpack.c.l.b16 %v343
        %v526 = vunpack.c.l.b16 %v344
        %v527 = vunpack.c.l.b16 %v345
        %v528 = vunpack.c.l.b16 %v346
        %v529 = vunpack.c.l.b16 %v347
        %v530 = vunpack.c.l.b16 %v348
        %v531 = vunpack.c.l.b16 %v349
        %v532 = vunpack.c.l.b16 %v350
        %v533 = vunpack.c.l.b16 %v351
        %v534 = vunpack.c.l.b16 %v352
        %v535 = vunpack.c.l.b16 %v353
        %v536 = vunpack.c.l.b16 %v354
        %v537 = vunpack.c.l.b16 %v355
        %v538 = vunpack.c.l.b16 %v356
        %v539 = vpack.c.b16 %v521, %v520
        %v540 = vpack.c.b16 %v523, %v522
        %v541 = vpack.c.b16 %v525, %v524
        %v542 = vpack.c.b16 %v527, %v526
        %v543 = vpack.c.b16 %v529, %v528
        %v544 = vpack.c.b16 %v531, %v530
        %v545 = vpack.c.b16 %v533, %v532
        %v546 = vpack.c.b16 %v535, %v534
        %v547 = vpack.c.b16 %v537, %v536
        %v548 = vpack.c.b16 %v538, %v538
        %vm558 = vcmask 154624
        %v560 = vsel %vm558, %v454, 0
        %v563 = vsel %vm558, %v456, 0
        %v566 = vsel %vm558, %v458, 0
        %v569 = vsel %vm558, %v460, 0
        %v572 = vsel %vm558, %v462, 0
        %v575 = vsel %vm558, %v464, 0
        %v578 = vsel %vm558, %v466, 0
        %v581 = vsel %vm558, %v468, 0
        %v584 = vsel %vm558, %v470, 0
        %v587 = vsel %vm558, %v472, 0
        %v590 = vsel %vm558, %v474, 0
        %v593 = vsel %vm558, %v476, 0
        %v596 = vsel %vm558, %v478, 0
        %v599 = vsel %vm558, %v480, 0
        %v602 = vsel %vm558, %v482, 0
        %v605 = vsel %vm558, %v484, 0
        %vm607 = vcmask 1040384
        %vm608 = vcmask 1041408
        %v609 = vsel %vm607, 4294967295, 65535
        %v610 = vsel %vm608, %v609, 0
        %v612 = vand.u32 %v548, %v610
        %614 = vmatpush.bf16.msra.mxu0 %v546
        %615 = vmatpush.bf16.msra.mxu0 %v545
        %616 = vmatpush.bf16.msra.mxu0 %v544
        %617 = vmatpush.bf16.msra.mxu0 %v543
        %618 = vmatpush.bf16.msra.mxu0 %v542
        %619 = vmatpush.bf16.msra.mxu0 %v541
        %620 = vmatpush.bf16.msra.mxu0 %v540
        %621 = vmatpush.bf16.msra.mxu0 %v539
        %622 = vmatmul.bf16.gmra.mxu0 %v453
        %v623 = vpop.f32.mrf.mxu0
        %v624 = vadd.f32 0.0, %v623
        %v625 = vpop.f32.mrf.mxu0
        %v626 = vadd.f32 0.0, %v625
        %627 = vmatmul.bf16.gmra.mxu0 %v455
        %v628 = vpop.f32.mrf.mxu0
        %v629 = vadd.f32 0.0, %v628
        %v630 = vpop.f32.mrf.mxu0
        %v631 = vadd.f32 0.0, %v630
        %632 = vmatmul.bf16.gmra.mxu0 %v457
        %v633 = vpop.f32.mrf.mxu0
        %v634 = vadd.f32 0.0, %v633
        %v635 = vpop.f32.mrf.mxu0
        %v636 = vadd.f32 0.0, %v635
        %637 = vmatmul.bf16.gmra.mxu0 %v459
        %v638 = vpop.f32.mrf.mxu0
        %v639 = vadd.f32 0.0, %v638
        %v640 = vpop.f32.mrf.mxu0
        %v641 = vadd.f32 0.0, %v640
        %642 = vmatmul.bf16.gmra.mxu0 %v461
        %v643 = vpop.f32.mrf.mxu0
        %v644 = vadd.f32 0.0, %v643
        %v645 = vpop.f32.mrf.mxu0
        %v646 = vadd.f32 0.0, %v645
        %647 = vmatmul.bf16.gmra.mxu0 %v463
        %v648 = vpop.f32.mrf.mxu0
        %v649 = vadd.f32 0.0, %v648
        %v650 = vpop.f32.mrf.mxu0
        %v651 = vadd.f32 0.0, %v650
        %652 = vmatmul.bf16.gmra.mxu0 %v465
        %v653 = vpop.f32.mrf.mxu0
        %v654 = vadd.f32 0.0, %v653
        %v655 = vpop.f32.mrf.mxu0
        %v656 = vadd.f32 0.0, %v655
        %657 = vmatmul.bf16.gmra.mxu0 %v467
        %v658 = vpop.f32.mrf.mxu0
        %v659 = vadd.f32 0.0, %v658
        %v660 = vpop.f32.mrf.mxu0
        %v661 = vadd.f32 0.0, %v660
        %662 = vmatmul.bf16.gmra.mxu0 %v469
        %v663 = vpop.f32.mrf.mxu0
        %v664 = vadd.f32 0.0, %v663
        %v665 = vpop.f32.mrf.mxu0
        %v666 = vadd.f32 0.0, %v665
        %667 = vmatmul.bf16.gmra.mxu0 %v471
        %v668 = vpop.f32.mrf.mxu0
        %v669 = vadd.f32 0.0, %v668
        %v670 = vpop.f32.mrf.mxu0
        %v671 = vadd.f32 0.0, %v670
        %672 = vmatmul.bf16.gmra.mxu0 %v473
        %v673 = vpop.f32.mrf.mxu0
        %v674 = vadd.f32 0.0, %v673
        %v675 = vpop.f32.mrf.mxu0
        %v676 = vadd.f32 0.0, %v675
        %677 = vmatmul.bf16.gmra.mxu0 %v475
        %v678 = vpop.f32.mrf.mxu0
        %v679 = vadd.f32 0.0, %v678
        %v680 = vpop.f32.mrf.mxu0
        %v681 = vadd.f32 0.0, %v680
        %682 = vmatmul.bf16.gmra.mxu0 %v477
        %v683 = vpop.f32.mrf.mxu0
        %v684 = vadd.f32 0.0, %v683
        %v685 = vpop.f32.mrf.mxu0
        %v686 = vadd.f32 0.0, %v685
        %687 = vmatmul.bf16.gmra.mxu0 %v479
        %v688 = vpop.f32.mrf.mxu0
        %v689 = vadd.f32 0.0, %v688
        %v690 = vpop.f32.mrf.mxu0
        %v691 = vadd.f32 0.0, %v690
        %692 = vmatmul.bf16.gmra.mxu0 %v481
        %v693 = vpop.f32.mrf.mxu0
        %v694 = vadd.f32 0.0, %v693
        %v695 = vpop.f32.mrf.mxu0
        %v696 = vadd.f32 0.0, %v695
        %697 = vmatmul.bf16.gmra.mxu0 %v483
        %v698 = vpop.f32.mrf.mxu0
        %v699 = vadd.f32 0.0, %v698
        %v700 = vpop.f32.mrf.mxu0
        %v701 = vadd.f32 0.0, %v700
        %702 = vdwg.mxu0
        %703 = vmatpush.bf16.msra.mxu0 0
        %704 = vmatpush.bf16.msra.mxu0 0
        %705 = vmatpush.bf16.msra.mxu0 0
        %706 = vmatpush.bf16.msra.mxu0 0
        %707 = vmatpush.bf16.msra.mxu0 0
        %708 = vmatpush.bf16.msra.mxu0 0
        %709 = vmatpush.bf16.msra.mxu0 %v612
        %710 = vmatpush.bf16.msra.mxu0 %v547
        %711 = vmatmul.bf16.gmra.mxu0 %v560
        %v712 = vpop.f32.mrf.mxu0
        %v713 = vadd.f32 %v624, %v712
        %v714 = vpop.f32.mrf.mxu0
        %v715 = vadd.f32 %v626, %v714
        %716 = vmatmul.bf16.gmra.mxu0 %v563
        %v717 = vpop.f32.mrf.mxu0
        %v718 = vadd.f32 %v629, %v717
        %v719 = vpop.f32.mrf.mxu0
        %v720 = vadd.f32 %v631, %v719
        %721 = vmatmul.bf16.gmra.mxu0 %v566
        %v722 = vpop.f32.mrf.mxu0
        %v723 = vadd.f32 %v634, %v722
        %v724 = vpop.f32.mrf.mxu0
        %v725 = vadd.f32 %v636, %v724
        %726 = vmatmul.bf16.gmra.mxu0 %v569
        %v727 = vpop.f32.mrf.mxu0
        %v728 = vadd.f32 %v639, %v727
        %v729 = vpop.f32.mrf.mxu0
        %v730 = vadd.f32 %v641, %v729
        %731 = vmatmul.bf16.gmra.mxu0 %v572
        %v732 = vpop.f32.mrf.mxu0
        %v733 = vadd.f32 %v644, %v732
        %v734 = vpop.f32.mrf.mxu0
        %v735 = vadd.f32 %v646, %v734
        %736 = vmatmul.bf16.gmra.mxu0 %v575
        %v737 = vpop.f32.mrf.mxu0
        %v738 = vadd.f32 %v649, %v737
        %v739 = vpop.f32.mrf.mxu0
        %v740 = vadd.f32 %v651, %v739
        %741 = vmatmul.bf16.gmra.mxu0 %v578
        %v742 = vpop.f32.mrf.mxu0
        %v743 = vadd.f32 %v654, %v742
        %v744 = vpop.f32.mrf.mxu0
        %v745 = vadd.f32 %v656, %v744
        %746 = vmatmul.bf16.gmra.mxu0 %v581
        %v747 = vpop.f32.mrf.mxu0
        %v748 = vadd.f32 %v659, %v747
        %v749 = vpop.f32.mrf.mxu0
        %v750 = vadd.f32 %v661, %v749
        %751 = vmatmul.bf16.gmra.mxu0 %v584
        %v752 = vpop.f32.mrf.mxu0
        %v753 = vadd.f32 %v664, %v752
        %v754 = vpop.f32.mrf.mxu0
        %v755 = vadd.f32 %v666, %v754
        %756 = vmatmul.bf16.gmra.mxu0 %v587
        %v757 = vpop.f32.mrf.mxu0
        %v758 = vadd.f32 %v669, %v757
        %v759 = vpop.f32.mrf.mxu0
        %v760 = vadd.f32 %v671, %v759
        %761 = vmatmul.bf16.gmra.mxu0 %v590
        %v762 = vpop.f32.mrf.mxu0
        %v763 = vadd.f32 %v674, %v762
        %v764 = vpop.f32.mrf.mxu0
        %v765 = vadd.f32 %v676, %v764
        %766 = vmatmul.bf16.gmra.mxu0 %v593
        %v767 = vpop.f32.mrf.mxu0
        %v768 = vadd.f32 %v679, %v767
        %v769 = vpop.f32.mrf.mxu0
        %v770 = vadd.f32 %v681, %v769
        %771 = vmatmul.bf16.gmra.mxu0 %v596
        %v772 = vpop.f32.mrf.mxu0
        %v773 = vadd.f32 %v684, %v772
        %v774 = vpop.f32.mrf.mxu0
        %v775 = vadd.f32 %v686, %v774
        %776 = vmatmul.bf16.gmra.mxu0 %v599
        %v777 = vpop.f32.mrf.mxu0
        %v778 = vadd.f32 %v689, %v777
        %v779 = vpop.f32.mrf.mxu0
        %v780 = vadd.f32 %v691, %v779
        %781 = vmatmul.bf16.gmra.mxu0 %v602
        %v782 = vpop.f32.mrf.mxu0
        %v783 = vadd.f32 %v694, %v782
        %v784 = vpop.f32.mrf.mxu0
        %v785 = vadd.f32 %v696, %v784
        %786 = vmatmul.bf16.gmra.mxu0 %v605
        %v787 = vpop.f32.mrf.mxu0
        %v788 = vadd.f32 %v699, %v787
        %v789 = vpop.f32.mrf.mxu0
        %v790 = vadd.f32 %v701, %v789
        %791 = vdwg.mxu0
        %v792 = vperm.slane %v304, 0
        %v793 = vmul.f32 %v713, %v792
        %v794 = vmul.f32 %v715, %v792
        %v795 = vmul.f32 %v718, %v792
        %v796 = vmul.f32 %v720, %v792
        %v797 = vmul.f32 %v723, %v792
        %v798 = vmul.f32 %v725, %v792
        %v799 = vmul.f32 %v728, %v792
        %v800 = vmul.f32 %v730, %v792
        %v801 = vmul.f32 %v733, %v792
        %v802 = vmul.f32 %v735, %v792
        %v803 = vmul.f32 %v738, %v792
        %v804 = vmul.f32 %v740, %v792
        %v805 = vmul.f32 %v743, %v792
        %v806 = vmul.f32 %v745, %v792
        %v807 = vmul.f32 %v748, %v792
        %v808 = vmul.f32 %v750, %v792
        %v809 = vmul.f32 %v753, %v792
        %v810 = vmul.f32 %v755, %v792
        %v811 = vmul.f32 %v758, %v792
        %v812 = vmul.f32 %v760, %v792
        %v813 = vmul.f32 %v763, %v792
        %v814 = vmul.f32 %v765, %v792
        %v815 = vmul.f32 %v768, %v792
        %v816 = vmul.f32 %v770, %v792
        %v817 = vmul.f32 %v773, %v792
        %v818 = vmul.f32 %v775, %v792
        %v819 = vmul.f32 %v778, %v792
        %v820 = vmul.f32 %v780, %v792
        %v821 = vmul.f32 %v783, %v792
        %v822 = vmul.f32 %v785, %v792
        %v823 = vmul.f32 %v788, %v792
        %v824 = vmul.f32 %v790, %v792
        %v825 = vperm.slane %v305, 0
        %v826 = vadd.f32 %v793, %v825
        %v827 = vadd.f32 %v794, %v825
        %v828 = vadd.f32 %v795, %v825
        %v829 = vadd.f32 %v796, %v825
        %v830 = vadd.f32 %v797, %v825
        %v831 = vadd.f32 %v798, %v825
        %v832 = vadd.f32 %v799, %v825
        %v833 = vadd.f32 %v800, %v825
        %v834 = vadd.f32 %v801, %v825
        %v835 = vadd.f32 %v802, %v825
        %v836 = vadd.f32 %v803, %v825
        %v837 = vadd.f32 %v804, %v825
        %v838 = vadd.f32 %v805, %v825
        %v839 = vadd.f32 %v806, %v825
        %v840 = vadd.f32 %v807, %v825
        %v841 = vadd.f32 %v808, %v825
        %v842 = vadd.f32 %v809, %v825
        %v843 = vadd.f32 %v810, %v825
        %v844 = vadd.f32 %v811, %v825
        %v845 = vadd.f32 %v812, %v825
        %v846 = vadd.f32 %v813, %v825
        %v847 = vadd.f32 %v814, %v825
        %v848 = vadd.f32 %v815, %v825
        %v849 = vadd.f32 %v816, %v825
        %v850 = vadd.f32 %v817, %v825
        %v851 = vadd.f32 %v818, %v825
        %v852 = vadd.f32 %v819, %v825
        %v853 = vadd.f32 %v820, %v825
        %v854 = vadd.f32 %v821, %v825
        %v855 = vadd.f32 %v822, %v825
        %v856 = vadd.f32 %v823, %v825
        %v857 = vadd.f32 %v824, %v825
        %v858 = vmax.f32 %v826, 0.0
        %v859 = vmax.f32 %v827, 0.0
        %v860 = vmax.f32 %v828, 0.0
        %v861 = vmax.f32 %v829, 0.0
        %v862 = vmax.f32 %v830, 0.0
        %v863 = vmax.f32 %v831, 0.0
        %v864 = vmax.f32 %v832, 0.0
        %v865 = vmax.f32 %v833, 0.0
        %v866 = vmax.f32 %v834, 0.0
        %v867 = vmax.f32 %v835, 0.0
        %v868 = vmax.f32 %v836, 0.0
        %v869 = vmax.f32 %v837, 0.0
        %v870 = vmax.f32 %v838, 0.0
        %v871 = vmax.f32 %v839, 0.0
        %v872 = vmax.f32 %v840, 0.0
        %v873 = vmax.f32 %v841, 0.0
        %v874 = vmax.f32 %v842, 0.0
        %v875 = vmax.f32 %v843, 0.0
        %v876 = vmax.f32 %v844, 0.0
        %v877 = vmax.f32 %v845, 0.0
        %v878 = vmax.f32 %v846, 0.0
        %v879 = vmax.f32 %v847, 0.0
        %v880 = vmax.f32 %v848, 0.0
        %v881 = vmax.f32 %v849, 0.0
        %v882 = vmax.f32 %v850, 0.0
        %v883 = vmax.f32 %v851, 0.0
        %v884 = vmax.f32 %v852, 0.0
        %v885 = vmax.f32 %v853, 0.0
        %v886 = vmax.f32 %v854, 0.0
        %v887 = vmax.f32 %v855, 0.0
        %v888 = vmax.f32 %v856, 0.0
        %v889 = vmax.f32 %v857, 0.0
        %v922 = vrot.slane %v858, 2
        %v923 = vrot.slane %v858, 4
        %v924 = vrot.slane %v858, 6
        %v925 = vrot.slane %v859, 2
        %v926 = vrot.slane %v859, 4
        %v927 = vrot.slane %v859, 6
        %v928 = vrot.slane %v860, 2
        %v929 = vrot.slane %v860, 4
        %v930 = vrot.slane %v860, 6
        %v931 = vrot.slane %v861, 2
        %v932 = vrot.slane %v861, 4
        %v933 = vrot.slane %v861, 6
        %v934 = vrot.slane %v862, 2
        %v935 = vrot.slane %v862, 4
        %v936 = vrot.slane %v862, 6
        %v937 = vrot.slane %v863, 2
        %v938 = vrot.slane %v863, 4
        %v939 = vrot.slane %v863, 6
        %v940 = vrot.slane %v864, 2
        %v941 = vrot.slane %v864, 4
        %v942 = vrot.slane %v864, 6
        %v943 = vrot.slane %v865, 2
        %v944 = vrot.slane %v865, 4
        %v945 = vrot.slane %v865, 6
        %v946 = vrot.slane %v866, 2
        %v947 = vrot.slane %v866, 4
        %v948 = vrot.slane %v866, 6
        %v949 = vrot.slane %v867, 2
        %v950 = vrot.slane %v867, 4
        %v951 = vrot.slane %v867, 6
        %v952 = vrot.slane %v868, 2
        %v953 = vrot.slane %v868, 4
        %v954 = vrot.slane %v868, 6
        %v955 = vrot.slane %v869, 2
        %v956 = vrot.slane %v869, 4
        %v957 = vrot.slane %v869, 6
        %v958 = vrot.slane %v870, 2
        %v959 = vrot.slane %v870, 4
        %v960 = vrot.slane %v870, 6
        %v961 = vrot.slane %v871, 2
        %v962 = vrot.slane %v871, 4
        %v963 = vrot.slane %v871, 6
        %v964 = vrot.slane %v872, 2
        %v965 = vrot.slane %v872, 4
        %v966 = vrot.slane %v872, 6
        %v967 = vrot.slane %v873, 2
        %v968 = vrot.slane %v873, 4
        %v969 = vrot.slane %v873, 6
        %v970 = vrot.slane %v874, 2
        %v971 = vrot.slane %v874, 4
        %v972 = vrot.slane %v874, 6
        %v973 = vrot.slane %v875, 2
        %v974 = vrot.slane %v875, 4
        %v975 = vrot.slane %v875, 6
        %v976 = vrot.slane %v876, 2
        %v977 = vrot.slane %v876, 4
        %v978 = vrot.slane %v876, 6
        %v979 = vrot.slane %v877, 2
        %v980 = vrot.slane %v877, 4
        %v981 = vrot.slane %v877, 6
        %v982 = vrot.slane %v878, 2
        %v983 = vrot.slane %v878, 4
        %v984 = vrot.slane %v878, 6
        %v985 = vrot.slane %v879, 2
        %v986 = vrot.slane %v879, 4
        %v987 = vrot.slane %v879, 6
        %v988 = vrot.slane %v880, 2
        %v989 = vrot.slane %v880, 4
        %v990 = vrot.slane %v880, 6
        %v991 = vrot.slane %v881, 2
        %v992 = vrot.slane %v881, 4
        %v993 = vrot.slane %v881, 6
        %v994 = vrot.slane %v882, 2
        %v995 = vrot.slane %v882, 4
        %v996 = vrot.slane %v882, 6
        %v997 = vrot.slane %v883, 2
        %v998 = vrot.slane %v883, 4
        %v999 = vrot.slane %v883, 6
        %v1000 = vrot.slane %v884, 2
        %v1001 = vrot.slane %v884, 4
        %v1002 = vrot.slane %v884, 6
        %v1003 = vrot.slane %v885, 2
        %v1004 = vrot.slane %v885, 4
        %v1005 = vrot.slane %v885, 6
        %v1006 = vrot.slane %v886, 2
        %v1007 = vrot.slane %v886, 4
        %v1008 = vrot.slane %v886, 6
        %v1009 = vrot.slane %v887, 2
        %v1010 = vrot.slane %v887, 4
        %v1011 = vrot.slane %v887, 6
        %v1012 = vrot.slane %v888, 2
        %v1013 = vrot.slane %v888, 4
        %v1014 = vrot.slane %v888, 6
        %v1015 = vrot.slane %v889, 2
        %v1016 = vrot.slane %v889, 4
        %v1017 = vrot.slane %v889, 6
        %vm1114 = vcmask 123904
        %1115 = vst.msk [vmem:[#allocation2] sm:$0x3] %vm1114, %v858
        %1116 = vst.msk [vmem:[#allocation2 + $0x2] sm:$0x3] %vm1114, %v922
        %1117 = vst.msk [vmem:[#allocation2 + $0x4] sm:$0x3] %vm1114, %v923
        %1118 = vst.msk [vmem:[#allocation2 + $0x6] sm:$0x3] %vm1114, %v924
        %1119 = vst.msk [vmem:[#allocation2 + $0x8] sm:$0x3] %vm1114, %v859
        %1120 = vst.msk [vmem:[#allocation2 + $0xa] sm:$0x3] %vm1114, %v925
        %1121 = vst.msk [vmem:[#allocation2 + $0xc] sm:$0x3] %vm1114, %v926
        %1122 = vst.msk [vmem:[#allocation2 + $0xe] sm:$0x3] %vm1114, %v927
        %1123 = vst.msk [vmem:[#allocation2 + $0x10] sm:$0x3] %vm1114, %v860
        %1124 = vst.msk [vmem:[#allocation2 + $0x12] sm:$0x3] %vm1114, %v928
        %1125 = vst.msk [vmem:[#allocation2 + $0x14] sm:$0x3] %vm1114, %v929
        %1126 = vst.msk [vmem:[#allocation2 + $0x16] sm:$0x3] %vm1114, %v930
        %1127 = vst.msk [vmem:[#allocation2 + $0x18] sm:$0x3] %vm1114, %v861
        %1128 = vst.msk [vmem:[#allocation2 + $0x1a] sm:$0x3] %vm1114, %v931
        %1129 = vst.msk [vmem:[#allocation2 + $0x1c] sm:$0x3] %vm1114, %v932
        %1130 = vst.msk [vmem:[#allocation2 + $0x1e] sm:$0x3] %vm1114, %v933
        %1131 = vst.msk [vmem:[#allocation2 + $0x20] sm:$0x3] %vm1114, %v862
        %1132 = vst.msk [vmem:[#allocation2 + $0x22] sm:$0x3] %vm1114, %v934
        %1133 = vst.msk [vmem:[#allocation2 + $0x24] sm:$0x3] %vm1114, %v935
        %1134 = vst.msk [vmem:[#allocation2 + $0x26] sm:$0x3] %vm1114, %v936
        %1135 = vst.msk [vmem:[#allocation2 + $0x28] sm:$0x3] %vm1114, %v863
        %1136 = vst.msk [vmem:[#allocation2 + $0x2a] sm:$0x3] %vm1114, %v937
        %1137 = vst.msk [vmem:[#allocation2 + $0x2c] sm:$0x3] %vm1114, %v938
        %1138 = vst.msk [vmem:[#allocation2 + $0x2e] sm:$0x3] %vm1114, %v939
        %1139 = vst.msk [vmem:[#allocation2 + $0x30] sm:$0x3] %vm1114, %v864
        %1140 = vst.msk [vmem:[#allocation2 + $0x32] sm:$0x3] %vm1114, %v940
        %1141 = vst.msk [vmem:[#allocation2 + $0x34] sm:$0x3] %vm1114, %v941
        %1142 = vst.msk [vmem:[#allocation2 + $0x36] sm:$0x3] %vm1114, %v942
        %1143 = vst.msk [vmem:[#allocation2 + $0x38] sm:$0x3] %vm1114, %v865
        %1144 = vst.msk [vmem:[#allocation2 + $0x3a] sm:$0x3] %vm1114, %v943
        %1145 = vst.msk [vmem:[#allocation2 + $0x3c] sm:$0x3] %vm1114, %v944
        %1146 = vst.msk [vmem:[#allocation2 + $0x3e] sm:$0x3] %vm1114, %v945
        %1147 = vst.msk [vmem:[#allocation2 + $0x40] sm:$0x3] %vm1114, %v866
        %1148 = vst.msk [vmem:[#allocation2 + $0x42] sm:$0x3] %vm1114, %v946
        %1149 = vst.msk [vmem:[#allocation2 + $0x44] sm:$0x3] %vm1114, %v947
        %1150 = vst.msk [vmem:[#allocation2 + $0x46] sm:$0x3] %vm1114, %v948
        %1151 = vst.msk [vmem:[#allocation2 + $0x48] sm:$0x3] %vm1114, %v867
        %1152 = vst.msk [vmem:[#allocation2 + $0x4a] sm:$0x3] %vm1114, %v949
        %1153 = vst.msk [vmem:[#allocation2 + $0x4c] sm:$0x3] %vm1114, %v950
        %1154 = vst.msk [vmem:[#allocation2 + $0x4e] sm:$0x3] %vm1114, %v951
        %1155 = vst.msk [vmem:[#allocation2 + $0x50] sm:$0x3] %vm1114, %v868
        %1156 = vst.msk [vmem:[#allocation2 + $0x52] sm:$0x3] %vm1114, %v952
        %1157 = vst.msk [vmem:[#allocation2 + $0x54] sm:$0x3] %vm1114, %v953
        %1158 = vst.msk [vmem:[#allocation2 + $0x56] sm:$0x3] %vm1114, %v954
        %1159 = vst.msk [vmem:[#allocation2 + $0x58] sm:$0x3] %vm1114, %v869
        %1160 = vst.msk [vmem:[#allocation2 + $0x5a] sm:$0x3] %vm1114, %v955
        %1161 = vst.msk [vmem:[#allocation2 + $0x5c] sm:$0x3] %vm1114, %v956
        %1162 = vst.msk [vmem:[#allocation2 + $0x5e] sm:$0x3] %vm1114, %v957
        %1163 = vst.msk [vmem:[#allocation2 + $0x60] sm:$0x3] %vm1114, %v870
        %1164 = vst.msk [vmem:[#allocation2 + $0x62] sm:$0x3] %vm1114, %v958
        %1165 = vst.msk [vmem:[#allocation2 + $0x64] sm:$0x3] %vm1114, %v959
        %1166 = vst.msk [vmem:[#allocation2 + $0x66] sm:$0x3] %vm1114, %v960
        %1167 = vst.msk [vmem:[#allocation2 + $0x68] sm:$0x3] %vm1114, %v871
        %1168 = vst.msk [vmem:[#allocation2 + $0x6a] sm:$0x3] %vm1114, %v961
        %1169 = vst.msk [vmem:[#allocation2 + $0x6c] sm:$0x3] %vm1114, %v962
        %1170 = vst.msk [vmem:[#allocation2 + $0x6e] sm:$0x3] %vm1114, %v963
        %1171 = vst.msk [vmem:[#allocation2 + $0x70] sm:$0x3] %vm1114, %v872
        %1172 = vst.msk [vmem:[#allocation2 + $0x72] sm:$0x3] %vm1114, %v964
        %1173 = vst.msk [vmem:[#allocation2 + $0x74] sm:$0x3] %vm1114, %v965
        %1174 = vst.msk [vmem:[#allocation2 + $0x76] sm:$0x3] %vm1114, %v966
        %1175 = vst.msk [vmem:[#allocation2 + $0x78] sm:$0x3] %vm1114, %v873
        %1176 = vst.msk [vmem:[#allocation2 + $0x7a] sm:$0x3] %vm1114, %v967
        %1177 = vst.msk [vmem:[#allocation2 + $0x7c] sm:$0x3] %vm1114, %v968
        %1178 = vst.msk [vmem:[#allocation2 + $0x7e] sm:$0x3] %vm1114, %v969
        %1179 = vst.msk [vmem:[#allocation2 + $0x80] sm:$0x3] %vm1114, %v874
        %1180 = vst.msk [vmem:[#allocation2 + $0x82] sm:$0x3] %vm1114, %v970
        %1181 = vst.msk [vmem:[#allocation2 + $0x84] sm:$0x3] %vm1114, %v971
        %1182 = vst.msk [vmem:[#allocation2 + $0x86] sm:$0x3] %vm1114, %v972
        %1183 = vst.msk [vmem:[#allocation2 + $0x88] sm:$0x3] %vm1114, %v875
        %1184 = vst.msk [vmem:[#allocation2 + $0x8a] sm:$0x3] %vm1114, %v973
        %1185 = vst.msk [vmem:[#allocation2 + $0x8c] sm:$0x3] %vm1114, %v974
        %1186 = vst.msk [vmem:[#allocation2 + $0x8e] sm:$0x3] %vm1114, %v975
        %1187 = vst.msk [vmem:[#allocation2 + $0x90] sm:$0x3] %vm1114, %v876
        %1188 = vst.msk [vmem:[#allocation2 + $0x92] sm:$0x3] %vm1114, %v976
        %1189 = vst.msk [vmem:[#allocation2 + $0x94] sm:$0x3] %vm1114, %v977
        %1190 = vst.msk [vmem:[#allocation2 + $0x96] sm:$0x3] %vm1114, %v978
        %1191 = vst.msk [vmem:[#allocation2 + $0x98] sm:$0x3] %vm1114, %v877
        %1192 = vst.msk [vmem:[#allocation2 + $0x9a] sm:$0x3] %vm1114, %v979
        %1193 = vst.msk [vmem:[#allocation2 + $0x9c] sm:$0x3] %vm1114, %v980
        %1194 = vst.msk [vmem:[#allocation2 + $0x9e] sm:$0x3] %vm1114, %v981
        %1195 = vst.msk [vmem:[#allocation2 + $0xa0] sm:$0x3] %vm1114, %v878
        %1196 = vst.msk [vmem:[#allocation2 + $0xa2] sm:$0x3] %vm1114, %v982
        %1197 = vst.msk [vmem:[#allocation2 + $0xa4] sm:$0x3] %vm1114, %v983
        %1198 = vst.msk [vmem:[#allocation2 + $0xa6] sm:$0x3] %vm1114, %v984
        %1199 = vst.msk [vmem:[#allocation2 + $0xa8] sm:$0x3] %vm1114, %v879
        %1200 = vst.msk [vmem:[#allocation2 + $0xaa] sm:$0x3] %vm1114, %v985
        %1201 = vst.msk [vmem:[#allocation2 + $0xac] sm:$0x3] %vm1114, %v986
        %1202 = vst.msk [vmem:[#allocation2 + $0xae] sm:$0x3] %vm1114, %v987
        %1203 = vst.msk [vmem:[#allocation2 + $0xb0] sm:$0x3] %vm1114, %v880
        %1204 = vst.msk [vmem:[#allocation2 + $0xb2] sm:$0x3] %vm1114, %v988
        %1205 = vst.msk [vmem:[#allocation2 + $0xb4] sm:$0x3] %vm1114, %v989
        %1206 = vst.msk [vmem:[#allocation2 + $0xb6] sm:$0x3] %vm1114, %v990
        %1207 = vst.msk [vmem:[#allocation2 + $0xb8] sm:$0x3] %vm1114, %v881
        %1208 = vst.msk [vmem:[#allocation2 + $0xba] sm:$0x3] %vm1114, %v991
        %1209 = vst.msk [vmem:[#allocation2 + $0xbc] sm:$0x3] %vm1114, %v992
        %1210 = vst.msk [vmem:[#allocation2 + $0xbe] sm:$0x3] %vm1114, %v993
        %1211 = vst.msk [vmem:[#allocation2 + $0xc0] sm:$0x3] %vm1114, %v882
        %1212 = vst.msk [vmem:[#allocation2 + $0xc2] sm:$0x3] %vm1114, %v994
        %1213 = vst.msk [vmem:[#allocation2 + $0xc4] sm:$0x3] %vm1114, %v995
        %1214 = vst.msk [vmem:[#allocation2 + $0xc6] sm:$0x3] %vm1114, %v996
        %1215 = vst.msk [vmem:[#allocation2 + $0xc8] sm:$0x3] %vm1114, %v883
        %1216 = vst.msk [vmem:[#allocation2 + $0xca] sm:$0x3] %vm1114, %v997
        %1217 = vst.msk [vmem:[#allocation2 + $0xcc] sm:$0x3] %vm1114, %v998
        %1218 = vst.msk [vmem:[#allocation2 + $0xce] sm:$0x3] %vm1114, %v999
        %1219 = vst.msk [vmem:[#allocation2 + $0xd0] sm:$0x3] %vm1114, %v884
        %1220 = vst.msk [vmem:[#allocation2 + $0xd2] sm:$0x3] %vm1114, %v1000
        %1221 = vst.msk [vmem:[#allocation2 + $0xd4] sm:$0x3] %vm1114, %v1001
        %1222 = vst.msk [vmem:[#allocation2 + $0xd6] sm:$0x3] %vm1114, %v1002
        %1223 = vst.msk [vmem:[#allocation2 + $0xd8] sm:$0x3] %vm1114, %v885
        %1224 = vst.msk [vmem:[#allocation2 + $0xda] sm:$0x3] %vm1114, %v1003
        %1225 = vst.msk [vmem:[#allocation2 + $0xdc] sm:$0x3] %vm1114, %v1004
        %1226 = vst.msk [vmem:[#allocation2 + $0xde] sm:$0x3] %vm1114, %v1005
        %1227 = vst.msk [vmem:[#allocation2 + $0xe0] sm:$0x3] %vm1114, %v886
        %1228 = vst.msk [vmem:[#allocation2 + $0xe2] sm:$0x3] %vm1114, %v1006
        %1229 = vst.msk [vmem:[#allocation2 + $0xe4] sm:$0x3] %vm1114, %v1007
        %1230 = vst.msk [vmem:[#allocation2 + $0xe6] sm:$0x3] %vm1114, %v1008
        %1231 = vst.msk [vmem:[#allocation2 + $0xe8] sm:$0x3] %vm1114, %v887
        %1232 = vst.msk [vmem:[#allocation2 + $0xea] sm:$0x3] %vm1114, %v1009
        %1233 = vst.msk [vmem:[#allocation2 + $0xec] sm:$0x3] %vm1114, %v1010
        %1234 = vst.msk [vmem:[#allocation2 + $0xee] sm:$0x3] %vm1114, %v1011
        %1235 = vst.msk [vmem:[#allocation2 + $0xf0] sm:$0x3] %vm1114, %v888
        %1236 = vst.msk [vmem:[#allocation2 + $0xf2] sm:$0x3] %vm1114, %v1012
        %1237 = vst.msk [vmem:[#allocation2 + $0xf4] sm:$0x3] %vm1114, %v1013
        %1238 = vst.msk [vmem:[#allocation2 + $0xf6] sm:$0x3] %vm1114, %v1014
        %1239 = vst.msk [vmem:[#allocation2 + $0xf8] sm:$0x3] %vm1114, %v889
        %1240 = vst.msk [vmem:[#allocation2 + $0xfa] sm:$0x3] %vm1114, %v1015
        %1241 = vst.msk [vmem:[#allocation2 + $0xfc] sm:$0x3] %vm1114, %v1016
        %1242 = vst.msk [vmem:[#allocation2 + $0xfe] sm:$0x3] %vm1114, %v1017
        %1243 = vst.msk [vmem:[#allocation3] sm:$0x3] %vm1114, 0.0
        %1244 = vst.msk [vmem:[#allocation3 + $0x2] sm:$0x3] %vm1114, 0.0
        %1245 = vst.msk [vmem:[#allocation3 + $0x4] sm:$0x3] %vm1114, 0.0
        %1246 = vst.msk [vmem:[#allocation3 + $0x6] sm:$0x3] %vm1114, 0.0
        %1247 = vst.msk [vmem:[#allocation3 + $0x8] sm:$0x3] %vm1114, 0.0
        %1248 = vst.msk [vmem:[#allocation3 + $0xa] sm:$0x3] %vm1114, 0.0
        %1249 = vst.msk [vmem:[#allocation3 + $0xc] sm:$0x3] %vm1114, 0.0
        %1250 = vst.msk [vmem:[#allocation3 + $0xe] sm:$0x3] %vm1114, 0.0
        %1251 = vst.msk [vmem:[#allocation3 + $0x10] sm:$0x3] %vm1114, 0.0
        %1252 = vst.msk [vmem:[#allocation3 + $0x12] sm:$0x3] %vm1114, 0.0
        %1253 = vst.msk [vmem:[#allocation3 + $0x14] sm:$0x3] %vm1114, 0.0
        %1254 = vst.msk [vmem:[#allocation3 + $0x16] sm:$0x3] %vm1114, 0.0
        %1255 = vst.msk [vmem:[#allocation3 + $0x18] sm:$0x3] %vm1114, 0.0
        %1256 = vst.msk [vmem:[#allocation3 + $0x1a] sm:$0x3] %vm1114, 0.0
        %1257 = vst.msk [vmem:[#allocation3 + $0x1c] sm:$0x3] %vm1114, 0.0
        %1258 = vst.msk [vmem:[#allocation3 + $0x1e] sm:$0x3] %vm1114, 0.0
        %1259 = vst.msk [vmem:[#allocation3 + $0x20] sm:$0x3] %vm1114, 0.0
        %1260 = vst.msk [vmem:[#allocation3 + $0x22] sm:$0x3] %vm1114, 0.0
        %1261 = vst.msk [vmem:[#allocation3 + $0x24] sm:$0x3] %vm1114, 0.0
        %1262 = vst.msk [vmem:[#allocation3 + $0x26] sm:$0x3] %vm1114, 0.0
        %1263 = vst.msk [vmem:[#allocation3 + $0x28] sm:$0x3] %vm1114, 0.0
        %1264 = vst.msk [vmem:[#allocation3 + $0x2a] sm:$0x3] %vm1114, 0.0
        %1265 = vst.msk [vmem:[#allocation3 + $0x2c] sm:$0x3] %vm1114, 0.0
        %1266 = vst.msk [vmem:[#allocation3 + $0x2e] sm:$0x3] %vm1114, 0.0
        %1267 = vst.msk [vmem:[#allocation3 + $0x30] sm:$0x3] %vm1114, 0.0
        %1268 = vst.msk [vmem:[#allocation3 + $0x32] sm:$0x3] %vm1114, 0.0
        %1269 = vst.msk [vmem:[#allocation3 + $0x34] sm:$0x3] %vm1114, 0.0
        %1270 = vst.msk [vmem:[#allocation3 + $0x36] sm:$0x3] %vm1114, 0.0
        %1271 = vst.msk [vmem:[#allocation3 + $0x38] sm:$0x3] %vm1114, 0.0
        %1272 = vst.msk [vmem:[#allocation3 + $0x3a] sm:$0x3] %vm1114, 0.0
        %1273 = vst.msk [vmem:[#allocation3 + $0x3c] sm:$0x3] %vm1114, 0.0
        %1274 = vst.msk [vmem:[#allocation3 + $0x3e] sm:$0x3] %vm1114, 0.0
        %1275 = vst.msk [vmem:[#allocation3 + $0x40] sm:$0x3] %vm1114, 0.0
        %1276 = vst.msk [vmem:[#allocation3 + $0x42] sm:$0x3] %vm1114, 0.0
        %1277 = vst.msk [vmem:[#allocation3 + $0x44] sm:$0x3] %vm1114, 0.0
        %1278 = vst.msk [vmem:[#allocation3 + $0x46] sm:$0x3] %vm1114, 0.0
        %1279 = vst.msk [vmem:[#allocation3 + $0x48] sm:$0x3] %vm1114, 0.0
        %1280 = vst.msk [vmem:[#allocation3 + $0x4a] sm:$0x3] %vm1114, 0.0
        %1281 = vst.msk [vmem:[#allocation3 + $0x4c] sm:$0x3] %vm1114, 0.0
        %1282 = vst.msk [vmem:[#allocation3 + $0x4e] sm:$0x3] %vm1114, 0.0
        %1283 = vst.msk [vmem:[#allocation3 + $0x50] sm:$0x3] %vm1114, 0.0
        %1284 = vst.msk [vmem:[#allocation3 + $0x52] sm:$0x3] %vm1114, 0.0
        %1285 = vst.msk [vmem:[#allocation3 + $0x54] sm:$0x3] %vm1114, 0.0
        %1286 = vst.msk [vmem:[#allocation3 + $0x56] sm:$0x3] %vm1114, 0.0
        %1287 = vst.msk [vmem:[#allocation3 + $0x58] sm:$0x3] %vm1114, 0.0
        %1288 = vst.msk [vmem:[#allocation3 + $0x5a] sm:$0x3] %vm1114, 0.0
        %1289 = vst.msk [vmem:[#allocation3 + $0x5c] sm:$0x3] %vm1114, 0.0
        %1290 = vst.msk [vmem:[#allocation3 + $0x5e] sm:$0x3] %vm1114, 0.0
        %1291 = vst.msk [vmem:[#allocation3 + $0x60] sm:$0x3] %vm1114, 0.0
        %1292 = vst.msk [vmem:[#allocation3 + $0x62] sm:$0x3] %vm1114, 0.0
        %1293 = vst.msk [vmem:[#allocation3 + $0x64] sm:$0x3] %vm1114, 0.0
        %1294 = vst.msk [vmem:[#allocation3 + $0x66] sm:$0x3] %vm1114, 0.0
        %1295 = vst.msk [vmem:[#allocation3 + $0x68] sm:$0x3] %vm1114, 0.0
        %1296 = vst.msk [vmem:[#allocation3 + $0x6a] sm:$0x3] %vm1114, 0.0
        %1297 = vst.msk [vmem:[#allocation3 + $0x6c] sm:$0x3] %vm1114, 0.0
        %1298 = vst.msk [vmem:[#allocation3 + $0x6e] sm:$0x3] %vm1114, 0.0
        %1299 = vst.msk [vmem:[#allocation3 + $0x70] sm:$0x3] %vm1114, 0.0
        %1300 = vst.msk [vmem:[#allocation3 + $0x72] sm:$0x3] %vm1114, 0.0
        %1301 = vst.msk [vmem:[#allocation3 + $0x74] sm:$0x3] %vm1114, 0.0
        %1302 = vst.msk [vmem:[#allocation3 + $0x76] sm:$0x3] %vm1114, 0.0
        %1303 = vst.msk [vmem:[#allocation3 + $0x78] sm:$0x3] %vm1114, 0.0
        %1304 = vst.msk [vmem:[#allocation3 + $0x7a] sm:$0x3] %vm1114, 0.0
        %1305 = vst.msk [vmem:[#allocation3 + $0x7c] sm:$0x3] %vm1114, 0.0
        %1306 = vst.msk [vmem:[#allocation3 + $0x7e] sm:$0x3] %vm1114, 0.0
        %1307 = vst.msk [vmem:[#allocation3 + $0x80] sm:$0x3] %vm1114, 0.0
        %1308 = vst.msk [vmem:[#allocation3 + $0x82] sm:$0x3] %vm1114, 0.0
        %1309 = vst.msk [vmem:[#allocation3 + $0x84] sm:$0x3] %vm1114, 0.0
        %1310 = vst.msk [vmem:[#allocation3 + $0x86] sm:$0x3] %vm1114, 0.0
        %1311 = vst.msk [vmem:[#allocation3 + $0x88] sm:$0x3] %vm1114, 0.0
        %1312 = vst.msk [vmem:[#allocation3 + $0x8a] sm:$0x3] %vm1114, 0.0
        %1313 = vst.msk [vmem:[#allocation3 + $0x8c] sm:$0x3] %vm1114, 0.0
        %1314 = vst.msk [vmem:[#allocation3 + $0x8e] sm:$0x3] %vm1114, 0.0
        %1315 = vst.msk [vmem:[#allocation3 + $0x90] sm:$0x3] %vm1114, 0.0
        %1316 = vst.msk [vmem:[#allocation3 + $0x92] sm:$0x3] %vm1114, 0.0
        %1317 = vst.msk [vmem:[#allocation3 + $0x94] sm:$0x3] %vm1114, 0.0
        %1318 = vst.msk [vmem:[#allocation3 + $0x96] sm:$0x3] %vm1114, 0.0
        %1319 = vst.msk [vmem:[#allocation3 + $0x98] sm:$0x3] %vm1114, 0.0
        %1320 = vst.msk [vmem:[#allocation3 + $0x9a] sm:$0x3] %vm1114, 0.0
        %1321 = vst.msk [vmem:[#allocation3 + $0x9c] sm:$0x3] %vm1114, 0.0
        %1322 = vst.msk [vmem:[#allocation3 + $0x9e] sm:$0x3] %vm1114, 0.0
        %1323 = vst.msk [vmem:[#allocation3 + $0xa0] sm:$0x3] %vm1114, 0.0
        %1324 = vst.msk [vmem:[#allocation3 + $0xa2] sm:$0x3] %vm1114, 0.0
        %1325 = vst.msk [vmem:[#allocation3 + $0xa4] sm:$0x3] %vm1114, 0.0
        %1326 = vst.msk [vmem:[#allocation3 + $0xa6] sm:$0x3] %vm1114, 0.0
        %1327 = vst.msk [vmem:[#allocation3 + $0xa8] sm:$0x3] %vm1114, 0.0
        %1328 = vst.msk [vmem:[#allocation3 + $0xaa] sm:$0x3] %vm1114, 0.0
        %1329 = vst.msk [vmem:[#allocation3 + $0xac] sm:$0x3] %vm1114, 0.0
        %1330 = vst.msk [vmem:[#allocation3 + $0xae] sm:$0x3] %vm1114, 0.0
        %1331 = vst.msk [vmem:[#allocation3 + $0xb0] sm:$0x3] %vm1114, 0.0
        %1332 = vst.msk [vmem:[#allocation3 + $0xb2] sm:$0x3] %vm1114, 0.0
        %1333 = vst.msk [vmem:[#allocation3 + $0xb4] sm:$0x3] %vm1114, 0.0
        %1334 = vst.msk [vmem:[#allocation3 + $0xb6] sm:$0x3] %vm1114, 0.0
        %1335 = vst.msk [vmem:[#allocation3 + $0xb8] sm:$0x3] %vm1114, 0.0
        %1336 = vst.msk [vmem:[#allocation3 + $0xba] sm:$0x3] %vm1114, 0.0
        %1337 = vst.msk [vmem:[#allocation3 + $0xbc] sm:$0x3] %vm1114, 0.0
        %1338 = vst.msk [vmem:[#allocation3 + $0xbe] sm:$0x3] %vm1114, 0.0
        %1339 = vst.msk [vmem:[#allocation3 + $0xc0] sm:$0x3] %vm1114, 0.0
        %1340 = vst.msk [vmem:[#allocation3 + $0xc2] sm:$0x3] %vm1114, 0.0
        %1341 = vst.msk [vmem:[#allocation3 + $0xc4] sm:$0x3] %vm1114, 0.0
        %1342 = vst.msk [vmem:[#allocation3 + $0xc6] sm:$0x3] %vm1114, 0.0
        %1343 = vst.msk [vmem:[#allocation3 + $0xc8] sm:$0x3] %vm1114, 0.0
        %1344 = vst.msk [vmem:[#allocation3 + $0xca] sm:$0x3] %vm1114, 0.0
        %1345 = vst.msk [vmem:[#allocation3 + $0xcc] sm:$0x3] %vm1114, 0.0
        %1346 = vst.msk [vmem:[#allocation3 + $0xce] sm:$0x3] %vm1114, 0.0
        %1347 = vst.msk [vmem:[#allocation3 + $0xd0] sm:$0x3] %vm1114, 0.0
        %1348 = vst.msk [vmem:[#allocation3 + $0xd2] sm:$0x3] %vm1114, 0.0
        %1349 = vst.msk [vmem:[#allocation3 + $0xd4] sm:$0x3] %vm1114, 0.0
        %1350 = vst.msk [vmem:[#allocation3 + $0xd6] sm:$0x3] %vm1114, 0.0
        %1351 = vst.msk [vmem:[#allocation3 + $0xd8] sm:$0x3] %vm1114, 0.0
        %1352 = vst.msk [vmem:[#allocation3 + $0xda] sm:$0x3] %vm1114, 0.0
        %1353 = vst.msk [vmem:[#allocation3 + $0xdc] sm:$0x3] %vm1114, 0.0
        %1354 = vst.msk [vmem:[#allocation3 + $0xde] sm:$0x3] %vm1114, 0.0
        %1355 = vst.msk [vmem:[#allocation3 + $0xe0] sm:$0x3] %vm1114, 0.0
        %1356 = vst.msk [vmem:[#allocation3 + $0xe2] sm:$0x3] %vm1114, 0.0
        %1357 = vst.msk [vmem:[#allocation3 + $0xe4] sm:$0x3] %vm1114, 0.0
        %1358 = vst.msk [vmem:[#allocation3 + $0xe6] sm:$0x3] %vm1114, 0.0
        %1359 = vst.msk [vmem:[#allocation3 + $0xe8] sm:$0x3] %vm1114, 0.0
        %1360 = vst.msk [vmem:[#allocation3 + $0xea] sm:$0x3] %vm1114, 0.0
        %1361 = vst.msk [vmem:[#allocation3 + $0xec] sm:$0x3] %vm1114, 0.0
        %1362 = vst.msk [vmem:[#allocation3 + $0xee] sm:$0x3] %vm1114, 0.0
        %1363 = vst.msk [vmem:[#allocation3 + $0xf0] sm:$0x3] %vm1114, 0.0
        %1364 = vst.msk [vmem:[#allocation3 + $0xf2] sm:$0x3] %vm1114, 0.0
        %1365 = vst.msk [vmem:[#allocation3 + $0xf4] sm:$0x3] %vm1114, 0.0
        %1366 = vst.msk [vmem:[#allocation3 + $0xf6] sm:$0x3] %vm1114, 0.0
        %1367 = vst.msk [vmem:[#allocation3 + $0xf8] sm:$0x3] %vm1114, 0.0
        %1368 = vst.msk [vmem:[#allocation3 + $0xfa] sm:$0x3] %vm1114, 0.0
        %1369 = vst.msk [vmem:[#allocation3 + $0xfc] sm:$0x3] %vm1114, 0.0
        %1370 = vst.msk [vmem:[#allocation3 + $0xfe] sm:$0x3] %vm1114, 0.0
        %1371 = vst.msk [vmem:[#allocation3 + $0x100] sm:$0x3] %vm1114, 0.0
        %1372 = vst.msk [vmem:[#allocation3 + $0x102] sm:$0x3] %vm1114, 0.0
        %1373 = vst.msk [vmem:[#allocation3 + $0x104] sm:$0x3] %vm1114, 0.0
        %1374 = vst.msk [vmem:[#allocation3 + $0x106] sm:$0x3] %vm1114, 0.0
        %1375 = vst.msk [vmem:[#allocation3 + $0x108] sm:$0x3] %vm1114, 0.0
        %1376 = vst.msk [vmem:[#allocation3 + $0x10a] sm:$0x3] %vm1114, 0.0
        %1377 = vst.msk [vmem:[#allocation3 + $0x10c] sm:$0x3] %vm1114, 0.0
        %1378 = vst.msk [vmem:[#allocation3 + $0x10e] sm:$0x3] %vm1114, 0.0
        %1379 = vst.msk [vmem:[#allocation3 + $0x110] sm:$0x3] %vm1114, 0.0
        %1380 = vst.msk [vmem:[#allocation3 + $0x112] sm:$0x3] %vm1114, 0.0
        %1381 = vst.msk [vmem:[#allocation3 + $0x114] sm:$0x3] %vm1114, 0.0
        %1382 = vst.msk [vmem:[#allocation3 + $0x116] sm:$0x3] %vm1114, 0.0
        %1383 = vst.msk [vmem:[#allocation3 + $0x118] sm:$0x3] %vm1114, 0.0
        %1384 = vst.msk [vmem:[#allocation3 + $0x11a] sm:$0x3] %vm1114, 0.0
        %1385 = vst.msk [vmem:[#allocation3 + $0x11c] sm:$0x3] %vm1114, 0.0
        %1386 = vst.msk [vmem:[#allocation3 + $0x11e] sm:$0x3] %vm1114, 0.0
        %1387 = vst.msk [vmem:[#allocation3 + $0x120] sm:$0x3] %vm1114, 0.0
        %1388 = vst.msk [vmem:[#allocation3 + $0x122] sm:$0x3] %vm1114, 0.0
        %1389 = vst.msk [vmem:[#allocation3 + $0x124] sm:$0x3] %vm1114, 0.0
        %1390 = vst.msk [vmem:[#allocation3 + $0x126] sm:$0x3] %vm1114, 0.0
        %1391 = vst.msk [vmem:[#allocation3 + $0x128] sm:$0x3] %vm1114, 0.0
        %1392 = vst.msk [vmem:[#allocation3 + $0x12a] sm:$0x3] %vm1114, 0.0
        %1393 = vst.msk [vmem:[#allocation3 + $0x12c] sm:$0x3] %vm1114, 0.0
        %1394 = vst.msk [vmem:[#allocation3 + $0x12e] sm:$0x3] %vm1114, 0.0
        %1395 = vst.msk [vmem:[#allocation3 + $0x130] sm:$0x3] %vm1114, 0.0
        %1396 = vst.msk [vmem:[#allocation3 + $0x132] sm:$0x3] %vm1114, 0.0
        %1397 = vst.msk [vmem:[#allocation3 + $0x134] sm:$0x3] %vm1114, 0.0
        %1398 = vst.msk [vmem:[#allocation3 + $0x136] sm:$0x3] %vm1114, 0.0
        %1399 = vst.msk [vmem:[#allocation3 + $0x138] sm:$0x3] %vm1114, 0.0
        %1400 = vst.msk [vmem:[#allocation3 + $0x13a] sm:$0x3] %vm1114, 0.0
        %1401 = vst.msk [vmem:[#allocation3 + $0x13c] sm:$0x3] %vm1114, 0.0
        %1402 = vst.msk [vmem:[#allocation3 + $0x13e] sm:$0x3] %vm1114, 0.0
        %1403 = vst.msk [vmem:[#allocation3 + $0x140] sm:$0x3] %vm1114, 0.0
        %1404 = vst.msk [vmem:[#allocation3 + $0x142] sm:$0x3] %vm1114, 0.0
        %v1405 = vld [vmem:[#allocation2] sm:$0x1]
        %v1406 = vld [vmem:[#allocation2 + $0x2] sm:$0x1]
        %v1407 = vld [vmem:[#allocation2 + $0x4] sm:$0x1]
        %v1408 = vld [vmem:[#allocation2 + $0x6] sm:$0x1]
        %v1409 = vld [vmem:[#allocation2 + $0x8] sm:$0x1]
        %v1410 = vld [vmem:[#allocation2 + $0xa] sm:$0x1]
        %v1411 = vld [vmem:[#allocation2 + $0xc] sm:$0x1]
        %v1412 = vld [vmem:[#allocation2 + $0xe] sm:$0x1]
        %v1413 = vld [vmem:[#allocation2 + $0x20] sm:$0x1]
        %v1414 = vld [vmem:[#allocation2 + $0x22] sm:$0x1]
        %v1415 = vld [vmem:[#allocation2 + $0x24] sm:$0x1]
        %v1416 = vld [vmem:[#allocation2 + $0x26] sm:$0x1]
        %v1417 = vld [vmem:[#allocation2 + $0x28] sm:$0x1]
        %v1418 = vld [vmem:[#allocation2 + $0x2a] sm:$0x1]
        %v1419 = vld [vmem:[#allocation2 + $0x2c] sm:$0x1]
        %v1420 = vld [vmem:[#allocation2 + $0x2e] sm:$0x1]
        %v1421 = vld [vmem:[#allocation2 + $0x40] sm:$0x1]
        %v1422 = vld [vmem:[#allocation2 + $0x42] sm:$0x1]
        %v1423 = vld [vmem:[#allocation2 + $0x44] sm:$0x1]
        %v1424 = vld [vmem:[#allocation2 + $0x46] sm:$0x1]
        %v1425 = vld [vmem:[#allocation2 + $0x48] sm:$0x1]
        %v1426 = vld [vmem:[#allocation2 + $0x4a] sm:$0x1]
        %v1427 = vld [vmem:[#allocation2 + $0x4c] sm:$0x1]
        %v1428 = vld [vmem:[#allocation2 + $0x4e] sm:$0x1]
        %v1429 = vld [vmem:[#allocation2 + $0x60] sm:$0x1]
        %v1430 = vld [vmem:[#allocation2 + $0x62] sm:$0x1]
        %v1431 = vld [vmem:[#allocation2 + $0x64] sm:$0x1]
        %v1432 = vld [vmem:[#allocation2 + $0x66] sm:$0x1]
        %v1433 = vld [vmem:[#allocation2 + $0x68] sm:$0x1]
        %v1434 = vld [vmem:[#allocation2 + $0x6a] sm:$0x1]
        %v1435 = vld [vmem:[#allocation2 + $0x6c] sm:$0x1]
        %v1436 = vld [vmem:[#allocation2 + $0x6e] sm:$0x1]
        %v1437 = vld [vmem:[#allocation2 + $0x80] sm:$0x1]
        %v1438 = vld [vmem:[#allocation2 + $0x82] sm:$0x1]
        %v1439 = vld [vmem:[#allocation2 + $0x84] sm:$0x1]
        %v1440 = vld [vmem:[#allocation2 + $0x86] sm:$0x1]
        %v1441 = vld [vmem:[#allocation2 + $0x88] sm:$0x1]
        %v1442 = vld [vmem:[#allocation2 + $0x8a] sm:$0x1]
        %v1443 = vld [vmem:[#allocation2 + $0x8c] sm:$0x1]
        %v1444 = vld [vmem:[#allocation2 + $0x8e] sm:$0x1]
        %v1445 = vld [vmem:[#allocation2 + $0xa0] sm:$0x1]
        %v1446 = vld [vmem:[#allocation2 + $0xa2] sm:$0x1]
        %v1447 = vld [vmem:[#allocation2 + $0xa4] sm:$0x1]
        %v1448 = vld [vmem:[#allocation2 + $0xa6] sm:$0x1]
        %v1449 = vld [vmem:[#allocation2 + $0xa8] sm:$0x1]
        %v1450 = vld [vmem:[#allocation2 + $0xaa] sm:$0x1]
        %v1451 = vld [vmem:[#allocation2 + $0xac] sm:$0x1]
        %v1452 = vld [vmem:[#allocation2 + $0xae] sm:$0x1]
        %v1453 = vld [vmem:[#allocation2 + $0xc0] sm:$0x1]
        %v1454 = vld [vmem:[#allocation2 + $0xc2] sm:$0x1]
        %v1455 = vld [vmem:[#allocation2 + $0xc4] sm:$0x1]
        %v1456 = vld [vmem:[#allocation2 + $0xc6] sm:$0x1]
        %v1457 = vld [vmem:[#allocation2 + $0xc8] sm:$0x1]
        %v1458 = vld [vmem:[#allocation2 + $0xca] sm:$0x1]
        %v1459 = vld [vmem:[#allocation2 + $0xcc] sm:$0x1]
        %v1460 = vld [vmem:[#allocation2 + $0xce] sm:$0x1]
        %v1461 = vld [vmem:[#allocation2 + $0xe0] sm:$0x1]
        %v1462 = vld [vmem:[#allocation2 + $0xe2] sm:$0x1]
        %v1463 = vld [vmem:[#allocation2 + $0xe4] sm:$0x1]
        %v1464 = vld [vmem:[#allocation2 + $0xe6] sm:$0x1]
        %v1465 = vld [vmem:[#allocation2 + $0xe8] sm:$0x1]
        %v1466 = vld [vmem:[#allocation2 + $0xea] sm:$0x1]
        %v1467 = vld [vmem:[#allocation2 + $0xec] sm:$0x1]
        %v1468 = vld [vmem:[#allocation2 + $0xee] sm:$0x1]
        %s1469 = scalar_lea.vmem [#allocation3], 18
        %vm1470 = vcmask 122880
        %1471 = vst.msk [vmem:[%s1469 + $0x1] sm:$0x1] %vm1470, %v1405
        %1472 = vst.msk [vmem:[%s1469 + $0x3] sm:$0x1] %vm1470, %v1406
        %1473 = vst.msk [vmem:[%s1469 + $0x5] sm:$0x1] %vm1470, %v1407
        %1474 = vst.msk [vmem:[%s1469 + $0x7] sm:$0x1] %vm1470, %v1408
        %1475 = vst.msk [vmem:[%s1469 + $0x9] sm:$0x1] %vm1470, %v1409
        %1476 = vst.msk [vmem:[%s1469 + $0xb] sm:$0x1] %vm1470, %v1410
        %1477 = vst.msk [vmem:[%s1469 + $0xd] sm:$0x1] %vm1470, %v1411
        %1478 = vst.msk [vmem:[%s1469 + $0xf] sm:$0x1] %vm1470, %v1412
        %1479 = vst.msk [vmem:[%s1469 + $0x25] sm:$0x1] %vm1470, %v1413
        %1480 = vst.msk [vmem:[%s1469 + $0x27] sm:$0x1] %vm1470, %v1414
        %1481 = vst.msk [vmem:[%s1469 + $0x29] sm:$0x1] %vm1470, %v1415
        %1482 = vst.msk [vmem:[%s1469 + $0x2b] sm:$0x1] %vm1470, %v1416
        %1483 = vst.msk [vmem:[%s1469 + $0x2d] sm:$0x1] %vm1470, %v1417
        %1484 = vst.msk [vmem:[%s1469 + $0x2f] sm:$0x1] %vm1470, %v1418
        %1485 = vst.msk [vmem:[%s1469 + $0x31] sm:$0x1] %vm1470, %v1419
        %1486 = vst.msk [vmem:[%s1469 + $0x33] sm:$0x1] %vm1470, %v1420
        %1487 = vst.msk [vmem:[%s1469 + $0x49] sm:$0x1] %vm1470, %v1421
        %1488 = vst.msk [vmem:[%s1469 + $0x4b] sm:$0x1] %vm1470, %v1422
        %1489 = vst.msk [vmem:[%s1469 + $0x4d] sm:$0x1] %vm1470, %v1423
        %1490 = vst.msk [vmem:[%s1469 + $0x4f] sm:$0x1] %vm1470, %v1424
        %1491 = vst.msk [vmem:[%s1469 + $0x51] sm:$0x1] %vm1470, %v1425
        %1492 = vst.msk [vmem:[%s1469 + $0x53] sm:$0x1] %vm1470, %v1426
        %1493 = vst.msk [vmem:[%s1469 + $0x55] sm:$0x1] %vm1470, %v1427
        %1494 = vst.msk [vmem:[%s1469 + $0x57] sm:$0x1] %vm1470, %v1428
        %1495 = vst.msk [vmem:[%s1469 + $0x6d] sm:$0x1] %vm1470, %v1429
        %1496 = vst.msk [vmem:[%s1469 + $0x6f] sm:$0x1] %vm1470, %v1430
        %1497 = vst.msk [vmem:[%s1469 + $0x71] sm:$0x1] %vm1470, %v1431
        %1498 = vst.msk [vmem:[%s1469 + $0x73] sm:$0x1] %vm1470, %v1432
        %1499 = vst.msk [vmem:[%s1469 + $0x75] sm:$0x1] %vm1470, %v1433
        %1500 = vst.msk [vmem:[%s1469 + $0x77] sm:$0x1] %vm1470, %v1434
        %1501 = vst.msk [vmem:[%s1469 + $0x79] sm:$0x1] %vm1470, %v1435
        %1502 = vst.msk [vmem:[%s1469 + $0x7b] sm:$0x1] %vm1470, %v1436
        %1503 = vst.msk [vmem:[%s1469 + $0x91] sm:$0x1] %vm1470, %v1437
        %1504 = vst.msk [vmem:[%s1469 + $0x93] sm:$0x1] %vm1470, %v1438
        %1505 = vst.msk [vmem:[%s1469 + $0x95] sm:$0x1] %vm1470, %v1439
        %1506 = vst.msk [vmem:[%s1469 + $0x97] sm:$0x1] %vm1470, %v1440
        %1507 = vst.msk [vmem:[%s1469 + $0x99] sm:$0x1] %vm1470, %v1441
        %1508 = vst.msk [vmem:[%s1469 + $0x9b] sm:$0x1] %vm1470, %v1442
        %1509 = vst.msk [vmem:[%s1469 + $0x9d] sm:$0x1] %vm1470, %v1443
        %1510 = vst.msk [vmem:[%s1469 + $0x9f] sm:$0x1] %vm1470, %v1444
        %1511 = vst.msk [vmem:[%s1469 + $0xb5] sm:$0x1] %vm1470, %v1445
        %1512 = vst.msk [vmem:[%s1469 + $0xb7] sm:$0x1] %vm1470, %v1446
        %1513 = vst.msk [vmem:[%s1469 + $0xb9] sm:$0x1] %vm1470, %v1447
        %1514 = vst.msk [vmem:[%s1469 + $0xbb] sm:$0x1] %vm1470, %v1448
        %1515 = vst.msk [vmem:[%s1469 + $0xbd] sm:$0x1] %vm1470, %v1449
        %1516 = vst.msk [vmem:[%s1469 + $0xbf] sm:$0x1] %vm1470, %v1450
        %1517 = vst.msk [vmem:[%s1469 + $0xc1] sm:$0x1] %vm1470, %v1451
        %1518 = vst.msk [vmem:[%s1469 + $0xc3] sm:$0x1] %vm1470, %v1452
        %1519 = vst.msk [vmem:[%s1469 + $0xd9] sm:$0x1] %vm1470, %v1453
        %1520 = vst.msk [vmem:[%s1469 + $0xdb] sm:$0x1] %vm1470, %v1454
        %1521 = vst.msk [vmem:[%s1469 + $0xdd] sm:$0x1] %vm1470, %v1455
        %1522 = vst.msk [vmem:[%s1469 + $0xdf] sm:$0x1] %vm1470, %v1456
        %1523 = vst.msk [vmem:[%s1469 + $0xe1] sm:$0x1] %vm1470, %v1457
        %1524 = vst.msk [vmem:[%s1469 + $0xe3] sm:$0x1] %vm1470, %v1458
        %1525 = vst.msk [vmem:[%s1469 + $0xe5] sm:$0x1] %vm1470, %v1459
        %1526 = vst.msk [vmem:[%s1469 + $0xe7] sm:$0x1] %vm1470, %v1460
        %1527 = vst.msk [vmem:[%s1469 + $0xfd] sm:$0x1] %vm1470, %v1461
        %1528 = vst.msk [vmem:[%s1469 + $0xff] sm:$0x1] %vm1470, %v1462
        %1529 = vst.msk [vmem:[%s1469 + $0x101] sm:$0x1] %vm1470, %v1463
        %1530 = vst.msk [vmem:[%s1469 + $0x103] sm:$0x1] %vm1470, %v1464
        %1531 = vst.msk [vmem:[%s1469 + $0x105] sm:$0x1] %vm1470, %v1465
        %1532 = vst.msk [vmem:[%s1469 + $0x107] sm:$0x1] %vm1470, %v1466
        %1533 = vst.msk [vmem:[%s1469 + $0x109] sm:$0x1] %vm1470, %v1467
        %1534 = vst.msk [vmem:[%s1469 + $0x10b] sm:$0x1] %vm1470, %v1468
        %v1535 = vld [vmem:[#allocation2 + $0x1] sm:$0x1]
        %v1536 = vld [vmem:[#allocation2 + $0x3] sm:$0x1]
        %v1537 = vld [vmem:[#allocation2 + $0x5] sm:$0x1]
        %v1538 = vld [vmem:[#allocation2 + $0x7] sm:$0x1]
        %v1539 = vld [vmem:[#allocation2 + $0x9] sm:$0x1]
        %v1540 = vld [vmem:[#allocation2 + $0xb] sm:$0x1]
        %v1541 = vld [vmem:[#allocation2 + $0xd] sm:$0x1]
        %v1542 = vld [vmem:[#allocation2 + $0xf] sm:$0x1]
        %v1543 = vld [vmem:[#allocation2 + $0x21] sm:$0x1]
        %v1544 = vld [vmem:[#allocation2 + $0x23] sm:$0x1]
        %v1545 = vld [vmem:[#allocation2 + $0x25] sm:$0x1]
        %v1546 = vld [vmem:[#allocation2 + $0x27] sm:$0x1]
        %v1547 = vld [vmem:[#allocation2 + $0x29] sm:$0x1]
        %v1548 = vld [vmem:[#allocation2 + $0x2b] sm:$0x1]
        %v1549 = vld [vmem:[#allocation2 + $0x2d] sm:$0x1]
        %v1550 = vld [vmem:[#allocation2 + $0x2f] sm:$0x1]
        %v1551 = vld [vmem:[#allocation2 + $0x41] sm:$0x1]
        %v1552 = vld [vmem:[#allocation2 + $0x43] sm:$0x1]
        %v1553 = vld [vmem:[#allocation2 + $0x45] sm:$0x1]
        %v1554 = vld [vmem:[#allocation2 + $0x47] sm:$0x1]
        %v1555 = vld [vmem:[#allocation2 + $0x49] sm:$0x1]
        %v1556 = vld [vmem:[#allocation2 + $0x4b] sm:$0x1]
        %v1557 = vld [vmem:[#allocation2 + $0x4d] sm:$0x1]
        %v1558 = vld [vmem:[#allocation2 + $0x4f] sm:$0x1]
        %v1559 = vld [vmem:[#allocation2 + $0x61] sm:$0x1]
        %v1560 = vld [vmem:[#allocation2 + $0x63] sm:$0x1]
        %v1561 = vld [vmem:[#allocation2 + $0x65] sm:$0x1]
        %v1562 = vld [vmem:[#allocation2 + $0x67] sm:$0x1]
        %v1563 = vld [vmem:[#allocation2 + $0x69] sm:$0x1]
        %v1564 = vld [vmem:[#allocation2 + $0x6b] sm:$0x1]
        %v1565 = vld [vmem:[#allocation2 + $0x6d] sm:$0x1]
        %v1566 = vld [vmem:[#allocation2 + $0x6f] sm:$0x1]
        %v1567 = vld [vmem:[#allocation2 + $0x81] sm:$0x1]
        %v1568 = vld [vmem:[#allocation2 + $0x83] sm:$0x1]
        %v1569 = vld [vmem:[#allocation2 + $0x85] sm:$0x1]
        %v1570 = vld [vmem:[#allocation2 + $0x87] sm:$0x1]
        %v1571 = vld [vmem:[#allocation2 + $0x89] sm:$0x1]
        %v1572 = vld [vmem:[#allocation2 + $0x8b] sm:$0x1]
        %v1573 = vld [vmem:[#allocation2 + $0x8d] sm:$0x1]
        %v1574 = vld [vmem:[#allocation2 + $0x8f] sm:$0x1]
        %v1575 = vld [vmem:[#allocation2 + $0xa1] sm:$0x1]
        %v1576 = vld [vmem:[#allocation2 + $0xa3] sm:$0x1]
        %v1577 = vld [vmem:[#allocation2 + $0xa5] sm:$0x1]
        %v1578 = vld [vmem:[#allocation2 + $0xa7] sm:$0x1]
        %v1579 = vld [vmem:[#allocation2 + $0xa9] sm:$0x1]
        %v1580 = vld [vmem:[#allocation2 + $0xab] sm:$0x1]
        %v1581 = vld [vmem:[#allocation2 + $0xad] sm:$0x1]
        %v1582 = vld [vmem:[#allocation2 + $0xaf] sm:$0x1]
        %v1583 = vld [vmem:[#allocation2 + $0xc1] sm:$0x1]
        %v1584 = vld [vmem:[#allocation2 + $0xc3] sm:$0x1]
        %v1585 = vld [vmem:[#allocation2 + $0xc5] sm:$0x1]
        %v1586 = vld [vmem:[#allocation2 + $0xc7] sm:$0x1]
        %v1587 = vld [vmem:[#allocation2 + $0xc9] sm:$0x1]
        %v1588 = vld [vmem:[#allocation2 + $0xcb] sm:$0x1]
        %v1589 = vld [vmem:[#allocation2 + $0xcd] sm:$0x1]
        %v1590 = vld [vmem:[#allocation2 + $0xcf] sm:$0x1]
        %v1591 = vld [vmem:[#allocation2 + $0xe1] sm:$0x1]
        %v1592 = vld [vmem:[#allocation2 + $0xe3] sm:$0x1]
        %v1593 = vld [vmem:[#allocation2 + $0xe5] sm:$0x1]
        %v1594 = vld [vmem:[#allocation2 + $0xe7] sm:$0x1]
        %v1595 = vld [vmem:[#allocation2 + $0xe9] sm:$0x1]
        %v1596 = vld [vmem:[#allocation2 + $0xeb] sm:$0x1]
        %v1597 = vld [vmem:[#allocation2 + $0xed] sm:$0x1]
        %v1598 = vld [vmem:[#allocation2 + $0xef] sm:$0x1]
        %s1599 = scalar_lea.vmem [#allocation3], 20
        %1600 = vst.msk [vmem:[%s1599] sm:$0x1] %vm1470, %v1535
        %1601 = vst.msk [vmem:[%s1599 + $0x2] sm:$0x1] %vm1470, %v1536
        %1602 = vst.msk [vmem:[%s1599 + $0x4] sm:$0x1] %vm1470, %v1537
        %1603 = vst.msk [vmem:[%s1599 + $0x6] sm:$0x1] %vm1470, %v1538
        %1604 = vst.msk [vmem:[%s1599 + $0x8] sm:$0x1] %vm1470, %v1539
        %1605 = vst.msk [vmem:[%s1599 + $0xa] sm:$0x1] %vm1470, %v1540
        %1606 = vst.msk [vmem:[%s1599 + $0xc] sm:$0x1] %vm1470, %v1541
        %1607 = vst.msk [vmem:[%s1599 + $0xe] sm:$0x1] %vm1470, %v1542
        %1608 = vst.msk [vmem:[%s1599 + $0x24] sm:$0x1] %vm1470, %v1543
        %1609 = vst.msk [vmem:[%s1599 + $0x26] sm:$0x1] %vm1470, %v1544
        %1610 = vst.msk [vmem:[%s1599 + $0x28] sm:$0x1] %vm1470, %v1545
        %1611 = vst.msk [vmem:[%s1599 + $0x2a] sm:$0x1] %vm1470, %v1546
        %1612 = vst.msk [vmem:[%s1599 + $0x2c] sm:$0x1] %vm1470, %v1547
        %1613 = vst.msk [vmem:[%s1599 + $0x2e] sm:$0x1] %vm1470, %v1548
        %1614 = vst.msk [vmem:[%s1599 + $0x30] sm:$0x1] %vm1470, %v1549
        %1615 = vst.msk [vmem:[%s1599 + $0x32] sm:$0x1] %vm1470, %v1550
        %1616 = vst.msk [vmem:[%s1599 + $0x48] sm:$0x1] %vm1470, %v1551
        %1617 = vst.msk [vmem:[%s1599 + $0x4a] sm:$0x1] %vm1470, %v1552
        %1618 = vst.msk [vmem:[%s1599 + $0x4c] sm:$0x1] %vm1470, %v1553
        %1619 = vst.msk [vmem:[%s1599 + $0x4e] sm:$0x1] %vm1470, %v1554
        %1620 = vst.msk [vmem:[%s1599 + $0x50] sm:$0x1] %vm1470, %v1555
        %1621 = vst.msk [vmem:[%s1599 + $0x52] sm:$0x1] %vm1470, %v1556
        %1622 = vst.msk [vmem:[%s1599 + $0x54] sm:$0x1] %vm1470, %v1557
        %1623 = vst.msk [vmem:[%s1599 + $0x56] sm:$0x1] %vm1470, %v1558
        %1624 = vst.msk [vmem:[%s1599 + $0x6c] sm:$0x1] %vm1470, %v1559
        %1625 = vst.msk [vmem:[%s1599 + $0x6e] sm:$0x1] %vm1470, %v1560
        %1626 = vst.msk [vmem:[%s1599 + $0x70] sm:$0x1] %vm1470, %v1561
        %1627 = vst.msk [vmem:[%s1599 + $0x72] sm:$0x1] %vm1470, %v1562
        %1628 = vst.msk [vmem:[%s1599 + $0x74] sm:$0x1] %vm1470, %v1563
        %1629 = vst.msk [vmem:[%s1599 + $0x76] sm:$0x1] %vm1470, %v1564
        %1630 = vst.msk [vmem:[%s1599 + $0x78] sm:$0x1] %vm1470, %v1565
        %1631 = vst.msk [vmem:[%s1599 + $0x7a] sm:$0x1] %vm1470, %v1566
        %1632 = vst.msk [vmem:[%s1599 + $0x90] sm:$0x1] %vm1470, %v1567
        %1633 = vst.msk [vmem:[%s1599 + $0x92] sm:$0x1] %vm1470, %v1568
        %1634 = vst.msk [vmem:[%s1599 + $0x94] sm:$0x1] %vm1470, %v1569
        %1635 = vst.msk [vmem:[%s1599 + $0x96] sm:$0x1] %vm1470, %v1570
        %1636 = vst.msk [vmem:[%s1599 + $0x98] sm:$0x1] %vm1470, %v1571
        %1637 = vst.msk [vmem:[%s1599 + $0x9a] sm:$0x1] %vm1470, %v1572
        %1638 = vst.msk [vmem:[%s1599 + $0x9c] sm:$0x1] %vm1470, %v1573
        %1639 = vst.msk [vmem:[%s1599 + $0x9e] sm:$0x1] %vm1470, %v1574
        %1640 = vst.msk [vmem:[%s1599 + $0xb4] sm:$0x1] %vm1470, %v1575
        %1641 = vst.msk [vmem:[%s1599 + $0xb6] sm:$0x1] %vm1470, %v1576
        %1642 = vst.msk [vmem:[%s1599 + $0xb8] sm:$0x1] %vm1470, %v1577
        %1643 = vst.msk [vmem:[%s1599 + $0xba] sm:$0x1] %vm1470, %v1578
        %1644 = vst.msk [vmem:[%s1599 + $0xbc] sm:$0x1] %vm1470, %v1579
        %1645 = vst.msk [vmem:[%s1599 + $0xbe] sm:$0x1] %vm1470, %v1580
        %1646 = vst.msk [vmem:[%s1599 + $0xc0] sm:$0x1] %vm1470, %v1581
        %1647 = vst.msk [vmem:[%s1599 + $0xc2] sm:$0x1] %vm1470, %v1582
        %1648 = vst.msk [vmem:[%s1599 + $0xd8] sm:$0x1] %vm1470, %v1583
        %1649 = vst.msk [vmem:[%s1599 + $0xda] sm:$0x1] %vm1470, %v1584
        %1650 = vst.msk [vmem:[%s1599 + $0xdc] sm:$0x1] %vm1470, %v1585
        %1651 = vst.msk [vmem:[%s1599 + $0xde] sm:$0x1] %vm1470, %v1586
        %1652 = vst.msk [vmem:[%s1599 + $0xe0] sm:$0x1] %vm1470, %v1587
        %1653 = vst.msk [vmem:[%s1599 + $0xe2] sm:$0x1] %vm1470, %v1588
        %1654 = vst.msk [vmem:[%s1599 + $0xe4] sm:$0x1] %vm1470, %v1589
        %1655 = vst.msk [vmem:[%s1599 + $0xe6] sm:$0x1] %vm1470, %v1590
        %1656 = vst.msk [vmem:[%s1599 + $0xfc] sm:$0x1] %vm1470, %v1591
        %1657 = vst.msk [vmem:[%s1599 + $0xfe] sm:$0x1] %vm1470, %v1592
        %1658 = vst.msk [vmem:[%s1599 + $0x100] sm:$0x1] %vm1470, %v1593
        %1659 = vst.msk [vmem:[%s1599 + $0x102] sm:$0x1] %vm1470, %v1594
        %1660 = vst.msk [vmem:[%s1599 + $0x104] sm:$0x1] %vm1470, %v1595
        %1661 = vst.msk [vmem:[%s1599 + $0x106] sm:$0x1] %vm1470, %v1596
        %1662 = vst.msk [vmem:[%s1599 + $0x108] sm:$0x1] %vm1470, %v1597
        %1663 = vst.msk [vmem:[%s1599 + $0x10a] sm:$0x1] %vm1470, %v1598
        %s1664 = scalar_lea.vmem [#allocation2], 16
        %v1665 = vld [vmem:[%s1664] sm:$0x1]
        %v1666 = vld [vmem:[%s1664 + $0x2] sm:$0x1]
        %v1667 = vld [vmem:[%s1664 + $0x4] sm:$0x1]
        %v1668 = vld [vmem:[%s1664 + $0x6] sm:$0x1]
        %v1669 = vld [vmem:[%s1664 + $0x8] sm:$0x1]
        %v1670 = vld [vmem:[%s1664 + $0xa] sm:$0x1]
        %v1671 = vld [vmem:[%s1664 + $0xc] sm:$0x1]
        %v1672 = vld [vmem:[%s1664 + $0xe] sm:$0x1]
        %v1673 = vld [vmem:[%s1664 + $0x20] sm:$0x1]
        %v1674 = vld [vmem:[%s1664 + $0x22] sm:$0x1]
        %v1675 = vld [vmem:[%s1664 + $0x24] sm:$0x1]
        %v1676 = vld [vmem:[%s1664 + $0x26] sm:$0x1]
        %v1677 = vld [vmem:[%s1664 + $0x28] sm:$0x1]
        %v1678 = vld [vmem:[%s1664 + $0x2a] sm:$0x1]
        %v1679 = vld [vmem:[%s1664 + $0x2c] sm:$0x1]
        %v1680 = vld [vmem:[%s1664 + $0x2e] sm:$0x1]
        %v1681 = vld [vmem:[%s1664 + $0x40] sm:$0x1]
        %v1682 = vld [vmem:[%s1664 + $0x42] sm:$0x1]
        %v1683 = vld [vmem:[%s1664 + $0x44] sm:$0x1]
        %v1684 = vld [vmem:[%s1664 + $0x46] sm:$0x1]
        %v1685 = vld [vmem:[%s1664 + $0x48] sm:$0x1]
        %v1686 = vld [vmem:[%s1664 + $0x4a] sm:$0x1]
        %v1687 = vld [vmem:[%s1664 + $0x4c] sm:$0x1]
        %v1688 = vld [vmem:[%s1664 + $0x4e] sm:$0x1]
        %v1689 = vld [vmem:[%s1664 + $0x60] sm:$0x1]
        %v1690 = vld [vmem:[%s1664 + $0x62] sm:$0x1]
        %v1691 = vld [vmem:[%s1664 + $0x64] sm:$0x1]
        %v1692 = vld [vmem:[%s1664 + $0x66] sm:$0x1]
        %v1693 = vld [vmem:[%s1664 + $0x68] sm:$0x1]
        %v1694 = vld [vmem:[%s1664 + $0x6a] sm:$0x1]
        %v1695 = vld [vmem:[%s1664 + $0x6c] sm:$0x1]
        %v1696 = vld [vmem:[%s1664 + $0x6e] sm:$0x1]
        %v1697 = vld [vmem:[%s1664 + $0x80] sm:$0x1]
        %v1698 = vld [vmem:[%s1664 + $0x82] sm:$0x1]
        %v1699 = vld [vmem:[%s1664 + $0x84] sm:$0x1]
        %v1700 = vld [vmem:[%s1664 + $0x86] sm:$0x1]
        %v1701 = vld [vmem:[%s1664 + $0x88] sm:$0x1]
        %v1702 = vld [vmem:[%s1664 + $0x8a] sm:$0x1]
        %v1703 = vld [vmem:[%s1664 + $0x8c] sm:$0x1]
        %v1704 = vld [vmem:[%s1664 + $0x8e] sm:$0x1]
        %v1705 = vld [vmem:[%s1664 + $0xa0] sm:$0x1]
        %v1706 = vld [vmem:[%s1664 + $0xa2] sm:$0x1]
        %v1707 = vld [vmem:[%s1664 + $0xa4] sm:$0x1]
        %v1708 = vld [vmem:[%s1664 + $0xa6] sm:$0x1]
        %v1709 = vld [vmem:[%s1664 + $0xa8] sm:$0x1]
        %v1710 = vld [vmem:[%s1664 + $0xaa] sm:$0x1]
        %v1711 = vld [vmem:[%s1664 + $0xac] sm:$0x1]
        %v1712 = vld [vmem:[%s1664 + $0xae] sm:$0x1]
        %v1713 = vld [vmem:[%s1664 + $0xc0] sm:$0x1]
        %v1714 = vld [vmem:[%s1664 + $0xc2] sm:$0x1]
        %v1715 = vld [vmem:[%s1664 + $0xc4] sm:$0x1]
        %v1716 = vld [vmem:[%s1664 + $0xc6] sm:$0x1]
        %v1717 = vld [vmem:[%s1664 + $0xc8] sm:$0x1]
        %v1718 = vld [vmem:[%s1664 + $0xca] sm:$0x1]
        %v1719 = vld [vmem:[%s1664 + $0xcc] sm:$0x1]
        %v1720 = vld [vmem:[%s1664 + $0xce] sm:$0x1]
        %v1721 = vld [vmem:[%s1664 + $0xe0] sm:$0x1]
        %v1722 = vld [vmem:[%s1664 + $0xe2] sm:$0x1]
        %v1723 = vld [vmem:[%s1664 + $0xe4] sm:$0x1]
        %v1724 = vld [vmem:[%s1664 + $0xe6] sm:$0x1]
        %v1725 = vld [vmem:[%s1664 + $0xe8] sm:$0x1]
        %v1726 = vld [vmem:[%s1664 + $0xea] sm:$0x1]
        %v1727 = vld [vmem:[%s1664 + $0xec] sm:$0x1]
        %v1728 = vld [vmem:[%s1664 + $0xee] sm:$0x1]
        %s1729 = scalar_lea.vmem [#allocation3], 36
        %1730 = vst.msk [vmem:[%s1729 + $0x1] sm:$0x1] %vm1470, %v1665
        %1731 = vst.msk [vmem:[%s1729 + $0x3] sm:$0x1] %vm1470, %v1666
        %1732 = vst.msk [vmem:[%s1729 + $0x5] sm:$0x1] %vm1470, %v1667
        %1733 = vst.msk [vmem:[%s1729 + $0x7] sm:$0x1] %vm1470, %v1668
        %1734 = vst.msk [vmem:[%s1729 + $0x9] sm:$0x1] %vm1470, %v1669
        %1735 = vst.msk [vmem:[%s1729 + $0xb] sm:$0x1] %vm1470, %v1670
        %1736 = vst.msk [vmem:[%s1729 + $0xd] sm:$0x1] %vm1470, %v1671
        %1737 = vst.msk [vmem:[%s1729 + $0xf] sm:$0x1] %vm1470, %v1672
        %1738 = vst.msk [vmem:[%s1729 + $0x25] sm:$0x1] %vm1470, %v1673
        %1739 = vst.msk [vmem:[%s1729 + $0x27] sm:$0x1] %vm1470, %v1674
        %1740 = vst.msk [vmem:[%s1729 + $0x29] sm:$0x1] %vm1470, %v1675
        %1741 = vst.msk [vmem:[%s1729 + $0x2b] sm:$0x1] %vm1470, %v1676
        %1742 = vst.msk [vmem:[%s1729 + $0x2d] sm:$0x1] %vm1470, %v1677
        %1743 = vst.msk [vmem:[%s1729 + $0x2f] sm:$0x1] %vm1470, %v1678
        %1744 = vst.msk [vmem:[%s1729 + $0x31] sm:$0x1] %vm1470, %v1679
        %1745 = vst.msk [vmem:[%s1729 + $0x33] sm:$0x1] %vm1470, %v1680
        %1746 = vst.msk [vmem:[%s1729 + $0x49] sm:$0x1] %vm1470, %v1681
        %1747 = vst.msk [vmem:[%s1729 + $0x4b] sm:$0x1] %vm1470, %v1682
        %1748 = vst.msk [vmem:[%s1729 + $0x4d] sm:$0x1] %vm1470, %v1683
        %1749 = vst.msk [vmem:[%s1729 + $0x4f] sm:$0x1] %vm1470, %v1684
        %1750 = vst.msk [vmem:[%s1729 + $0x51] sm:$0x1] %vm1470, %v1685
        %1751 = vst.msk [vmem:[%s1729 + $0x53] sm:$0x1] %vm1470, %v1686
        %1752 = vst.msk [vmem:[%s1729 + $0x55] sm:$0x1] %vm1470, %v1687
        %1753 = vst.msk [vmem:[%s1729 + $0x57] sm:$0x1] %vm1470, %v1688
        %1754 = vst.msk [vmem:[%s1729 + $0x6d] sm:$0x1] %vm1470, %v1689
        %1755 = vst.msk [vmem:[%s1729 + $0x6f] sm:$0x1] %vm1470, %v1690
        %1756 = vst.msk [vmem:[%s1729 + $0x71] sm:$0x1] %vm1470, %v1691
        %1757 = vst.msk [vmem:[%s1729 + $0x73] sm:$0x1] %vm1470, %v1692
        %1758 = vst.msk [vmem:[%s1729 + $0x75] sm:$0x1] %vm1470, %v1693
        %1759 = vst.msk [vmem:[%s1729 + $0x77] sm:$0x1] %vm1470, %v1694
        %1760 = vst.msk [vmem:[%s1729 + $0x79] sm:$0x1] %vm1470, %v1695
        %1761 = vst.msk [vmem:[%s1729 + $0x7b] sm:$0x1] %vm1470, %v1696
        %1762 = vst.msk [vmem:[%s1729 + $0x91] sm:$0x1] %vm1470, %v1697
        %1763 = vst.msk [vmem:[%s1729 + $0x93] sm:$0x1] %vm1470, %v1698
        %1764 = vst.msk [vmem:[%s1729 + $0x95] sm:$0x1] %vm1470, %v1699
        %1765 = vst.msk [vmem:[%s1729 + $0x97] sm:$0x1] %vm1470, %v1700
        %1766 = vst.msk [vmem:[%s1729 + $0x99] sm:$0x1] %vm1470, %v1701
        %1767 = vst.msk [vmem:[%s1729 + $0x9b] sm:$0x1] %vm1470, %v1702
        %1768 = vst.msk [vmem:[%s1729 + $0x9d] sm:$0x1] %vm1470, %v1703
        %1769 = vst.msk [vmem:[%s1729 + $0x9f] sm:$0x1] %vm1470, %v1704
        %1770 = vst.msk [vmem:[%s1729 + $0xb5] sm:$0x1] %vm1470, %v1705
        %1771 = vst.msk [vmem:[%s1729 + $0xb7] sm:$0x1] %vm1470, %v1706
        %1772 = vst.msk [vmem:[%s1729 + $0xb9] sm:$0x1] %vm1470, %v1707
        %1773 = vst.msk [vmem:[%s1729 + $0xbb] sm:$0x1] %vm1470, %v1708
        %1774 = vst.msk [vmem:[%s1729 + $0xbd] sm:$0x1] %vm1470, %v1709
        %1775 = vst.msk [vmem:[%s1729 + $0xbf] sm:$0x1] %vm1470, %v1710
        %1776 = vst.msk [vmem:[%s1729 + $0xc1] sm:$0x1] %vm1470, %v1711
        %1777 = vst.msk [vmem:[%s1729 + $0xc3] sm:$0x1] %vm1470, %v1712
        %1778 = vst.msk [vmem:[%s1729 + $0xd9] sm:$0x1] %vm1470, %v1713
        %1779 = vst.msk [vmem:[%s1729 + $0xdb] sm:$0x1] %vm1470, %v1714
        %1780 = vst.msk [vmem:[%s1729 + $0xdd] sm:$0x1] %vm1470, %v1715
        %1781 = vst.msk [vmem:[%s1729 + $0xdf] sm:$0x1] %vm1470, %v1716
        %1782 = vst.msk [vmem:[%s1729 + $0xe1] sm:$0x1] %vm1470, %v1717
        %1783 = vst.msk [vmem:[%s1729 + $0xe3] sm:$0x1] %vm1470, %v1718
        %1784 = vst.msk [vmem:[%s1729 + $0xe5] sm:$0x1] %vm1470, %v1719
        %1785 = vst.msk [vmem:[%s1729 + $0xe7] sm:$0x1] %vm1470, %v1720
        %1786 = vst.msk [vmem:[%s1729 + $0xfd] sm:$0x1] %vm1470, %v1721
        %1787 = vst.msk [vmem:[%s1729 + $0xff] sm:$0x1] %vm1470, %v1722
        %1788 = vst.msk [vmem:[%s1729 + $0x101] sm:$0x1] %vm1470, %v1723
        %1789 = vst.msk [vmem:[%s1729 + $0x103] sm:$0x1] %vm1470, %v1724
        %1790 = vst.msk [vmem:[%s1729 + $0x105] sm:$0x1] %vm1470, %v1725
        %1791 = vst.msk [vmem:[%s1729 + $0x107] sm:$0x1] %vm1470, %v1726
        %1792 = vst.msk [vmem:[%s1729 + $0x109] sm:$0x1] %vm1470, %v1727
        %1793 = vst.msk [vmem:[%s1729 + $0x10b] sm:$0x1] %vm1470, %v1728
        %v1794 = vld [vmem:[%s1664 + $0x1] sm:$0x1]
        %v1795 = vld [vmem:[%s1664 + $0x3] sm:$0x1]
        %v1796 = vld [vmem:[%s1664 + $0x5] sm:$0x1]
        %v1797 = vld [vmem:[%s1664 + $0x7] sm:$0x1]
        %v1798 = vld [vmem:[%s1664 + $0x9] sm:$0x1]
        %v1799 = vld [vmem:[%s1664 + $0xb] sm:$0x1]
        %v1800 = vld [vmem:[%s1664 + $0xd] sm:$0x1]
        %v1801 = vld [vmem:[%s1664 + $0xf] sm:$0x1]
        %v1802 = vld [vmem:[%s1664 + $0x21] sm:$0x1]
        %v1803 = vld [vmem:[%s1664 + $0x23] sm:$0x1]
        %v1804 = vld [vmem:[%s1664 + $0x25] sm:$0x1]
        %v1805 = vld [vmem:[%s1664 + $0x27] sm:$0x1]
        %v1806 = vld [vmem:[%s1664 + $0x29] sm:$0x1]
        %v1807 = vld [vmem:[%s1664 + $0x2b] sm:$0x1]
        %v1808 = vld [vmem:[%s1664 + $0x2d] sm:$0x1]
        %v1809 = vld [vmem:[%s1664 + $0x2f] sm:$0x1]
        %v1810 = vld [vmem:[%s1664 + $0x41] sm:$0x1]
        %v1811 = vld [vmem:[%s1664 + $0x43] sm:$0x1]
        %v1812 = vld [vmem:[%s1664 + $0x45] sm:$0x1]
        %v1813 = vld [vmem:[%s1664 + $0x47] sm:$0x1]
        %v1814 = vld [vmem:[%s1664 + $0x49] sm:$0x1]
        %v1815 = vld [vmem:[%s1664 + $0x4b] sm:$0x1]
        %v1816 = vld [vmem:[%s1664 + $0x4d] sm:$0x1]
        %v1817 = vld [vmem:[%s1664 + $0x4f] sm:$0x1]
        %v1818 = vld [vmem:[%s1664 + $0x61] sm:$0x1]
        %v1819 = vld [vmem:[%s1664 + $0x63] sm:$0x1]
        %v1820 = vld [vmem:[%s1664 + $0x65] sm:$0x1]
        %v1821 = vld [vmem:[%s1664 + $0x67] sm:$0x1]
        %v1822 = vld [vmem:[%s1664 + $0x69] sm:$0x1]
        %v1823 = vld [vmem:[%s1664 + $0x6b] sm:$0x1]
        %v1824 = vld [vmem:[%s1664 + $0x6d] sm:$0x1]
        %v1825 = vld [vmem:[%s1664 + $0x6f] sm:$0x1]
        %v1826 = vld [vmem:[%s1664 + $0x81] sm:$0x1]
        %v1827 = vld [vmem:[%s1664 + $0x83] sm:$0x1]
        %v1828 = vld [vmem:[%s1664 + $0x85] sm:$0x1]
        %v1829 = vld [vmem:[%s1664 + $0x87] sm:$0x1]
        %v1830 = vld [vmem:[%s1664 + $0x89] sm:$0x1]
        %v1831 = vld [vmem:[%s1664 + $0x8b] sm:$0x1]
        %v1832 = vld [vmem:[%s1664 + $0x8d] sm:$0x1]
        %v1833 = vld [vmem:[%s1664 + $0x8f] sm:$0x1]
        %v1834 = vld [vmem:[%s1664 + $0xa1] sm:$0x1]
        %v1835 = vld [vmem:[%s1664 + $0xa3] sm:$0x1]
        %v1836 = vld [vmem:[%s1664 + $0xa5] sm:$0x1]
        %v1837 = vld [vmem:[%s1664 + $0xa7] sm:$0x1]
        %v1838 = vld [vmem:[%s1664 + $0xa9] sm:$0x1]
        %v1839 = vld [vmem:[%s1664 + $0xab] sm:$0x1]
        %v1840 = vld [vmem:[%s1664 + $0xad] sm:$0x1]
        %v1841 = vld [vmem:[%s1664 + $0xaf] sm:$0x1]
        %v1842 = vld [vmem:[%s1664 + $0xc1] sm:$0x1]
        %v1843 = vld [vmem:[%s1664 + $0xc3] sm:$0x1]
        %v1844 = vld [vmem:[%s1664 + $0xc5] sm:$0x1]
        %v1845 = vld [vmem:[%s1664 + $0xc7] sm:$0x1]
        %v1846 = vld [vmem:[%s1664 + $0xc9] sm:$0x1]
        %v1847 = vld [vmem:[%s1664 + $0xcb] sm:$0x1]
        %v1848 = vld [vmem:[%s1664 + $0xcd] sm:$0x1]
        %v1849 = vld [vmem:[%s1664 + $0xcf] sm:$0x1]
        %v1850 = vld [vmem:[%s1664 + $0xe1] sm:$0x1]
        %v1851 = vld [vmem:[%s1664 + $0xe3] sm:$0x1]
        %v1852 = vld [vmem:[%s1664 + $0xe5] sm:$0x1]
        %v1853 = vld [vmem:[%s1664 + $0xe7] sm:$0x1]
        %v1854 = vld [vmem:[%s1664 + $0xe9] sm:$0x1]
        %v1855 = vld [vmem:[%s1664 + $0xeb] sm:$0x1]
        %v1856 = vld [vmem:[%s1664 + $0xed] sm:$0x1]
        %v1857 = vld [vmem:[%s1664 + $0xef] sm:$0x1]
        %s1858 = scalar_lea.vmem [#allocation3], 38
        %1859 = vst.msk [vmem:[%s1858] sm:$0x1] %vm1470, %v1794
        %1860 = vst.msk [vmem:[%s1858 + $0x2] sm:$0x1] %vm1470, %v1795
        %1861 = vst.msk [vmem:[%s1858 + $0x4] sm:$0x1] %vm1470, %v1796
        %1862 = vst.msk [vmem:[%s1858 + $0x6] sm:$0x1] %vm1470, %v1797
        %1863 = vst.msk [vmem:[%s1858 + $0x8] sm:$0x1] %vm1470, %v1798
        %1864 = vst.msk [vmem:[%s1858 + $0xa] sm:$0x1] %vm1470, %v1799
        %1865 = vst.msk [vmem:[%s1858 + $0xc] sm:$0x1] %vm1470, %v1800
        %1866 = vst.msk [vmem:[%s1858 + $0xe] sm:$0x1] %vm1470, %v1801
        %1867 = vst.msk [vmem:[%s1858 + $0x24] sm:$0x1] %vm1470, %v1802
        %1868 = vst.msk [vmem:[%s1858 + $0x26] sm:$0x1] %vm1470, %v1803
        %1869 = vst.msk [vmem:[%s1858 + $0x28] sm:$0x1] %vm1470, %v1804
        %1870 = vst.msk [vmem:[%s1858 + $0x2a] sm:$0x1] %vm1470, %v1805
        %1871 = vst.msk [vmem:[%s1858 + $0x2c] sm:$0x1] %vm1470, %v1806
        %1872 = vst.msk [vmem:[%s1858 + $0x2e] sm:$0x1] %vm1470, %v1807
        %1873 = vst.msk [vmem:[%s1858 + $0x30] sm:$0x1] %vm1470, %v1808
        %1874 = vst.msk [vmem:[%s1858 + $0x32] sm:$0x1] %vm1470, %v1809
        %1875 = vst.msk [vmem:[%s1858 + $0x48] sm:$0x1] %vm1470, %v1810
        %1876 = vst.msk [vmem:[%s1858 + $0x4a] sm:$0x1] %vm1470, %v1811
        %1877 = vst.msk [vmem:[%s1858 + $0x4c] sm:$0x1] %vm1470, %v1812
        %1878 = vst.msk [vmem:[%s1858 + $0x4e] sm:$0x1] %vm1470, %v1813
        %1879 = vst.msk [vmem:[%s1858 + $0x50] sm:$0x1] %vm1470, %v1814
        %1880 = vst.msk [vmem:[%s1858 + $0x52] sm:$0x1] %vm1470, %v1815
        %1881 = vst.msk [vmem:[%s1858 + $0x54] sm:$0x1] %vm1470, %v1816
        %1882 = vst.msk [vmem:[%s1858 + $0x56] sm:$0x1] %vm1470, %v1817
        %1883 = vst.msk [vmem:[%s1858 + $0x6c] sm:$0x1] %vm1470, %v1818
        %1884 = vst.msk [vmem:[%s1858 + $0x6e] sm:$0x1] %vm1470, %v1819
        %1885 = vst.msk [vmem:[%s1858 + $0x70] sm:$0x1] %vm1470, %v1820
        %1886 = vst.msk [vmem:[%s1858 + $0x72] sm:$0x1] %vm1470, %v1821
        %1887 = vst.msk [vmem:[%s1858 + $0x74] sm:$0x1] %vm1470, %v1822
        %1888 = vst.msk [vmem:[%s1858 + $0x76] sm:$0x1] %vm1470, %v1823
        %1889 = vst.msk [vmem:[%s1858 + $0x78] sm:$0x1] %vm1470, %v1824
        %1890 = vst.msk [vmem:[%s1858 + $0x7a] sm:$0x1] %vm1470, %v1825
        %1891 = vst.msk [vmem:[%s1858 + $0x90] sm:$0x1] %vm1470, %v1826
        %1892 = vst.msk [vmem:[%s1858 + $0x92] sm:$0x1] %vm1470, %v1827
        %1893 = vst.msk [vmem:[%s1858 + $0x94] sm:$0x1] %vm1470, %v1828
        %1894 = vst.msk [vmem:[%s1858 + $0x96] sm:$0x1] %vm1470, %v1829
        %1895 = vst.msk [vmem:[%s1858 + $0x98] sm:$0x1] %vm1470, %v1830
        %1896 = vst.msk [vmem:[%s1858 + $0x9a] sm:$0x1] %vm1470, %v1831
        %1897 = vst.msk [vmem:[%s1858 + $0x9c] sm:$0x1] %vm1470, %v1832
        %1898 = vst.msk [vmem:[%s1858 + $0x9e] sm:$0x1] %vm1470, %v1833
        %1899 = vst.msk [vmem:[%s1858 + $0xb4] sm:$0x1] %vm1470, %v1834
        %1900 = vst.msk [vmem:[%s1858 + $0xb6] sm:$0x1] %vm1470, %v1835
        %1901 = vst.msk [vmem:[%s1858 + $0xb8] sm:$0x1] %vm1470, %v1836
        %1902 = vst.msk [vmem:[%s1858 + $0xba] sm:$0x1] %vm1470, %v1837
        %1903 = vst.msk [vmem:[%s1858 + $0xbc] sm:$0x1] %vm1470, %v1838
        %1904 = vst.msk [vmem:[%s1858 + $0xbe] sm:$0x1] %vm1470, %v1839
        %1905 = vst.msk [vmem:[%s1858 + $0xc0] sm:$0x1] %vm1470, %v1840
        %1906 = vst.msk [vmem:[%s1858 + $0xc2] sm:$0x1] %vm1470, %v1841
        %1907 = vst.msk [vmem:[%s1858 + $0xd8] sm:$0x1] %vm1470, %v1842
        %1908 = vst.msk [vmem:[%s1858 + $0xda] sm:$0x1] %vm1470, %v1843
        %1909 = vst.msk [vmem:[%s1858 + $0xdc] sm:$0x1] %vm1470, %v1844
        %1910 = vst.msk [vmem:[%s1858 + $0xde] sm:$0x1] %vm1470, %v1845
        %1911 = vst.msk [vmem:[%s1858 + $0xe0] sm:$0x1] %vm1470, %v1846
        %1912 = vst.msk [vmem:[%s1858 + $0xe2] sm:$0x1] %vm1470, %v1847
        %1913 = vst.msk [vmem:[%s1858 + $0xe4] sm:$0x1] %vm1470, %v1848
        %1914 = vst.msk [vmem:[%s1858 + $0xe6] sm:$0x1] %vm1470, %v1849
        %1915 = vst.msk [vmem:[%s1858 + $0xfc] sm:$0x1] %vm1470, %v1850
        %1916 = vst.msk [vmem:[%s1858 + $0xfe] sm:$0x1] %vm1470, %v1851
        %1917 = vst.msk [vmem:[%s1858 + $0x100] sm:$0x1] %vm1470, %v1852
        %1918 = vst.msk [vmem:[%s1858 + $0x102] sm:$0x1] %vm1470, %v1853
        %1919 = vst.msk [vmem:[%s1858 + $0x104] sm:$0x1] %vm1470, %v1854
        %1920 = vst.msk [vmem:[%s1858 + $0x106] sm:$0x1] %vm1470, %v1855
        %1921 = vst.msk [vmem:[%s1858 + $0x108] sm:$0x1] %vm1470, %v1856
        %1922 = vst.msk [vmem:[%s1858 + $0x10a] sm:$0x1] %vm1470, %v1857
        %v1923 = vld [vmem:[#allocation3] sm:$0x1]
        %v1924 = vld [vmem:[#allocation3 + $0x2] sm:$0x1]
        %v1925 = vld [vmem:[#allocation3 + $0x4] sm:$0x1]
        %v1926 = vld [vmem:[#allocation3 + $0x6] sm:$0x1]
        %v1927 = vld [vmem:[#allocation3 + $0x8] sm:$0x1]
        %v1928 = vld [vmem:[#allocation3 + $0xa] sm:$0x1]
        %v1929 = vld [vmem:[#allocation3 + $0xc] sm:$0x1]
        %v1930 = vld [vmem:[#allocation3 + $0xe] sm:$0x1]
        %v1931 = vld [vmem:[#allocation3 + $0x24] sm:$0x1]
        %v1932 = vld [vmem:[#allocation3 + $0x26] sm:$0x1]
        %v1933 = vld [vmem:[#allocation3 + $0x28] sm:$0x1]
        %v1934 = vld [vmem:[#allocation3 + $0x2a] sm:$0x1]
        %v1935 = vld [vmem:[#allocation3 + $0x2c] sm:$0x1]
        %v1936 = vld [vmem:[#allocation3 + $0x2e] sm:$0x1]
        %v1937 = vld [vmem:[#allocation3 + $0x30] sm:$0x1]
        %v1938 = vld [vmem:[#allocation3 + $0x32] sm:$0x1]
        %v1939 = vld [vmem:[#allocation3 + $0x48] sm:$0x1]
        %v1940 = vld [vmem:[#allocation3 + $0x4a] sm:$0x1]
        %v1941 = vld [vmem:[#allocation3 + $0x4c] sm:$0x1]
        %v1942 = vld [vmem:[#allocation3 + $0x4e] sm:$0x1]
        %v1943 = vld [vmem:[#allocation3 + $0x50] sm:$0x1]
        %v1944 = vld [vmem:[#allocation3 + $0x52] sm:$0x1]
        %v1945 = vld [vmem:[#allocation3 + $0x54] sm:$0x1]
        %v1946 = vld [vmem:[#allocation3 + $0x56] sm:$0x1]
        %v1947 = vld [vmem:[#allocation3 + $0x6c] sm:$0x1]
        %v1948 = vld [vmem:[#allocation3 + $0x6e] sm:$0x1]
        %v1949 = vld [vmem:[#allocation3 + $0x70] sm:$0x1]
        %v1950 = vld [vmem:[#allocation3 + $0x72] sm:$0x1]
        %v1951 = vld [vmem:[#allocation3 + $0x74] sm:$0x1]
        %v1952 = vld [vmem:[#allocation3 + $0x76] sm:$0x1]
        %v1953 = vld [vmem:[#allocation3 + $0x78] sm:$0x1]
        %v1954 = vld [vmem:[#allocation3 + $0x7a] sm:$0x1]
        %v1955 = vld [vmem:[#allocation3 + $0x90] sm:$0x1]
        %v1956 = vld [vmem:[#allocation3 + $0x92] sm:$0x1]
        %v1957 = vld [vmem:[#allocation3 + $0x94] sm:$0x1]
        %v1958 = vld [vmem:[#allocation3 + $0x96] sm:$0x1]
        %v1959 = vld [vmem:[#allocation3 + $0x98] sm:$0x1]
        %v1960 = vld [vmem:[#allocation3 + $0x9a] sm:$0x1]
        %v1961 = vld [vmem:[#allocation3 + $0x9c] sm:$0x1]
        %v1962 = vld [vmem:[#allocation3 + $0x9e] sm:$0x1]
        %v1963 = vld [vmem:[#allocation3 + $0xb4] sm:$0x1]
        %v1964 = vld [vmem:[#allocation3 + $0xb6] sm:$0x1]
        %v1965 = vld [vmem:[#allocation3 + $0xb8] sm:$0x1]
        %v1966 = vld [vmem:[#allocation3 + $0xba] sm:$0x1]
        %v1967 = vld [vmem:[#allocation3 + $0xbc] sm:$0x1]
        %v1968 = vld [vmem:[#allocation3 + $0xbe] sm:$0x1]
        %v1969 = vld [vmem:[#allocation3 + $0xc0] sm:$0x1]
        %v1970 = vld [vmem:[#allocation3 + $0xc2] sm:$0x1]
        %v1971 = vld [vmem:[#allocation3 + $0xd8] sm:$0x1]
        %v1972 = vld [vmem:[#allocation3 + $0xda] sm:$0x1]
        %v1973 = vld [vmem:[#allocation3 + $0xdc] sm:$0x1]
        %v1974 = vld [vmem:[#allocation3 + $0xde] sm:$0x1]
        %v1975 = vld [vmem:[#allocation3 + $0xe0] sm:$0x1]
        %v1976 = vld [vmem:[#allocation3 + $0xe2] sm:$0x1]
        %v1977 = vld [vmem:[#allocation3 + $0xe4] sm:$0x1]
        %v1978 = vld [vmem:[#allocation3 + $0xe6] sm:$0x1]
        %v1979 = vld [vmem:[#allocation3 + $0xfc] sm:$0x1]
        %v1980 = vld [vmem:[#allocation3 + $0xfe] sm:$0x1]
        %v1981 = vld [vmem:[#allocation3 + $0x100] sm:$0x1]
        %v1982 = vld [vmem:[#allocation3 + $0x102] sm:$0x1]
        %v1983 = vld [vmem:[#allocation3 + $0x104] sm:$0x1]
        %v1984 = vld [vmem:[#allocation3 + $0x106] sm:$0x1]
        %v1985 = vld [vmem:[#allocation3 + $0x108] sm:$0x1]
        %v1986 = vld [vmem:[#allocation3 + $0x10a] sm:$0x1]
        %v1987 = vld [vmem:[#allocation3 + $0x1] sm:$0x1]
        %v1988 = vld [vmem:[#allocation3 + $0x3] sm:$0x1]
        %v1989 = vld [vmem:[#allocation3 + $0x5] sm:$0x1]
        %v1990 = vld [vmem:[#allocation3 + $0x7] sm:$0x1]
        %v1991 = vld [vmem:[#allocation3 + $0x9] sm:$0x1]
        %v1992 = vld [vmem:[#allocation3 + $0xb] sm:$0x1]
        %v1993 = vld [vmem:[#allocation3 + $0xd] sm:$0x1]
        %v1994 = vld [vmem:[#allocation3 + $0xf] sm:$0x1]
        %v1995 = vld [vmem:[#allocation3 + $0x25] sm:$0x1]
        %v1996 = vld [vmem:[#allocation3 + $0x27] sm:$0x1]
        %v1997 = vld [vmem:[#allocation3 + $0x29] sm:$0x1]
        %v1998 = vld [vmem:[#allocation3 + $0x2b] sm:$0x1]
        %v1999 = vld [vmem:[#allocation3 + $0x2d] sm:$0x1]
        %v2000 = vld [vmem:[#allocation3 + $0x2f] sm:$0x1]
        %v2001 = vld [vmem:[#allocation3 + $0x31] sm:$0x1]
        %v2002 = vld [vmem:[#allocation3 + $0x33] sm:$0x1]
        %v2003 = vld [vmem:[#allocation3 + $0x49] sm:$0x1]
        %v2004 = vld [vmem:[#allocation3 + $0x4b] sm:$0x1]
        %v2005 = vld [vmem:[#allocation3 + $0x4d] sm:$0x1]
        %v2006 = vld [vmem:[#allocation3 + $0x4f] sm:$0x1]
        %v2007 = vld [vmem:[#allocation3 + $0x51] sm:$0x1]
        %v2008 = vld [vmem:[#allocation3 + $0x53] sm:$0x1]
        %v2009 = vld [vmem:[#allocation3 + $0x55] sm:$0x1]
        %v2010 = vld [vmem:[#allocation3 + $0x57] sm:$0x1]
        %v2011 = vld [vmem:[#allocation3 + $0x6d] sm:$0x1]
        %v2012 = vld [vmem:[#allocation3 + $0x6f] sm:$0x1]
        %v2013 = vld [vmem:[#allocation3 + $0x71] sm:$0x1]
        %v2014 = vld [vmem:[#allocation3 + $0x73] sm:$0x1]
        %v2015 = vld [vmem:[#allocation3 + $0x75] sm:$0x1]
        %v2016 = vld [vmem:[#allocation3 + $0x77] sm:$0x1]
        %v2017 = vld [vmem:[#allocation3 + $0x79] sm:$0x1]
        %v2018 = vld [vmem:[#allocation3 + $0x7b] sm:$0x1]
        %v2019 = vld [vmem:[#allocation3 + $0x91] sm:$0x1]
        %v2020 = vld [vmem:[#allocation3 + $0x93] sm:$0x1]
        %v2021 = vld [vmem:[#allocation3 + $0x95] sm:$0x1]
        %v2022 = vld [vmem:[#allocation3 + $0x97] sm:$0x1]
        %v2023 = vld [vmem:[#allocation3 + $0x99] sm:$0x1]
        %v2024 = vld [vmem:[#allocation3 + $0x9b] sm:$0x1]
        %v2025 = vld [vmem:[#allocation3 + $0x9d] sm:$0x1]
        %v2026 = vld [vmem:[#allocation3 + $0x9f] sm:$0x1]
        %v2027 = vld [vmem:[#allocation3 + $0xb5] sm:$0x1]
        %v2028 = vld [vmem:[#allocation3 + $0xb7] sm:$0x1]
        %v2029 = vld [vmem:[#allocation3 + $0xb9] sm:$0x1]
        %v2030 = vld [vmem:[#allocation3 + $0xbb] sm:$0x1]
        %v2031 = vld [vmem:[#allocation3 + $0xbd] sm:$0x1]
        %v2032 = vld [vmem:[#allocation3 + $0xbf] sm:$0x1]
        %v2033 = vld [vmem:[#allocation3 + $0xc1] sm:$0x1]
        %v2034 = vld [vmem:[#allocation3 + $0xc3] sm:$0x1]
        %v2035 = vld [vmem:[#allocation3 + $0xd9] sm:$0x1]
        %v2036 = vld [vmem:[#allocation3 + $0xdb] sm:$0x1]
        %v2037 = vld [vmem:[#allocation3 + $0xdd] sm:$0x1]
        %v2038 = vld [vmem:[#allocation3 + $0xdf] sm:$0x1]
        %v2039 = vld [vmem:[#allocation3 + $0xe1] sm:$0x1]
        %v2040 = vld [vmem:[#allocation3 + $0xe3] sm:$0x1]
        %v2041 = vld [vmem:[#allocation3 + $0xe5] sm:$0x1]
        %v2042 = vld [vmem:[#allocation3 + $0xe7] sm:$0x1]
        %v2043 = vld [vmem:[#allocation3 + $0xfd] sm:$0x1]
        %v2044 = vld [vmem:[#allocation3 + $0xff] sm:$0x1]
        %v2045 = vld [vmem:[#allocation3 + $0x101] sm:$0x1]
        %v2046 = vld [vmem:[#allocation3 + $0x103] sm:$0x1]
        %v2047 = vld [vmem:[#allocation3 + $0x105] sm:$0x1]
        %v2048 = vld [vmem:[#allocation3 + $0x107] sm:$0x1]
        %v2049 = vld [vmem:[#allocation3 + $0x109] sm:$0x1]
        %v2050 = vld [vmem:[#allocation3 + $0x10b] sm:$0x1]
        %v2051 = vmax.f32 %v1923, %v1987
        %v2052 = vmax.f32 %v1924, %v1988
        %v2053 = vmax.f32 %v1925, %v1989
        %v2054 = vmax.f32 %v1926, %v1990
        %v2055 = vmax.f32 %v1927, %v1991
        %v2056 = vmax.f32 %v1928, %v1992
        %v2057 = vmax.f32 %v1929, %v1993
        %v2058 = vmax.f32 %v1930, %v1994
        %v2059 = vmax.f32 %v1931, %v1995
        %v2060 = vmax.f32 %v1932, %v1996
        %v2061 = vmax.f32 %v1933, %v1997
        %v2062 = vmax.f32 %v1934, %v1998
        %v2063 = vmax.f32 %v1935, %v1999
        %v2064 = vmax.f32 %v1936, %v2000
        %v2065 = vmax.f32 %v1937, %v2001
        %v2066 = vmax.f32 %v1938, %v2002
        %v2067 = vmax.f32 %v1939, %v2003
        %v2068 = vmax.f32 %v1940, %v2004
        %v2069 = vmax.f32 %v1941, %v2005
        %v2070 = vmax.f32 %v1942, %v2006
        %v2071 = vmax.f32 %v1943, %v2007
        %v2072 = vmax.f32 %v1944, %v2008
        %v2073 = vmax.f32 %v1945, %v2009
        %v2074 = vmax.f32 %v1946, %v2010
        %v2075 = vmax.f32 %v1947, %v2011
        %v2076 = vmax.f32 %v1948, %v2012
        %v2077 = vmax.f32 %v1949, %v2013
        %v2078 = vmax.f32 %v1950, %v2014
        %v2079 = vmax.f32 %v1951, %v2015
        %v2080 = vmax.f32 %v1952, %v2016
        %v2081 = vmax.f32 %v1953, %v2017
        %v2082 = vmax.f32 %v1954, %v2018
        %v2083 = vmax.f32 %v1955, %v2019
        %v2084 = vmax.f32 %v1956, %v2020
        %v2085 = vmax.f32 %v1957, %v2021
        %v2086 = vmax.f32 %v1958, %v2022
        %v2087 = vmax.f32 %v1959, %v2023
        %v2088 = vmax.f32 %v1960, %v2024
        %v2089 = vmax.f32 %v1961, %v2025
        %v2090 = vmax.f32 %v1962, %v2026
        %v2091 = vmax.f32 %v1963, %v2027
        %v2092 = vmax.f32 %v1964, %v2028
        %v2093 = vmax.f32 %v1965, %v2029
        %v2094 = vmax.f32 %v1966, %v2030
        %v2095 = vmax.f32 %v1967, %v2031
        %v2096 = vmax.f32 %v1968, %v2032
        %v2097 = vmax.f32 %v1969, %v2033
        %v2098 = vmax.f32 %v1970, %v2034
        %v2099 = vmax.f32 %v1971, %v2035
        %v2100 = vmax.f32 %v1972, %v2036
        %v2101 = vmax.f32 %v1973, %v2037
        %v2102 = vmax.f32 %v1974, %v2038
        %v2103 = vmax.f32 %v1975, %v2039
        %v2104 = vmax.f32 %v1976, %v2040
        %v2105 = vmax.f32 %v1977, %v2041
        %v2106 = vmax.f32 %v1978, %v2042
        %v2107 = vmax.f32 %v1979, %v2043
        %v2108 = vmax.f32 %v1980, %v2044
        %v2109 = vmax.f32 %v1981, %v2045
        %v2110 = vmax.f32 %v1982, %v2046
        %v2111 = vmax.f32 %v1983, %v2047
        %v2112 = vmax.f32 %v1984, %v2048
        %v2113 = vmax.f32 %v1985, %v2049
        %v2114 = vmax.f32 %v1986, %v2050
        %s2115 = scalar_lea.vmem [#allocation3], 2
        %v2116 = vld [vmem:[%s2115] sm:$0x1]
        %v2117 = vld [vmem:[%s2115 + $0x2] sm:$0x1]
        %v2118 = vld [vmem:[%s2115 + $0x4] sm:$0x1]
        %v2119 = vld [vmem:[%s2115 + $0x6] sm:$0x1]
        %v2120 = vld [vmem:[%s2115 + $0x8] sm:$0x1]
        %v2121 = vld [vmem:[%s2115 + $0xa] sm:$0x1]
        %v2122 = vld [vmem:[%s2115 + $0xc] sm:$0x1]
        %v2123 = vld [vmem:[%s2115 + $0xe] sm:$0x1]
        %v2124 = vld [vmem:[%s2115 + $0x24] sm:$0x1]
        %v2125 = vld [vmem:[%s2115 + $0x26] sm:$0x1]
        %v2126 = vld [vmem:[%s2115 + $0x28] sm:$0x1]
        %v2127 = vld [vmem:[%s2115 + $0x2a] sm:$0x1]
        %v2128 = vld [vmem:[%s2115 + $0x2c] sm:$0x1]
        %v2129 = vld [vmem:[%s2115 + $0x2e] sm:$0x1]
        %v2130 = vld [vmem:[%s2115 + $0x30] sm:$0x1]
        %v2131 = vld [vmem:[%s2115 + $0x32] sm:$0x1]
        %v2132 = vld [vmem:[%s2115 + $0x48] sm:$0x1]
        %v2133 = vld [vmem:[%s2115 + $0x4a] sm:$0x1]
        %v2134 = vld [vmem:[%s2115 + $0x4c] sm:$0x1]
        %v2135 = vld [vmem:[%s2115 + $0x4e] sm:$0x1]
        %v2136 = vld [vmem:[%s2115 + $0x50] sm:$0x1]
        %v2137 = vld [vmem:[%s2115 + $0x52] sm:$0x1]
        %v2138 = vld [vmem:[%s2115 + $0x54] sm:$0x1]
        %v2139 = vld [vmem:[%s2115 + $0x56] sm:$0x1]
        %v2140 = vld [vmem:[%s2115 + $0x6c] sm:$0x1]
        %v2141 = vld [vmem:[%s2115 + $0x6e] sm:$0x1]
        %v2142 = vld [vmem:[%s2115 + $0x70] sm:$0x1]
        %v2143 = vld [vmem:[%s2115 + $0x72] sm:$0x1]
        %v2144 = vld [vmem:[%s2115 + $0x74] sm:$0x1]
        %v2145 = vld [vmem:[%s2115 + $0x76] sm:$0x1]
        %v2146 = vld [vmem:[%s2115 + $0x78] sm:$0x1]
        %v2147 = vld [vmem:[%s2115 + $0x7a] sm:$0x1]
        %v2148 = vld [vmem:[%s2115 + $0x90] sm:$0x1]
        %v2149 = vld [vmem:[%s2115 + $0x92] sm:$0x1]
        %v2150 = vld [vmem:[%s2115 + $0x94] sm:$0x1]
        %v2151 = vld [vmem:[%s2115 + $0x96] sm:$0x1]
        %v2152 = vld [vmem:[%s2115 + $0x98] sm:$0x1]
        %v2153 = vld [vmem:[%s2115 + $0x9a] sm:$0x1]
        %v2154 = vld [vmem:[%s2115 + $0x9c] sm:$0x1]
        %v2155 = vld [vmem:[%s2115 + $0x9e] sm:$0x1]
        %v2156 = vld [vmem:[%s2115 + $0xb4] sm:$0x1]
        %v2157 = vld [vmem:[%s2115 + $0xb6] sm:$0x1]
        %v2158 = vld [vmem:[%s2115 + $0xb8] sm:$0x1]
        %v2159 = vld [vmem:[%s2115 + $0xba] sm:$0x1]
        %v2160 = vld [vmem:[%s2115 + $0xbc] sm:$0x1]
        %v2161 = vld [vmem:[%s2115 + $0xbe] sm:$0x1]
        %v2162 = vld [vmem:[%s2115 + $0xc0] sm:$0x1]
        %v2163 = vld [vmem:[%s2115 + $0xc2] sm:$0x1]
        %v2164 = vld [vmem:[%s2115 + $0xd8] sm:$0x1]
        %v2165 = vld [vmem:[%s2115 + $0xda] sm:$0x1]
        %v2166 = vld [vmem:[%s2115 + $0xdc] sm:$0x1]
        %v2167 = vld [vmem:[%s2115 + $0xde] sm:$0x1]
        %v2168 = vld [vmem:[%s2115 + $0xe0] sm:$0x1]
        %v2169 = vld [vmem:[%s2115 + $0xe2] sm:$0x1]
        %v2170 = vld [vmem:[%s2115 + $0xe4] sm:$0x1]
        %v2171 = vld [vmem:[%s2115 + $0xe6] sm:$0x1]
        %v2172 = vld [vmem:[%s2115 + $0xfc] sm:$0x1]
        %v2173 = vld [vmem:[%s2115 + $0xfe] sm:$0x1]
        %v2174 = vld [vmem:[%s2115 + $0x100] sm:$0x1]
        %v2175 = vld [vmem:[%s2115 + $0x102] sm:$0x1]
        %v2176 = vld [vmem:[%s2115 + $0x104] sm:$0x1]
        %v2177 = vld [vmem:[%s2115 + $0x106] sm:$0x1]
        %v2178 = vld [vmem:[%s2115 + $0x108] sm:$0x1]
        %v2179 = vld [vmem:[%s2115 + $0x10a] sm:$0x1]
        %v2180 = vmax.f32 %v2051, %v2116
        %v2181 = vmax.f32 %v2052, %v2117
        %v2182 = vmax.f32 %v2053, %v2118
        %v2183 = vmax.f32 %v2054, %v2119
        %v2184 = vmax.f32 %v2055, %v2120
        %v2185 = vmax.f32 %v2056, %v2121
        %v2186 = vmax.f32 %v2057, %v2122
        %v2187 = vmax.f32 %v2058, %v2123
        %v2188 = vmax.f32 %v2059, %v2124
        %v2189 = vmax.f32 %v2060, %v2125
        %v2190 = vmax.f32 %v2061, %v2126
        %v2191 = vmax.f32 %v2062, %v2127
        %v2192 = vmax.f32 %v2063, %v2128
        %v2193 = vmax.f32 %v2064, %v2129
        %v2194 = vmax.f32 %v2065, %v2130
        %v2195 = vmax.f32 %v2066, %v2131
        %v2196 = vmax.f32 %v2067, %v2132
        %v2197 = vmax.f32 %v2068, %v2133
        %v2198 = vmax.f32 %v2069, %v2134
        %v2199 = vmax.f32 %v2070, %v2135
        %v2200 = vmax.f32 %v2071, %v2136
        %v2201 = vmax.f32 %v2072, %v2137
        %v2202 = vmax.f32 %v2073, %v2138
        %v2203 = vmax.f32 %v2074, %v2139
        %v2204 = vmax.f32 %v2075, %v2140
        %v2205 = vmax.f32 %v2076, %v2141
        %v2206 = vmax.f32 %v2077, %v2142
        %v2207 = vmax.f32 %v2078, %v2143
        %v2208 = vmax.f32 %v2079, %v2144
        %v2209 = vmax.f32 %v2080, %v2145
        %v2210 = vmax.f32 %v2081, %v2146
        %v2211 = vmax.f32 %v2082, %v2147
        %v2212 = vmax.f32 %v2083, %v2148
        %v2213 = vmax.f32 %v2084, %v2149
        %v2214 = vmax.f32 %v2085, %v2150
        %v2215 = vmax.f32 %v2086, %v2151
        %v2216 = vmax.f32 %v2087, %v2152
        %v2217 = vmax.f32 %v2088, %v2153
        %v2218 = vmax.f32 %v2089, %v2154
        %v2219 = vmax.f32 %v2090, %v2155
        %v2220 = vmax.f32 %v2091, %v2156
        %v2221 = vmax.f32 %v2092, %v2157
        %v2222 = vmax.f32 %v2093, %v2158
        %v2223 = vmax.f32 %v2094, %v2159
        %v2224 = vmax.f32 %v2095, %v2160
        %v2225 = vmax.f32 %v2096, %v2161
        %v2226 = vmax.f32 %v2097, %v2162
        %v2227 = vmax.f32 %v2098, %v2163
        %v2228 = vmax.f32 %v2099, %v2164
        %v2229 = vmax.f32 %v2100, %v2165
        %v2230 = vmax.f32 %v2101, %v2166
        %v2231 = vmax.f32 %v2102, %v2167
        %v2232 = vmax.f32 %v2103, %v2168
        %v2233 = vmax.f32 %v2104, %v2169
        %v2234 = vmax.f32 %v2105, %v2170
        %v2235 = vmax.f32 %v2106, %v2171
        %v2236 = vmax.f32 %v2107, %v2172
        %v2237 = vmax.f32 %v2108, %v2173
        %v2238 = vmax.f32 %v2109, %v2174
        %v2239 = vmax.f32 %v2110, %v2175
        %v2240 = vmax.f32 %v2111, %v2176
        %v2241 = vmax.f32 %v2112, %v2177
        %v2242 = vmax.f32 %v2113, %v2178
        %v2243 = vmax.f32 %v2114, %v2179
        %v2244 = vld [vmem:[%s1469] sm:$0x1]
        %v2245 = vld [vmem:[%s1469 + $0x2] sm:$0x1]
        %v2246 = vld [vmem:[%s1469 + $0x4] sm:$0x1]
        %v2247 = vld [vmem:[%s1469 + $0x6] sm:$0x1]
        %v2248 = vld [vmem:[%s1469 + $0x8] sm:$0x1]
        %v2249 = vld [vmem:[%s1469 + $0xa] sm:$0x1]
        %v2250 = vld [vmem:[%s1469 + $0xc] sm:$0x1]
        %v2251 = vld [vmem:[%s1469 + $0xe] sm:$0x1]
        %v2252 = vld [vmem:[%s1469 + $0x24] sm:$0x1]
        %v2253 = vld [vmem:[%s1469 + $0x26] sm:$0x1]
        %v2254 = vld [vmem:[%s1469 + $0x28] sm:$0x1]
        %v2255 = vld [vmem:[%s1469 + $0x2a] sm:$0x1]
        %v2256 = vld [vmem:[%s1469 + $0x2c] sm:$0x1]
        %v2257 = vld [vmem:[%s1469 + $0x2e] sm:$0x1]
        %v2258 = vld [vmem:[%s1469 + $0x30] sm:$0x1]
        %v2259 = vld [vmem:[%s1469 + $0x32] sm:$0x1]
        %v2260 = vld [vmem:[%s1469 + $0x48] sm:$0x1]
        %v2261 = vld [vmem:[%s1469 + $0x4a] sm:$0x1]
        %v2262 = vld [vmem:[%s1469 + $0x4c] sm:$0x1]
        %v2263 = vld [vmem:[%s1469 + $0x4e] sm:$0x1]
        %v2264 = vld [vmem:[%s1469 + $0x50] sm:$0x1]
        %v2265 = vld [vmem:[%s1469 + $0x52] sm:$0x1]
        %v2266 = vld [vmem:[%s1469 + $0x54] sm:$0x1]
        %v2267 = vld [vmem:[%s1469 + $0x56] sm:$0x1]
        %v2268 = vld [vmem:[%s1469 + $0x6c] sm:$0x1]
        %v2269 = vld [vmem:[%s1469 + $0x6e] sm:$0x1]
        %v2270 = vld [vmem:[%s1469 + $0x70] sm:$0x1]
        %v2271 = vld [vmem:[%s1469 + $0x72] sm:$0x1]
        %v2272 = vld [vmem:[%s1469 + $0x74] sm:$0x1]
        %v2273 = vld [vmem:[%s1469 + $0x76] sm:$0x1]
        %v2274 = vld [vmem:[%s1469 + $0x78] sm:$0x1]
        %v2275 = vld [vmem:[%s1469 + $0x7a] sm:$0x1]
        %v2276 = vld [vmem:[%s1469 + $0x90] sm:$0x1]
        %v2277 = vld [vmem:[%s1469 + $0x92] sm:$0x1]
        %v2278 = vld [vmem:[%s1469 + $0x94] sm:$0x1]
        %v2279 = vld [vmem:[%s1469 + $0x96] sm:$0x1]
        %v2280 = vld [vmem:[%s1469 + $0x98] sm:$0x1]
        %v2281 = vld [vmem:[%s1469 + $0x9a] sm:$0x1]
        %v2282 = vld [vmem:[%s1469 + $0x9c] sm:$0x1]
        %v2283 = vld [vmem:[%s1469 + $0x9e] sm:$0x1]
        %v2284 = vld [vmem:[%s1469 + $0xb4] sm:$0x1]
        %v2285 = vld [vmem:[%s1469 + $0xb6] sm:$0x1]
        %v2286 = vld [vmem:[%s1469 + $0xb8] sm:$0x1]
        %v2287 = vld [vmem:[%s1469 + $0xba] sm:$0x1]
        %v2288 = vld [vmem:[%s1469 + $0xbc] sm:$0x1]
        %v2289 = vld [vmem:[%s1469 + $0xbe] sm:$0x1]
        %v2290 = vld [vmem:[%s1469 + $0xc0] sm:$0x1]
        %v2291 = vld [vmem:[%s1469 + $0xc2] sm:$0x1]
        %v2292 = vld [vmem:[%s1469 + $0xd8] sm:$0x1]
        %v2293 = vld [vmem:[%s1469 + $0xda] sm:$0x1]
        %v2294 = vld [vmem:[%s1469 + $0xdc] sm:$0x1]
        %v2295 = vld [vmem:[%s1469 + $0xde] sm:$0x1]
        %v2296 = vld [vmem:[%s1469 + $0xe0] sm:$0x1]
        %v2297 = vld [vmem:[%s1469 + $0xe2] sm:$0x1]
        %v2298 = vld [vmem:[%s1469 + $0xe4] sm:$0x1]
        %v2299 = vld [vmem:[%s1469 + $0xe6] sm:$0x1]
        %v2300 = vld [vmem:[%s1469 + $0xfc] sm:$0x1]
        %v2301 = vld [vmem:[%s1469 + $0xfe] sm:$0x1]
        %v2302 = vld [vmem:[%s1469 + $0x100] sm:$0x1]
        %v2303 = vld [vmem:[%s1469 + $0x102] sm:$0x1]
        %v2304 = vld [vmem:[%s1469 + $0x104] sm:$0x1]
        %v2305 = vld [vmem:[%s1469 + $0x106] sm:$0x1]
        %v2306 = vld [vmem:[%s1469 + $0x108] sm:$0x1]
        %v2307 = vld [vmem:[%s1469 + $0x10a] sm:$0x1]
        %v2308 = vmax.f32 %v2180, %v2244
        %v2309 = vmax.f32 %v2181, %v2245
        %v2310 = vmax.f32 %v2182, %v2246
        %v2311 = vmax.f32 %v2183, %v2247
        %v2312 = vmax.f32 %v2184, %v2248
        %v2313 = vmax.f32 %v2185, %v2249
        %v2314 = vmax.f32 %v2186, %v2250
        %v2315 = vmax.f32 %v2187, %v2251
        %v2316 = vmax.f32 %v2188, %v2252
        %v2317 = vmax.f32 %v2189, %v2253
        %v2318 = vmax.f32 %v2190, %v2254
        %v2319 = vmax.f32 %v2191, %v2255
        %v2320 = vmax.f32 %v2192, %v2256
        %v2321 = vmax.f32 %v2193, %v2257
        %v2322 = vmax.f32 %v2194, %v2258
        %v2323 = vmax.f32 %v2195, %v2259
        %v2324 = vmax.f32 %v2196, %v2260
        %v2325 = vmax.f32 %v2197, %v2261
        %v2326 = vmax.f32 %v2198, %v2262
        %v2327 = vmax.f32 %v2199, %v2263
        %v2328 = vmax.f32 %v2200, %v2264
        %v2329 = vmax.f32 %v2201, %v2265
        %v2330 = vmax.f32 %v2202, %v2266
        %v2331 = vmax.f32 %v2203, %v2267
        %v2332 = vmax.f32 %v2204, %v2268
        %v2333 = vmax.f32 %v2205, %v2269
        %v2334 = vmax.f32 %v2206, %v2270
        %v2335 = vmax.f32 %v2207, %v2271
        %v2336 = vmax.f32 %v2208, %v2272
        %v2337 = vmax.f32 %v2209, %v2273
        %v2338 = vmax.f32 %v2210, %v2274
        %v2339 = vmax.f32 %v2211, %v2275
        %v2340 = vmax.f32 %v2212, %v2276
        %v2341 = vmax.f32 %v2213, %v2277
        %v2342 = vmax.f32 %v2214, %v2278
        %v2343 = vmax.f32 %v2215, %v2279
        %v2344 = vmax.f32 %v2216, %v2280
        %v2345 = vmax.f32 %v2217, %v2281
        %v2346 = vmax.f32 %v2218, %v2282
        %v2347 = vmax.f32 %v2219, %v2283
        %v2348 = vmax.f32 %v2220, %v2284
        %v2349 = vmax.f32 %v2221, %v2285
        %v2350 = vmax.f32 %v2222, %v2286
        %v2351 = vmax.f32 %v2223, %v2287
        %v2352 = vmax.f32 %v2224, %v2288
        %v2353 = vmax.f32 %v2225, %v2289
        %v2354 = vmax.f32 %v2226, %v2290
        %v2355 = vmax.f32 %v2227, %v2291
        %v2356 = vmax.f32 %v2228, %v2292
        %v2357 = vmax.f32 %v2229, %v2293
        %v2358 = vmax.f32 %v2230, %v2294
        %v2359 = vmax.f32 %v2231, %v2295
        %v2360 = vmax.f32 %v2232, %v2296
        %v2361 = vmax.f32 %v2233, %v2297
        %v2362 = vmax.f32 %v2234, %v2298
        %v2363 = vmax.f32 %v2235, %v2299
        %v2364 = vmax.f32 %v2236, %v2300
        %v2365 = vmax.f32 %v2237, %v2301
        %v2366 = vmax.f32 %v2238, %v2302
        %v2367 = vmax.f32 %v2239, %v2303
        %v2368 = vmax.f32 %v2240, %v2304
        %v2369 = vmax.f32 %v2241, %v2305
        %v2370 = vmax.f32 %v2242, %v2306
        %v2371 = vmax.f32 %v2243, %v2307
        %v2372 = vld [vmem:[%s1469 + $0x1] sm:$0x1]
        %v2373 = vld [vmem:[%s1469 + $0x3] sm:$0x1]
        %v2374 = vld [vmem:[%s1469 + $0x5] sm:$0x1]
        %v2375 = vld [vmem:[%s1469 + $0x7] sm:$0x1]
        %v2376 = vld [vmem:[%s1469 + $0x9] sm:$0x1]
        %v2377 = vld [vmem:[%s1469 + $0xb] sm:$0x1]
        %v2378 = vld [vmem:[%s1469 + $0xd] sm:$0x1]
        %v2379 = vld [vmem:[%s1469 + $0xf] sm:$0x1]
        %v2380 = vld [vmem:[%s1469 + $0x25] sm:$0x1]
        %v2381 = vld [vmem:[%s1469 + $0x27] sm:$0x1]
        %v2382 = vld [vmem:[%s1469 + $0x29] sm:$0x1]
        %v2383 = vld [vmem:[%s1469 + $0x2b] sm:$0x1]
        %v2384 = vld [vmem:[%s1469 + $0x2d] sm:$0x1]
        %v2385 = vld [vmem:[%s1469 + $0x2f] sm:$0x1]
        %v2386 = vld [vmem:[%s1469 + $0x31] sm:$0x1]
        %v2387 = vld [vmem:[%s1469 + $0x33] sm:$0x1]
        %v2388 = vld [vmem:[%s1469 + $0x49] sm:$0x1]
        %v2389 = vld [vmem:[%s1469 + $0x4b] sm:$0x1]
        %v2390 = vld [vmem:[%s1469 + $0x4d] sm:$0x1]
        %v2391 = vld [vmem:[%s1469 + $0x4f] sm:$0x1]
        %v2392 = vld [vmem:[%s1469 + $0x51] sm:$0x1]
        %v2393 = vld [vmem:[%s1469 + $0x53] sm:$0x1]
        %v2394 = vld [vmem:[%s1469 + $0x55] sm:$0x1]
        %v2395 = vld [vmem:[%s1469 + $0x57] sm:$0x1]
        %v2396 = vld [vmem:[%s1469 + $0x6d] sm:$0x1]
        %v2397 = vld [vmem:[%s1469 + $0x6f] sm:$0x1]
        %v2398 = vld [vmem:[%s1469 + $0x71] sm:$0x1]
        %v2399 = vld [vmem:[%s1469 + $0x73] sm:$0x1]
        %v2400 = vld [vmem:[%s1469 + $0x75] sm:$0x1]
        %v2401 = vld [vmem:[%s1469 + $0x77] sm:$0x1]
        %v2402 = vld [vmem:[%s1469 + $0x79] sm:$0x1]
        %v2403 = vld [vmem:[%s1469 + $0x7b] sm:$0x1]
        %v2404 = vld [vmem:[%s1469 + $0x91] sm:$0x1]
        %v2405 = vld [vmem:[%s1469 + $0x93] sm:$0x1]
        %v2406 = vld [vmem:[%s1469 + $0x95] sm:$0x1]
        %v2407 = vld [vmem:[%s1469 + $0x97] sm:$0x1]
        %v2408 = vld [vmem:[%s1469 + $0x99] sm:$0x1]
        %v2409 = vld [vmem:[%s1469 + $0x9b] sm:$0x1]
        %v2410 = vld [vmem:[%s1469 + $0x9d] sm:$0x1]
        %v2411 = vld [vmem:[%s1469 + $0x9f] sm:$0x1]
        %v2412 = vld [vmem:[%s1469 + $0xb5] sm:$0x1]
        %v2413 = vld [vmem:[%s1469 + $0xb7] sm:$0x1]
        %v2414 = vld [vmem:[%s1469 + $0xb9] sm:$0x1]
        %v2415 = vld [vmem:[%s1469 + $0xbb] sm:$0x1]
        %v2416 = vld [vmem:[%s1469 + $0xbd] sm:$0x1]
        %v2417 = vld [vmem:[%s1469 + $0xbf] sm:$0x1]
        %v2418 = vld [vmem:[%s1469 + $0xc1] sm:$0x1]
        %v2419 = vld [vmem:[%s1469 + $0xc3] sm:$0x1]
        %v2420 = vld [vmem:[%s1469 + $0xd9] sm:$0x1]
        %v2421 = vld [vmem:[%s1469 + $0xdb] sm:$0x1]
        %v2422 = vld [vmem:[%s1469 + $0xdd] sm:$0x1]
        %v2423 = vld [vmem:[%s1469 + $0xdf] sm:$0x1]
        %v2424 = vld [vmem:[%s1469 + $0xe1] sm:$0x1]
        %v2425 = vld [vmem:[%s1469 + $0xe3] sm:$0x1]
        %v2426 = vld [vmem:[%s1469 + $0xe5] sm:$0x1]
        %v2427 = vld [vmem:[%s1469 + $0xe7] sm:$0x1]
        %v2428 = vld [vmem:[%s1469 + $0xfd] sm:$0x1]
        %v2429 = vld [vmem:[%s1469 + $0xff] sm:$0x1]
        %v2430 = vld [vmem:[%s1469 + $0x101] sm:$0x1]
        %v2431 = vld [vmem:[%s1469 + $0x103] sm:$0x1]
        %v2432 = vld [vmem:[%s1469 + $0x105] sm:$0x1]
        %v2433 = vld [vmem:[%s1469 + $0x107] sm:$0x1]
        %v2434 = vld [vmem:[%s1469 + $0x109] sm:$0x1]
        %v2435 = vld [vmem:[%s1469 + $0x10b] sm:$0x1]
        %v2436 = vmax.f32 %v2308, %v2372
        %v2437 = vmax.f32 %v2309, %v2373
        %v2438 = vmax.f32 %v2310, %v2374
        %v2439 = vmax.f32 %v2311, %v2375
        %v2440 = vmax.f32 %v2312, %v2376
        %v2441 = vmax.f32 %v2313, %v2377
        %v2442 = vmax.f32 %v2314, %v2378
        %v2443 = vmax.f32 %v2315, %v2379
        %v2444 = vmax.f32 %v2316, %v2380
        %v2445 = vmax.f32 %v2317, %v2381
        %v2446 = vmax.f32 %v2318, %v2382
        %v2447 = vmax.f32 %v2319, %v2383
        %v2448 = vmax.f32 %v2320, %v2384
        %v2449 = vmax.f32 %v2321, %v2385
        %v2450 = vmax.f32 %v2322, %v2386
        %v2451 = vmax.f32 %v2323, %v2387
        %v2452 = vmax.f32 %v2324, %v2388
        %v2453 = vmax.f32 %v2325, %v2389
        %v2454 = vmax.f32 %v2326, %v2390
        %v2455 = vmax.f32 %v2327, %v2391
        %v2456 = vmax.f32 %v2328, %v2392
        %v2457 = vmax.f32 %v2329, %v2393
        %v2458 = vmax.f32 %v2330, %v2394
        %v2459 = vmax.f32 %v2331, %v2395
        %v2460 = vmax.f32 %v2332, %v2396
        %v2461 = vmax.f32 %v2333, %v2397
        %v2462 = vmax.f32 %v2334, %v2398
        %v2463 = vmax.f32 %v2335, %v2399
        %v2464 = vmax.f32 %v2336, %v2400
        %v2465 = vmax.f32 %v2337, %v2401
        %v2466 = vmax.f32 %v2338, %v2402
        %v2467 = vmax.f32 %v2339, %v2403
        %v2468 = vmax.f32 %v2340, %v2404
        %v2469 = vmax.f32 %v2341, %v2405
        %v2470 = vmax.f32 %v2342, %v2406
        %v2471 = vmax.f32 %v2343, %v2407
        %v2472 = vmax.f32 %v2344, %v2408
        %v2473 = vmax.f32 %v2345, %v2409
        %v2474 = vmax.f32 %v2346, %v2410
        %v2475 = vmax.f32 %v2347, %v2411
        %v2476 = vmax.f32 %v2348, %v2412
        %v2477 = vmax.f32 %v2349, %v2413
        %v2478 = vmax.f32 %v2350, %v2414
        %v2479 = vmax.f32 %v2351, %v2415
        %v2480 = vmax.f32 %v2352, %v2416
        %v2481 = vmax.f32 %v2353, %v2417
        %v2482 = vmax.f32 %v2354, %v2418
        %v2483 = vmax.f32 %v2355, %v2419
        %v2484 = vmax.f32 %v2356, %v2420
        %v2485 = vmax.f32 %v2357, %v2421
        %v2486 = vmax.f32 %v2358, %v2422
        %v2487 = vmax.f32 %v2359, %v2423
        %v2488 = vmax.f32 %v2360, %v2424
        %v2489 = vmax.f32 %v2361, %v2425
        %v2490 = vmax.f32 %v2362, %v2426
        %v2491 = vmax.f32 %v2363, %v2427
        %v2492 = vmax.f32 %v2364, %v2428
        %v2493 = vmax.f32 %v2365, %v2429
        %v2494 = vmax.f32 %v2366, %v2430
        %v2495 = vmax.f32 %v2367, %v2431
        %v2496 = vmax.f32 %v2368, %v2432
        %v2497 = vmax.f32 %v2369, %v2433
        %v2498 = vmax.f32 %v2370, %v2434
        %v2499 = vmax.f32 %v2371, %v2435
        %v2500 = vld [vmem:[%s1599] sm:$0x1]
        %v2501 = vld [vmem:[%s1599 + $0x2] sm:$0x1]
        %v2502 = vld [vmem:[%s1599 + $0x4] sm:$0x1]
        %v2503 = vld [vmem:[%s1599 + $0x6] sm:$0x1]
        %v2504 = vld [vmem:[%s1599 + $0x8] sm:$0x1]
        %v2505 = vld [vmem:[%s1599 + $0xa] sm:$0x1]
        %v2506 = vld [vmem:[%s1599 + $0xc] sm:$0x1]
        %v2507 = vld [vmem:[%s1599 + $0xe] sm:$0x1]
        %v2508 = vld [vmem:[%s1599 + $0x24] sm:$0x1]
        %v2509 = vld [vmem:[%s1599 + $0x26] sm:$0x1]
        %v2510 = vld [vmem:[%s1599 + $0x28] sm:$0x1]
        %v2511 = vld [vmem:[%s1599 + $0x2a] sm:$0x1]
        %v2512 = vld [vmem:[%s1599 + $0x2c] sm:$0x1]
        %v2513 = vld [vmem:[%s1599 + $0x2e] sm:$0x1]
        %v2514 = vld [vmem:[%s1599 + $0x30] sm:$0x1]
        %v2515 = vld [vmem:[%s1599 + $0x32] sm:$0x1]
        %v2516 = vld [vmem:[%s1599 + $0x48] sm:$0x1]
        %v2517 = vld [vmem:[%s1599 + $0x4a] sm:$0x1]
        %v2518 = vld [vmem:[%s1599 + $0x4c] sm:$0x1]
        %v2519 = vld [vmem:[%s1599 + $0x4e] sm:$0x1]
        %v2520 = vld [vmem:[%s1599 + $0x50] sm:$0x1]
        %v2521 = vld [vmem:[%s1599 + $0x52] sm:$0x1]
        %v2522 = vld [vmem:[%s1599 + $0x54] sm:$0x1]
        %v2523 = vld [vmem:[%s1599 + $0x56] sm:$0x1]
        %v2524 = vld [vmem:[%s1599 + $0x6c] sm:$0x1]
        %v2525 = vld [vmem:[%s1599 + $0x6e] sm:$0x1]
        %v2526 = vld [vmem:[%s1599 + $0x70] sm:$0x1]
        %v2527 = vld [vmem:[%s1599 + $0x72] sm:$0x1]
        %v2528 = vld [vmem:[%s1599 + $0x74] sm:$0x1]
        %v2529 = vld [vmem:[%s1599 + $0x76] sm:$0x1]
        %v2530 = vld [vmem:[%s1599 + $0x78] sm:$0x1]
        %v2531 = vld [vmem:[%s1599 + $0x7a] sm:$0x1]
        %v2532 = vld [vmem:[%s1599 + $0x90] sm:$0x1]
        %v2533 = vld [vmem:[%s1599 + $0x92] sm:$0x1]
        %v2534 = vld [vmem:[%s1599 + $0x94] sm:$0x1]
        %v2535 = vld [vmem:[%s1599 + $0x96] sm:$0x1]
        %v2536 = vld [vmem:[%s1599 + $0x98] sm:$0x1]
        %v2537 = vld [vmem:[%s1599 + $0x9a] sm:$0x1]
        %v2538 = vld [vmem:[%s1599 + $0x9c] sm:$0x1]
        %v2539 = vld [vmem:[%s1599 + $0x9e] sm:$0x1]
        %v2540 = vld [vmem:[%s1599 + $0xb4] sm:$0x1]
        %v2541 = vld [vmem:[%s1599 + $0xb6] sm:$0x1]
        %v2542 = vld [vmem:[%s1599 + $0xb8] sm:$0x1]
        %v2543 = vld [vmem:[%s1599 + $0xba] sm:$0x1]
        %v2544 = vld [vmem:[%s1599 + $0xbc] sm:$0x1]
        %v2545 = vld [vmem:[%s1599 + $0xbe] sm:$0x1]
        %v2546 = vld [vmem:[%s1599 + $0xc0] sm:$0x1]
        %v2547 = vld [vmem:[%s1599 + $0xc2] sm:$0x1]
        %v2548 = vld [vmem:[%s1599 + $0xd8] sm:$0x1]
        %v2549 = vld [vmem:[%s1599 + $0xda] sm:$0x1]
        %v2550 = vld [vmem:[%s1599 + $0xdc] sm:$0x1]
        %v2551 = vld [vmem:[%s1599 + $0xde] sm:$0x1]
        %v2552 = vld [vmem:[%s1599 + $0xe0] sm:$0x1]
        %v2553 = vld [vmem:[%s1599 + $0xe2] sm:$0x1]
        %v2554 = vld [vmem:[%s1599 + $0xe4] sm:$0x1]
        %v2555 = vld [vmem:[%s1599 + $0xe6] sm:$0x1]
        %v2556 = vld [vmem:[%s1599 + $0xfc] sm:$0x1]
        %v2557 = vld [vmem:[%s1599 + $0xfe] sm:$0x1]
        %v2558 = vld [vmem:[%s1599 + $0x100] sm:$0x1]
        %v2559 = vld [vmem:[%s1599 + $0x102] sm:$0x1]
        %v2560 = vld [vmem:[%s1599 + $0x104] sm:$0x1]
        %v2561 = vld [vmem:[%s1599 + $0x106] sm:$0x1]
        %v2562 = vld [vmem:[%s1599 + $0x108] sm:$0x1]
        %v2563 = vld [vmem:[%s1599 + $0x10a] sm:$0x1]
        %v2564 = vmax.f32 %v2436, %v2500
        %v2565 = vmax.f32 %v2437, %v2501
        %v2566 = vmax.f32 %v2438, %v2502
        %v2567 = vmax.f32 %v2439, %v2503
        %v2568 = vmax.f32 %v2440, %v2504
        %v2569 = vmax.f32 %v2441, %v2505
        %v2570 = vmax.f32 %v2442, %v2506
        %v2571 = vmax.f32 %v2443, %v2507
        %v2572 = vmax.f32 %v2444, %v2508
        %v2573 = vmax.f32 %v2445, %v2509
        %v2574 = vmax.f32 %v2446, %v2510
        %v2575 = vmax.f32 %v2447, %v2511
        %v2576 = vmax.f32 %v2448, %v2512
        %v2577 = vmax.f32 %v2449, %v2513
        %v2578 = vmax.f32 %v2450, %v2514
        %v2579 = vmax.f32 %v2451, %v2515
        %v2580 = vmax.f32 %v2452, %v2516
        %v2581 = vmax.f32 %v2453, %v2517
        %v2582 = vmax.f32 %v2454, %v2518
        %v2583 = vmax.f32 %v2455, %v2519
        %v2584 = vmax.f32 %v2456, %v2520
        %v2585 = vmax.f32 %v2457, %v2521
        %v2586 = vmax.f32 %v2458, %v2522
        %v2587 = vmax.f32 %v2459, %v2523
        %v2588 = vmax.f32 %v2460, %v2524
        %v2589 = vmax.f32 %v2461, %v2525
        %v2590 = vmax.f32 %v2462, %v2526
        %v2591 = vmax.f32 %v2463, %v2527
        %v2592 = vmax.f32 %v2464, %v2528
        %v2593 = vmax.f32 %v2465, %v2529
        %v2594 = vmax.f32 %v2466, %v2530
        %v2595 = vmax.f32 %v2467, %v2531
        %v2596 = vmax.f32 %v2468, %v2532
        %v2597 = vmax.f32 %v2469, %v2533
        %v2598 = vmax.f32 %v2470, %v2534
        %v2599 = vmax.f32 %v2471, %v2535
        %v2600 = vmax.f32 %v2472, %v2536
        %v2601 = vmax.f32 %v2473, %v2537
        %v2602 = vmax.f32 %v2474, %v2538
        %v2603 = vmax.f32 %v2475, %v2539
        %v2604 = vmax.f32 %v2476, %v2540
        %v2605 = vmax.f32 %v2477, %v2541
        %v2606 = vmax.f32 %v2478, %v2542
        %v2607 = vmax.f32 %v2479, %v2543
        %v2608 = vmax.f32 %v2480, %v2544
        %v2609 = vmax.f32 %v2481, %v2545
        %v2610 = vmax.f32 %v2482, %v2546
        %v2611 = vmax.f32 %v2483, %v2547
        %v2612 = vmax.f32 %v2484, %v2548
        %v2613 = vmax.f32 %v2485, %v2549
        %v2614 = vmax.f32 %v2486, %v2550
        %v2615 = vmax.f32 %v2487, %v2551
        %v2616 = vmax.f32 %v2488, %v2552
        %v2617 = vmax.f32 %v2489, %v2553
        %v2618 = vmax.f32 %v2490, %v2554
        %v2619 = vmax.f32 %v2491, %v2555
        %v2620 = vmax.f32 %v2492, %v2556
        %v2621 = vmax.f32 %v2493, %v2557
        %v2622 = vmax.f32 %v2494, %v2558
        %v2623 = vmax.f32 %v2495, %v2559
        %v2624 = vmax.f32 %v2496, %v2560
        %v2625 = vmax.f32 %v2497, %v2561
        %v2626 = vmax.f32 %v2498, %v2562
        %v2627 = vmax.f32 %v2499, %v2563
        %v2628 = vld [vmem:[%s1729] sm:$0x1]
        %v2629 = vld [vmem:[%s1729 + $0x2] sm:$0x1]
        %v2630 = vld [vmem:[%s1729 + $0x4] sm:$0x1]
        %v2631 = vld [vmem:[%s1729 + $0x6] sm:$0x1]
        %v2632 = vld [vmem:[%s1729 + $0x8] sm:$0x1]
        %v2633 = vld [vmem:[%s1729 + $0xa] sm:$0x1]
        %v2634 = vld [vmem:[%s1729 + $0xc] sm:$0x1]
        %v2635 = vld [vmem:[%s1729 + $0xe] sm:$0x1]
        %v2636 = vld [vmem:[%s1729 + $0x24] sm:$0x1]
        %v2637 = vld [vmem:[%s1729 + $0x26] sm:$0x1]
        %v2638 = vld [vmem:[%s1729 + $0x28] sm:$0x1]
        %v2639 = vld [vmem:[%s1729 + $0x2a] sm:$0x1]
        %v2640 = vld [vmem:[%s1729 + $0x2c] sm:$0x1]
        %v2641 = vld [vmem:[%s1729 + $0x2e] sm:$0x1]
        %v2642 = vld [vmem:[%s1729 + $0x30] sm:$0x1]
        %v2643 = vld [vmem:[%s1729 + $0x32] sm:$0x1]
        %v2644 = vld [vmem:[%s1729 + $0x48] sm:$0x1]
        %v2645 = vld [vmem:[%s1729 + $0x4a] sm:$0x1]
        %v2646 = vld [vmem:[%s1729 + $0x4c] sm:$0x1]
        %v2647 = vld [vmem:[%s1729 + $0x4e] sm:$0x1]
        %v2648 = vld [vmem:[%s1729 + $0x50] sm:$0x1]
        %v2649 = vld [vmem:[%s1729 + $0x52] sm:$0x1]
        %v2650 = vld [vmem:[%s1729 + $0x54] sm:$0x1]
        %v2651 = vld [vmem:[%s1729 + $0x56] sm:$0x1]
        %v2652 = vld [vmem:[%s1729 + $0x6c] sm:$0x1]
        %v2653 = vld [vmem:[%s1729 + $0x6e] sm:$0x1]
        %v2654 = vld [vmem:[%s1729 + $0x70] sm:$0x1]
        %v2655 = vld [vmem:[%s1729 + $0x72] sm:$0x1]
        %v2656 = vld [vmem:[%s1729 + $0x74] sm:$0x1]
        %v2657 = vld [vmem:[%s1729 + $0x76] sm:$0x1]
        %v2658 = vld [vmem:[%s1729 + $0x78] sm:$0x1]
        %v2659 = vld [vmem:[%s1729 + $0x7a] sm:$0x1]
        %v2660 = vld [vmem:[%s1729 + $0x90] sm:$0x1]
        %v2661 = vld [vmem:[%s1729 + $0x92] sm:$0x1]
        %v2662 = vld [vmem:[%s1729 + $0x94] sm:$0x1]
        %v2663 = vld [vmem:[%s1729 + $0x96] sm:$0x1]
        %v2664 = vld [vmem:[%s1729 + $0x98] sm:$0x1]
        %v2665 = vld [vmem:[%s1729 + $0x9a] sm:$0x1]
        %v2666 = vld [vmem:[%s1729 + $0x9c] sm:$0x1]
        %v2667 = vld [vmem:[%s1729 + $0x9e] sm:$0x1]
        %v2668 = vld [vmem:[%s1729 + $0xb4] sm:$0x1]
        %v2669 = vld [vmem:[%s1729 + $0xb6] sm:$0x1]
        %v2670 = vld [vmem:[%s1729 + $0xb8] sm:$0x1]
        %v2671 = vld [vmem:[%s1729 + $0xba] sm:$0x1]
        %v2672 = vld [vmem:[%s1729 + $0xbc] sm:$0x1]
        %v2673 = vld [vmem:[%s1729 + $0xbe] sm:$0x1]
        %v2674 = vld [vmem:[%s1729 + $0xc0] sm:$0x1]
        %v2675 = vld [vmem:[%s1729 + $0xc2] sm:$0x1]
        %v2676 = vld [vmem:[%s1729 + $0xd8] sm:$0x1]
        %v2677 = vld [vmem:[%s1729 + $0xda] sm:$0x1]
        %v2678 = vld [vmem:[%s1729 + $0xdc] sm:$0x1]
        %v2679 = vld [vmem:[%s1729 + $0xde] sm:$0x1]
        %v2680 = vld [vmem:[%s1729 + $0xe0] sm:$0x1]
        %v2681 = vld [vmem:[%s1729 + $0xe2] sm:$0x1]
        %v2682 = vld [vmem:[%s1729 + $0xe4] sm:$0x1]
        %v2683 = vld [vmem:[%s1729 + $0xe6] sm:$0x1]
        %v2684 = vld [vmem:[%s1729 + $0xfc] sm:$0x1]
        %v2685 = vld [vmem:[%s1729 + $0xfe] sm:$0x1]
        %v2686 = vld [vmem:[%s1729 + $0x100] sm:$0x1]
        %v2687 = vld [vmem:[%s1729 + $0x102] sm:$0x1]
        %v2688 = vld [vmem:[%s1729 + $0x104] sm:$0x1]
        %v2689 = vld [vmem:[%s1729 + $0x106] sm:$0x1]
        %v2690 = vld [vmem:[%s1729 + $0x108] sm:$0x1]
        %v2691 = vld [vmem:[%s1729 + $0x10a] sm:$0x1]
        %v2692 = vmax.f32 %v2564, %v2628
        %v2693 = vmax.f32 %v2565, %v2629
        %v2694 = vmax.f32 %v2566, %v2630
        %v2695 = vmax.f32 %v2567, %v2631
        %v2696 = vmax.f32 %v2568, %v2632
        %v2697 = vmax.f32 %v2569, %v2633
        %v2698 = vmax.f32 %v2570, %v2634
        %v2699 = vmax.f32 %v2571, %v2635
        %v2700 = vmax.f32 %v2572, %v2636
        %v2701 = vmax.f32 %v2573, %v2637
        %v2702 = vmax.f32 %v2574, %v2638
        %v2703 = vmax.f32 %v2575, %v2639
        %v2704 = vmax.f32 %v2576, %v2640
        %v2705 = vmax.f32 %v2577, %v2641
        %v2706 = vmax.f32 %v2578, %v2642
        %v2707 = vmax.f32 %v2579, %v2643
        %v2708 = vmax.f32 %v2580, %v2644
        %v2709 = vmax.f32 %v2581, %v2645
        %v2710 = vmax.f32 %v2582, %v2646
        %v2711 = vmax.f32 %v2583, %v2647
        %v2712 = vmax.f32 %v2584, %v2648
        %v2713 = vmax.f32 %v2585, %v2649
        %v2714 = vmax.f32 %v2586, %v2650
        %v2715 = vmax.f32 %v2587, %v2651
        %v2716 = vmax.f32 %v2588, %v2652
        %v2717 = vmax.f32 %v2589, %v2653
        %v2718 = vmax.f32 %v2590, %v2654
        %v2719 = vmax.f32 %v2591, %v2655
        %v2720 = vmax.f32 %v2592, %v2656
        %v2721 = vmax.f32 %v2593, %v2657
        %v2722 = vmax.f32 %v2594, %v2658
        %v2723 = vmax.f32 %v2595, %v2659
        %v2724 = vmax.f32 %v2596, %v2660
        %v2725 = vmax.f32 %v2597, %v2661
        %v2726 = vmax.f32 %v2598, %v2662
        %v2727 = vmax.f32 %v2599, %v2663
        %v2728 = vmax.f32 %v2600, %v2664
        %v2729 = vmax.f32 %v2601, %v2665
        %v2730 = vmax.f32 %v2602, %v2666
        %v2731 = vmax.f32 %v2603, %v2667
        %v2732 = vmax.f32 %v2604, %v2668
        %v2733 = vmax.f32 %v2605, %v2669
        %v2734 = vmax.f32 %v2606, %v2670
        %v2735 = vmax.f32 %v2607, %v2671
        %v2736 = vmax.f32 %v2608, %v2672
        %v2737 = vmax.f32 %v2609, %v2673
        %v2738 = vmax.f32 %v2610, %v2674
        %v2739 = vmax.f32 %v2611, %v2675
        %v2740 = vmax.f32 %v2612, %v2676
        %v2741 = vmax.f32 %v2613, %v2677
        %v2742 = vmax.f32 %v2614, %v2678
        %v2743 = vmax.f32 %v2615, %v2679
        %v2744 = vmax.f32 %v2616, %v2680
        %v2745 = vmax.f32 %v2617, %v2681
        %v2746 = vmax.f32 %v2618, %v2682
        %v2747 = vmax.f32 %v2619, %v2683
        %v2748 = vmax.f32 %v2620, %v2684
        %v2749 = vmax.f32 %v2621, %v2685
        %v2750 = vmax.f32 %v2622, %v2686
        %v2751 = vmax.f32 %v2623, %v2687
        %v2752 = vmax.f32 %v2624, %v2688
        %v2753 = vmax.f32 %v2625, %v2689
        %v2754 = vmax.f32 %v2626, %v2690
        %v2755 = vmax.f32 %v2627, %v2691
        %v2756 = vld [vmem:[%s1729 + $0x1] sm:$0x1]
        %v2757 = vld [vmem:[%s1729 + $0x3] sm:$0x1]
        %v2758 = vld [vmem:[%s1729 + $0x5] sm:$0x1]
        %v2759 = vld [vmem:[%s1729 + $0x7] sm:$0x1]
        %v2760 = vld [vmem:[%s1729 + $0x9] sm:$0x1]
        %v2761 = vld [vmem:[%s1729 + $0xb] sm:$0x1]
        %v2762 = vld [vmem:[%s1729 + $0xd] sm:$0x1]
        %v2763 = vld [vmem:[%s1729 + $0xf] sm:$0x1]
        %v2764 = vld [vmem:[%s1729 + $0x25] sm:$0x1]
        %v2765 = vld [vmem:[%s1729 + $0x27] sm:$0x1]
        %v2766 = vld [vmem:[%s1729 + $0x29] sm:$0x1]
        %v2767 = vld [vmem:[%s1729 + $0x2b] sm:$0x1]
        %v2768 = vld [vmem:[%s1729 + $0x2d] sm:$0x1]
        %v2769 = vld [vmem:[%s1729 + $0x2f] sm:$0x1]
        %v2770 = vld [vmem:[%s1729 + $0x31] sm:$0x1]
        %v2771 = vld [vmem:[%s1729 + $0x33] sm:$0x1]
        %v2772 = vld [vmem:[%s1729 + $0x49] sm:$0x1]
        %v2773 = vld [vmem:[%s1729 + $0x4b] sm:$0x1]
        %v2774 = vld [vmem:[%s1729 + $0x4d] sm:$0x1]
        %v2775 = vld [vmem:[%s1729 + $0x4f] sm:$0x1]
        %v2776 = vld [vmem:[%s1729 + $0x51] sm:$0x1]
        %v2777 = vld [vmem:[%s1729 + $0x53] sm:$0x1]
        %v2778 = vld [vmem:[%s1729 + $0x55] sm:$0x1]
        %v2779 = vld [vmem:[%s1729 + $0x57] sm:$0x1]
        %v2780 = vld [vmem:[%s1729 + $0x6d] sm:$0x1]
        %v2781 = vld [vmem:[%s1729 + $0x6f] sm:$0x1]
        %v2782 = vld [vmem:[%s1729 + $0x71] sm:$0x1]
        %v2783 = vld [vmem:[%s1729 + $0x73] sm:$0x1]
        %v2784 = vld [vmem:[%s1729 + $0x75] sm:$0x1]
        %v2785 = vld [vmem:[%s1729 + $0x77] sm:$0x1]
        %v2786 = vld [vmem:[%s1729 + $0x79] sm:$0x1]
        %v2787 = vld [vmem:[%s1729 + $0x7b] sm:$0x1]
        %v2788 = vld [vmem:[%s1729 + $0x91] sm:$0x1]
        %v2789 = vld [vmem:[%s1729 + $0x93] sm:$0x1]
        %v2790 = vld [vmem:[%s1729 + $0x95] sm:$0x1]
        %v2791 = vld [vmem:[%s1729 + $0x97] sm:$0x1]
        %v2792 = vld [vmem:[%s1729 + $0x99] sm:$0x1]
        %v2793 = vld [vmem:[%s1729 + $0x9b] sm:$0x1]
        %v2794 = vld [vmem:[%s1729 + $0x9d] sm:$0x1]
        %v2795 = vld [vmem:[%s1729 + $0x9f] sm:$0x1]
        %v2796 = vld [vmem:[%s1729 + $0xb5] sm:$0x1]
        %v2797 = vld [vmem:[%s1729 + $0xb7] sm:$0x1]
        %v2798 = vld [vmem:[%s1729 + $0xb9] sm:$0x1]
        %v2799 = vld [vmem:[%s1729 + $0xbb] sm:$0x1]
        %v2800 = vld [vmem:[%s1729 + $0xbd] sm:$0x1]
        %v2801 = vld [vmem:[%s1729 + $0xbf] sm:$0x1]
        %v2802 = vld [vmem:[%s1729 + $0xc1] sm:$0x1]
        %v2803 = vld [vmem:[%s1729 + $0xc3] sm:$0x1]
        %v2804 = vld [vmem:[%s1729 + $0xd9] sm:$0x1]
        %v2805 = vld [vmem:[%s1729 + $0xdb] sm:$0x1]
        %v2806 = vld [vmem:[%s1729 + $0xdd] sm:$0x1]
        %v2807 = vld [vmem:[%s1729 + $0xdf] sm:$0x1]
        %v2808 = vld [vmem:[%s1729 + $0xe1] sm:$0x1]
        %v2809 = vld [vmem:[%s1729 + $0xe3] sm:$0x1]
        %v2810 = vld [vmem:[%s1729 + $0xe5] sm:$0x1]
        %v2811 = vld [vmem:[%s1729 + $0xe7] sm:$0x1]
        %v2812 = vld [vmem:[%s1729 + $0xfd] sm:$0x1]
        %v2813 = vld [vmem:[%s1729 + $0xff] sm:$0x1]
        %v2814 = vld [vmem:[%s1729 + $0x101] sm:$0x1]
        %v2815 = vld [vmem:[%s1729 + $0x103] sm:$0x1]
        %v2816 = vld [vmem:[%s1729 + $0x105] sm:$0x1]
        %v2817 = vld [vmem:[%s1729 + $0x107] sm:$0x1]
        %v2818 = vld [vmem:[%s1729 + $0x109] sm:$0x1]
        %v2819 = vld [vmem:[%s1729 + $0x10b] sm:$0x1]
        %v2820 = vmax.f32 %v2692, %v2756
        %v2821 = vmax.f32 %v2693, %v2757
        %v2822 = vmax.f32 %v2694, %v2758
        %v2823 = vmax.f32 %v2695, %v2759
        %v2824 = vmax.f32 %v2696, %v2760
        %v2825 = vmax.f32 %v2697, %v2761
        %v2826 = vmax.f32 %v2698, %v2762
        %v2827 = vmax.f32 %v2699, %v2763
        %v2828 = vmax.f32 %v2700, %v2764
        %v2829 = vmax.f32 %v2701, %v2765
        %v2830 = vmax.f32 %v2702, %v2766
        %v2831 = vmax.f32 %v2703, %v2767
        %v2832 = vmax.f32 %v2704, %v2768
        %v2833 = vmax.f32 %v2705, %v2769
        %v2834 = vmax.f32 %v2706, %v2770
        %v2835 = vmax.f32 %v2707, %v2771
        %v2836 = vmax.f32 %v2708, %v2772
        %v2837 = vmax.f32 %v2709, %v2773
        %v2838 = vmax.f32 %v2710, %v2774
        %v2839 = vmax.f32 %v2711, %v2775
        %v2840 = vmax.f32 %v2712, %v2776
        %v2841 = vmax.f32 %v2713, %v2777
        %v2842 = vmax.f32 %v2714, %v2778
        %v2843 = vmax.f32 %v2715, %v2779
        %v2844 = vmax.f32 %v2716, %v2780
        %v2845 = vmax.f32 %v2717, %v2781
        %v2846 = vmax.f32 %v2718, %v2782
        %v2847 = vmax.f32 %v2719, %v2783
        %v2848 = vmax.f32 %v2720, %v2784
        %v2849 = vmax.f32 %v2721, %v2785
        %v2850 = vmax.f32 %v2722, %v2786
        %v2851 = vmax.f32 %v2723, %v2787
        %v2852 = vmax.f32 %v2724, %v2788
        %v2853 = vmax.f32 %v2725, %v2789
        %v2854 = vmax.f32 %v2726, %v2790
        %v2855 = vmax.f32 %v2727, %v2791
        %v2856 = vmax.f32 %v2728, %v2792
        %v2857 = vmax.f32 %v2729, %v2793
        %v2858 = vmax.f32 %v2730, %v2794
        %v2859 = vmax.f32 %v2731, %v2795
        %v2860 = vmax.f32 %v2732, %v2796
        %v2861 = vmax.f32 %v2733, %v2797
        %v2862 = vmax.f32 %v2734, %v2798
        %v2863 = vmax.f32 %v2735, %v2799
        %v2864 = vmax.f32 %v2736, %v2800
        %v2865 = vmax.f32 %v2737, %v2801
        %v2866 = vmax.f32 %v2738, %v2802
        %v2867 = vmax.f32 %v2739, %v2803
        %v2868 = vmax.f32 %v2740, %v2804
        %v2869 = vmax.f32 %v2741, %v2805
        %v2870 = vmax.f32 %v2742, %v2806
        %v2871 = vmax.f32 %v2743, %v2807
        %v2872 = vmax.f32 %v2744, %v2808
        %v2873 = vmax.f32 %v2745, %v2809
        %v2874 = vmax.f32 %v2746, %v2810
        %v2875 = vmax.f32 %v2747, %v2811
        %v2876 = vmax.f32 %v2748, %v2812
        %v2877 = vmax.f32 %v2749, %v2813
        %v2878 = vmax.f32 %v2750, %v2814
        %v2879 = vmax.f32 %v2751, %v2815
        %v2880 = vmax.f32 %v2752, %v2816
        %v2881 = vmax.f32 %v2753, %v2817
        %v2882 = vmax.f32 %v2754, %v2818
        %v2883 = vmax.f32 %v2755, %v2819
        %v2884 = vld [vmem:[%s1858] sm:$0x1]
        %v2885 = vld [vmem:[%s1858 + $0x2] sm:$0x1]
        %v2886 = vld [vmem:[%s1858 + $0x4] sm:$0x1]
        %v2887 = vld [vmem:[%s1858 + $0x6] sm:$0x1]
        %v2888 = vld [vmem:[%s1858 + $0x8] sm:$0x1]
        %v2889 = vld [vmem:[%s1858 + $0xa] sm:$0x1]
        %v2890 = vld [vmem:[%s1858 + $0xc] sm:$0x1]
        %v2891 = vld [vmem:[%s1858 + $0xe] sm:$0x1]
        %v2892 = vld [vmem:[%s1858 + $0x24] sm:$0x1]
        %v2893 = vld [vmem:[%s1858 + $0x26] sm:$0x1]
        %v2894 = vld [vmem:[%s1858 + $0x28] sm:$0x1]
        %v2895 = vld [vmem:[%s1858 + $0x2a] sm:$0x1]
        %v2896 = vld [vmem:[%s1858 + $0x2c] sm:$0x1]
        %v2897 = vld [vmem:[%s1858 + $0x2e] sm:$0x1]
        %v2898 = vld [vmem:[%s1858 + $0x30] sm:$0x1]
        %v2899 = vld [vmem:[%s1858 + $0x32] sm:$0x1]
        %v2900 = vld [vmem:[%s1858 + $0x48] sm:$0x1]
        %v2901 = vld [vmem:[%s1858 + $0x4a] sm:$0x1]
        %v2902 = vld [vmem:[%s1858 + $0x4c] sm:$0x1]
        %v2903 = vld [vmem:[%s1858 + $0x4e] sm:$0x1]
        %v2904 = vld [vmem:[%s1858 + $0x50] sm:$0x1]
        %v2905 = vld [vmem:[%s1858 + $0x52] sm:$0x1]
        %v2906 = vld [vmem:[%s1858 + $0x54] sm:$0x1]
        %v2907 = vld [vmem:[%s1858 + $0x56] sm:$0x1]
        %v2908 = vld [vmem:[%s1858 + $0x6c] sm:$0x1]
        %v2909 = vld [vmem:[%s1858 + $0x6e] sm:$0x1]
        %v2910 = vld [vmem:[%s1858 + $0x70] sm:$0x1]
        %v2911 = vld [vmem:[%s1858 + $0x72] sm:$0x1]
        %v2912 = vld [vmem:[%s1858 + $0x74] sm:$0x1]
        %v2913 = vld [vmem:[%s1858 + $0x76] sm:$0x1]
        %v2914 = vld [vmem:[%s1858 + $0x78] sm:$0x1]
        %v2915 = vld [vmem:[%s1858 + $0x7a] sm:$0x1]
        %v2916 = vld [vmem:[%s1858 + $0x90] sm:$0x1]
        %v2917 = vld [vmem:[%s1858 + $0x92] sm:$0x1]
        %v2918 = vld [vmem:[%s1858 + $0x94] sm:$0x1]
        %v2919 = vld [vmem:[%s1858 + $0x96] sm:$0x1]
        %v2920 = vld [vmem:[%s1858 + $0x98] sm:$0x1]
        %v2921 = vld [vmem:[%s1858 + $0x9a] sm:$0x1]
        %v2922 = vld [vmem:[%s1858 + $0x9c] sm:$0x1]
        %v2923 = vld [vmem:[%s1858 + $0x9e] sm:$0x1]
        %v2924 = vld [vmem:[%s1858 + $0xb4] sm:$0x1]
        %v2925 = vld [vmem:[%s1858 + $0xb6] sm:$0x1]
        %v2926 = vld [vmem:[%s1858 + $0xb8] sm:$0x1]
        %v2927 = vld [vmem:[%s1858 + $0xba] sm:$0x1]
        %v2928 = vld [vmem:[%s1858 + $0xbc] sm:$0x1]
        %v2929 = vld [vmem:[%s1858 + $0xbe] sm:$0x1]
        %v2930 = vld [vmem:[%s1858 + $0xc0] sm:$0x1]
        %v2931 = vld [vmem:[%s1858 + $0xc2] sm:$0x1]
        %v2932 = vld [vmem:[%s1858 + $0xd8] sm:$0x1]
        %v2933 = vld [vmem:[%s1858 + $0xda] sm:$0x1]
        %v2934 = vld [vmem:[%s1858 + $0xdc] sm:$0x1]
        %v2935 = vld [vmem:[%s1858 + $0xde] sm:$0x1]
        %v2936 = vld [vmem:[%s1858 + $0xe0] sm:$0x1]
        %v2937 = vld [vmem:[%s1858 + $0xe2] sm:$0x1]
        %v2938 = vld [vmem:[%s1858 + $0xe4] sm:$0x1]
        %v2939 = vld [vmem:[%s1858 + $0xe6] sm:$0x1]
        %v2940 = vld [vmem:[%s1858 + $0xfc] sm:$0x1]
        %v2941 = vld [vmem:[%s1858 + $0xfe] sm:$0x1]
        %v2942 = vld [vmem:[%s1858 + $0x100] sm:$0x1]
        %v2943 = vld [vmem:[%s1858 + $0x102] sm:$0x1]
        %v2944 = vld [vmem:[%s1858 + $0x104] sm:$0x1]
        %v2945 = vld [vmem:[%s1858 + $0x106] sm:$0x1]
        %v2946 = vld [vmem:[%s1858 + $0x108] sm:$0x1]
        %v2947 = vld [vmem:[%s1858 + $0x10a] sm:$0x1]
        %v2948 = vmax.f32 %v2820, %v2884
        %v2949 = vmax.f32 %v2821, %v2885
        %v2950 = vmax.f32 %v2822, %v2886
        %v2951 = vmax.f32 %v2823, %v2887
        %v2952 = vmax.f32 %v2824, %v2888
        %v2953 = vmax.f32 %v2825, %v2889
        %v2954 = vmax.f32 %v2826, %v2890
        %v2955 = vmax.f32 %v2827, %v2891
        %v2956 = vmax.f32 %v2828, %v2892
        %v2957 = vmax.f32 %v2829, %v2893
        %v2958 = vmax.f32 %v2830, %v2894
        %v2959 = vmax.f32 %v2831, %v2895
        %v2960 = vmax.f32 %v2832, %v2896
        %v2961 = vmax.f32 %v2833, %v2897
        %v2962 = vmax.f32 %v2834, %v2898
        %v2963 = vmax.f32 %v2835, %v2899
        %v2964 = vmax.f32 %v2836, %v2900
        %v2965 = vmax.f32 %v2837, %v2901
        %v2966 = vmax.f32 %v2838, %v2902
        %v2967 = vmax.f32 %v2839, %v2903
        %v2968 = vmax.f32 %v2840, %v2904
        %v2969 = vmax.f32 %v2841, %v2905
        %v2970 = vmax.f32 %v2842, %v2906
        %v2971 = vmax.f32 %v2843, %v2907
        %v2972 = vmax.f32 %v2844, %v2908
        %v2973 = vmax.f32 %v2845, %v2909
        %v2974 = vmax.f32 %v2846, %v2910
        %v2975 = vmax.f32 %v2847, %v2911
        %v2976 = vmax.f32 %v2848, %v2912
        %v2977 = vmax.f32 %v2849, %v2913
        %v2978 = vmax.f32 %v2850, %v2914
        %v2979 = vmax.f32 %v2851, %v2915
        %v2980 = vmax.f32 %v2852, %v2916
        %v2981 = vmax.f32 %v2853, %v2917
        %v2982 = vmax.f32 %v2854, %v2918
        %v2983 = vmax.f32 %v2855, %v2919
        %v2984 = vmax.f32 %v2856, %v2920
        %v2985 = vmax.f32 %v2857, %v2921
        %v2986 = vmax.f32 %v2858, %v2922
        %v2987 = vmax.f32 %v2859, %v2923
        %v2988 = vmax.f32 %v2860, %v2924
        %v2989 = vmax.f32 %v2861, %v2925
        %v2990 = vmax.f32 %v2862, %v2926
        %v2991 = vmax.f32 %v2863, %v2927
        %v2992 = vmax.f32 %v2864, %v2928
        %v2993 = vmax.f32 %v2865, %v2929
        %v2994 = vmax.f32 %v2866, %v2930
        %v2995 = vmax.f32 %v2867, %v2931
        %v2996 = vmax.f32 %v2868, %v2932
        %v2997 = vmax.f32 %v2869, %v2933
        %v2998 = vmax.f32 %v2870, %v2934
        %v2999 = vmax.f32 %v2871, %v2935
        %v3000 = vmax.f32 %v2872, %v2936
        %v3001 = vmax.f32 %v2873, %v2937
        %v3002 = vmax.f32 %v2874, %v2938
        %v3003 = vmax.f32 %v2875, %v2939
        %v3004 = vmax.f32 %v2876, %v2940
        %v3005 = vmax.f32 %v2877, %v2941
        %v3006 = vmax.f32 %v2878, %v2942
        %v3007 = vmax.f32 %v2879, %v2943
        %v3008 = vmax.f32 %v2880, %v2944
        %v3009 = vmax.f32 %v2881, %v2945
        %v3010 = vmax.f32 %v2882, %v2946
        %v3011 = vmax.f32 %v2883, %v2947
        %vm3012 = vcmask 261120
        %3013 = vst.msk [vmem:[#allocation4] sm:$0xff] %vm3012, 0.0
        %3014 = vst.msk [vmem:[#allocation4 + $0x8] sm:$0xff] %vm3012, 0.0
        %3015 = vst.msk [vmem:[#allocation4 + $0x10] sm:$0xff] %vm3012, 0.0
        %3016 = vst.msk [vmem:[#allocation4 + $0x18] sm:$0xff] %vm3012, 0.0
        %3017 = vst.msk [vmem:[#allocation4 + $0x20] sm:$0xff] %vm3012, 0.0
        %3018 = vst.msk [vmem:[#allocation4 + $0x28] sm:$0xff] %vm3012, 0.0
        %3019 = vst.msk [vmem:[#allocation4 + $0x30] sm:$0xff] %vm3012, 0.0
        %3020 = vst.msk [vmem:[#allocation4 + $0x38] sm:$0xff] %vm3012, 0.0
        %v3085 = vrot.slane %v2949, 7
        %vm3086 = vcmask 1041409
        %v3087 = vsel %vm3086, %v3085, %v2948
        %v3088 = vrot.slane %v2950, 6
        %vm3089 = vcmask 1042434
        %v3090 = vsel %vm3089, %v3088, %v3087
        %v3091 = vrot.slane %v2951, 5
        %vm3092 = vcmask 1043459
        %v3093 = vsel %vm3092, %v3091, %v3090
        %v3094 = vrot.slane %v2952, 4
        %vm3095 = vcmask 1044484
        %v3096 = vsel %vm3095, %v3094, %v3093
        %v3097 = vrot.slane %v2953, 3
        %vm3098 = vcmask 1045509
        %v3099 = vsel %vm3098, %v3097, %v3096
        %v3100 = vrot.slane %v2954, 2
        %vm3101 = vcmask 1046534
        %v3102 = vsel %vm3101, %v3100, %v3099
        %v3103 = vrot.slane %v2955, 1
        %vm3104 = vcmask 1047559
        %v3105 = vsel %vm3104, %v3103, %v3102
        %v3106 = vrot.slane %v2957, 7
        %v3107 = vsel %vm3086, %v3106, %v2956
        %v3108 = vrot.slane %v2958, 6
        %v3109 = vsel %vm3089, %v3108, %v3107
        %v3110 = vrot.slane %v2959, 5
        %v3111 = vsel %vm3092, %v3110, %v3109
        %v3112 = vrot.slane %v2960, 4
        %v3113 = vsel %vm3095, %v3112, %v3111
        %v3114 = vrot.slane %v2961, 3
        %v3115 = vsel %vm3098, %v3114, %v3113
        %v3116 = vrot.slane %v2962, 2
        %v3117 = vsel %vm3101, %v3116, %v3115
        %v3118 = vrot.slane %v2963, 1
        %v3119 = vsel %vm3104, %v3118, %v3117
        %v3120 = vrot.slane %v2965, 7
        %v3121 = vsel %vm3086, %v3120, %v2964
        %v3122 = vrot.slane %v2966, 6
        %v3123 = vsel %vm3089, %v3122, %v3121
        %v3124 = vrot.slane %v2967, 5
        %v3125 = vsel %vm3092, %v3124, %v3123
        %v3126 = vrot.slane %v2968, 4
        %v3127 = vsel %vm3095, %v3126, %v3125
        %v3128 = vrot.slane %v2969, 3
        %v3129 = vsel %vm3098, %v3128, %v3127
        %v3130 = vrot.slane %v2970, 2
        %v3131 = vsel %vm3101, %v3130, %v3129
        %v3132 = vrot.slane %v2971, 1
        %v3133 = vsel %vm3104, %v3132, %v3131
        %v3134 = vrot.slane %v2973, 7
        %v3135 = vsel %vm3086, %v3134, %v2972
        %v3136 = vrot.slane %v2974, 6
        %v3137 = vsel %vm3089, %v3136, %v3135
        %v3138 = vrot.slane %v2975, 5
        %v3139 = vsel %vm3092, %v3138, %v3137
        %v3140 = vrot.slane %v2976, 4
        %v3141 = vsel %vm3095, %v3140, %v3139
        %v3142 = vrot.slane %v2977, 3
        %v3143 = vsel %vm3098, %v3142, %v3141
        %v3144 = vrot.slane %v2978, 2
        %v3145 = vsel %vm3101, %v3144, %v3143
        %v3146 = vrot.slane %v2979, 1
        %v3147 = vsel %vm3104, %v3146, %v3145
        %v3148 = vrot.slane %v2981, 7
        %v3149 = vsel %vm3086, %v3148, %v2980
        %v3150 = vrot.slane %v2982, 6
        %v3151 = vsel %vm3089, %v3150, %v3149
        %v3152 = vrot.slane %v2983, 5
        %v3153 = vsel %vm3092, %v3152, %v3151
        %v3154 = vrot.slane %v2984, 4
        %v3155 = vsel %vm3095, %v3154, %v3153
        %v3156 = vrot.slane %v2985, 3
        %v3157 = vsel %vm3098, %v3156, %v3155
        %v3158 = vrot.slane %v2986, 2
        %v3159 = vsel %vm3101, %v3158, %v3157
        %v3160 = vrot.slane %v2987, 1
        %v3161 = vsel %vm3104, %v3160, %v3159
        %v3162 = vrot.slane %v2989, 7
        %v3163 = vsel %vm3086, %v3162, %v2988
        %v3164 = vrot.slane %v2990, 6
        %v3165 = vsel %vm3089, %v3164, %v3163
        %v3166 = vrot.slane %v2991, 5
        %v3167 = vsel %vm3092, %v3166, %v3165
        %v3168 = vrot.slane %v2992, 4
        %v3169 = vsel %vm3095, %v3168, %v3167
        %v3170 = vrot.slane %v2993, 3
        %v3171 = vsel %vm3098, %v3170, %v3169
        %v3172 = vrot.slane %v2994, 2
        %v3173 = vsel %vm3101, %v3172, %v3171
        %v3174 = vrot.slane %v2995, 1
        %v3175 = vsel %vm3104, %v3174, %v3173
        %v3176 = vrot.slane %v2997, 7
        %v3177 = vsel %vm3086, %v3176, %v2996
        %v3178 = vrot.slane %v2998, 6
        %v3179 = vsel %vm3089, %v3178, %v3177
        %v3180 = vrot.slane %v2999, 5
        %v3181 = vsel %vm3092, %v3180, %v3179
        %v3182 = vrot.slane %v3000, 4
        %v3183 = vsel %vm3095, %v3182, %v3181
        %v3184 = vrot.slane %v3001, 3
        %v3185 = vsel %vm3098, %v3184, %v3183
        %v3186 = vrot.slane %v3002, 2
        %v3187 = vsel %vm3101, %v3186, %v3185
        %v3188 = vrot.slane %v3003, 1
        %v3189 = vsel %vm3104, %v3188, %v3187
        %v3190 = vrot.slane %v3005, 7
        %v3191 = vsel %vm3086, %v3190, %v3004
        %v3192 = vrot.slane %v3006, 6
        %v3193 = vsel %vm3089, %v3192, %v3191
        %v3194 = vrot.slane %v3007, 5
        %v3195 = vsel %vm3092, %v3194, %v3193
        %v3196 = vrot.slane %v3008, 4
        %v3197 = vsel %vm3095, %v3196, %v3195
        %v3198 = vrot.slane %v3009, 3
        %v3199 = vsel %vm3098, %v3198, %v3197
        %v3200 = vrot.slane %v3010, 2
        %v3201 = vsel %vm3101, %v3200, %v3199
        %v3202 = vrot.slane %v3011, 1
        %v3203 = vsel %vm3104, %v3202, %v3201
        %vm3212 = vcmask 130048
        %3213 = vst.msk [vmem:[#allocation4] sm:$0xff] %vm3212, %v3105
        %3214 = vst.msk [vmem:[#allocation4 + $0x8] sm:$0xff] %vm3212, %v3119
        %3215 = vst.msk [vmem:[#allocation4 + $0x10] sm:$0xff] %vm3212, %v3133
        %3216 = vst.msk [vmem:[#allocation4 + $0x18] sm:$0xff] %vm3212, %v3147
        %3217 = vst.msk [vmem:[#allocation4 + $0x20] sm:$0xff] %vm3212, %v3161
        %3218 = vst.msk [vmem:[#allocation4 + $0x28] sm:$0xff] %vm3212, %v3175
        %3219 = vst.msk [vmem:[#allocation4 + $0x30] sm:$0xff] %vm3212, %v3189
        %3220 = vst.msk [vmem:[#allocation4 + $0x38] sm:$0xff] %vm3212, %v3203
        %s3221 = scalar_lea.vmem %s2, 2
        %v3222 = vld [vmem:[%s3221] sm:$0x1]
        %v3223 = vld [vmem:[%s3221 + $0x1] sm:$0x1]
        %v3224 = vld [vmem:[#allocation4] sm:$0xff]
        %v3225 = vld [vmem:[#allocation4 + $0x8] sm:$0xff]
        %v3226 = vld [vmem:[#allocation4 + $0x10] sm:$0xff]
        %v3227 = vld [vmem:[#allocation4 + $0x18] sm:$0xff]
        %v3228 = vld [vmem:[#allocation4 + $0x20] sm:$0xff]
        %v3229 = vld [vmem:[#allocation4 + $0x28] sm:$0xff]
        %v3230 = vld [vmem:[#allocation4 + $0x30] sm:$0xff]
        %v3231 = vld [vmem:[#allocation4 + $0x38] sm:$0xff]
        %v3232 = vperm.slane %v3222, 0
        %v3233 = vmul.f32 %v3224, %v3232
        %v3234 = vmul.f32 %v3225, %v3232
        %v3235 = vmul.f32 %v3226, %v3232
        %v3236 = vmul.f32 %v3227, %v3232
        %v3237 = vmul.f32 %v3228, %v3232
        %v3238 = vmul.f32 %v3229, %v3232
        %v3239 = vmul.f32 %v3230, %v3232
        %v3240 = vmul.f32 %v3231, %v3232
        %v3241 = vperm.slane %v3223, 0
        %v3242 = vadd.f32 %v3233, %v3241
        %v3243 = vadd.f32 %v3234, %v3241
        %v3244 = vadd.f32 %v3235, %v3241
        %v3245 = vadd.f32 %v3236, %v3241
        %v3246 = vadd.f32 %v3237, %v3241
        %v3247 = vadd.f32 %v3238, %v3241
        %v3248 = vadd.f32 %v3239, %v3241
        %v3249 = vadd.f32 %v3240, %v3241
        %v3250 = vmax.f32 %v3242, 0.0
        %v3251 = vmax.f32 %v3243, 0.0
        %v3252 = vmax.f32 %v3244, 0.0
        %v3253 = vmax.f32 %v3245, 0.0
        %v3254 = vmax.f32 %v3246, 0.0
        %v3255 = vmax.f32 %v3247, 0.0
        %v3256 = vmax.f32 %v3248, 0.0
        %v3257 = vmax.f32 %v3249, 0.0
        %v3258 = vpack.c.bf16 %v3251, %v3250
        %v3259 = vpack.c.bf16 %v3253, %v3252
        %v3260 = vpack.c.bf16 %v3255, %v3254
        %v3261 = vpack.c.bf16 %v3257, %v3256
        %v3262 = vld [vmem:[%s3] sm:$0xf]
        %v3263 = vld [vmem:[%s3 + $0x4] sm:$0xf]
        %v3264 = vld [vmem:[%s3 + $0x8] sm:$0xf]
        %v3265 = vld [vmem:[%s3 + $0xc] sm:$0xf]
        %v3270 = vunpack.c.l.b16 %v3262
        %v3271 = vunpack.c.l.b16 %v3263
        %v3272 = vunpack.c.l.b16 %v3264
        %v3273 = vunpack.c.l.b16 %v3265
        %v3274 = vpack.c.b16 %v3271, %v3270
        %v3275 = vpack.c.b16 %v3273, %v3272
        %v3279 = vsel %vm3012, %v3258, 0
        %v3282 = vsel %vm3012, %v3259, 0
        %v3285 = vsel %vm3012, %v3260, 0
        %v3288 = vsel %vm3012, %v3261, 0
        %3290 = vmatpush.bf16.msra.mxu0 0
        %3291 = vmatpush.bf16.msra.mxu0 0
        %3292 = vmatpush.bf16.msra.mxu0 0
        %3293 = vmatpush.bf16.msra.mxu0 0
        %3294 = vmatpush.bf16.msra.mxu0 0
        %3295 = vmatpush.bf16.msra.mxu0 0
        %3296 = vmatpush.bf16.msra.mxu0 %v3275
        %3297 = vmatpush.bf16.msra.mxu0 %v3274
        %3298 = vmatmul.bf16.gmra.mxu0 %v3279
        %v3299 = vpop.f32.mrf.mxu0
        %v3300 = vadd.f32 0.0, %v3299
        %v3301 = vpop.f32.mrf.mxu0
        %v3302 = vadd.f32 0.0, %v3301
        %3303 = vmatmul.bf16.gmra.mxu0 %v3282
        %v3304 = vpop.f32.mrf.mxu0
        %v3305 = vadd.f32 0.0, %v3304
        %v3306 = vpop.f32.mrf.mxu0
        %v3307 = vadd.f32 0.0, %v3306
        %3308 = vmatmul.bf16.gmra.mxu0 %v3285
        %v3309 = vpop.f32.mrf.mxu0
        %v3310 = vadd.f32 0.0, %v3309
        %v3311 = vpop.f32.mrf.mxu0
        %v3312 = vadd.f32 0.0, %v3311
        %3313 = vmatmul.bf16.gmra.mxu0 %v3288
        %v3314 = vpop.f32.mrf.mxu0
        %v3315 = vadd.f32 0.0, %v3314
        %v3316 = vpop.f32.mrf.mxu0
        %v3317 = vadd.f32 0.0, %v3316
        %3318 = vdwg.mxu0
        %s3319 = scalar_lea.vmem %s2, 4
        %v3320 = vld [vmem:[%s3319] sm:$0x1]
        %v3321 = vld [vmem:[%s3319 + $0x1] sm:$0x1]
        %v3322 = vperm.slane %v3320, 0
        %v3323 = vmul.f32 %v3300, %v3322
        %v3324 = vmul.f32 %v3302, %v3322
        %v3325 = vmul.f32 %v3305, %v3322
        %v3326 = vmul.f32 %v3307, %v3322
        %v3327 = vmul.f32 %v3310, %v3322
        %v3328 = vmul.f32 %v3312, %v3322
        %v3329 = vmul.f32 %v3315, %v3322
        %v3330 = vmul.f32 %v3317, %v3322
        %v3331 = vperm.slane %v3321, 0
        %v3332 = vadd.f32 %v3323, %v3331
        %v3333 = vadd.f32 %v3324, %v3331
        %v3334 = vadd.f32 %v3325, %v3331
        %v3335 = vadd.f32 %v3326, %v3331
        %v3336 = vadd.f32 %v3327, %v3331
        %v3337 = vadd.f32 %v3328, %v3331
        %v3338 = vadd.f32 %v3329, %v3331
        %v3339 = vadd.f32 %v3330, %v3331
        %v3340 = vmax.f32 %v3332, 0.0
        %v3341 = vmax.f32 %v3333, 0.0
        %v3342 = vmax.f32 %v3334, 0.0
        %v3343 = vmax.f32 %v3335, 0.0
        %v3344 = vmax.f32 %v3336, 0.0
        %v3345 = vmax.f32 %v3337, 0.0
        %v3346 = vmax.f32 %v3338, 0.0
        %v3347 = vmax.f32 %v3339, 0.0
        %vm3348 = vcmask 125952
        %3349 = vst.msk [vmem:[#allocation6] sm:$0xf] %vm3348, 0
        %3350 = vst.msk [vmem:[#allocation6 + $0x4] sm:$0x1] %vm1470, 0
        %3351 = vst.msk [vmem:[#allocation6 + $0x8] sm:$0xf] %vm3348, 0
        %3352 = vst.msk [vmem:[#allocation6 + $0xc] sm:$0x1] %vm1470, 0
        %3353 = vst.msk [vmem:[#allocation6 + $0x10] sm:$0xf] %vm3348, 0
        %3354 = vst.msk [vmem:[#allocation6 + $0x14] sm:$0x1] %vm1470, 0
        %3355 = vst.msk [vmem:[#allocation6 + $0x18] sm:$0xf] %vm3348, 0
        %3356 = vst.msk [vmem:[#allocation6 + $0x1c] sm:$0x1] %vm1470, 0
        %3357 = vst.msk [vmem:[#allocation6 + $0x20] sm:$0xf] %vm3348, 0
        %3358 = vst.msk [vmem:[#allocation6 + $0x24] sm:$0x1] %vm1470, 0
        %3359 = vst.msk [vmem:[#allocation6 + $0x28] sm:$0xf] %vm3348, 0
        %3360 = vst.msk [vmem:[#allocation6 + $0x2c] sm:$0x1] %vm1470, 0
        %3361 = vst.msk [vmem:[#allocation6 + $0x30] sm:$0xf] %vm3348, 0
        %3362 = vst.msk [vmem:[#allocation6 + $0x34] sm:$0x1] %vm1470, 0
        %3363 = vst.msk [vmem:[#allocation6 + $0x38] sm:$0xf] %vm3348, 0
        %3364 = vst.msk [vmem:[#allocation6 + $0x3c] sm:$0x1] %vm1470, 0
        %3365 = vst.msk [vmem:[#allocation6 + $0x40] sm:$0xf] %vm3348, 0
        %3366 = vst.msk [vmem:[#allocation6 + $0x44] sm:$0x1] %vm1470, 0
        %3367 = vst.msk [vmem:[#allocation6 + $0x48] sm:$0xf] %vm3348, 0
        %3368 = vst.msk [vmem:[#allocation6 + $0x4c] sm:$0x1] %vm1470, 0
        %v3369 = vpack.c.bf16 %v3340, %v3340
        %v3370 = vpack.c.bf16 %v3341, %v3341
        %v3371 = vpack.c.bf16 %v3342, %v3342
        %v3372 = vpack.c.bf16 %v3343, %v3343
        %v3373 = vpack.c.bf16 %v3344, %v3344
        %v3374 = vpack.c.bf16 %v3345, %v3345
        %v3375 = vpack.c.bf16 %v3346, %v3346
        %v3376 = vpack.c.bf16 %v3347, %v3347
        %v3378 = vshrl.u32 %v3369, 16
        %v3380 = vrot.slane %v3378, 7
        %v3381 = vshll.u32 %v3369, 16
        %v3383 = vor.u32 %v3380, %v3381
        %v3384 = vrot.slane %v3380, 4
        %v3386 = vshrl.u32 %v3370, 16
        %v3388 = vrot.slane %v3386, 7
        %v3389 = vshll.u32 %v3370, 16
        %v3391 = vor.u32 %v3388, %v3389
        %v3392 = vrot.slane %v3388, 4
        %v3394 = vshrl.u32 %v3371, 16
        %v3396 = vrot.slane %v3394, 7
        %v3397 = vshll.u32 %v3371, 16
        %v3399 = vor.u32 %v3396, %v3397
        %v3400 = vrot.slane %v3396, 4
        %v3402 = vshrl.u32 %v3372, 16
        %v3404 = vrot.slane %v3402, 7
        %v3405 = vshll.u32 %v3372, 16
        %v3407 = vor.u32 %v3404, %v3405
        %v3408 = vrot.slane %v3404, 4
        %v3410 = vshrl.u32 %v3373, 16
        %v3412 = vrot.slane %v3410, 7
        %v3413 = vshll.u32 %v3373, 16
        %v3415 = vor.u32 %v3412, %v3413
        %v3416 = vrot.slane %v3412, 4
        %v3418 = vshrl.u32 %v3374, 16
        %v3420 = vrot.slane %v3418, 7
        %v3421 = vshll.u32 %v3374, 16
        %v3423 = vor.u32 %v3420, %v3421
        %v3424 = vrot.slane %v3420, 4
        %v3426 = vshrl.u32 %v3375, 16
        %v3428 = vrot.slane %v3426, 7
        %v3429 = vshll.u32 %v3375, 16
        %v3431 = vor.u32 %v3428, %v3429
        %v3432 = vrot.slane %v3428, 4
        %v3434 = vshrl.u32 %v3376, 16
        %v3436 = vrot.slane %v3434, 7
        %v3437 = vshll.u32 %v3376, 16
        %v3439 = vor.u32 %v3436, %v3437
        %v3440 = vrot.slane %v3436, 4
        %s3457 = scalar_lea.vmem [#allocation6], 8
        %vm3458 = vcmask 125952
        %vm3459 = vsmask.f32 7938
        %vm3460 = vmand %vm3458, %vm3459
        %v3461 = vld [vmem:[%s3457] sm:$0xf]
        %v3462 = vsel %vm3460, %v3383, %v3461
        %3463 = vst [vmem:[%s3457] sm:$0xf] %v3462
        %vm3464 = vcmask 122880
        %vm3465 = vsmask.f32 256
        %vm3466 = vmand %vm3464, %vm3465
        %v3467 = vld [vmem:[%s3457 + $0x4] sm:$0x1]
        %v3468 = vsel %vm3466, %v3384, %v3467
        %3469 = vst [vmem:[%s3457 + $0x4] sm:$0x1] %v3468
        %v3470 = vld [vmem:[%s3457 + $0x8] sm:$0xf]
        %v3471 = vsel %vm3460, %v3391, %v3470
        %3472 = vst [vmem:[%s3457 + $0x8] sm:$0xf] %v3471
        %v3473 = vld [vmem:[%s3457 + $0xc] sm:$0x1]
        %v3474 = vsel %vm3466, %v3392, %v3473
        %3475 = vst [vmem:[%s3457 + $0xc] sm:$0x1] %v3474
        %v3476 = vld [vmem:[%s3457 + $0x10] sm:$0xf]
        %v3477 = vsel %vm3460, %v3399, %v3476
        %3478 = vst [vmem:[%s3457 + $0x10] sm:$0xf] %v3477
        %v3479 = vld [vmem:[%s3457 + $0x14] sm:$0x1]
        %v3480 = vsel %vm3466, %v3400, %v3479
        %3481 = vst [vmem:[%s3457 + $0x14] sm:$0x1] %v3480
        %v3482 = vld [vmem:[%s3457 + $0x18] sm:$0xf]
        %v3483 = vsel %vm3460, %v3407, %v3482
        %3484 = vst [vmem:[%s3457 + $0x18] sm:$0xf] %v3483
        %v3485 = vld [vmem:[%s3457 + $0x1c] sm:$0x1]
        %v3486 = vsel %vm3466, %v3408, %v3485
        %3487 = vst [vmem:[%s3457 + $0x1c] sm:$0x1] %v3486
        %v3488 = vld [vmem:[%s3457 + $0x20] sm:$0xf]
        %v3489 = vsel %vm3460, %v3415, %v3488
        %3490 = vst [vmem:[%s3457 + $0x20] sm:$0xf] %v3489
        %v3491 = vld [vmem:[%s3457 + $0x24] sm:$0x1]
        %v3492 = vsel %vm3466, %v3416, %v3491
        %3493 = vst [vmem:[%s3457 + $0x24] sm:$0x1] %v3492
        %v3494 = vld [vmem:[%s3457 + $0x28] sm:$0xf]
        %v3495 = vsel %vm3460, %v3423, %v3494
        %3496 = vst [vmem:[%s3457 + $0x28] sm:$0xf] %v3495
        %v3497 = vld [vmem:[%s3457 + $0x2c] sm:$0x1]
        %v3498 = vsel %vm3466, %v3424, %v3497
        %3499 = vst [vmem:[%s3457 + $0x2c] sm:$0x1] %v3498
        %v3500 = vld [vmem:[%s3457 + $0x30] sm:$0xf]
        %v3501 = vsel %vm3460, %v3431, %v3500
        %3502 = vst [vmem:[%s3457 + $0x30] sm:$0xf] %v3501
        %v3503 = vld [vmem:[%s3457 + $0x34] sm:$0x1]
        %v3504 = vsel %vm3466, %v3432, %v3503
        %3505 = vst [vmem:[%s3457 + $0x34] sm:$0x1] %v3504
        %v3506 = vld [vmem:[%s3457 + $0x38] sm:$0xf]
        %v3507 = vsel %vm3460, %v3439, %v3506
        %3508 = vst [vmem:[%s3457 + $0x38] sm:$0xf] %v3507
        %v3509 = vld [vmem:[%s3457 + $0x3c] sm:$0x1]
        %v3510 = vsel %vm3466, %v3440, %v3509
        %3511 = vst [vmem:[%s3457 + $0x3c] sm:$0x1] %v3510
        %v3512 = vld [vmem:[#allocation6] sm:$0xf]
        %v3513 = vld [vmem:[#allocation6 + $0x8] sm:$0xf]
        %v3514 = vld [vmem:[#allocation6 + $0x10] sm:$0xf]
        %v3515 = vld [vmem:[#allocation6 + $0x18] sm:$0xf]
        %v3516 = vld [vmem:[#allocation6 + $0x20] sm:$0xf]
        %v3517 = vld [vmem:[#allocation6 + $0x28] sm:$0xf]
        %v3518 = vld [vmem:[#allocation6 + $0x30] sm:$0xf]
        %v3519 = vld [vmem:[#allocation6 + $0x38] sm:$0xf]
        %3520 = vst.msk [vmem:[#allocation7] sm:$0xf] %vm3348, %v3512
        %3521 = vst.msk [vmem:[#allocation7 + $0x8] sm:$0xf] %vm3348, %v3513
        %3522 = vst.msk [vmem:[#allocation7 + $0x10] sm:$0xf] %vm3348, %v3514
        %3523 = vst.msk [vmem:[#allocation7 + $0x18] sm:$0xf] %vm3348, %v3515
        %3524 = vst.msk [vmem:[#allocation7 + $0x20] sm:$0xf] %vm3348, %v3516
        %3525 = vst.msk [vmem:[#allocation7 + $0x28] sm:$0xf] %vm3348, %v3517
        %3526 = vst.msk [vmem:[#allocation7 + $0x30] sm:$0xf] %vm3348, %v3518
        %3527 = vst.msk [vmem:[#allocation7 + $0x38] sm:$0xf] %vm3348, %v3519
        %v3528 = vld [vmem:[#allocation6] sm:$0xf]
        %v3529 = vld [vmem:[#allocation6 + $0x4] sm:$0x1]
        %v3530 = vld [vmem:[#allocation6 + $0x8] sm:$0xf]
        %v3531 = vld [vmem:[#allocation6 + $0xc] sm:$0x1]
        %v3532 = vld [vmem:[#allocation6 + $0x10] sm:$0xf]
        %v3533 = vld [vmem:[#allocation6 + $0x14] sm:$0x1]
        %v3534 = vld [vmem:[#allocation6 + $0x18] sm:$0xf]
        %v3535 = vld [vmem:[#allocation6 + $0x1c] sm:$0x1]
        %v3536 = vld [vmem:[#allocation6 + $0x20] sm:$0xf]
        %v3537 = vld [vmem:[#allocation6 + $0x24] sm:$0x1]
        %v3538 = vld [vmem:[#allocation6 + $0x28] sm:$0xf]
        %v3539 = vld [vmem:[#allocation6 + $0x2c] sm:$0x1]
        %v3540 = vld [vmem:[#allocation6 + $0x30] sm:$0xf]
        %v3541 = vld [vmem:[#allocation6 + $0x34] sm:$0x1]
        %v3542 = vld [vmem:[#allocation6 + $0x38] sm:$0xf]
        %v3543 = vld [vmem:[#allocation6 + $0x3c] sm:$0x1]
        %vm3544 = vsmask.f32 3328
        %vm3545 = vsmask.f32 7440
        %vm3546 = vmor %vm3544, %vm3545
        %v3548 = vshrl.u32 %v3528, 16
        %v3550 = vrot.slane %v3548, 4
        %v3551 = vshll.u32 %v3528, 16
        %v3553 = vrot.slane %v3551, 5
        %v3554 = vor.u32 %v3550, %v3553
        %v3555 = vrot.slane %v3554, 4
        %v3557 = vshll.u32 %v3529, 16
        %v3559 = vrot.slane %v3557, 5
        %v3560 = vsel %vm3546, %v3555, %v3559
        %v3562 = vshrl.u32 %v3530, 16
        %v3564 = vrot.slane %v3562, 4
        %v3565 = vshll.u32 %v3530, 16
        %v3567 = vrot.slane %v3565, 5
        %v3568 = vor.u32 %v3564, %v3567
        %v3569 = vrot.slane %v3568, 4
        %v3571 = vshll.u32 %v3531, 16
        %v3573 = vrot.slane %v3571, 5
        %v3574 = vsel %vm3546, %v3569, %v3573
        %v3576 = vshrl.u32 %v3532, 16
        %v3578 = vrot.slane %v3576, 4
        %v3579 = vshll.u32 %v3532, 16
        %v3581 = vrot.slane %v3579, 5
        %v3582 = vor.u32 %v3578, %v3581
        %v3583 = vrot.slane %v3582, 4
        %v3585 = vshll.u32 %v3533, 16
        %v3587 = vrot.slane %v3585, 5
        %v3588 = vsel %vm3546, %v3583, %v3587
        %v3590 = vshrl.u32 %v3534, 16
        %v3592 = vrot.slane %v3590, 4
        %v3593 = vshll.u32 %v3534, 16
        %v3595 = vrot.slane %v3593, 5
        %v3596 = vor.u32 %v3592, %v3595
        %v3597 = vrot.slane %v3596, 4
        %v3599 = vshll.u32 %v3535, 16
        %v3601 = vrot.slane %v3599, 5
        %v3602 = vsel %vm3546, %v3597, %v3601
        %v3604 = vshrl.u32 %v3536, 16
        %v3606 = vrot.slane %v3604, 4
        %v3607 = vshll.u32 %v3536, 16
        %v3609 = vrot.slane %v3607, 5
        %v3610 = vor.u32 %v3606, %v3609
        %v3611 = vrot.slane %v3610, 4
        %v3613 = vshll.u32 %v3537, 16
        %v3615 = vrot.slane %v3613, 5
        %v3616 = vsel %vm3546, %v3611, %v3615
        %v3618 = vshrl.u32 %v3538, 16
        %v3620 = vrot.slane %v3618, 4
        %v3621 = vshll.u32 %v3538, 16
        %v3623 = vrot.slane %v3621, 5
        %v3624 = vor.u32 %v3620, %v3623
        %v3625 = vrot.slane %v3624, 4
        %v3627 = vshll.u32 %v3539, 16
        %v3629 = vrot.slane %v3627, 5
        %v3630 = vsel %vm3546, %v3625, %v3629
        %v3632 = vshrl.u32 %v3540, 16
        %v3634 = vrot.slane %v3632, 4
        %v3635 = vshll.u32 %v3540, 16
        %v3637 = vrot.slane %v3635, 5
        %v3638 = vor.u32 %v3634, %v3637
        %v3639 = vrot.slane %v3638, 4
        %v3641 = vshll.u32 %v3541, 16
        %v3643 = vrot.slane %v3641, 5
        %v3644 = vsel %vm3546, %v3639, %v3643
        %v3646 = vshrl.u32 %v3542, 16
        %v3648 = vrot.slane %v3646, 4
        %v3649 = vshll.u32 %v3542, 16
        %v3651 = vrot.slane %v3649, 5
        %v3652 = vor.u32 %v3648, %v3651
        %v3653 = vrot.slane %v3652, 4
        %v3655 = vshll.u32 %v3543, 16
        %v3657 = vrot.slane %v3655, 5
        %v3658 = vsel %vm3546, %v3653, %v3657
        %3659 = vrot.lane.b32.xlu0 %v3560, 16
        %v3660 = vpop.permute.xlu0 %3659
        %3661 = vrot.lane.b32.xlu0 %v3574, 16
        %v3662 = vpop.permute.xlu0 %3661
        %3663 = vrot.lane.b32.xlu0 %v3588, 16
        %v3664 = vpop.permute.xlu0 %3663
        %3665 = vrot.lane.b32.xlu0 %v3602, 16
        %v3666 = vpop.permute.xlu0 %3665
        %3667 = vrot.lane.b32.xlu0 %v3616, 16
        %v3668 = vpop.permute.xlu0 %3667
        %3669 = vrot.lane.b32.xlu0 %v3630, 16
        %v3670 = vpop.permute.xlu0 %3669
        %3671 = vrot.lane.b32.xlu0 %v3644, 16
        %v3672 = vpop.permute.xlu0 %3671
        %3673 = vrot.lane.b32.xlu0 %v3658, 16
        %v3674 = vpop.permute.xlu0 %3673
        %vm3683 = vcmask 257152
        %3684 = vst.msk [vmem:[#allocation7] sm:$0xf] %vm3683, %v3660
        %3685 = vst.msk [vmem:[#allocation7 + $0x8] sm:$0xf] %vm3683, %v3662
        %3686 = vst.msk [vmem:[#allocation7 + $0x10] sm:$0xf] %vm3683, %v3664
        %3687 = vst.msk [vmem:[#allocation7 + $0x18] sm:$0xf] %vm3683, %v3666
        %3688 = vst.msk [vmem:[#allocation7 + $0x20] sm:$0xf] %vm3683, %v3668
        %3689 = vst.msk [vmem:[#allocation7 + $0x28] sm:$0xf] %vm3683, %v3670
        %3690 = vst.msk [vmem:[#allocation7 + $0x30] sm:$0xf] %vm3683, %v3672
        %3691 = vst.msk [vmem:[#allocation7 + $0x38] sm:$0xf] %vm3683, %v3674
        %v3692 = vld [vmem:[#allocation6] sm:$0xe]
        %v3693 = vld [vmem:[#allocation6 + $0x4] sm:$0x1]
        %v3694 = vld [vmem:[#allocation6 + $0x8] sm:$0xe]
        %v3695 = vld [vmem:[#allocation6 + $0xc] sm:$0x1]
        %v3696 = vld [vmem:[#allocation6 + $0x10] sm:$0xe]
        %v3697 = vld [vmem:[#allocation6 + $0x14] sm:$0x1]
        %v3698 = vld [vmem:[#allocation6 + $0x18] sm:$0xe]
        %v3699 = vld [vmem:[#allocation6 + $0x1c] sm:$0x1]
        %v3700 = vld [vmem:[#allocation6 + $0x20] sm:$0xe]
        %v3701 = vld [vmem:[#allocation6 + $0x24] sm:$0x1]
        %v3702 = vld [vmem:[#allocation6 + $0x28] sm:$0xe]
        %v3703 = vld [vmem:[#allocation6 + $0x2c] sm:$0x1]
        %v3704 = vld [vmem:[#allocation6 + $0x30] sm:$0xe]
        %v3705 = vld [vmem:[#allocation6 + $0x34] sm:$0x1]
        %v3706 = vld [vmem:[#allocation6 + $0x38] sm:$0xe]
        %v3707 = vld [vmem:[#allocation6 + $0x3c] sm:$0x1]
        %vm3724 = vcmask 1042432
        %vm3725 = vcmask 1046532
        %vm3726 = vmor %vm3724, %vm3725
        %v3727 = vrot.slane %v3692, 5
        %v3728 = vrot.slane %v3727, 4
        %v3729 = vrot.slane %v3693, 5
        %v3730 = vsel %vm3726, %v3728, %v3729
        %v3731 = vrot.slane %v3694, 5
        %v3732 = vrot.slane %v3731, 4
        %v3733 = vrot.slane %v3695, 5
        %v3734 = vsel %vm3726, %v3732, %v3733
        %v3735 = vrot.slane %v3696, 5
        %v3736 = vrot.slane %v3735, 4
        %v3737 = vrot.slane %v3697, 5
        %v3738 = vsel %vm3726, %v3736, %v3737
        %v3739 = vrot.slane %v3698, 5
        %v3740 = vrot.slane %v3739, 4
        %v3741 = vrot.slane %v3699, 5
        %v3742 = vsel %vm3726, %v3740, %v3741
        %v3743 = vrot.slane %v3700, 5
        %v3744 = vrot.slane %v3743, 4
        %v3745 = vrot.slane %v3701, 5
        %v3746 = vsel %vm3726, %v3744, %v3745
        %v3747 = vrot.slane %v3702, 5
        %v3748 = vrot.slane %v3747, 4
        %v3749 = vrot.slane %v3703, 5
        %v3750 = vsel %vm3726, %v3748, %v3749
        %v3751 = vrot.slane %v3704, 5
        %v3752 = vrot.slane %v3751, 4
        %v3753 = vrot.slane %v3705, 5
        %v3754 = vsel %vm3726, %v3752, %v3753
        %v3755 = vrot.slane %v3706, 5
        %v3756 = vrot.slane %v3755, 4
        %v3757 = vrot.slane %v3707, 5
        %v3758 = vsel %vm3726, %v3756, %v3757
        %3759 = vrot.lane.b32.xlu0 %v3730, 32
        %v3760 = vpop.permute.xlu0 %3759
        %3761 = vrot.lane.b32.xlu0 %v3734, 32
        %v3762 = vpop.permute.xlu0 %3761
        %3763 = vrot.lane.b32.xlu0 %v3738, 32
        %v3764 = vpop.permute.xlu0 %3763
        %3765 = vrot.lane.b32.xlu0 %v3742, 32
        %v3766 = vpop.permute.xlu0 %3765
        %3767 = vrot.lane.b32.xlu0 %v3746, 32
        %v3768 = vpop.permute.xlu0 %3767
        %3769 = vrot.lane.b32.xlu0 %v3750, 32
        %v3770 = vpop.permute.xlu0 %3769
        %3771 = vrot.lane.b32.xlu0 %v3754, 32
        %v3772 = vpop.permute.xlu0 %3771
        %3773 = vrot.lane.b32.xlu0 %v3758, 32
        %v3774 = vpop.permute.xlu0 %3773
        %vm3783 = vcmask 388352
        %3784 = vst.msk [vmem:[#allocation7] sm:$0xf] %vm3783, %v3760
        %3785 = vst.msk [vmem:[#allocation7 + $0x8] sm:$0xf] %vm3783, %v3762
        %3786 = vst.msk [vmem:[#allocation7 + $0x10] sm:$0xf] %vm3783, %v3764
        %3787 = vst.msk [vmem:[#allocation7 + $0x18] sm:$0xf] %vm3783, %v3766
        %3788 = vst.msk [vmem:[#allocation7 + $0x20] sm:$0xf] %vm3783, %v3768
        %3789 = vst.msk [vmem:[#allocation7 + $0x28] sm:$0xf] %vm3783, %v3770
        %3790 = vst.msk [vmem:[#allocation7 + $0x30] sm:$0xf] %vm3783, %v3772
        %3791 = vst.msk [vmem:[#allocation7 + $0x38] sm:$0xf] %vm3783, %v3774
        %v3792 = vld [vmem:[%s3457] sm:$0xf]
        %v3793 = vld [vmem:[%s3457 + $0x8] sm:$0xf]
        %v3794 = vld [vmem:[%s3457 + $0x10] sm:$0xf]
        %v3795 = vld [vmem:[%s3457 + $0x18] sm:$0xf]
        %v3796 = vld [vmem:[%s3457 + $0x20] sm:$0xf]
        %v3797 = vld [vmem:[%s3457 + $0x28] sm:$0xf]
        %v3798 = vld [vmem:[%s3457 + $0x30] sm:$0xf]
        %v3799 = vld [vmem:[%s3457 + $0x38] sm:$0xf]
        %3808 = vrot.lane.b32.xlu0 %v3792, 48
        %v3809 = vpop.permute.xlu0 %3808
        %3810 = vrot.lane.b32.xlu0 %v3793, 48
        %v3811 = vpop.permute.xlu0 %3810
        %3812 = vrot.lane.b32.xlu0 %v3794, 48
        %v3813 = vpop.permute.xlu0 %3812
        %3814 = vrot.lane.b32.xlu0 %v3795, 48
        %v3815 = vpop.permute.xlu0 %3814
        %3816 = vrot.lane.b32.xlu0 %v3796, 48
        %v3817 = vpop.permute.xlu0 %3816
        %3818 = vrot.lane.b32.xlu0 %v3797, 48
        %v3819 = vpop.permute.xlu0 %3818
        %3820 = vrot.lane.b32.xlu0 %v3798, 48
        %v3821 = vpop.permute.xlu0 %3820
        %3822 = vrot.lane.b32.xlu0 %v3799, 48
        %v3823 = vpop.permute.xlu0 %3822
        %vm3832 = vcmask 519552
        %3833 = vst.msk [vmem:[#allocation7] sm:$0xf] %vm3832, %v3809
        %3834 = vst.msk [vmem:[#allocation7 + $0x8] sm:$0xf] %vm3832, %v3811
        %3835 = vst.msk [vmem:[#allocation7 + $0x10] sm:$0xf] %vm3832, %v3813
        %3836 = vst.msk [vmem:[#allocation7 + $0x18] sm:$0xf] %vm3832, %v3815
        %3837 = vst.msk [vmem:[#allocation7 + $0x20] sm:$0xf] %vm3832, %v3817
        %3838 = vst.msk [vmem:[#allocation7 + $0x28] sm:$0xf] %vm3832, %v3819
        %3839 = vst.msk [vmem:[#allocation7 + $0x30] sm:$0xf] %vm3832, %v3821
        %3840 = vst.msk [vmem:[#allocation7 + $0x38] sm:$0xf] %vm3832, %v3823
        %v3841 = vld [vmem:[%s3457] sm:$0xf]
        %v3842 = vld [vmem:[%s3457 + $0x4] sm:$0x1]
        %v3843 = vld [vmem:[%s3457 + $0x8] sm:$0xf]
        %v3844 = vld [vmem:[%s3457 + $0xc] sm:$0x1]
        %v3845 = vld [vmem:[%s3457 + $0x10] sm:$0xf]
        %v3846 = vld [vmem:[%s3457 + $0x14] sm:$0x1]
        %v3847 = vld [vmem:[%s3457 + $0x18] sm:$0xf]
        %v3848 = vld [vmem:[%s3457 + $0x1c] sm:$0x1]
        %v3849 = vld [vmem:[%s3457 + $0x20] sm:$0xf]
        %v3850 = vld [vmem:[%s3457 + $0x24] sm:$0x1]
        %v3851 = vld [vmem:[%s3457 + $0x28] sm:$0xf]
        %v3852 = vld [vmem:[%s3457 + $0x2c] sm:$0x1]
        %v3853 = vld [vmem:[%s3457 + $0x30] sm:$0xf]
        %v3854 = vld [vmem:[%s3457 + $0x34] sm:$0x1]
        %v3855 = vld [vmem:[%s3457 + $0x38] sm:$0xf]
        %v3856 = vld [vmem:[%s3457 + $0x3c] sm:$0x1]
        %v3858 = vshrl.u32 %v3841, 16
        %v3860 = vrot.slane %v3858, 4
        %v3861 = vshll.u32 %v3841, 16
        %v3863 = vrot.slane %v3861, 5
        %v3864 = vor.u32 %v3860, %v3863
        %v3865 = vrot.slane %v3864, 4
        %v3867 = vshll.u32 %v3842, 16
        %v3869 = vrot.slane %v3867, 5
        %v3870 = vsel %vm3546, %v3865, %v3869
        %v3872 = vshrl.u32 %v3843, 16
        %v3874 = vrot.slane %v3872, 4
        %v3875 = vshll.u32 %v3843, 16
        %v3877 = vrot.slane %v3875, 5
        %v3878 = vor.u32 %v3874, %v3877
        %v3879 = vrot.slane %v3878, 4
        %v3881 = vshll.u32 %v3844, 16
        %v3883 = vrot.slane %v3881, 5
        %v3884 = vsel %vm3546, %v3879, %v3883
        %v3886 = vshrl.u32 %v3845, 16
        %v3888 = vrot.slane %v3886, 4
        %v3889 = vshll.u32 %v3845, 16
        %v3891 = vrot.slane %v3889, 5
        %v3892 = vor.u32 %v3888, %v3891
        %v3893 = vrot.slane %v3892, 4
        %v3895 = vshll.u32 %v3846, 16
        %v3897 = vrot.slane %v3895, 5
        %v3898 = vsel %vm3546, %v3893, %v3897
        %v3900 = vshrl.u32 %v3847, 16
        %v3902 = vrot.slane %v3900, 4
        %v3903 = vshll.u32 %v3847, 16
        %v3905 = vrot.slane %v3903, 5
        %v3906 = vor.u32 %v3902, %v3905
        %v3907 = vrot.slane %v3906, 4
        %v3909 = vshll.u32 %v3848, 16
        %v3911 = vrot.slane %v3909, 5
        %v3912 = vsel %vm3546, %v3907, %v3911
        %v3914 = vshrl.u32 %v3849, 16
        %v3916 = vrot.slane %v3914, 4
        %v3917 = vshll.u32 %v3849, 16
        %v3919 = vrot.slane %v3917, 5
        %v3920 = vor.u32 %v3916, %v3919
        %v3921 = vrot.slane %v3920, 4
        %v3923 = vshll.u32 %v3850, 16
        %v3925 = vrot.slane %v3923, 5
        %v3926 = vsel %vm3546, %v3921, %v3925
        %v3928 = vshrl.u32 %v3851, 16
        %v3930 = vrot.slane %v3928, 4
        %v3931 = vshll.u32 %v3851, 16
        %v3933 = vrot.slane %v3931, 5
        %v3934 = vor.u32 %v3930, %v3933
        %v3935 = vrot.slane %v3934, 4
        %v3937 = vshll.u32 %v3852, 16
        %v3939 = vrot.slane %v3937, 5
        %v3940 = vsel %vm3546, %v3935, %v3939
        %v3942 = vshrl.u32 %v3853, 16
        %v3944 = vrot.slane %v3942, 4
        %v3945 = vshll.u32 %v3853, 16
        %v3947 = vrot.slane %v3945, 5
        %v3948 = vor.u32 %v3944, %v3947
        %v3949 = vrot.slane %v3948, 4
        %v3951 = vshll.u32 %v3854, 16
        %v3953 = vrot.slane %v3951, 5
        %v3954 = vsel %vm3546, %v3949, %v3953
        %v3956 = vshrl.u32 %v3855, 16
        %v3958 = vrot.slane %v3956, 4
        %v3959 = vshll.u32 %v3855, 16
        %v3961 = vrot.slane %v3959, 5
        %v3962 = vor.u32 %v3958, %v3961
        %v3963 = vrot.slane %v3962, 4
        %v3965 = vshll.u32 %v3856, 16
        %v3967 = vrot.slane %v3965, 5
        %v3968 = vsel %vm3546, %v3963, %v3967
        %3969 = vrot.lane.b32.xlu0 %v3870, 64
        %v3970 = vpop.permute.xlu0 %3969
        %3971 = vrot.lane.b32.xlu0 %v3884, 64
        %v3972 = vpop.permute.xlu0 %3971
        %3973 = vrot.lane.b32.xlu0 %v3898, 64
        %v3974 = vpop.permute.xlu0 %3973
        %3975 = vrot.lane.b32.xlu0 %v3912, 64
        %v3976 = vpop.permute.xlu0 %3975
        %3977 = vrot.lane.b32.xlu0 %v3926, 64
        %v3978 = vpop.permute.xlu0 %3977
        %3979 = vrot.lane.b32.xlu0 %v3940, 64
        %v3980 = vpop.permute.xlu0 %3979
        %3981 = vrot.lane.b32.xlu0 %v3954, 64
        %v3982 = vpop.permute.xlu0 %3981
        %3983 = vrot.lane.b32.xlu0 %v3968, 64
        %v3984 = vpop.permute.xlu0 %3983
        %vm3993 = vcmask 650752
        %3994 = vst.msk [vmem:[#allocation7] sm:$0xf] %vm3993, %v3970
        %3995 = vst.msk [vmem:[#allocation7 + $0x8] sm:$0xf] %vm3993, %v3972
        %3996 = vst.msk [vmem:[#allocation7 + $0x10] sm:$0xf] %vm3993, %v3974
        %3997 = vst.msk [vmem:[#allocation7 + $0x18] sm:$0xf] %vm3993, %v3976
        %3998 = vst.msk [vmem:[#allocation7 + $0x20] sm:$0xf] %vm3993, %v3978
        %3999 = vst.msk [vmem:[#allocation7 + $0x28] sm:$0xf] %vm3993, %v3980
        %4000 = vst.msk [vmem:[#allocation7 + $0x30] sm:$0xf] %vm3993, %v3982
        %4001 = vst.msk [vmem:[#allocation7 + $0x38] sm:$0xf] %vm3993, %v3984
        %v4002 = vld [vmem:[%s3457] sm:$0xe]
        %v4003 = vld [vmem:[%s3457 + $0x4] sm:$0x1]
        %v4004 = vld [vmem:[%s3457 + $0x8] sm:$0xe]
        %v4005 = vld [vmem:[%s3457 + $0xc] sm:$0x1]
        %v4006 = vld [vmem:[%s3457 + $0x10] sm:$0xe]
        %v4007 = vld [vmem:[%s3457 + $0x14] sm:$0x1]
        %v4008 = vld [vmem:[%s3457 + $0x18] sm:$0xe]
        %v4009 = vld [vmem:[%s3457 + $0x1c] sm:$0x1]
        %v4010 = vld [vmem:[%s3457 + $0x20] sm:$0xe]
        %v4011 = vld [vmem:[%s3457 + $0x24] sm:$0x1]
        %v4012 = vld [vmem:[%s3457 + $0x28] sm:$0xe]
        %v4013 = vld [vmem:[%s3457 + $0x2c] sm:$0x1]
        %v4014 = vld [vmem:[%s3457 + $0x30] sm:$0xe]
        %v4015 = vld [vmem:[%s3457 + $0x34] sm:$0x1]
        %v4016 = vld [vmem:[%s3457 + $0x38] sm:$0xe]
        %v4017 = vld [vmem:[%s3457 + $0x3c] sm:$0x1]
        %v4034 = vrot.slane %v4002, 5
        %v4035 = vrot.slane %v4034, 4
        %v4036 = vrot.slane %v4003, 5
        %v4037 = vsel %vm3726, %v4035, %v4036
        %v4038 = vrot.slane %v4004, 5
        %v4039 = vrot.slane %v4038, 4
        %v4040 = vrot.slane %v4005, 5
        %v4041 = vsel %vm3726, %v4039, %v4040
        %v4042 = vrot.slane %v4006, 5
        %v4043 = vrot.slane %v4042, 4
        %v4044 = vrot.slane %v4007, 5
        %v4045 = vsel %vm3726, %v4043, %v4044
        %v4046 = vrot.slane %v4008, 5
        %v4047 = vrot.slane %v4046, 4
        %v4048 = vrot.slane %v4009, 5
        %v4049 = vsel %vm3726, %v4047, %v4048
        %v4050 = vrot.slane %v4010, 5
        %v4051 = vrot.slane %v4050, 4
        %v4052 = vrot.slane %v4011, 5
        %v4053 = vsel %vm3726, %v4051, %v4052
        %v4054 = vrot.slane %v4012, 5
        %v4055 = vrot.slane %v4054, 4
        %v4056 = vrot.slane %v4013, 5
        %v4057 = vsel %vm3726, %v4055, %v4056
        %v4058 = vrot.slane %v4014, 5
        %v4059 = vrot.slane %v4058, 4
        %v4060 = vrot.slane %v4015, 5
        %v4061 = vsel %vm3726, %v4059, %v4060
        %v4062 = vrot.slane %v4016, 5
        %v4063 = vrot.slane %v4062, 4
        %v4064 = vrot.slane %v4017, 5
        %v4065 = vsel %vm3726, %v4063, %v4064
        %4066 = vrot.lane.b32.xlu0 %v4037, 80
        %v4067 = vpop.permute.xlu0 %4066
        %4068 = vrot.lane.b32.xlu0 %v4041, 80
        %v4069 = vpop.permute.xlu0 %4068
        %4070 = vrot.lane.b32.xlu0 %v4045, 80
        %v4071 = vpop.permute.xlu0 %4070
        %4072 = vrot.lane.b32.xlu0 %v4049, 80
        %v4073 = vpop.permute.xlu0 %4072
        %4074 = vrot.lane.b32.xlu0 %v4053, 80
        %v4075 = vpop.permute.xlu0 %4074
        %4076 = vrot.lane.b32.xlu0 %v4057, 80
        %v4077 = vpop.permute.xlu0 %4076
        %4078 = vrot.lane.b32.xlu0 %v4061, 80
        %v4079 = vpop.permute.xlu0 %4078
        %4080 = vrot.lane.b32.xlu0 %v4065, 80
        %v4081 = vpop.permute.xlu0 %4080
        %vm4090 = vcmask 781952
        %4091 = vst.msk [vmem:[#allocation7] sm:$0xf] %vm4090, %v4067
        %4092 = vst.msk [vmem:[#allocation7 + $0x8] sm:$0xf] %vm4090, %v4069
        %4093 = vst.msk [vmem:[#allocation7 + $0x10] sm:$0xf] %vm4090, %v4071
        %4094 = vst.msk [vmem:[#allocation7 + $0x18] sm:$0xf] %vm4090, %v4073
        %4095 = vst.msk [vmem:[#allocation7 + $0x20] sm:$0xf] %vm4090, %v4075
        %4096 = vst.msk [vmem:[#allocation7 + $0x28] sm:$0xf] %vm4090, %v4077
        %4097 = vst.msk [vmem:[#allocation7 + $0x30] sm:$0xf] %vm4090, %v4079
        %4098 = vst.msk [vmem:[#allocation7 + $0x38] sm:$0xf] %vm4090, %v4081
        %s4099 = scalar_lea.vmem [#allocation6], 16
        %v4100 = vld [vmem:[%s4099] sm:$0xf]
        %v4101 = vld [vmem:[%s4099 + $0x8] sm:$0xf]
        %v4102 = vld [vmem:[%s4099 + $0x10] sm:$0xf]
        %v4103 = vld [vmem:[%s4099 + $0x18] sm:$0xf]
        %v4104 = vld [vmem:[%s4099 + $0x20] sm:$0xf]
        %v4105 = vld [vmem:[%s4099 + $0x28] sm:$0xf]
        %v4106 = vld [vmem:[%s4099 + $0x30] sm:$0xf]
        %v4107 = vld [vmem:[%s4099 + $0x38] sm:$0xf]
        %4116 = vrot.lane.b32.xlu0 %v4100, 96
        %v4117 = vpop.permute.xlu0 %4116
        %4118 = vrot.lane.b32.xlu0 %v4101, 96
        %v4119 = vpop.permute.xlu0 %4118
        %4120 = vrot.lane.b32.xlu0 %v4102, 96
        %v4121 = vpop.permute.xlu0 %4120
        %4122 = vrot.lane.b32.xlu0 %v4103, 96
        %v4123 = vpop.permute.xlu0 %4122
        %4124 = vrot.lane.b32.xlu0 %v4104, 96
        %v4125 = vpop.permute.xlu0 %4124
        %4126 = vrot.lane.b32.xlu0 %v4105, 96
        %v4127 = vpop.permute.xlu0 %4126
        %4128 = vrot.lane.b32.xlu0 %v4106, 96
        %v4129 = vpop.permute.xlu0 %4128
        %4130 = vrot.lane.b32.xlu0 %v4107, 96
        %v4131 = vpop.permute.xlu0 %4130
        %vm4140 = vcmask 913152
        %4141 = vst.msk [vmem:[#allocation7] sm:$0xf] %vm4140, %v4117
        %4142 = vst.msk [vmem:[#allocation7 + $0x8] sm:$0xf] %vm4140, %v4119
        %4143 = vst.msk [vmem:[#allocation7 + $0x10] sm:$0xf] %vm4140, %v4121
        %4144 = vst.msk [vmem:[#allocation7 + $0x18] sm:$0xf] %vm4140, %v4123
        %4145 = vst.msk [vmem:[#allocation7 + $0x20] sm:$0xf] %vm4140, %v4125
        %4146 = vst.msk [vmem:[#allocation7 + $0x28] sm:$0xf] %vm4140, %v4127
        %4147 = vst.msk [vmem:[#allocation7 + $0x30] sm:$0xf] %vm4140, %v4129
        %4148 = vst.msk [vmem:[#allocation7 + $0x38] sm:$0xf] %vm4140, %v4131
        %v4149 = vld [vmem:[%s4099] sm:$0xf]
        %v4150 = vld [vmem:[%s4099 + $0x4] sm:$0x1]
        %v4151 = vld [vmem:[%s4099 + $0x8] sm:$0xf]
        %v4152 = vld [vmem:[%s4099 + $0xc] sm:$0x1]
        %v4153 = vld [vmem:[%s4099 + $0x10] sm:$0xf]
        %v4154 = vld [vmem:[%s4099 + $0x14] sm:$0x1]
        %v4155 = vld [vmem:[%s4099 + $0x18] sm:$0xf]
        %v4156 = vld [vmem:[%s4099 + $0x1c] sm:$0x1]
        %v4157 = vld [vmem:[%s4099 + $0x20] sm:$0xf]
        %v4158 = vld [vmem:[%s4099 + $0x24] sm:$0x1]
        %v4159 = vld [vmem:[%s4099 + $0x28] sm:$0xf]
        %v4160 = vld [vmem:[%s4099 + $0x2c] sm:$0x1]
        %v4161 = vld [vmem:[%s4099 + $0x30] sm:$0xf]
        %v4162 = vld [vmem:[%s4099 + $0x34] sm:$0x1]
        %v4163 = vld [vmem:[%s4099 + $0x38] sm:$0xf]
        %v4164 = vld [vmem:[%s4099 + $0x3c] sm:$0x1]
        %v4166 = vshrl.u32 %v4149, 16
        %v4168 = vrot.slane %v4166, 4
        %v4169 = vshll.u32 %v4149, 16
        %v4171 = vrot.slane %v4169, 5
        %v4172 = vor.u32 %v4168, %v4171
        %v4173 = vrot.slane %v4172, 4
        %v4175 = vshll.u32 %v4150, 16
        %v4177 = vrot.slane %v4175, 5
        %v4178 = vsel %vm3546, %v4173, %v4177
        %v4180 = vshrl.u32 %v4151, 16
        %v4182 = vrot.slane %v4180, 4
        %v4183 = vshll.u32 %v4151, 16
        %v4185 = vrot.slane %v4183, 5
        %v4186 = vor.u32 %v4182, %v4185
        %v4187 = vrot.slane %v4186, 4
        %v4189 = vshll.u32 %v4152, 16
        %v4191 = vrot.slane %v4189, 5
        %v4192 = vsel %vm3546, %v4187, %v4191
        %v4194 = vshrl.u32 %v4153, 16
        %v4196 = vrot.slane %v4194, 4
        %v4197 = vshll.u32 %v4153, 16
        %v4199 = vrot.slane %v4197, 5
        %v4200 = vor.u32 %v4196, %v4199
        %v4201 = vrot.slane %v4200, 4
        %v4203 = vshll.u32 %v4154, 16
        %v4205 = vrot.slane %v4203, 5
        %v4206 = vsel %vm3546, %v4201, %v4205
        %v4208 = vshrl.u32 %v4155, 16
        %v4210 = vrot.slane %v4208, 4
        %v4211 = vshll.u32 %v4155, 16
        %v4213 = vrot.slane %v4211, 5
        %v4214 = vor.u32 %v4210, %v4213
        %v4215 = vrot.slane %v4214, 4
        %v4217 = vshll.u32 %v4156, 16
        %v4219 = vrot.slane %v4217, 5
        %v4220 = vsel %vm3546, %v4215, %v4219
        %v4222 = vshrl.u32 %v4157, 16
        %v4224 = vrot.slane %v4222, 4
        %v4225 = vshll.u32 %v4157, 16
        %v4227 = vrot.slane %v4225, 5
        %v4228 = vor.u32 %v4224, %v4227
        %v4229 = vrot.slane %v4228, 4
        %v4231 = vshll.u32 %v4158, 16
        %v4233 = vrot.slane %v4231, 5
        %v4234 = vsel %vm3546, %v4229, %v4233
        %v4236 = vshrl.u32 %v4159, 16
        %v4238 = vrot.slane %v4236, 4
        %v4239 = vshll.u32 %v4159, 16
        %v4241 = vrot.slane %v4239, 5
        %v4242 = vor.u32 %v4238, %v4241
        %v4243 = vrot.slane %v4242, 4
        %v4245 = vshll.u32 %v4160, 16
        %v4247 = vrot.slane %v4245, 5
        %v4248 = vsel %vm3546, %v4243, %v4247
        %v4250 = vshrl.u32 %v4161, 16
        %v4252 = vrot.slane %v4250, 4
        %v4253 = vshll.u32 %v4161, 16
        %v4255 = vrot.slane %v4253, 5
        %v4256 = vor.u32 %v4252, %v4255
        %v4257 = vrot.slane %v4256, 4
        %v4259 = vshll.u32 %v4162, 16
        %v4261 = vrot.slane %v4259, 5
        %v4262 = vsel %vm3546, %v4257, %v4261
        %v4264 = vshrl.u32 %v4163, 16
        %v4266 = vrot.slane %v4264, 4
        %v4267 = vshll.u32 %v4163, 16
        %v4269 = vrot.slane %v4267, 5
        %v4270 = vor.u32 %v4266, %v4269
        %v4271 = vrot.slane %v4270, 4
        %v4273 = vshll.u32 %v4164, 16
        %v4275 = vrot.slane %v4273, 5
        %v4276 = vsel %vm3546, %v4271, %v4275
        %4277 = vrot.lane.b32.xlu0 %v4178, 112
        %v4278 = vpop.permute.xlu0 %4277
        %4279 = vrot.lane.b32.xlu0 %v4192, 112
        %v4280 = vpop.permute.xlu0 %4279
        %4281 = vrot.lane.b32.xlu0 %v4206, 112
        %v4282 = vpop.permute.xlu0 %4281
        %4283 = vrot.lane.b32.xlu0 %v4220, 112
        %v4284 = vpop.permute.xlu0 %4283
        %4285 = vrot.lane.b32.xlu0 %v4234, 112
        %v4286 = vpop.permute.xlu0 %4285
        %4287 = vrot.lane.b32.xlu0 %v4248, 112
        %v4288 = vpop.permute.xlu0 %4287
        %4289 = vrot.lane.b32.xlu0 %v4262, 112
        %v4290 = vpop.permute.xlu0 %4289
        %4291 = vrot.lane.b32.xlu0 %v4276, 112
        %v4292 = vpop.permute.xlu0 %4291
        %vm4301 = vcmask 1044352
        %4302 = vst.msk [vmem:[#allocation7] sm:$0xf] %vm4301, %v4278
        %4303 = vst.msk [vmem:[#allocation7 + $0x8] sm:$0xf] %vm4301, %v4280
        %4304 = vst.msk [vmem:[#allocation7 + $0x10] sm:$0xf] %vm4301, %v4282
        %4305 = vst.msk [vmem:[#allocation7 + $0x18] sm:$0xf] %vm4301, %v4284
        %4306 = vst.msk [vmem:[#allocation7 + $0x20] sm:$0xf] %vm4301, %v4286
        %4307 = vst.msk [vmem:[#allocation7 + $0x28] sm:$0xf] %vm4301, %v4288
        %4308 = vst.msk [vmem:[#allocation7 + $0x30] sm:$0xf] %vm4301, %v4290
        %4309 = vst.msk [vmem:[#allocation7 + $0x38] sm:$0xf] %vm4301, %v4292
        %v4310 = vld [vmem:[%s4099] sm:$0xe]
        %v4311 = vld [vmem:[%s4099 + $0x4] sm:$0x1]
        %v4312 = vld [vmem:[%s4099 + $0x8] sm:$0xe]
        %v4313 = vld [vmem:[%s4099 + $0xc] sm:$0x1]
        %v4314 = vld [vmem:[%s4099 + $0x10] sm:$0xe]
        %v4315 = vld [vmem:[%s4099 + $0x14] sm:$0x1]
        %v4316 = vld [vmem:[%s4099 + $0x18] sm:$0xe]
        %v4317 = vld [vmem:[%s4099 + $0x1c] sm:$0x1]
        %v4318 = vld [vmem:[%s4099 + $0x20] sm:$0xe]
        %v4319 = vld [vmem:[%s4099 + $0x24] sm:$0x1]
        %v4320 = vld [vmem:[%s4099 + $0x28] sm:$0xe]
        %v4321 = vld [vmem:[%s4099 + $0x2c] sm:$0x1]
        %v4322 = vld [vmem:[%s4099 + $0x30] sm:$0xe]
        %v4323 = vld [vmem:[%s4099 + $0x34] sm:$0x1]
        %v4324 = vld [vmem:[%s4099 + $0x38] sm:$0xe]
        %v4325 = vld [vmem:[%s4099 + $0x3c] sm:$0x1]
        %v4342 = vrot.slane %v4310, 5
        %v4343 = vrot.slane %v4342, 4
        %v4344 = vrot.slane %v4311, 5
        %v4345 = vsel %vm3726, %v4343, %v4344
        %v4346 = vrot.slane %v4312, 5
        %v4347 = vrot.slane %v4346, 4
        %v4348 = vrot.slane %v4313, 5
        %v4349 = vsel %vm3726, %v4347, %v4348
        %v4350 = vrot.slane %v4314, 5
        %v4351 = vrot.slane %v4350, 4
        %v4352 = vrot.slane %v4315, 5
        %v4353 = vsel %vm3726, %v4351, %v4352
        %v4354 = vrot.slane %v4316, 5
        %v4355 = vrot.slane %v4354, 4
        %v4356 = vrot.slane %v4317, 5
        %v4357 = vsel %vm3726, %v4355, %v4356
        %v4358 = vrot.slane %v4318, 5
        %v4359 = vrot.slane %v4358, 4
        %v4360 = vrot.slane %v4319, 5
        %v4361 = vsel %vm3726, %v4359, %v4360
        %v4362 = vrot.slane %v4320, 5
        %v4363 = vrot.slane %v4362, 4
        %v4364 = vrot.slane %v4321, 5
        %v4365 = vsel %vm3726, %v4363, %v4364
        %v4366 = vrot.slane %v4322, 5
        %v4367 = vrot.slane %v4366, 4
        %v4368 = vrot.slane %v4323, 5
        %v4369 = vsel %vm3726, %v4367, %v4368
        %v4370 = vrot.slane %v4324, 5
        %v4371 = vrot.slane %v4370, 4
        %v4372 = vrot.slane %v4325, 5
        %v4373 = vsel %vm3726, %v4371, %v4372
        %4382 = vst.msk [vmem:[#allocation7 + $0x4] sm:$0xf] %vm3348, %v4345
        %4383 = vst.msk [vmem:[#allocation7 + $0xc] sm:$0xf] %vm3348, %v4349
        %4384 = vst.msk [vmem:[#allocation7 + $0x14] sm:$0xf] %vm3348, %v4353
        %4385 = vst.msk [vmem:[#allocation7 + $0x1c] sm:$0xf] %vm3348, %v4357
        %4386 = vst.msk [vmem:[#allocation7 + $0x24] sm:$0xf] %vm3348, %v4361
        %4387 = vst.msk [vmem:[#allocation7 + $0x2c] sm:$0xf] %vm3348, %v4365
        %4388 = vst.msk [vmem:[#allocation7 + $0x34] sm:$0xf] %vm3348, %v4369
        %4389 = vst.msk [vmem:[#allocation7 + $0x3c] sm:$0xf] %vm3348, %v4373
        %v4390 = vld [vmem:[#allocation7] sm:$0xff]
        %v4391 = vld [vmem:[#allocation7 + $0x8] sm:$0xff]
        %v4392 = vld [vmem:[#allocation7 + $0x10] sm:$0xff]
        %v4393 = vld [vmem:[#allocation7 + $0x18] sm:$0xff]
        %v4394 = vld [vmem:[#allocation7 + $0x20] sm:$0xff]
        %v4395 = vld [vmem:[#allocation7 + $0x28] sm:$0xff]
        %v4396 = vld [vmem:[#allocation7 + $0x30] sm:$0xff]
        %v4397 = vld [vmem:[#allocation7 + $0x38] sm:$0xff]
        %v4398 = vld [vmem:[%s4] sm:$0xf]
        %v4399 = vld [vmem:[%s4 + $0x4] sm:$0xf]
        %v4400 = vld [vmem:[%s4 + $0x8] sm:$0xf]
        %v4401 = vld [vmem:[%s4 + $0xc] sm:$0xf]
        %v4402 = vld [vmem:[%s4 + $0x10] sm:$0xf]
        %v4403 = vld [vmem:[%s4 + $0x14] sm:$0xf]
        %v4404 = vld [vmem:[%s4 + $0x18] sm:$0xf]
        %v4405 = vld [vmem:[%s4 + $0x1c] sm:$0xf]
        %v4406 = vld [vmem:[%s4 + $0x20] sm:$0xf]
        %v4407 = vld [vmem:[%s4 + $0x24] sm:$0xf]
        %v4408 = vld [vmem:[%s4 + $0x28] sm:$0xf]
        %v4409 = vld [vmem:[%s4 + $0x2c] sm:$0xf]
        %v4410 = vld [vmem:[%s4 + $0x30] sm:$0xf]
        %v4411 = vld [vmem:[%s4 + $0x34] sm:$0xf]
        %v4412 = vld [vmem:[%s4 + $0x38] sm:$0xf]
        %v4413 = vld [vmem:[%s4 + $0x3c] sm:$0xf]
        %v4414 = vld [vmem:[%s4 + $0x40] sm:$0xf]
        %v4415 = vld [vmem:[%s4 + $0x44] sm:$0xf]
        %v4424 = vunpack.c.l.b16 %v4390
        %v4425 = vunpack.c.h.b16 %v4390
        %v4426 = vunpack.c.l.b16 %v4391
        %v4427 = vunpack.c.h.b16 %v4391
        %v4428 = vunpack.c.l.b16 %v4392
        %v4429 = vunpack.c.h.b16 %v4392
        %v4430 = vunpack.c.l.b16 %v4393
        %v4431 = vunpack.c.h.b16 %v4393
        %v4432 = vunpack.c.l.b16 %v4394
        %v4433 = vunpack.c.h.b16 %v4394
        %v4434 = vunpack.c.l.b16 %v4395
        %v4435 = vunpack.c.h.b16 %v4395
        %v4436 = vunpack.c.l.b16 %v4396
        %v4437 = vunpack.c.h.b16 %v4396
        %v4438 = vunpack.c.l.b16 %v4397
        %v4439 = vunpack.c.h.b16 %v4397
        %v4440 = vpack.c.b16 %v4426, %v4424
        %v4441 = vpack.c.b16 %v4427, %v4425
        %v4442 = vpack.c.b16 %v4430, %v4428
        %v4443 = vpack.c.b16 %v4431, %v4429
        %v4444 = vpack.c.b16 %v4434, %v4432
        %v4445 = vpack.c.b16 %v4435, %v4433
        %v4446 = vpack.c.b16 %v4438, %v4436
        %v4447 = vpack.c.b16 %v4439, %v4437
        %v4470 = vunpack.c.l.b16 %v4398
        %v4471 = vunpack.c.l.b16 %v4399
        %v4472 = vunpack.c.l.b16 %v4400
        %v4473 = vunpack.c.l.b16 %v4401
        %v4474 = vunpack.c.l.b16 %v4402
        %v4475 = vunpack.c.l.b16 %v4403
        %v4476 = vunpack.c.l.b16 %v4404
        %v4477 = vunpack.c.l.b16 %v4405
        %v4478 = vunpack.c.l.b16 %v4406
        %v4479 = vunpack.c.l.b16 %v4407
        %v4480 = vunpack.c.l.b16 %v4408
        %v4481 = vunpack.c.l.b16 %v4409
        %v4482 = vunpack.c.l.b16 %v4410
        %v4483 = vunpack.c.l.b16 %v4411
        %v4484 = vunpack.c.l.b16 %v4412
        %v4485 = vunpack.c.l.b16 %v4413
        %v4486 = vunpack.c.l.b16 %v4414
        %v4487 = vunpack.c.l.b16 %v4415
        %v4488 = vpack.c.b16 %v4471, %v4470
        %v4489 = vpack.c.b16 %v4473, %v4472
        %v4490 = vpack.c.b16 %v4475, %v4474
        %v4491 = vpack.c.b16 %v4477, %v4476
        %v4492 = vpack.c.b16 %v4479, %v4478
        %v4493 = vpack.c.b16 %v4481, %v4480
        %v4494 = vpack.c.b16 %v4483, %v4482
        %v4495 = vpack.c.b16 %v4485, %v4484
        %v4496 = vpack.c.b16 %v4487, %v4486
        %v4507 = vsel %vm3212, %v4441, 0
        %v4510 = vsel %vm3212, %v4443, 0
        %v4513 = vsel %vm3212, %v4445, 0
        %v4516 = vsel %vm3212, %v4447, 0
        %4518 = vmatpush.bf16.msra.mxu0 %v4495
        %4519 = vmatpush.bf16.msra.mxu0 %v4494
        %4520 = vmatpush.bf16.msra.mxu0 %v4493
        %4521 = vmatpush.bf16.msra.mxu0 %v4492
        %4522 = vmatpush.bf16.msra.mxu0 %v4491
        %4523 = vmatpush.bf16.msra.mxu0 %v4490
        %4524 = vmatpush.bf16.msra.mxu0 %v4489
        %4525 = vmatpush.bf16.msra.mxu0 %v4488
        %4526 = vmatmul.bf16.gmra.mxu0 %v4440
        %v4527 = vpop.f32.mrf.mxu0
        %v4528 = vadd.f32 0.0, %v4527
        %v4529 = vpop.f32.mrf.mxu0
        %v4530 = vadd.f32 0.0, %v4529
        %4531 = vmatmul.bf16.gmra.mxu0 %v4442
        %v4532 = vpop.f32.mrf.mxu0
        %v4533 = vadd.f32 0.0, %v4532
        %v4534 = vpop.f32.mrf.mxu0
        %v4535 = vadd.f32 0.0, %v4534
        %4536 = vmatmul.bf16.gmra.mxu0 %v4444
        %v4537 = vpop.f32.mrf.mxu0
        %v4538 = vadd.f32 0.0, %v4537
        %v4539 = vpop.f32.mrf.mxu0
        %v4540 = vadd.f32 0.0, %v4539
        %4541 = vmatmul.bf16.gmra.mxu0 %v4446
        %v4542 = vpop.f32.mrf.mxu0
        %v4543 = vadd.f32 0.0, %v4542
        %v4544 = vpop.f32.mrf.mxu0
        %v4545 = vadd.f32 0.0, %v4544
        %4546 = vdwg.mxu0
        %4547 = vmatpush.bf16.msra.mxu0 0
        %4548 = vmatpush.bf16.msra.mxu0 0
        %4549 = vmatpush.bf16.msra.mxu0 0
        %4550 = vmatpush.bf16.msra.mxu0 0
        %4551 = vmatpush.bf16.msra.mxu0 0
        %4552 = vmatpush.bf16.msra.mxu0 0
        %4553 = vmatpush.bf16.msra.mxu0 0
        %4554 = vmatpush.bf16.msra.mxu0 %v4496
        %4555 = vmatmul.bf16.gmra.mxu0 %v4507
        %v4556 = vpop.f32.mrf.mxu0
        %v4557 = vadd.f32 %v4528, %v4556
        %v4558 = vpop.f32.mrf.mxu0
        %v4559 = vadd.f32 %v4530, %v4558
        %4560 = vmatmul.bf16.gmra.mxu0 %v4510
        %v4561 = vpop.f32.mrf.mxu0
        %v4562 = vadd.f32 %v4533, %v4561
        %v4563 = vpop.f32.mrf.mxu0
        %v4564 = vadd.f32 %v4535, %v4563
        %4565 = vmatmul.bf16.gmra.mxu0 %v4513
        %v4566 = vpop.f32.mrf.mxu0
        %v4567 = vadd.f32 %v4538, %v4566
        %v4568 = vpop.f32.mrf.mxu0
        %v4569 = vadd.f32 %v4540, %v4568
        %4570 = vmatmul.bf16.gmra.mxu0 %v4516
        %v4571 = vpop.f32.mrf.mxu0
        %v4572 = vadd.f32 %v4543, %v4571
        %v4573 = vpop.f32.mrf.mxu0
        %v4574 = vadd.f32 %v4545, %v4573
        %4575 = vdwg.mxu0
        %4584 = vrot.lane.b32.xlu0 %v4557, 16
        %v4585 = vpop.permute.xlu0 %4584
        %4586 = vrot.lane.b32.xlu0 %v4559, 16
        %v4587 = vpop.permute.xlu0 %4586
        %4588 = vrot.lane.b32.xlu0 %v4562, 16
        %v4589 = vpop.permute.xlu0 %4588
        %4590 = vrot.lane.b32.xlu0 %v4564, 16
        %v4591 = vpop.permute.xlu0 %4590
        %4592 = vrot.lane.b32.xlu0 %v4567, 16
        %v4593 = vpop.permute.xlu0 %4592
        %4594 = vrot.lane.b32.xlu0 %v4569, 16
        %v4595 = vpop.permute.xlu0 %4594
        %4596 = vrot.lane.b32.xlu0 %v4572, 16
        %v4597 = vpop.permute.xlu0 %4596
        %4598 = vrot.lane.b32.xlu0 %v4574, 16
        %v4599 = vpop.permute.xlu0 %4598
        %vm4608 = vcmask 195712
        %4609 = vst.msk [vmem:[#allocation4] sm:$0xff] %vm4608, %v4585
        %4610 = vst.msk [vmem:[#allocation4 + $0x8] sm:$0xff] %vm4608, %v4587
        %4611 = vst.msk [vmem:[#allocation4 + $0x10] sm:$0xff] %vm4608, %v4589
        %4612 = vst.msk [vmem:[#allocation4 + $0x18] sm:$0xff] %vm4608, %v4591
        %4613 = vst.msk [vmem:[#allocation4 + $0x20] sm:$0xff] %vm4608, %v4593
        %4614 = vst.msk [vmem:[#allocation4 + $0x28] sm:$0xff] %vm4608, %v4595
        %4615 = vst.msk [vmem:[#allocation4 + $0x30] sm:$0xff] %vm4608, %v4597
        %4616 = vst.msk [vmem:[#allocation4 + $0x38] sm:$0xff] %vm4608, %v4599
        %s4617 = scalar_lea.vmem %s2, 6
        %v4618 = vld [vmem:[%s4617] sm:$0x1]
        %v4619 = vld [vmem:[%s4617 + $0x1] sm:$0x1]
        %v4620 = vld [vmem:[#allocation4] sm:$0xff]
        %v4621 = vld [vmem:[#allocation4 + $0x8] sm:$0xff]
        %v4622 = vld [vmem:[#allocation4 + $0x10] sm:$0xff]
        %v4623 = vld [vmem:[#allocation4 + $0x18] sm:$0xff]
        %v4624 = vld [vmem:[#allocation4 + $0x20] sm:$0xff]
        %v4625 = vld [vmem:[#allocation4 + $0x28] sm:$0xff]
        %v4626 = vld [vmem:[#allocation4 + $0x30] sm:$0xff]
        %v4627 = vld [vmem:[#allocation4 + $0x38] sm:$0xff]
        %v4628 = vperm.slane %v4618, 0
        %v4629 = vmul.f32 %v4620, %v4628
        %v4630 = vmul.f32 %v4621, %v4628
        %v4631 = vmul.f32 %v4622, %v4628
        %v4632 = vmul.f32 %v4623, %v4628
        %v4633 = vmul.f32 %v4624, %v4628
        %v4634 = vmul.f32 %v4625, %v4628
        %v4635 = vmul.f32 %v4626, %v4628
        %v4636 = vmul.f32 %v4627, %v4628
        %v4637 = vperm.slane %v4619, 0
        %v4638 = vadd.f32 %v4629, %v4637
        %v4639 = vadd.f32 %v4630, %v4637
        %v4640 = vadd.f32 %v4631, %v4637
        %v4641 = vadd.f32 %v4632, %v4637
        %v4642 = vadd.f32 %v4633, %v4637
        %v4643 = vadd.f32 %v4634, %v4637
        %v4644 = vadd.f32 %v4635, %v4637
        %v4645 = vadd.f32 %v4636, %v4637
        %v4646 = vmax.f32 %v4638, 0.0
        %v4647 = vmax.f32 %v4639, 0.0
        %v4648 = vmax.f32 %v4640, 0.0
        %v4649 = vmax.f32 %v4641, 0.0
        %v4650 = vmax.f32 %v4642, 0.0
        %v4651 = vmax.f32 %v4643, 0.0
        %v4652 = vmax.f32 %v4644, 0.0
        %v4653 = vmax.f32 %v4645, 0.0
        %v4654 = vpack.c.bf16 %v4647, %v4646
        %v4655 = vpack.c.bf16 %v4649, %v4648
        %v4656 = vpack.c.bf16 %v4651, %v4650
        %v4657 = vpack.c.bf16 %v4653, %v4652
        %s4658 = scalar_lea.vmem %s3, 16
        %v4659 = vld [vmem:[%s4658] sm:$0xf]
        %v4660 = vld [vmem:[%s4658 + $0x4] sm:$0xf]
        %v4661 = vld [vmem:[%s4658 + $0x8] sm:$0xf]
        %v4662 = vld [vmem:[%s4658 + $0xc] sm:$0xf]
        %v4667 = vunpack.c.l.b16 %v4659
        %v4668 = vunpack.c.l.b16 %v4660
        %v4669 = vunpack.c.l.b16 %v4661
        %v4670 = vunpack.c.l.b16 %v4662
        %v4671 = vpack.c.b16 %v4668, %v4667
        %v4672 = vpack.c.b16 %v4670, %v4669
        %v4676 = vsel %vm3012, %v4654, 0
        %v4679 = vsel %vm3012, %v4655, 0
        %v4682 = vsel %vm3012, %v4656, 0
        %v4685 = vsel %vm3012, %v4657, 0
        %4687 = vmatpush.bf16.msra.mxu0 0
        %4688 = vmatpush.bf16.msra.mxu0 0
        %4689 = vmatpush.bf16.msra.mxu0 0
        %4690 = vmatpush.bf16.msra.mxu0 0
        %4691 = vmatpush.bf16.msra.mxu0 0
        %4692 = vmatpush.bf16.msra.mxu0 0
        %4693 = vmatpush.bf16.msra.mxu0 %v4672
        %4694 = vmatpush.bf16.msra.mxu0 %v4671
        %4695 = vmatmul.bf16.gmra.mxu0 %v4676
        %v4696 = vpop.f32.mrf.mxu0
        %v4697 = vadd.f32 0.0, %v4696
        %v4698 = vpop.f32.mrf.mxu0
        %v4699 = vadd.f32 0.0, %v4698
        %4700 = vmatmul.bf16.gmra.mxu0 %v4679
        %v4701 = vpop.f32.mrf.mxu0
        %v4702 = vadd.f32 0.0, %v4701
        %v4703 = vpop.f32.mrf.mxu0
        %v4704 = vadd.f32 0.0, %v4703
        %4705 = vmatmul.bf16.gmra.mxu0 %v4682
        %v4706 = vpop.f32.mrf.mxu0
        %v4707 = vadd.f32 0.0, %v4706
        %v4708 = vpop.f32.mrf.mxu0
        %v4709 = vadd.f32 0.0, %v4708
        %4710 = vmatmul.bf16.gmra.mxu0 %v4685
        %v4711 = vpop.f32.mrf.mxu0
        %v4712 = vadd.f32 0.0, %v4711
        %v4713 = vpop.f32.mrf.mxu0
        %v4714 = vadd.f32 0.0, %v4713
        %4715 = vdwg.mxu0
        %s4716 = scalar_lea.vmem %s2, 8
        %v4717 = vld [vmem:[%s4716] sm:$0x1]
        %v4718 = vld [vmem:[%s4716 + $0x1] sm:$0x1]
        %v4719 = vperm.slane %v4717, 0
        %v4720 = vmul.f32 %v4697, %v4719
        %v4721 = vmul.f32 %v4699, %v4719
        %v4722 = vmul.f32 %v4702, %v4719
        %v4723 = vmul.f32 %v4704, %v4719
        %v4724 = vmul.f32 %v4707, %v4719
        %v4725 = vmul.f32 %v4709, %v4719
        %v4726 = vmul.f32 %v4712, %v4719
        %v4727 = vmul.f32 %v4714, %v4719
        %v4728 = vperm.slane %v4718, 0
        %v4729 = vadd.f32 %v4720, %v4728
        %v4730 = vadd.f32 %v4721, %v4728
        %v4731 = vadd.f32 %v4722, %v4728
        %v4732 = vadd.f32 %v4723, %v4728
        %v4733 = vadd.f32 %v4724, %v4728
        %v4734 = vadd.f32 %v4725, %v4728
        %v4735 = vadd.f32 %v4726, %v4728
        %v4736 = vadd.f32 %v4727, %v4728
        %v4737 = vmax.f32 %v4729, 0.0
        %v4738 = vmax.f32 %v4730, 0.0
        %v4739 = vmax.f32 %v4731, 0.0
        %v4740 = vmax.f32 %v4732, 0.0
        %v4741 = vmax.f32 %v4733, 0.0
        %v4742 = vmax.f32 %v4734, 0.0
        %v4743 = vmax.f32 %v4735, 0.0
        %v4744 = vmax.f32 %v4736, 0.0
        %4745 = vst.msk [vmem:[#allocation6] sm:$0xf] %vm3348, 0
        %4746 = vst.msk [vmem:[#allocation6 + $0x4] sm:$0x1] %vm1470, 0
        %4747 = vst.msk [vmem:[#allocation6 + $0x8] sm:$0xf] %vm3348, 0
        %4748 = vst.msk [vmem:[#allocation6 + $0xc] sm:$0x1] %vm1470, 0
        %4749 = vst.msk [vmem:[#allocation6 + $0x10] sm:$0xf] %vm3348, 0
        %4750 = vst.msk [vmem:[#allocation6 + $0x14] sm:$0x1] %vm1470, 0
        %4751 = vst.msk [vmem:[#allocation6 + $0x18] sm:$0xf] %vm3348, 0
        %4752 = vst.msk [vmem:[#allocation6 + $0x1c] sm:$0x1] %vm1470, 0
        %4753 = vst.msk [vmem:[#allocation6 + $0x20] sm:$0xf] %vm3348, 0
        %4754 = vst.msk [vmem:[#allocation6 + $0x24] sm:$0x1] %vm1470, 0
        %4755 = vst.msk [vmem:[#allocation6 + $0x28] sm:$0xf] %vm3348, 0
        %4756 = vst.msk [vmem:[#allocation6 + $0x2c] sm:$0x1] %vm1470, 0
        %4757 = vst.msk [vmem:[#allocation6 + $0x30] sm:$0xf] %vm3348, 0
        %4758 = vst.msk [vmem:[#allocation6 + $0x34] sm:$0x1] %vm1470, 0
        %4759 = vst.msk [vmem:[#allocation6 + $0x38] sm:$0xf] %vm3348, 0
        %4760 = vst.msk [vmem:[#allocation6 + $0x3c] sm:$0x1] %vm1470, 0
        %4761 = vst.msk [vmem:[#allocation6 + $0x40] sm:$0xf] %vm3348, 0
        %4762 = vst.msk [vmem:[#allocation6 + $0x44] sm:$0x1] %vm1470, 0
        %4763 = vst.msk [vmem:[#allocation6 + $0x48] sm:$0xf] %vm3348, 0
        %4764 = vst.msk [vmem:[#allocation6 + $0x4c] sm:$0x1] %vm1470, 0
        %v4765 = vpack.c.bf16 %v4737, %v4737
        %v4766 = vpack.c.bf16 %v4738, %v4738
        %v4767 = vpack.c.bf16 %v4739, %v4739
        %v4768 = vpack.c.bf16 %v4740, %v4740
        %v4769 = vpack.c.bf16 %v4741, %v4741
        %v4770 = vpack.c.bf16 %v4742, %v4742
        %v4771 = vpack.c.bf16 %v4743, %v4743
        %v4772 = vpack.c.bf16 %v4744, %v4744
        %v4774 = vshrl.u32 %v4765, 16
        %v4776 = vrot.slane %v4774, 7
        %v4777 = vshll.u32 %v4765, 16
        %v4779 = vor.u32 %v4776, %v4777
        %v4780 = vrot.slane %v4776, 4
        %v4782 = vshrl.u32 %v4766, 16
        %v4784 = vrot.slane %v4782, 7
        %v4785 = vshll.u32 %v4766, 16
        %v4787 = vor.u32 %v4784, %v4785
        %v4788 = vrot.slane %v4784, 4
        %v4790 = vshrl.u32 %v4767, 16
        %v4792 = vrot.slane %v4790, 7
        %v4793 = vshll.u32 %v4767, 16
        %v4795 = vor.u32 %v4792, %v4793
        %v4796 = vrot.slane %v4792, 4
        %v4798 = vshrl.u32 %v4768, 16
        %v4800 = vrot.slane %v4798, 7
        %v4801 = vshll.u32 %v4768, 16
        %v4803 = vor.u32 %v4800, %v4801
        %v4804 = vrot.slane %v4800, 4
        %v4806 = vshrl.u32 %v4769, 16
        %v4808 = vrot.slane %v4806, 7
        %v4809 = vshll.u32 %v4769, 16
        %v4811 = vor.u32 %v4808, %v4809
        %v4812 = vrot.slane %v4808, 4
        %v4814 = vshrl.u32 %v4770, 16
        %v4816 = vrot.slane %v4814, 7
        %v4817 = vshll.u32 %v4770, 16
        %v4819 = vor.u32 %v4816, %v4817
        %v4820 = vrot.slane %v4816, 4
        %v4822 = vshrl.u32 %v4771, 16
        %v4824 = vrot.slane %v4822, 7
        %v4825 = vshll.u32 %v4771, 16
        %v4827 = vor.u32 %v4824, %v4825
        %v4828 = vrot.slane %v4824, 4
        %v4830 = vshrl.u32 %v4772, 16
        %v4832 = vrot.slane %v4830, 7
        %v4833 = vshll.u32 %v4772, 16
        %v4835 = vor.u32 %v4832, %v4833
        %v4836 = vrot.slane %v4832, 4
        %v4853 = vld [vmem:[%s3457] sm:$0xf]
        %v4854 = vsel %vm3460, %v4779, %v4853
        %4855 = vst [vmem:[%s3457] sm:$0xf] %v4854
        %v4856 = vld [vmem:[%s3457 + $0x4] sm:$0x1]
        %v4857 = vsel %vm3466, %v4780, %v4856
        %4858 = vst [vmem:[%s3457 + $0x4] sm:$0x1] %v4857
        %v4859 = vld [vmem:[%s3457 + $0x8] sm:$0xf]
        %v4860 = vsel %vm3460, %v4787, %v4859
        %4861 = vst [vmem:[%s3457 + $0x8] sm:$0xf] %v4860
        %v4862 = vld [vmem:[%s3457 + $0xc] sm:$0x1]
        %v4863 = vsel %vm3466, %v4788, %v4862
        %4864 = vst [vmem:[%s3457 + $0xc] sm:$0x1] %v4863
        %v4865 = vld [vmem:[%s3457 + $0x10] sm:$0xf]
        %v4866 = vsel %vm3460, %v4795, %v4865
        %4867 = vst [vmem:[%s3457 + $0x10] sm:$0xf] %v4866
        %v4868 = vld [vmem:[%s3457 + $0x14] sm:$0x1]
        %v4869 = vsel %vm3466, %v4796, %v4868
        %4870 = vst [vmem:[%s3457 + $0x14] sm:$0x1] %v4869
        %v4871 = vld [vmem:[%s3457 + $0x18] sm:$0xf]
        %v4872 = vsel %vm3460, %v4803, %v4871
        %4873 = vst [vmem:[%s3457 + $0x18] sm:$0xf] %v4872
        %v4874 = vld [vmem:[%s3457 + $0x1c] sm:$0x1]
        %v4875 = vsel %vm3466, %v4804, %v4874
        %4876 = vst [vmem:[%s3457 + $0x1c] sm:$0x1] %v4875
        %v4877 = vld [vmem:[%s3457 + $0x20] sm:$0xf]
        %v4878 = vsel %vm3460, %v4811, %v4877
        %4879 = vst [vmem:[%s3457 + $0x20] sm:$0xf] %v4878
        %v4880 = vld [vmem:[%s3457 + $0x24] sm:$0x1]
        %v4881 = vsel %vm3466, %v4812, %v4880
        %4882 = vst [vmem:[%s3457 + $0x24] sm:$0x1] %v4881
        %v4883 = vld [vmem:[%s3457 + $0x28] sm:$0xf]
        %v4884 = vsel %vm3460, %v4819, %v4883
        %4885 = vst [vmem:[%s3457 + $0x28] sm:$0xf] %v4884
        %v4886 = vld [vmem:[%s3457 + $0x2c] sm:$0x1]
        %v4887 = vsel %vm3466, %v4820, %v4886
        %4888 = vst [vmem:[%s3457 + $0x2c] sm:$0x1] %v4887
        %v4889 = vld [vmem:[%s3457 + $0x30] sm:$0xf]
        %v4890 = vsel %vm3460, %v4827, %v4889
        %4891 = vst [vmem:[%s3457 + $0x30] sm:$0xf] %v4890
        %v4892 = vld [vmem:[%s3457 + $0x34] sm:$0x1]
        %v4893 = vsel %vm3466, %v4828, %v4892
        %4894 = vst [vmem:[%s3457 + $0x34] sm:$0x1] %v4893
        %v4895 = vld [vmem:[%s3457 + $0x38] sm:$0xf]
        %v4896 = vsel %vm3460, %v4835, %v4895
        %4897 = vst [vmem:[%s3457 + $0x38] sm:$0xf] %v4896
        %v4898 = vld [vmem:[%s3457 + $0x3c] sm:$0x1]
        %v4899 = vsel %vm3466, %v4836, %v4898
        %4900 = vst [vmem:[%s3457 + $0x3c] sm:$0x1] %v4899
        %v4901 = vld [vmem:[#allocation6] sm:$0xf]
        %v4902 = vld [vmem:[#allocation6 + $0x8] sm:$0xf]
        %v4903 = vld [vmem:[#allocation6 + $0x10] sm:$0xf]
        %v4904 = vld [vmem:[#allocation6 + $0x18] sm:$0xf]
        %v4905 = vld [vmem:[#allocation6 + $0x20] sm:$0xf]
        %v4906 = vld [vmem:[#allocation6 + $0x28] sm:$0xf]
        %v4907 = vld [vmem:[#allocation6 + $0x30] sm:$0xf]
        %v4908 = vld [vmem:[#allocation6 + $0x38] sm:$0xf]
        %4909 = vst.msk [vmem:[#allocation7] sm:$0xf] %vm3348, %v4901
        %4910 = vst.msk [vmem:[#allocation7 + $0x8] sm:$0xf] %vm3348, %v4902
        %4911 = vst.msk [vmem:[#allocation7 + $0x10] sm:$0xf] %vm3348, %v4903
        %4912 = vst.msk [vmem:[#allocation7 + $0x18] sm:$0xf] %vm3348, %v4904
        %4913 = vst.msk [vmem:[#allocation7 + $0x20] sm:$0xf] %vm3348, %v4905
        %4914 = vst.msk [vmem:[#allocation7 + $0x28] sm:$0xf] %vm3348, %v4906
        %4915 = vst.msk [vmem:[#allocation7 + $0x30] sm:$0xf] %vm3348, %v4907
        %4916 = vst.msk [vmem:[#allocation7 + $0x38] sm:$0xf] %vm3348, %v4908
        %v4917 = vld [vmem:[#allocation6] sm:$0xf]
        %v4918 = vld [vmem:[#allocation6 + $0x4] sm:$0x1]
        %v4919 = vld [vmem:[#allocation6 + $0x8] sm:$0xf]
        %v4920 = vld [vmem:[#allocation6 + $0xc] sm:$0x1]
        %v4921 = vld [vmem:[#allocation6 + $0x10] sm:$0xf]
        %v4922 = vld [vmem:[#allocation6 + $0x14] sm:$0x1]
        %v4923 = vld [vmem:[#allocation6 + $0x18] sm:$0xf]
        %v4924 = vld [vmem:[#allocation6 + $0x1c] sm:$0x1]
        %v4925 = vld [vmem:[#allocation6 + $0x20] sm:$0xf]
        %v4926 = vld [vmem:[#allocation6 + $0x24] sm:$0x1]
        %v4927 = vld [vmem:[#allocation6 + $0x28] sm:$0xf]
        %v4928 = vld [vmem:[#allocation6 + $0x2c] sm:$0x1]
        %v4929 = vld [vmem:[#allocation6 + $0x30] sm:$0xf]
        %v4930 = vld [vmem:[#allocation6 + $0x34] sm:$0x1]
        %v4931 = vld [vmem:[#allocation6 + $0x38] sm:$0xf]
        %v4932 = vld [vmem:[#allocation6 + $0x3c] sm:$0x1]
        %v4934 = vshrl.u32 %v4917, 16
        %v4936 = vrot.slane %v4934, 4
        %v4937 = vshll.u32 %v4917, 16
        %v4939 = vrot.slane %v4937, 5
        %v4940 = vor.u32 %v4936, %v4939
        %v4941 = vrot.slane %v4940, 4
        %v4943 = vshll.u32 %v4918, 16
        %v4945 = vrot.slane %v4943, 5
        %v4946 = vsel %vm3546, %v4941, %v4945
        %v4948 = vshrl.u32 %v4919, 16
        %v4950 = vrot.slane %v4948, 4
        %v4951 = vshll.u32 %v4919, 16
        %v4953 = vrot.slane %v4951, 5
        %v4954 = vor.u32 %v4950, %v4953
        %v4955 = vrot.slane %v4954, 4
        %v4957 = vshll.u32 %v4920, 16
        %v4959 = vrot.slane %v4957, 5
        %v4960 = vsel %vm3546, %v4955, %v4959
        %v4962 = vshrl.u32 %v4921, 16
        %v4964 = vrot.slane %v4962, 4
        %v4965 = vshll.u32 %v4921, 16
        %v4967 = vrot.slane %v4965, 5
        %v4968 = vor.u32 %v4964, %v4967
        %v4969 = vrot.slane %v4968, 4
        %v4971 = vshll.u32 %v4922, 16
        %v4973 = vrot.slane %v4971, 5
        %v4974 = vsel %vm3546, %v4969, %v4973
        %v4976 = vshrl.u32 %v4923, 16
        %v4978 = vrot.slane %v4976, 4
        %v4979 = vshll.u32 %v4923, 16
        %v4981 = vrot.slane %v4979, 5
        %v4982 = vor.u32 %v4978, %v4981
        %v4983 = vrot.slane %v4982, 4
        %v4985 = vshll.u32 %v4924, 16
        %v4987 = vrot.slane %v4985, 5
        %v4988 = vsel %vm3546, %v4983, %v4987
        %v4990 = vshrl.u32 %v4925, 16
        %v4992 = vrot.slane %v4990, 4
        %v4993 = vshll.u32 %v4925, 16
        %v4995 = vrot.slane %v4993, 5
        %v4996 = vor.u32 %v4992, %v4995
        %v4997 = vrot.slane %v4996, 4
        %v4999 = vshll.u32 %v4926, 16
        %v5001 = vrot.slane %v4999, 5
        %v5002 = vsel %vm3546, %v4997, %v5001
        %v5004 = vshrl.u32 %v4927, 16
        %v5006 = vrot.slane %v5004, 4
        %v5007 = vshll.u32 %v4927, 16
        %v5009 = vrot.slane %v5007, 5
        %v5010 = vor.u32 %v5006, %v5009
        %v5011 = vrot.slane %v5010, 4
        %v5013 = vshll.u32 %v4928, 16
        %v5015 = vrot.slane %v5013, 5
        %v5016 = vsel %vm3546, %v5011, %v5015
        %v5018 = vshrl.u32 %v4929, 16
        %v5020 = vrot.slane %v5018, 4
        %v5021 = vshll.u32 %v4929, 16
        %v5023 = vrot.slane %v5021, 5
        %v5024 = vor.u32 %v5020, %v5023
        %v5025 = vrot.slane %v5024, 4
        %v5027 = vshll.u32 %v4930, 16
        %v5029 = vrot.slane %v5027, 5
        %v5030 = vsel %vm3546, %v5025, %v5029
        %v5032 = vshrl.u32 %v4931, 16
        %v5034 = vrot.slane %v5032, 4
        %v5035 = vshll.u32 %v4931, 16
        %v5037 = vrot.slane %v5035, 5
        %v5038 = vor.u32 %v5034, %v5037
        %v5039 = vrot.slane %v5038, 4
        %v5041 = vshll.u32 %v4932, 16
        %v5043 = vrot.slane %v5041, 5
        %v5044 = vsel %vm3546, %v5039, %v5043
        %5045 = vrot.lane.b32.xlu0 %v4946, 16
        %v5046 = vpop.permute.xlu0 %5045
        %5047 = vrot.lane.b32.xlu0 %v4960, 16
        %v5048 = vpop.permute.xlu0 %5047
        %5049 = vrot.lane.b32.xlu0 %v4974, 16
        %v5050 = vpop.permute.xlu0 %5049
        %5051 = vrot.lane.b32.xlu0 %v4988, 16
        %v5052 = vpop.permute.xlu0 %5051
        %5053 = vrot.lane.b32.xlu0 %v5002, 16
        %v5054 = vpop.permute.xlu0 %5053
        %5055 = vrot.lane.b32.xlu0 %v5016, 16
        %v5056 = vpop.permute.xlu0 %5055
        %5057 = vrot.lane.b32.xlu0 %v5030, 16
        %v5058 = vpop.permute.xlu0 %5057
        %5059 = vrot.lane.b32.xlu0 %v5044, 16
        %v5060 = vpop.permute.xlu0 %5059
        %5069 = vst.msk [vmem:[#allocation7] sm:$0xf] %vm3683, %v5046
        %5070 = vst.msk [vmem:[#allocation7 + $0x8] sm:$0xf] %vm3683, %v5048
        %5071 = vst.msk [vmem:[#allocation7 + $0x10] sm:$0xf] %vm3683, %v5050
        %5072 = vst.msk [vmem:[#allocation7 + $0x18] sm:$0xf] %vm3683, %v5052
        %5073 = vst.msk [vmem:[#allocation7 + $0x20] sm:$0xf] %vm3683, %v5054
        %5074 = vst.msk [vmem:[#allocation7 + $0x28] sm:$0xf] %vm3683, %v5056
        %5075 = vst.msk [vmem:[#allocation7 + $0x30] sm:$0xf] %vm3683, %v5058
        %5076 = vst.msk [vmem:[#allocation7 + $0x38] sm:$0xf] %vm3683, %v5060
        %v5077 = vld [vmem:[#allocation6] sm:$0xe]
        %v5078 = vld [vmem:[#allocation6 + $0x4] sm:$0x1]
        %v5079 = vld [vmem:[#allocation6 + $0x8] sm:$0xe]
        %v5080 = vld [vmem:[#allocation6 + $0xc] sm:$0x1]
        %v5081 = vld [vmem:[#allocation6 + $0x10] sm:$0xe]
        %v5082 = vld [vmem:[#allocation6 + $0x14] sm:$0x1]
        %v5083 = vld [vmem:[#allocation6 + $0x18] sm:$0xe]
        %v5084 = vld [vmem:[#allocation6 + $0x1c] sm:$0x1]
        %v5085 = vld [vmem:[#allocation6 + $0x20] sm:$0xe]
        %v5086 = vld [vmem:[#allocation6 + $0x24] sm:$0x1]
        %v5087 = vld [vmem:[#allocation6 + $0x28] sm:$0xe]
        %v5088 = vld [vmem:[#allocation6 + $0x2c] sm:$0x1]
        %v5089 = vld [vmem:[#allocation6 + $0x30] sm:$0xe]
        %v5090 = vld [vmem:[#allocation6 + $0x34] sm:$0x1]
        %v5091 = vld [vmem:[#allocation6 + $0x38] sm:$0xe]
        %v5092 = vld [vmem:[#allocation6 + $0x3c] sm:$0x1]
        %v5109 = vrot.slane %v5077, 5
        %v5110 = vrot.slane %v5109, 4
        %v5111 = vrot.slane %v5078, 5
        %v5112 = vsel %vm3726, %v5110, %v5111
        %v5113 = vrot.slane %v5079, 5
        %v5114 = vrot.slane %v5113, 4
        %v5115 = vrot.slane %v5080, 5
        %v5116 = vsel %vm3726, %v5114, %v5115
        %v5117 = vrot.slane %v5081, 5
        %v5118 = vrot.slane %v5117, 4
        %v5119 = vrot.slane %v5082, 5
        %v5120 = vsel %vm3726, %v5118, %v5119
        %v5121 = vrot.slane %v5083, 5
        %v5122 = vrot.slane %v5121, 4
        %v5123 = vrot.slane %v5084, 5
        %v5124 = vsel %vm3726, %v5122, %v5123
        %v5125 = vrot.slane %v5085, 5
        %v5126 = vrot.slane %v5125, 4
        %v5127 = vrot.slane %v5086, 5
        %v5128 = vsel %vm3726, %v5126, %v5127
        %v5129 = vrot.slane %v5087, 5
        %v5130 = vrot.slane %v5129, 4
        %v5131 = vrot.slane %v5088, 5
        %v5132 = vsel %vm3726, %v5130, %v5131
        %v5133 = vrot.slane %v5089, 5
        %v5134 = vrot.slane %v5133, 4
        %v5135 = vrot.slane %v5090, 5
        %v5136 = vsel %vm3726, %v5134, %v5135
        %v5137 = vrot.slane %v5091, 5
        %v5138 = vrot.slane %v5137, 4
        %v5139 = vrot.slane %v5092, 5
        %v5140 = vsel %vm3726, %v5138, %v5139
        %5141 = vrot.lane.b32.xlu0 %v5112, 32
        %v5142 = vpop.permute.xlu0 %5141
        %5143 = vrot.lane.b32.xlu0 %v5116, 32
        %v5144 = vpop.permute.xlu0 %5143
        %5145 = vrot.lane.b32.xlu0 %v5120, 32
        %v5146 = vpop.permute.xlu0 %5145
        %5147 = vrot.lane.b32.xlu0 %v5124, 32
        %v5148 = vpop.permute.xlu0 %5147
        %5149 = vrot.lane.b32.xlu0 %v5128, 32
        %v5150 = vpop.permute.xlu0 %5149
        %5151 = vrot.lane.b32.xlu0 %v5132, 32
        %v5152 = vpop.permute.xlu0 %5151
        %5153 = vrot.lane.b32.xlu0 %v5136, 32
        %v5154 = vpop.permute.xlu0 %5153
        %5155 = vrot.lane.b32.xlu0 %v5140, 32
        %v5156 = vpop.permute.xlu0 %5155
        %5165 = vst.msk [vmem:[#allocation7] sm:$0xf] %vm3783, %v5142
        %5166 = vst.msk [vmem:[#allocation7 + $0x8] sm:$0xf] %vm3783, %v5144
        %5167 = vst.msk [vmem:[#allocation7 + $0x10] sm:$0xf] %vm3783, %v5146
        %5168 = vst.msk [vmem:[#allocation7 + $0x18] sm:$0xf] %vm3783, %v5148
        %5169 = vst.msk [vmem:[#allocation7 + $0x20] sm:$0xf] %vm3783, %v5150
        %5170 = vst.msk [vmem:[#allocation7 + $0x28] sm:$0xf] %vm3783, %v5152
        %5171 = vst.msk [vmem:[#allocation7 + $0x30] sm:$0xf] %vm3783, %v5154
        %5172 = vst.msk [vmem:[#allocation7 + $0x38] sm:$0xf] %vm3783, %v5156
        %v5173 = vld [vmem:[%s3457] sm:$0xf]
        %v5174 = vld [vmem:[%s3457 + $0x8] sm:$0xf]
        %v5175 = vld [vmem:[%s3457 + $0x10] sm:$0xf]
        %v5176 = vld [vmem:[%s3457 + $0x18] sm:$0xf]
        %v5177 = vld [vmem:[%s3457 + $0x20] sm:$0xf]
        %v5178 = vld [vmem:[%s3457 + $0x28] sm:$0xf]
        %v5179 = vld [vmem:[%s3457 + $0x30] sm:$0xf]
        %v5180 = vld [vmem:[%s3457 + $0x38] sm:$0xf]
        %5189 = vrot.lane.b32.xlu0 %v5173, 48
        %v5190 = vpop.permute.xlu0 %5189
        %5191 = vrot.lane.b32.xlu0 %v5174, 48
        %v5192 = vpop.permute.xlu0 %5191
        %5193 = vrot.lane.b32.xlu0 %v5175, 48
        %v5194 = vpop.permute.xlu0 %5193
        %5195 = vrot.lane.b32.xlu0 %v5176, 48
        %v5196 = vpop.permute.xlu0 %5195
        %5197 = vrot.lane.b32.xlu0 %v5177, 48
        %v5198 = vpop.permute.xlu0 %5197
        %5199 = vrot.lane.b32.xlu0 %v5178, 48
        %v5200 = vpop.permute.xlu0 %5199
        %5201 = vrot.lane.b32.xlu0 %v5179, 48
        %v5202 = vpop.permute.xlu0 %5201
        %5203 = vrot.lane.b32.xlu0 %v5180, 48
        %v5204 = vpop.permute.xlu0 %5203
        %5213 = vst.msk [vmem:[#allocation7] sm:$0xf] %vm3832, %v5190
        %5214 = vst.msk [vmem:[#allocation7 + $0x8] sm:$0xf] %vm3832, %v5192
        %5215 = vst.msk [vmem:[#allocation7 + $0x10] sm:$0xf] %vm3832, %v5194
        %5216 = vst.msk [vmem:[#allocation7 + $0x18] sm:$0xf] %vm3832, %v5196
        %5217 = vst.msk [vmem:[#allocation7 + $0x20] sm:$0xf] %vm3832, %v5198
        %5218 = vst.msk [vmem:[#allocation7 + $0x28] sm:$0xf] %vm3832, %v5200
        %5219 = vst.msk [vmem:[#allocation7 + $0x30] sm:$0xf] %vm3832, %v5202
        %5220 = vst.msk [vmem:[#allocation7 + $0x38] sm:$0xf] %vm3832, %v5204
        %v5221 = vld [vmem:[%s3457] sm:$0xf]
        %v5222 = vld [vmem:[%s3457 + $0x4] sm:$0x1]
        %v5223 = vld [vmem:[%s3457 + $0x8] sm:$0xf]
        %v5224 = vld [vmem:[%s3457 + $0xc] sm:$0x1]
        %v5225 = vld [vmem:[%s3457 + $0x10] sm:$0xf]
        %v5226 = vld [vmem:[%s3457 + $0x14] sm:$0x1]
        %v5227 = vld [vmem:[%s3457 + $0x18] sm:$0xf]
        %v5228 = vld [vmem:[%s3457 + $0x1c] sm:$0x1]
        %v5229 = vld [vmem:[%s3457 + $0x20] sm:$0xf]
        %v5230 = vld [vmem:[%s3457 + $0x24] sm:$0x1]
        %v5231 = vld [vmem:[%s3457 + $0x28] sm:$0xf]
        %v5232 = vld [vmem:[%s3457 + $0x2c] sm:$0x1]
        %v5233 = vld [vmem:[%s3457 + $0x30] sm:$0xf]
        %v5234 = vld [vmem:[%s3457 + $0x34] sm:$0x1]
        %v5235 = vld [vmem:[%s3457 + $0x38] sm:$0xf]
        %v5236 = vld [vmem:[%s3457 + $0x3c] sm:$0x1]
        %v5238 = vshrl.u32 %v5221, 16
        %v5240 = vrot.slane %v5238, 4
        %v5241 = vshll.u32 %v5221, 16
        %v5243 = vrot.slane %v5241, 5
        %v5244 = vor.u32 %v5240, %v5243
        %v5245 = vrot.slane %v5244, 4
        %v5247 = vshll.u32 %v5222, 16
        %v5249 = vrot.slane %v5247, 5
        %v5250 = vsel %vm3546, %v5245, %v5249
        %v5252 = vshrl.u32 %v5223, 16
        %v5254 = vrot.slane %v5252, 4
        %v5255 = vshll.u32 %v5223, 16
        %v5257 = vrot.slane %v5255, 5
        %v5258 = vor.u32 %v5254, %v5257
        %v5259 = vrot.slane %v5258, 4
        %v5261 = vshll.u32 %v5224, 16
        %v5263 = vrot.slane %v5261, 5
        %v5264 = vsel %vm3546, %v5259, %v5263
        %v5266 = vshrl.u32 %v5225, 16
        %v5268 = vrot.slane %v5266, 4
        %v5269 = vshll.u32 %v5225, 16
        %v5271 = vrot.slane %v5269, 5
        %v5272 = vor.u32 %v5268, %v5271
        %v5273 = vrot.slane %v5272, 4
        %v5275 = vshll.u32 %v5226, 16
        %v5277 = vrot.slane %v5275, 5
        %v5278 = vsel %vm3546, %v5273, %v5277
        %v5280 = vshrl.u32 %v5227, 16
        %v5282 = vrot.slane %v5280, 4
        %v5283 = vshll.u32 %v5227, 16
        %v5285 = vrot.slane %v5283, 5
        %v5286 = vor.u32 %v5282, %v5285
        %v5287 = vrot.slane %v5286, 4
        %v5289 = vshll.u32 %v5228, 16
        %v5291 = vrot.slane %v5289, 5
        %v5292 = vsel %vm3546, %v5287, %v5291
        %v5294 = vshrl.u32 %v5229, 16
        %v5296 = vrot.slane %v5294, 4
        %v5297 = vshll.u32 %v5229, 16
        %v5299 = vrot.slane %v5297, 5
        %v5300 = vor.u32 %v5296, %v5299
        %v5301 = vrot.slane %v5300, 4
        %v5303 = vshll.u32 %v5230, 16
        %v5305 = vrot.slane %v5303, 5
        %v5306 = vsel %vm3546, %v5301, %v5305
        %v5308 = vshrl.u32 %v5231, 16
        %v5310 = vrot.slane %v5308, 4
        %v5311 = vshll.u32 %v5231, 16
        %v5313 = vrot.slane %v5311, 5
        %v5314 = vor.u32 %v5310, %v5313
        %v5315 = vrot.slane %v5314, 4
        %v5317 = vshll.u32 %v5232, 16
        %v5319 = vrot.slane %v5317, 5
        %v5320 = vsel %vm3546, %v5315, %v5319
        %v5322 = vshrl.u32 %v5233, 16
        %v5324 = vrot.slane %v5322, 4
        %v5325 = vshll.u32 %v5233, 16
        %v5327 = vrot.slane %v5325, 5
        %v5328 = vor.u32 %v5324, %v5327
        %v5329 = vrot.slane %v5328, 4
        %v5331 = vshll.u32 %v5234, 16
        %v5333 = vrot.slane %v5331, 5
        %v5334 = vsel %vm3546, %v5329, %v5333
        %v5336 = vshrl.u32 %v5235, 16
        %v5338 = vrot.slane %v5336, 4
        %v5339 = vshll.u32 %v5235, 16
        %v5341 = vrot.slane %v5339, 5
        %v5342 = vor.u32 %v5338, %v5341
        %v5343 = vrot.slane %v5342, 4
        %v5345 = vshll.u32 %v5236, 16
        %v5347 = vrot.slane %v5345, 5
        %v5348 = vsel %vm3546, %v5343, %v5347
        %5349 = vrot.lane.b32.xlu0 %v5250, 64
        %v5350 = vpop.permute.xlu0 %5349
        %5351 = vrot.lane.b32.xlu0 %v5264, 64
        %v5352 = vpop.permute.xlu0 %5351
        %5353 = vrot.lane.b32.xlu0 %v5278, 64
        %v5354 = vpop.permute.xlu0 %5353
        %5355 = vrot.lane.b32.xlu0 %v5292, 64
        %v5356 = vpop.permute.xlu0 %5355
        %5357 = vrot.lane.b32.xlu0 %v5306, 64
        %v5358 = vpop.permute.xlu0 %5357
        %5359 = vrot.lane.b32.xlu0 %v5320, 64
        %v5360 = vpop.permute.xlu0 %5359
        %5361 = vrot.lane.b32.xlu0 %v5334, 64
        %v5362 = vpop.permute.xlu0 %5361
        %5363 = vrot.lane.b32.xlu0 %v5348, 64
        %v5364 = vpop.permute.xlu0 %5363
        %5373 = vst.msk [vmem:[#allocation7] sm:$0xf] %vm3993, %v5350
        %5374 = vst.msk [vmem:[#allocation7 + $0x8] sm:$0xf] %vm3993, %v5352
        %5375 = vst.msk [vmem:[#allocation7 + $0x10] sm:$0xf] %vm3993, %v5354
        %5376 = vst.msk [vmem:[#allocation7 + $0x18] sm:$0xf] %vm3993, %v5356
        %5377 = vst.msk [vmem:[#allocation7 + $0x20] sm:$0xf] %vm3993, %v5358
        %5378 = vst.msk [vmem:[#allocation7 + $0x28] sm:$0xf] %vm3993, %v5360
        %5379 = vst.msk [vmem:[#allocation7 + $0x30] sm:$0xf] %vm3993, %v5362
        %5380 = vst.msk [vmem:[#allocation7 + $0x38] sm:$0xf] %vm3993, %v5364
        %v5381 = vld [vmem:[%s3457] sm:$0xe]
        %v5382 = vld [vmem:[%s3457 + $0x4] sm:$0x1]
        %v5383 = vld [vmem:[%s3457 + $0x8] sm:$0xe]
        %v5384 = vld [vmem:[%s3457 + $0xc] sm:$0x1]
        %v5385 = vld [vmem:[%s3457 + $0x10] sm:$0xe]
        %v5386 = vld [vmem:[%s3457 + $0x14] sm:$0x1]
        %v5387 = vld [vmem:[%s3457 + $0x18] sm:$0xe]
        %v5388 = vld [vmem:[%s3457 + $0x1c] sm:$0x1]
        %v5389 = vld [vmem:[%s3457 + $0x20] sm:$0xe]
        %v5390 = vld [vmem:[%s3457 + $0x24] sm:$0x1]
        %v5391 = vld [vmem:[%s3457 + $0x28] sm:$0xe]
        %v5392 = vld [vmem:[%s3457 + $0x2c] sm:$0x1]
        %v5393 = vld [vmem:[%s3457 + $0x30] sm:$0xe]
        %v5394 = vld [vmem:[%s3457 + $0x34] sm:$0x1]
        %v5395 = vld [vmem:[%s3457 + $0x38] sm:$0xe]
        %v5396 = vld [vmem:[%s3457 + $0x3c] sm:$0x1]
        %v5413 = vrot.slane %v5381, 5
        %v5414 = vrot.slane %v5413, 4
        %v5415 = vrot.slane %v5382, 5
        %v5416 = vsel %vm3726, %v5414, %v5415
        %v5417 = vrot.slane %v5383, 5
        %v5418 = vrot.slane %v5417, 4
        %v5419 = vrot.slane %v5384, 5
        %v5420 = vsel %vm3726, %v5418, %v5419
        %v5421 = vrot.slane %v5385, 5
        %v5422 = vrot.slane %v5421, 4
        %v5423 = vrot.slane %v5386, 5
        %v5424 = vsel %vm3726, %v5422, %v5423
        %v5425 = vrot.slane %v5387, 5
        %v5426 = vrot.slane %v5425, 4
        %v5427 = vrot.slane %v5388, 5
        %v5428 = vsel %vm3726, %v5426, %v5427
        %v5429 = vrot.slane %v5389, 5
        %v5430 = vrot.slane %v5429, 4
        %v5431 = vrot.slane %v5390, 5
        %v5432 = vsel %vm3726, %v5430, %v5431
        %v5433 = vrot.slane %v5391, 5
        %v5434 = vrot.slane %v5433, 4
        %v5435 = vrot.slane %v5392, 5
        %v5436 = vsel %vm3726, %v5434, %v5435
        %v5437 = vrot.slane %v5393, 5
        %v5438 = vrot.slane %v5437, 4
        %v5439 = vrot.slane %v5394, 5
        %v5440 = vsel %vm3726, %v5438, %v5439
        %v5441 = vrot.slane %v5395, 5
        %v5442 = vrot.slane %v5441, 4
        %v5443 = vrot.slane %v5396, 5
        %v5444 = vsel %vm3726, %v5442, %v5443
        %5445 = vrot.lane.b32.xlu0 %v5416, 80
        %v5446 = vpop.permute.xlu0 %5445
        %5447 = vrot.lane.b32.xlu0 %v5420, 80
        %v5448 = vpop.permute.xlu0 %5447
        %5449 = vrot.lane.b32.xlu0 %v5424, 80
        %v5450 = vpop.permute.xlu0 %5449
        %5451 = vrot.lane.b32.xlu0 %v5428, 80
        %v5452 = vpop.permute.xlu0 %5451
        %5453 = vrot.lane.b32.xlu0 %v5432, 80
        %v5454 = vpop.permute.xlu0 %5453
        %5455 = vrot.lane.b32.xlu0 %v5436, 80
        %v5456 = vpop.permute.xlu0 %5455
        %5457 = vrot.lane.b32.xlu0 %v5440, 80
        %v5458 = vpop.permute.xlu0 %5457
        %5459 = vrot.lane.b32.xlu0 %v5444, 80
        %v5460 = vpop.permute.xlu0 %5459
        %5469 = vst.msk [vmem:[#allocation7] sm:$0xf] %vm4090, %v5446
        %5470 = vst.msk [vmem:[#allocation7 + $0x8] sm:$0xf] %vm4090, %v5448
        %5471 = vst.msk [vmem:[#allocation7 + $0x10] sm:$0xf] %vm4090, %v5450
        %5472 = vst.msk [vmem:[#allocation7 + $0x18] sm:$0xf] %vm4090, %v5452
        %5473 = vst.msk [vmem:[#allocation7 + $0x20] sm:$0xf] %vm4090, %v5454
        %5474 = vst.msk [vmem:[#allocation7 + $0x28] sm:$0xf] %vm4090, %v5456
        %5475 = vst.msk [vmem:[#allocation7 + $0x30] sm:$0xf] %vm4090, %v5458
        %5476 = vst.msk [vmem:[#allocation7 + $0x38] sm:$0xf] %vm4090, %v5460
        %v5477 = vld [vmem:[%s4099] sm:$0xf]
        %v5478 = vld [vmem:[%s4099 + $0x8] sm:$0xf]
        %v5479 = vld [vmem:[%s4099 + $0x10] sm:$0xf]
        %v5480 = vld [vmem:[%s4099 + $0x18] sm:$0xf]
        %v5481 = vld [vmem:[%s4099 + $0x20] sm:$0xf]
        %v5482 = vld [vmem:[%s4099 + $0x28] sm:$0xf]
        %v5483 = vld [vmem:[%s4099 + $0x30] sm:$0xf]
        %v5484 = vld [vmem:[%s4099 + $0x38] sm:$0xf]
        %5493 = vrot.lane.b32.xlu0 %v5477, 96
        %v5494 = vpop.permute.xlu0 %5493
        %5495 = vrot.lane.b32.xlu0 %v5478, 96
        %v5496 = vpop.permute.xlu0 %5495
        %5497 = vrot.lane.b32.xlu0 %v5479, 96
        %v5498 = vpop.permute.xlu0 %5497
        %5499 = vrot.lane.b32.xlu0 %v5480, 96
        %v5500 = vpop.permute.xlu0 %5499
        %5501 = vrot.lane.b32.xlu0 %v5481, 96
        %v5502 = vpop.permute.xlu0 %5501
        %5503 = vrot.lane.b32.xlu0 %v5482, 96
        %v5504 = vpop.permute.xlu0 %5503
        %5505 = vrot.lane.b32.xlu0 %v5483, 96
        %v5506 = vpop.permute.xlu0 %5505
        %5507 = vrot.lane.b32.xlu0 %v5484, 96
        %v5508 = vpop.permute.xlu0 %5507
        %5517 = vst.msk [vmem:[#allocation7] sm:$0xf] %vm4140, %v5494
        %5518 = vst.msk [vmem:[#allocation7 + $0x8] sm:$0xf] %vm4140, %v5496
        %5519 = vst.msk [vmem:[#allocation7 + $0x10] sm:$0xf] %vm4140, %v5498
        %5520 = vst.msk [vmem:[#allocation7 + $0x18] sm:$0xf] %vm4140, %v5500
        %5521 = vst.msk [vmem:[#allocation7 + $0x20] sm:$0xf] %vm4140, %v5502
        %5522 = vst.msk [vmem:[#allocation7 + $0x28] sm:$0xf] %vm4140, %v5504
        %5523 = vst.msk [vmem:[#allocation7 + $0x30] sm:$0xf] %vm4140, %v5506
        %5524 = vst.msk [vmem:[#allocation7 + $0x38] sm:$0xf] %vm4140, %v5508
        %v5525 = vld [vmem:[%s4099] sm:$0xf]
        %v5526 = vld [vmem:[%s4099 + $0x4] sm:$0x1]
        %v5527 = vld [vmem:[%s4099 + $0x8] sm:$0xf]
        %v5528 = vld [vmem:[%s4099 + $0xc] sm:$0x1]
        %v5529 = vld [vmem:[%s4099 + $0x10] sm:$0xf]
        %v5530 = vld [vmem:[%s4099 + $0x14] sm:$0x1]
        %v5531 = vld [vmem:[%s4099 + $0x18] sm:$0xf]
        %v5532 = vld [vmem:[%s4099 + $0x1c] sm:$0x1]
        %v5533 = vld [vmem:[%s4099 + $0x20] sm:$0xf]
        %v5534 = vld [vmem:[%s4099 + $0x24] sm:$0x1]
        %v5535 = vld [vmem:[%s4099 + $0x28] sm:$0xf]
        %v5536 = vld [vmem:[%s4099 + $0x2c] sm:$0x1]
        %v5537 = vld [vmem:[%s4099 + $0x30] sm:$0xf]
        %v5538 = vld [vmem:[%s4099 + $0x34] sm:$0x1]
        %v5539 = vld [vmem:[%s4099 + $0x38] sm:$0xf]
        %v5540 = vld [vmem:[%s4099 + $0x3c] sm:$0x1]
        %v5542 = vshrl.u32 %v5525, 16
        %v5544 = vrot.slane %v5542, 4
        %v5545 = vshll.u32 %v5525, 16
        %v5547 = vrot.slane %v5545, 5
        %v5548 = vor.u32 %v5544, %v5547
        %v5549 = vrot.slane %v5548, 4
        %v5551 = vshll.u32 %v5526, 16
        %v5553 = vrot.slane %v5551, 5
        %v5554 = vsel %vm3546, %v5549, %v5553
        %v5556 = vshrl.u32 %v5527, 16
        %v5558 = vrot.slane %v5556, 4
        %v5559 = vshll.u32 %v5527, 16
        %v5561 = vrot.slane %v5559, 5
        %v5562 = vor.u32 %v5558, %v5561
        %v5563 = vrot.slane %v5562, 4
        %v5565 = vshll.u32 %v5528, 16
        %v5567 = vrot.slane %v5565, 5
        %v5568 = vsel %vm3546, %v5563, %v5567
        %v5570 = vshrl.u32 %v5529, 16
        %v5572 = vrot.slane %v5570, 4
        %v5573 = vshll.u32 %v5529, 16
        %v5575 = vrot.slane %v5573, 5
        %v5576 = vor.u32 %v5572, %v5575
        %v5577 = vrot.slane %v5576, 4
        %v5579 = vshll.u32 %v5530, 16
        %v5581 = vrot.slane %v5579, 5
        %v5582 = vsel %vm3546, %v5577, %v5581
        %v5584 = vshrl.u32 %v5531, 16
        %v5586 = vrot.slane %v5584, 4
        %v5587 = vshll.u32 %v5531, 16
        %v5589 = vrot.slane %v5587, 5
        %v5590 = vor.u32 %v5586, %v5589
        %v5591 = vrot.slane %v5590, 4
        %v5593 = vshll.u32 %v5532, 16
        %v5595 = vrot.slane %v5593, 5
        %v5596 = vsel %vm3546, %v5591, %v5595
        %v5598 = vshrl.u32 %v5533, 16
        %v5600 = vrot.slane %v5598, 4
        %v5601 = vshll.u32 %v5533, 16
        %v5603 = vrot.slane %v5601, 5
        %v5604 = vor.u32 %v5600, %v5603
        %v5605 = vrot.slane %v5604, 4
        %v5607 = vshll.u32 %v5534, 16
        %v5609 = vrot.slane %v5607, 5
        %v5610 = vsel %vm3546, %v5605, %v5609
        %v5612 = vshrl.u32 %v5535, 16
        %v5614 = vrot.slane %v5612, 4
        %v5615 = vshll.u32 %v5535, 16
        %v5617 = vrot.slane %v5615, 5
        %v5618 = vor.u32 %v5614, %v5617
        %v5619 = vrot.slane %v5618, 4
        %v5621 = vshll.u32 %v5536, 16
        %v5623 = vrot.slane %v5621, 5
        %v5624 = vsel %vm3546, %v5619, %v5623
        %v5626 = vshrl.u32 %v5537, 16
        %v5628 = vrot.slane %v5626, 4
        %v5629 = vshll.u32 %v5537, 16
        %v5631 = vrot.slane %v5629, 5
        %v5632 = vor.u32 %v5628, %v5631
        %v5633 = vrot.slane %v5632, 4
        %v5635 = vshll.u32 %v5538, 16
        %v5637 = vrot.slane %v5635, 5
        %v5638 = vsel %vm3546, %v5633, %v5637
        %v5640 = vshrl.u32 %v5539, 16
        %v5642 = vrot.slane %v5640, 4
        %v5643 = vshll.u32 %v5539, 16
        %v5645 = vrot.slane %v5643, 5
        %v5646 = vor.u32 %v5642, %v5645
        %v5647 = vrot.slane %v5646, 4
        %v5649 = vshll.u32 %v5540, 16
        %v5651 = vrot.slane %v5649, 5
        %v5652 = vsel %vm3546, %v5647, %v5651
        %5653 = vrot.lane.b32.xlu0 %v5554, 112
        %v5654 = vpop.permute.xlu0 %5653
        %5655 = vrot.lane.b32.xlu0 %v5568, 112
        %v5656 = vpop.permute.xlu0 %5655
        %5657 = vrot.lane.b32.xlu0 %v5582, 112
        %v5658 = vpop.permute.xlu0 %5657
        %5659 = vrot.lane.b32.xlu0 %v5596, 112
        %v5660 = vpop.permute.xlu0 %5659
        %5661 = vrot.lane.b32.xlu0 %v5610, 112
        %v5662 = vpop.permute.xlu0 %5661
        %5663 = vrot.lane.b32.xlu0 %v5624, 112
        %v5664 = vpop.permute.xlu0 %5663
        %5665 = vrot.lane.b32.xlu0 %v5638, 112
        %v5666 = vpop.permute.xlu0 %5665
        %5667 = vrot.lane.b32.xlu0 %v5652, 112
        %v5668 = vpop.permute.xlu0 %5667
        %5677 = vst.msk [vmem:[#allocation7] sm:$0xf] %vm4301, %v5654
        %5678 = vst.msk [vmem:[#allocation7 + $0x8] sm:$0xf] %vm4301, %v5656
        %5679 = vst.msk [vmem:[#allocation7 + $0x10] sm:$0xf] %vm4301, %v5658
        %5680 = vst.msk [vmem:[#allocation7 + $0x18] sm:$0xf] %vm4301, %v5660
        %5681 = vst.msk [vmem:[#allocation7 + $0x20] sm:$0xf] %vm4301, %v5662
        %5682 = vst.msk [vmem:[#allocation7 + $0x28] sm:$0xf] %vm4301, %v5664
        %5683 = vst.msk [vmem:[#allocation7 + $0x30] sm:$0xf] %vm4301, %v5666
        %5684 = vst.msk [vmem:[#allocation7 + $0x38] sm:$0xf] %vm4301, %v5668
        %v5685 = vld [vmem:[%s4099] sm:$0xe]
        %v5686 = vld [vmem:[%s4099 + $0x4] sm:$0x1]
        %v5687 = vld [vmem:[%s4099 + $0x8] sm:$0xe]
        %v5688 = vld [vmem:[%s4099 + $0xc] sm:$0x1]
        %v5689 = vld [vmem:[%s4099 + $0x10] sm:$0xe]
        %v5690 = vld [vmem:[%s4099 + $0x14] sm:$0x1]
        %v5691 = vld [vmem:[%s4099 + $0x18] sm:$0xe]
        %v5692 = vld [vmem:[%s4099 + $0x1c] sm:$0x1]
        %v5693 = vld [vmem:[%s4099 + $0x20] sm:$0xe]
        %v5694 = vld [vmem:[%s4099 + $0x24] sm:$0x1]
        %v5695 = vld [vmem:[%s4099 + $0x28] sm:$0xe]
        %v5696 = vld [vmem:[%s4099 + $0x2c] sm:$0x1]
        %v5697 = vld [vmem:[%s4099 + $0x30] sm:$0xe]
        %v5698 = vld [vmem:[%s4099 + $0x34] sm:$0x1]
        %v5699 = vld [vmem:[%s4099 + $0x38] sm:$0xe]
        %v5700 = vld [vmem:[%s4099 + $0x3c] sm:$0x1]
        %v5717 = vrot.slane %v5685, 5
        %v5718 = vrot.slane %v5717, 4
        %v5719 = vrot.slane %v5686, 5
        %v5720 = vsel %vm3726, %v5718, %v5719
        %v5721 = vrot.slane %v5687, 5
        %v5722 = vrot.slane %v5721, 4
        %v5723 = vrot.slane %v5688, 5
        %v5724 = vsel %vm3726, %v5722, %v5723
        %v5725 = vrot.slane %v5689, 5
        %v5726 = vrot.slane %v5725, 4
        %v5727 = vrot.slane %v5690, 5
        %v5728 = vsel %vm3726, %v5726, %v5727
        %v5729 = vrot.slane %v5691, 5
        %v5730 = vrot.slane %v5729, 4
        %v5731 = vrot.slane %v5692, 5
        %v5732 = vsel %vm3726, %v5730, %v5731
        %v5733 = vrot.slane %v5693, 5
        %v5734 = vrot.slane %v5733, 4
        %v5735 = vrot.slane %v5694, 5
        %v5736 = vsel %vm3726, %v5734, %v5735
        %v5737 = vrot.slane %v5695, 5
        %v5738 = vrot.slane %v5737, 4
        %v5739 = vrot.slane %v5696, 5
        %v5740 = vsel %vm3726, %v5738, %v5739
        %v5741 = vrot.slane %v5697, 5
        %v5742 = vrot.slane %v5741, 4
        %v5743 = vrot.slane %v5698, 5
        %v5744 = vsel %vm3726, %v5742, %v5743
        %v5745 = vrot.slane %v5699, 5
        %v5746 = vrot.slane %v5745, 4
        %v5747 = vrot.slane %v5700, 5
        %v5748 = vsel %vm3726, %v5746, %v5747
        %5757 = vst.msk [vmem:[#allocation7 + $0x4] sm:$0xf] %vm3348, %v5720
        %5758 = vst.msk [vmem:[#allocation7 + $0xc] sm:$0xf] %vm3348, %v5724
        %5759 = vst.msk [vmem:[#allocation7 + $0x14] sm:$0xf] %vm3348, %v5728
        %5760 = vst.msk [vmem:[#allocation7 + $0x1c] sm:$0xf] %vm3348, %v5732
        %5761 = vst.msk [vmem:[#allocation7 + $0x24] sm:$0xf] %vm3348, %v5736
        %5762 = vst.msk [vmem:[#allocation7 + $0x2c] sm:$0xf] %vm3348, %v5740
        %5763 = vst.msk [vmem:[#allocation7 + $0x34] sm:$0xf] %vm3348, %v5744
        %5764 = vst.msk [vmem:[#allocation7 + $0x3c] sm:$0xf] %vm3348, %v5748
        %v5765 = vld [vmem:[#allocation7] sm:$0xff]
        %v5766 = vld [vmem:[#allocation7 + $0x8] sm:$0xff]
        %v5767 = vld [vmem:[#allocation7 + $0x10] sm:$0xff]
        %v5768 = vld [vmem:[#allocation7 + $0x18] sm:$0xff]
        %v5769 = vld [vmem:[#allocation7 + $0x20] sm:$0xff]
        %v5770 = vld [vmem:[#allocation7 + $0x28] sm:$0xff]
        %v5771 = vld [vmem:[#allocation7 + $0x30] sm:$0xff]
        %v5772 = vld [vmem:[#allocation7 + $0x38] sm:$0xff]
        %s5773 = scalar_lea.vmem %s4, 72
        %v5774 = vld [vmem:[%s5773] sm:$0xf]
        %v5775 = vld [vmem:[%s5773 + $0x4] sm:$0xf]
        %v5776 = vld [vmem:[%s5773 + $0x8] sm:$0xf]
        %v5777 = vld [vmem:[%s5773 + $0xc] sm:$0xf]
        %v5778 = vld [vmem:[%s5773 + $0x10] sm:$0xf]
        %v5779 = vld [vmem:[%s5773 + $0x14] sm:$0xf]
        %v5780 = vld [vmem:[%s5773 + $0x18] sm:$0xf]
        %v5781 = vld [vmem:[%s5773 + $0x1c] sm:$0xf]
        %v5782 = vld [vmem:[%s5773 + $0x20] sm:$0xf]
        %v5783 = vld [vmem:[%s5773 + $0x24] sm:$0xf]
        %v5784 = vld [vmem:[%s5773 + $0x28] sm:$0xf]
        %v5785 = vld [vmem:[%s5773 + $0x2c] sm:$0xf]
        %v5786 = vld [vmem:[%s5773 + $0x30] sm:$0xf]
        %v5787 = vld [vmem:[%s5773 + $0x34] sm:$0xf]
        %v5788 = vld [vmem:[%s5773 + $0x38] sm:$0xf]
        %v5789 = vld [vmem:[%s5773 + $0x3c] sm:$0xf]
        %v5790 = vld [vmem:[%s5773 + $0x40] sm:$0xf]
        %v5791 = vld [vmem:[%s5773 + $0x44] sm:$0xf]
        %v5800 = vunpack.c.l.b16 %v5765
        %v5801 = vunpack.c.h.b16 %v5765
        %v5802 = vunpack.c.l.b16 %v5766
        %v5803 = vunpack.c.h.b16 %v5766
        %v5804 = vunpack.c.l.b16 %v5767
        %v5805 = vunpack.c.h.b16 %v5767
        %v5806 = vunpack.c.l.b16 %v5768
        %v5807 = vunpack.c.h.b16 %v5768
        %v5808 = vunpack.c.l.b16 %v5769
        %v5809 = vunpack.c.h.b16 %v5769
        %v5810 = vunpack.c.l.b16 %v5770
        %v5811 = vunpack.c.h.b16 %v5770
        %v5812 = vunpack.c.l.b16 %v5771
        %v5813 = vunpack.c.h.b16 %v5771
        %v5814 = vunpack.c.l.b16 %v5772
        %v5815 = vunpack.c.h.b16 %v5772
        %v5816 = vpack.c.b16 %v5802, %v5800
        %v5817 = vpack.c.b16 %v5803, %v5801
        %v5818 = vpack.c.b16 %v5806, %v5804
        %v5819 = vpack.c.b16 %v5807, %v5805
        %v5820 = vpack.c.b16 %v5810, %v5808
        %v5821 = vpack.c.b16 %v5811, %v5809
        %v5822 = vpack.c.b16 %v5814, %v5812
        %v5823 = vpack.c.b16 %v5815, %v5813
        %v5846 = vunpack.c.l.b16 %v5774
        %v5847 = vunpack.c.l.b16 %v5775
        %v5848 = vunpack.c.l.b16 %v5776
        %v5849 = vunpack.c.l.b16 %v5777
        %v5850 = vunpack.c.l.b16 %v5778
        %v5851 = vunpack.c.l.b16 %v5779
        %v5852 = vunpack.c.l.b16 %v5780
        %v5853 = vunpack.c.l.b16 %v5781
        %v5854 = vunpack.c.l.b16 %v5782
        %v5855 = vunpack.c.l.b16 %v5783
        %v5856 = vunpack.c.l.b16 %v5784
        %v5857 = vunpack.c.l.b16 %v5785
        %v5858 = vunpack.c.l.b16 %v5786
        %v5859 = vunpack.c.l.b16 %v5787
        %v5860 = vunpack.c.l.b16 %v5788
        %v5861 = vunpack.c.l.b16 %v5789
        %v5862 = vunpack.c.l.b16 %v5790
        %v5863 = vunpack.c.l.b16 %v5791
        %v5864 = vpack.c.b16 %v5847, %v5846
        %v5865 = vpack.c.b16 %v5849, %v5848
        %v5866 = vpack.c.b16 %v5851, %v5850
        %v5867 = vpack.c.b16 %v5853, %v5852
        %v5868 = vpack.c.b16 %v5855, %v5854
        %v5869 = vpack.c.b16 %v5857, %v5856
        %v5870 = vpack.c.b16 %v5859, %v5858
        %v5871 = vpack.c.b16 %v5861, %v5860
        %v5872 = vpack.c.b16 %v5863, %v5862
        %v5883 = vsel %vm3212, %v5817, 0
        %v5886 = vsel %vm3212, %v5819, 0
        %v5889 = vsel %vm3212, %v5821, 0
        %v5892 = vsel %vm3212, %v5823, 0
        %5894 = vmatpush.bf16.msra.mxu0 %v5871
        %5895 = vmatpush.bf16.msra.mxu0 %v5870
        %5896 = vmatpush.bf16.msra.mxu0 %v5869
        %5897 = vmatpush.bf16.msra.mxu0 %v5868
        %5898 = vmatpush.bf16.msra.mxu0 %v5867
        %5899 = vmatpush.bf16.msra.mxu0 %v5866
        %5900 = vmatpush.bf16.msra.mxu0 %v5865
        %5901 = vmatpush.bf16.msra.mxu0 %v5864
        %5902 = vmatmul.bf16.gmra.mxu0 %v5816
        %v5903 = vpop.f32.mrf.mxu0
        %v5904 = vadd.f32 0.0, %v5903
        %v5905 = vpop.f32.mrf.mxu0
        %v5906 = vadd.f32 0.0, %v5905
        %5907 = vmatmul.bf16.gmra.mxu0 %v5818
        %v5908 = vpop.f32.mrf.mxu0
        %v5909 = vadd.f32 0.0, %v5908
        %v5910 = vpop.f32.mrf.mxu0
        %v5911 = vadd.f32 0.0, %v5910
        %5912 = vmatmul.bf16.gmra.mxu0 %v5820
        %v5913 = vpop.f32.mrf.mxu0
        %v5914 = vadd.f32 0.0, %v5913
        %v5915 = vpop.f32.mrf.mxu0
        %v5916 = vadd.f32 0.0, %v5915
        %5917 = vmatmul.bf16.gmra.mxu0 %v5822
        %v5918 = vpop.f32.mrf.mxu0
        %v5919 = vadd.f32 0.0, %v5918
        %v5920 = vpop.f32.mrf.mxu0
        %v5921 = vadd.f32 0.0, %v5920
        %5922 = vdwg.mxu0
        %5923 = vmatpush.bf16.msra.mxu0 0
        %5924 = vmatpush.bf16.msra.mxu0 0
        %5925 = vmatpush.bf16.msra.mxu0 0
        %5926 = vmatpush.bf16.msra.mxu0 0
        %5927 = vmatpush.bf16.msra.mxu0 0
        %5928 = vmatpush.bf16.msra.mxu0 0
        %5929 = vmatpush.bf16.msra.mxu0 0
        %5930 = vmatpush.bf16.msra.mxu0 %v5872
        %5931 = vmatmul.bf16.gmra.mxu0 %v5883
        %v5932 = vpop.f32.mrf.mxu0
        %v5933 = vadd.f32 %v5904, %v5932
        %v5934 = vpop.f32.mrf.mxu0
        %v5935 = vadd.f32 %v5906, %v5934
        %5936 = vmatmul.bf16.gmra.mxu0 %v5886
        %v5937 = vpop.f32.mrf.mxu0
        %v5938 = vadd.f32 %v5909, %v5937
        %v5939 = vpop.f32.mrf.mxu0
        %v5940 = vadd.f32 %v5911, %v5939
        %5941 = vmatmul.bf16.gmra.mxu0 %v5889
        %v5942 = vpop.f32.mrf.mxu0
        %v5943 = vadd.f32 %v5914, %v5942
        %v5944 = vpop.f32.mrf.mxu0
        %v5945 = vadd.f32 %v5916, %v5944
        %5946 = vmatmul.bf16.gmra.mxu0 %v5892
        %v5947 = vpop.f32.mrf.mxu0
        %v5948 = vadd.f32 %v5919, %v5947
        %v5949 = vpop.f32.mrf.mxu0
        %v5950 = vadd.f32 %v5921, %v5949
        %5951 = vdwg.mxu0
        %5960 = vrot.lane.b32.xlu0 %v5933, 24
        %v5961 = vpop.permute.xlu0 %5960
        %5962 = vrot.lane.b32.xlu0 %v5935, 24
        %v5963 = vpop.permute.xlu0 %5962
        %5964 = vrot.lane.b32.xlu0 %v5938, 24
        %v5965 = vpop.permute.xlu0 %5964
        %5966 = vrot.lane.b32.xlu0 %v5940, 24
        %v5967 = vpop.permute.xlu0 %5966
        %5968 = vrot.lane.b32.xlu0 %v5943, 24
        %v5969 = vpop.permute.xlu0 %5968
        %5970 = vrot.lane.b32.xlu0 %v5945, 24
        %v5971 = vpop.permute.xlu0 %5970
        %5972 = vrot.lane.b32.xlu0 %v5948, 24
        %v5973 = vpop.permute.xlu0 %5972
        %5974 = vrot.lane.b32.xlu0 %v5950, 24
        %v5975 = vpop.permute.xlu0 %5974
        %vm5984 = vcmask 261312
        %5985 = vst.msk [vmem:[#allocation4] sm:$0xff] %vm5984, %v5961
        %5986 = vst.msk [vmem:[#allocation4 + $0x8] sm:$0xff] %vm5984, %v5963
        %5987 = vst.msk [vmem:[#allocation4 + $0x10] sm:$0xff] %vm5984, %v5965
        %5988 = vst.msk [vmem:[#allocation4 + $0x18] sm:$0xff] %vm5984, %v5967
        %5989 = vst.msk [vmem:[#allocation4 + $0x20] sm:$0xff] %vm5984, %v5969
        %5990 = vst.msk [vmem:[#allocation4 + $0x28] sm:$0xff] %vm5984, %v5971
        %5991 = vst.msk [vmem:[#allocation4 + $0x30] sm:$0xff] %vm5984, %v5973
        %5992 = vst.msk [vmem:[#allocation4 + $0x38] sm:$0xff] %vm5984, %v5975
        %s5993 = scalar_lea.vmem %s2, 10
        %v5994 = vld [vmem:[%s5993] sm:$0x1]
        %v5995 = vld [vmem:[%s5993 + $0x1] sm:$0x1]
        %v5996 = vld [vmem:[#allocation4] sm:$0xff]
        %v5997 = vld [vmem:[#allocation4 + $0x8] sm:$0xff]
        %v5998 = vld [vmem:[#allocation4 + $0x10] sm:$0xff]
        %v5999 = vld [vmem:[#allocation4 + $0x18] sm:$0xff]
        %v6000 = vld [vmem:[#allocation4 + $0x20] sm:$0xff]
        %v6001 = vld [vmem:[#allocation4 + $0x28] sm:$0xff]
        %v6002 = vld [vmem:[#allocation4 + $0x30] sm:$0xff]
        %v6003 = vld [vmem:[#allocation4 + $0x38] sm:$0xff]
        %v6004 = vperm.slane %v5994, 0
        %v6005 = vmul.f32 %v5996, %v6004
        %v6006 = vmul.f32 %v5997, %v6004
        %v6007 = vmul.f32 %v5998, %v6004
        %v6008 = vmul.f32 %v5999, %v6004
        %v6009 = vmul.f32 %v6000, %v6004
        %v6010 = vmul.f32 %v6001, %v6004
        %v6011 = vmul.f32 %v6002, %v6004
        %v6012 = vmul.f32 %v6003, %v6004
        %v6013 = vperm.slane %v5995, 0
        %v6014 = vadd.f32 %v6005, %v6013
        %v6015 = vadd.f32 %v6006, %v6013
        %v6016 = vadd.f32 %v6007, %v6013
        %v6017 = vadd.f32 %v6008, %v6013
        %v6018 = vadd.f32 %v6009, %v6013
        %v6019 = vadd.f32 %v6010, %v6013
        %v6020 = vadd.f32 %v6011, %v6013
        %v6021 = vadd.f32 %v6012, %v6013
        %v6022 = vmax.f32 %v6014, 0.0
        %v6023 = vmax.f32 %v6015, 0.0
        %v6024 = vmax.f32 %v6016, 0.0
        %v6025 = vmax.f32 %v6017, 0.0
        %v6026 = vmax.f32 %v6018, 0.0
        %v6027 = vmax.f32 %v6019, 0.0
        %v6028 = vmax.f32 %v6020, 0.0
        %v6029 = vmax.f32 %v6021, 0.0
        %v6038 = vrot.slane %v6022, 2
        %v6039 = vrot.slane %v6022, 4
        %v6040 = vrot.slane %v6022, 6
        %v6041 = vrot.slane %v6023, 2
        %v6042 = vrot.slane %v6023, 4
        %v6043 = vrot.slane %v6023, 6
        %v6044 = vrot.slane %v6024, 2
        %v6045 = vrot.slane %v6024, 4
        %v6046 = vrot.slane %v6024, 6
        %v6047 = vrot.slane %v6025, 2
        %v6048 = vrot.slane %v6025, 4
        %v6049 = vrot.slane %v6025, 6
        %v6050 = vrot.slane %v6026, 2
        %v6051 = vrot.slane %v6026, 4
        %v6052 = vrot.slane %v6026, 6
        %v6053 = vrot.slane %v6027, 2
        %v6054 = vrot.slane %v6027, 4
        %v6055 = vrot.slane %v6027, 6
        %v6056 = vrot.slane %v6028, 2
        %v6057 = vrot.slane %v6028, 4
        %v6058 = vrot.slane %v6028, 6
        %v6059 = vrot.slane %v6029, 2
        %v6060 = vrot.slane %v6029, 4
        %v6061 = vrot.slane %v6029, 6
        %vm6086 = vcmask 254976
        %6087 = vst.msk [vmem:[#allocation8] sm:$0x3] %vm6086, %v6022
        %6088 = vst.msk [vmem:[#allocation8 + $0x2] sm:$0x3] %vm6086, %v6038
        %6089 = vst.msk [vmem:[#allocation8 + $0x4] sm:$0x3] %vm6086, %v6039
        %6090 = vst.msk [vmem:[#allocation8 + $0x6] sm:$0x3] %vm6086, %v6040
        %6091 = vst.msk [vmem:[#allocation8 + $0x8] sm:$0x3] %vm6086, %v6023
        %6092 = vst.msk [vmem:[#allocation8 + $0xa] sm:$0x3] %vm6086, %v6041
        %6093 = vst.msk [vmem:[#allocation8 + $0xc] sm:$0x3] %vm6086, %v6042
        %6094 = vst.msk [vmem:[#allocation8 + $0xe] sm:$0x3] %vm6086, %v6043
        %6095 = vst.msk [vmem:[#allocation8 + $0x10] sm:$0x3] %vm6086, %v6024
        %6096 = vst.msk [vmem:[#allocation8 + $0x12] sm:$0x3] %vm6086, %v6044
        %6097 = vst.msk [vmem:[#allocation8 + $0x14] sm:$0x3] %vm6086, %v6045
        %6098 = vst.msk [vmem:[#allocation8 + $0x16] sm:$0x3] %vm6086, %v6046
        %6099 = vst.msk [vmem:[#allocation8 + $0x18] sm:$0x3] %vm6086, %v6025
        %6100 = vst.msk [vmem:[#allocation8 + $0x1a] sm:$0x3] %vm6086, %v6047
        %6101 = vst.msk [vmem:[#allocation8 + $0x1c] sm:$0x3] %vm6086, %v6048
        %6102 = vst.msk [vmem:[#allocation8 + $0x1e] sm:$0x3] %vm6086, %v6049
        %6103 = vst.msk [vmem:[#allocation8 + $0x20] sm:$0x3] %vm6086, %v6026
        %6104 = vst.msk [vmem:[#allocation8 + $0x22] sm:$0x3] %vm6086, %v6050
        %6105 = vst.msk [vmem:[#allocation8 + $0x24] sm:$0x3] %vm6086, %v6051
        %6106 = vst.msk [vmem:[#allocation8 + $0x26] sm:$0x3] %vm6086, %v6052
        %6107 = vst.msk [vmem:[#allocation8 + $0x28] sm:$0x3] %vm6086, %v6027
        %6108 = vst.msk [vmem:[#allocation8 + $0x2a] sm:$0x3] %vm6086, %v6053
        %6109 = vst.msk [vmem:[#allocation8 + $0x2c] sm:$0x3] %vm6086, %v6054
        %6110 = vst.msk [vmem:[#allocation8 + $0x2e] sm:$0x3] %vm6086, %v6055
        %6111 = vst.msk [vmem:[#allocation8 + $0x30] sm:$0x3] %vm6086, %v6028
        %6112 = vst.msk [vmem:[#allocation8 + $0x32] sm:$0x3] %vm6086, %v6056
        %6113 = vst.msk [vmem:[#allocation8 + $0x34] sm:$0x3] %vm6086, %v6057
        %6114 = vst.msk [vmem:[#allocation8 + $0x36] sm:$0x3] %vm6086, %v6058
        %6115 = vst.msk [vmem:[#allocation8 + $0x38] sm:$0x3] %vm6086, %v6029
        %6116 = vst.msk [vmem:[#allocation8 + $0x3a] sm:$0x3] %vm6086, %v6059
        %6117 = vst.msk [vmem:[#allocation8 + $0x3c] sm:$0x3] %vm6086, %v6060
        %6118 = vst.msk [vmem:[#allocation8 + $0x3e] sm:$0x3] %vm6086, %v6061
        %v6119 = vld [vmem:[#allocation8] sm:$0x1]
        %v6120 = vld [vmem:[#allocation8 + $0x2] sm:$0x1]
        %v6121 = vld [vmem:[#allocation8 + $0x4] sm:$0x1]
        %v6122 = vld [vmem:[#allocation8 + $0x6] sm:$0x1]
        %v6123 = vld [vmem:[#allocation8 + $0x10] sm:$0x1]
        %v6124 = vld [vmem:[#allocation8 + $0x12] sm:$0x1]
        %v6125 = vld [vmem:[#allocation8 + $0x14] sm:$0x1]
        %v6126 = vld [vmem:[#allocation8 + $0x16] sm:$0x1]
        %v6127 = vld [vmem:[#allocation8 + $0x20] sm:$0x1]
        %v6128 = vld [vmem:[#allocation8 + $0x22] sm:$0x1]
        %v6129 = vld [vmem:[#allocation8 + $0x24] sm:$0x1]
        %v6130 = vld [vmem:[#allocation8 + $0x26] sm:$0x1]
        %v6131 = vld [vmem:[#allocation8 + $0x30] sm:$0x1]
        %v6132 = vld [vmem:[#allocation8 + $0x32] sm:$0x1]
        %v6133 = vld [vmem:[#allocation8 + $0x34] sm:$0x1]
        %v6134 = vld [vmem:[#allocation8 + $0x36] sm:$0x1]
        %v6135 = vld [vmem:[#allocation8 + $0x1] sm:$0x1]
        %v6136 = vld [vmem:[#allocation8 + $0x3] sm:$0x1]
        %v6137 = vld [vmem:[#allocation8 + $0x5] sm:$0x1]
        %v6138 = vld [vmem:[#allocation8 + $0x7] sm:$0x1]
        %v6139 = vld [vmem:[#allocation8 + $0x11] sm:$0x1]
        %v6140 = vld [vmem:[#allocation8 + $0x13] sm:$0x1]
        %v6141 = vld [vmem:[#allocation8 + $0x15] sm:$0x1]
        %v6142 = vld [vmem:[#allocation8 + $0x17] sm:$0x1]
        %v6143 = vld [vmem:[#allocation8 + $0x21] sm:$0x1]
        %v6144 = vld [vmem:[#allocation8 + $0x23] sm:$0x1]
        %v6145 = vld [vmem:[#allocation8 + $0x25] sm:$0x1]
        %v6146 = vld [vmem:[#allocation8 + $0x27] sm:$0x1]
        %v6147 = vld [vmem:[#allocation8 + $0x31] sm:$0x1]
        %v6148 = vld [vmem:[#allocation8 + $0x33] sm:$0x1]
        %v6149 = vld [vmem:[#allocation8 + $0x35] sm:$0x1]
        %v6150 = vld [vmem:[#allocation8 + $0x37] sm:$0x1]
        %v6151 = vadd.f32 %v6119, %v6135
        %v6152 = vadd.f32 %v6120, %v6136
        %v6153 = vadd.f32 %v6121, %v6137
        %v6154 = vadd.f32 %v6122, %v6138
        %v6155 = vadd.f32 %v6123, %v6139
        %v6156 = vadd.f32 %v6124, %v6140
        %v6157 = vadd.f32 %v6125, %v6141
        %v6158 = vadd.f32 %v6126, %v6142
        %v6159 = vadd.f32 %v6127, %v6143
        %v6160 = vadd.f32 %v6128, %v6144
        %v6161 = vadd.f32 %v6129, %v6145
        %v6162 = vadd.f32 %v6130, %v6146
        %v6163 = vadd.f32 %v6131, %v6147
        %v6164 = vadd.f32 %v6132, %v6148
        %v6165 = vadd.f32 %v6133, %v6149
        %v6166 = vadd.f32 %v6134, %v6150
        %s6167 = scalar_lea.vmem [#allocation8], 8
        %v6168 = vld [vmem:[%s6167] sm:$0x1]
        %v6169 = vld [vmem:[%s6167 + $0x2] sm:$0x1]
        %v6170 = vld [vmem:[%s6167 + $0x4] sm:$0x1]
        %v6171 = vld [vmem:[%s6167 + $0x6] sm:$0x1]
        %v6172 = vld [vmem:[%s6167 + $0x10] sm:$0x1]
        %v6173 = vld [vmem:[%s6167 + $0x12] sm:$0x1]
        %v6174 = vld [vmem:[%s6167 + $0x14] sm:$0x1]
        %v6175 = vld [vmem:[%s6167 + $0x16] sm:$0x1]
        %v6176 = vld [vmem:[%s6167 + $0x20] sm:$0x1]
        %v6177 = vld [vmem:[%s6167 + $0x22] sm:$0x1]
        %v6178 = vld [vmem:[%s6167 + $0x24] sm:$0x1]
        %v6179 = vld [vmem:[%s6167 + $0x26] sm:$0x1]
        %v6180 = vld [vmem:[%s6167 + $0x30] sm:$0x1]
        %v6181 = vld [vmem:[%s6167 + $0x32] sm:$0x1]
        %v6182 = vld [vmem:[%s6167 + $0x34] sm:$0x1]
        %v6183 = vld [vmem:[%s6167 + $0x36] sm:$0x1]
        %v6184 = vadd.f32 %v6151, %v6168
        %v6185 = vadd.f32 %v6152, %v6169
        %v6186 = vadd.f32 %v6153, %v6170
        %v6187 = vadd.f32 %v6154, %v6171
        %v6188 = vadd.f32 %v6155, %v6172
        %v6189 = vadd.f32 %v6156, %v6173
        %v6190 = vadd.f32 %v6157, %v6174
        %v6191 = vadd.f32 %v6158, %v6175
        %v6192 = vadd.f32 %v6159, %v6176
        %v6193 = vadd.f32 %v6160, %v6177
        %v6194 = vadd.f32 %v6161, %v6178
        %v6195 = vadd.f32 %v6162, %v6179
        %v6196 = vadd.f32 %v6163, %v6180
        %v6197 = vadd.f32 %v6164, %v6181
        %v6198 = vadd.f32 %v6165, %v6182
        %v6199 = vadd.f32 %v6166, %v6183
        %v6200 = vld [vmem:[%s6167 + $0x1] sm:$0x1]
        %v6201 = vld [vmem:[%s6167 + $0x3] sm:$0x1]
        %v6202 = vld [vmem:[%s6167 + $0x5] sm:$0x1]
        %v6203 = vld [vmem:[%s6167 + $0x7] sm:$0x1]
        %v6204 = vld [vmem:[%s6167 + $0x11] sm:$0x1]
        %v6205 = vld [vmem:[%s6167 + $0x13] sm:$0x1]
        %v6206 = vld [vmem:[%s6167 + $0x15] sm:$0x1]
        %v6207 = vld [vmem:[%s6167 + $0x17] sm:$0x1]
        %v6208 = vld [vmem:[%s6167 + $0x21] sm:$0x1]
        %v6209 = vld [vmem:[%s6167 + $0x23] sm:$0x1]
        %v6210 = vld [vmem:[%s6167 + $0x25] sm:$0x1]
        %v6211 = vld [vmem:[%s6167 + $0x27] sm:$0x1]
        %v6212 = vld [vmem:[%s6167 + $0x31] sm:$0x1]
        %v6213 = vld [vmem:[%s6167 + $0x33] sm:$0x1]
        %v6214 = vld [vmem:[%s6167 + $0x35] sm:$0x1]
        %v6215 = vld [vmem:[%s6167 + $0x37] sm:$0x1]
        %v6216 = vadd.f32 %v6184, %v6200
        %v6217 = vadd.f32 %v6185, %v6201
        %v6218 = vadd.f32 %v6186, %v6202
        %v6219 = vadd.f32 %v6187, %v6203
        %v6220 = vadd.f32 %v6188, %v6204
        %v6221 = vadd.f32 %v6189, %v6205
        %v6222 = vadd.f32 %v6190, %v6206
        %v6223 = vadd.f32 %v6191, %v6207
        %v6224 = vadd.f32 %v6192, %v6208
        %v6225 = vadd.f32 %v6193, %v6209
        %v6226 = vadd.f32 %v6194, %v6210
        %v6227 = vadd.f32 %v6195, %v6211
        %v6228 = vadd.f32 %v6196, %v6212
        %v6229 = vadd.f32 %v6197, %v6213
        %v6230 = vadd.f32 %v6198, %v6214
        %v6231 = vadd.f32 %v6199, %v6215
        %v6232 = vmul.f32 %v6216, 0.25
        %v6233 = vmul.f32 %v6217, 0.25
        %v6234 = vmul.f32 %v6218, 0.25
        %v6235 = vmul.f32 %v6219, 0.25
        %v6236 = vmul.f32 %v6220, 0.25
        %v6237 = vmul.f32 %v6221, 0.25
        %v6238 = vmul.f32 %v6222, 0.25
        %v6239 = vmul.f32 %v6223, 0.25
        %v6240 = vmul.f32 %v6224, 0.25
        %v6241 = vmul.f32 %v6225, 0.25
        %v6242 = vmul.f32 %v6226, 0.25
        %v6243 = vmul.f32 %v6227, 0.25
        %v6244 = vmul.f32 %v6228, 0.25
        %v6245 = vmul.f32 %v6229, 0.25
        %v6246 = vmul.f32 %v6230, 0.25
        %v6247 = vmul.f32 %v6231, 0.25
        %v6248 = vpack.c.bf16 %v6232, %v6232
        %v6249 = vpack.c.bf16 %v6233, %v6233
        %v6250 = vpack.c.bf16 %v6234, %v6234
        %v6251 = vpack.c.bf16 %v6235, %v6235
        %v6252 = vpack.c.bf16 %v6236, %v6236
        %v6253 = vpack.c.bf16 %v6237, %v6237
        %v6254 = vpack.c.bf16 %v6238, %v6238
        %v6255 = vpack.c.bf16 %v6239, %v6239
        %v6256 = vpack.c.bf16 %v6240, %v6240
        %v6257 = vpack.c.bf16 %v6241, %v6241
        %v6258 = vpack.c.bf16 %v6242, %v6242
        %v6259 = vpack.c.bf16 %v6243, %v6243
        %v6260 = vpack.c.bf16 %v6244, %v6244
        %v6261 = vpack.c.bf16 %v6245, %v6245
        %v6262 = vpack.c.bf16 %v6246, %v6246
        %v6263 = vpack.c.bf16 %v6247, %v6247
        %v6264 = vld [vmem:[%s5] sm:$0xf]
        %v6265 = vld [vmem:[%s5 + $0x4] sm:$0xf]
        %v6266 = vld [vmem:[%s5 + $0x8] sm:$0xf]
        %v6267 = vld [vmem:[%s5 + $0xc] sm:$0xf]
        %v6284 = vunpack.c.l.b16 %v6248
        %v6285 = vunpack.c.l.b16 %v6249
        %v6286 = vunpack.c.l.b16 %v6250
        %v6287 = vunpack.c.l.b16 %v6251
        %v6288 = vunpack.c.l.b16 %v6252
        %v6289 = vunpack.c.l.b16 %v6253
        %v6290 = vunpack.c.l.b16 %v6254
        %v6291 = vunpack.c.l.b16 %v6255
        %v6292 = vunpack.c.l.b16 %v6256
        %v6293 = vunpack.c.l.b16 %v6257
        %v6294 = vunpack.c.l.b16 %v6258
        %v6295 = vunpack.c.l.b16 %v6259
        %v6296 = vunpack.c.l.b16 %v6260
        %v6297 = vunpack.c.l.b16 %v6261
        %v6298 = vunpack.c.l.b16 %v6262
        %v6299 = vunpack.c.l.b16 %v6263
        %v6300 = vrot.slane %v6285, 7
        %v6301 = vsel %vm3086, %v6300, %v6284
        %v6302 = vrot.slane %v6286, 6
        %v6303 = vsel %vm3089, %v6302, %v6301
        %v6304 = vrot.slane %v6287, 5
        %v6305 = vsel %vm3092, %v6304, %v6303
        %v6306 = vrot.slane %v6288, 4
        %v6307 = vsel %vm3095, %v6306, %v6305
        %v6308 = vrot.slane %v6289, 3
        %v6309 = vsel %vm3098, %v6308, %v6307
        %v6310 = vrot.slane %v6290, 2
        %v6311 = vsel %vm3101, %v6310, %v6309
        %v6312 = vrot.slane %v6291, 1
        %v6313 = vsel %vm3104, %v6312, %v6311
        %v6314 = vrot.slane %v6293, 7
        %v6315 = vsel %vm3086, %v6314, %v6292
        %v6316 = vrot.slane %v6294, 6
        %v6317 = vsel %vm3089, %v6316, %v6315
        %v6318 = vrot.slane %v6295, 5
        %v6319 = vsel %vm3092, %v6318, %v6317
        %v6320 = vrot.slane %v6296, 4
        %v6321 = vsel %vm3095, %v6320, %v6319
        %v6322 = vrot.slane %v6297, 3
        %v6323 = vsel %vm3098, %v6322, %v6321
        %v6324 = vrot.slane %v6298, 2
        %v6325 = vsel %vm3101, %v6324, %v6323
        %v6326 = vrot.slane %v6299, 1
        %v6327 = vsel %vm3104, %v6326, %v6325
        %v6328 = vpack.c.b16 %v6327, %v6313
        %v6333 = vunpack.c.l.b16 %v6264
        %v6334 = vunpack.c.l.b16 %v6265
        %v6335 = vunpack.c.l.b16 %v6266
        %v6336 = vunpack.c.l.b16 %v6267
        %v6337 = vpack.c.b16 %v6334, %v6333
        %v6338 = vpack.c.b16 %v6336, %v6335
        %v6342 = vsel %vm3012, %v6328, 0
        %6344 = vmatpush.bf16.msra.mxu0 0
        %6345 = vmatpush.bf16.msra.mxu0 0
        %6346 = vmatpush.bf16.msra.mxu0 0
        %6347 = vmatpush.bf16.msra.mxu0 0
        %6348 = vmatpush.bf16.msra.mxu0 0
        %6349 = vmatpush.bf16.msra.mxu0 0
        %6350 = vmatpush.bf16.msra.mxu0 %v6338
        %6351 = vmatpush.bf16.msra.mxu0 %v6337
        %6352 = vmatmul.bf16.gmra.mxu0 %v6342
        %v6353 = vpop.f32.mrf.mxu0
        %v6354 = vadd.f32 0.0, %v6353
        %v6355 = vpop.f32.mrf.mxu0
        %v6356 = vadd.f32 0.0, %v6355
        %6357 = vdwg.mxu0
        %6358 = vst.msk [vmem:[#allocation5] sm:$0xff] %vm3012, 0.0
        %6359 = vst.msk [vmem:[#allocation5 + $0x8] sm:$0xff] %vm3012, 0.0
        %6360 = vst.msk [vmem:[#allocation5] sm:$0xff] %vm3212, %v6354
        %6361 = vst.msk [vmem:[#allocation5 + $0x8] sm:$0xff] %vm3212, %v6356
        %s6362 = scalar_lea.vmem %s2, 12
        %v6363 = vld [vmem:[%s6362] sm:$0x1]
        %v6364 = vld [vmem:[%s6362 + $0x1] sm:$0x1]
        %v6365 = vld [vmem:[#allocation5] sm:$0xff]
        %v6366 = vld [vmem:[#allocation5 + $0x8] sm:$0xff]
        %v6367 = vperm.slane %v6363, 0
        %v6368 = vmul.f32 %v6365, %v6367
        %v6369 = vmul.f32 %v6366, %v6367
        %v6370 = vperm.slane %v6364, 0
        %v6371 = vadd.f32 %v6368, %v6370
        %v6372 = vadd.f32 %v6369, %v6370
        %v6373 = vmax.f32 %v6371, 0.0
        %v6374 = vmax.f32 %v6372, 0.0
        %v6375 = vpack.c.bf16 %v6374, %v6373
        %s6376 = scalar_lea.vmem %s3, 32
        %v6377 = vld [vmem:[%s6376] sm:$0xf]
        %v6378 = vld [vmem:[%s6376 + $0x4] sm:$0xf]
        %v6379 = vld [vmem:[%s6376 + $0x8] sm:$0xf]
        %v6380 = vld [vmem:[%s6376 + $0xc] sm:$0xf]
        %v6385 = vunpack.c.l.b16 %v6377
        %v6386 = vunpack.c.l.b16 %v6378
        %v6387 = vunpack.c.l.b16 %v6379
        %v6388 = vunpack.c.l.b16 %v6380
        %v6389 = vpack.c.b16 %v6386, %v6385
        %v6390 = vpack.c.b16 %v6388, %v6387
        %v6394 = vsel %vm3012, %v6375, 0
        %6396 = vmatpush.bf16.msra.mxu0 0
        %6397 = vmatpush.bf16.msra.mxu0 0
        %6398 = vmatpush.bf16.msra.mxu0 0
        %6399 = vmatpush.bf16.msra.mxu0 0
        %6400 = vmatpush.bf16.msra.mxu0 0
        %6401 = vmatpush.bf16.msra.mxu0 0
        %6402 = vmatpush.bf16.msra.mxu0 %v6390
        %6403 = vmatpush.bf16.msra.mxu0 %v6389
        %6404 = vmatmul.bf16.gmra.mxu0 %v6394
        %v6405 = vpop.f32.mrf.mxu0
        %v6406 = vadd.f32 0.0, %v6405
        %v6407 = vpop.f32.mrf.mxu0
        %v6408 = vadd.f32 0.0, %v6407
        %6409 = vdwg.mxu0
        %s6410 = scalar_lea.vmem %s2, 14
        %v6411 = vld [vmem:[%s6410] sm:$0x1]
        %v6412 = vld [vmem:[%s6410 + $0x1] sm:$0x1]
        %v6413 = vperm.slane %v6411, 0
        %v6414 = vmul.f32 %v6406, %v6413
        %v6415 = vmul.f32 %v6408, %v6413
        %v6416 = vperm.slane %v6412, 0
        %v6417 = vadd.f32 %v6414, %v6416
        %v6418 = vadd.f32 %v6415, %v6416
        %v6419 = vmax.f32 %v6417, 0.0
        %v6420 = vmax.f32 %v6418, 0.0
        %6421 = vst.msk [vmem:[#allocation6] sm:$0xf] %vm3348, 0
        %6422 = vst.msk [vmem:[#allocation6 + $0x4] sm:$0x1] %vm1470, 0
        %6423 = vst.msk [vmem:[#allocation6 + $0x8] sm:$0xf] %vm3348, 0
        %6424 = vst.msk [vmem:[#allocation6 + $0xc] sm:$0x1] %vm1470, 0
        %6425 = vst.msk [vmem:[#allocation6 + $0x10] sm:$0xf] %vm3348, 0
        %6426 = vst.msk [vmem:[#allocation6 + $0x14] sm:$0x1] %vm1470, 0
        %6427 = vst.msk [vmem:[#allocation6 + $0x18] sm:$0xf] %vm3348, 0
        %6428 = vst.msk [vmem:[#allocation6 + $0x1c] sm:$0x1] %vm1470, 0
        %6429 = vst.msk [vmem:[#allocation6 + $0x20] sm:$0xf] %vm3348, 0
        %6430 = vst.msk [vmem:[#allocation6 + $0x24] sm:$0x1] %vm1470, 0
        %6431 = vst.msk [vmem:[#allocation6 + $0x28] sm:$0xf] %vm3348, 0
        %6432 = vst.msk [vmem:[#allocation6 + $0x2c] sm:$0x1] %vm1470, 0
        %6433 = vst.msk [vmem:[#allocation6 + $0x30] sm:$0xf] %vm3348, 0
        %6434 = vst.msk [vmem:[#allocation6 + $0x34] sm:$0x1] %vm1470, 0
        %6435 = vst.msk [vmem:[#allocation6 + $0x38] sm:$0xf] %vm3348, 0
        %6436 = vst.msk [vmem:[#allocation6 + $0x3c] sm:$0x1] %vm1470, 0
        %6437 = vst.msk [vmem:[#allocation6 + $0x40] sm:$0xf] %vm3348, 0
        %6438 = vst.msk [vmem:[#allocation6 + $0x44] sm:$0x1] %vm1470, 0
        %6439 = vst.msk [vmem:[#allocation6 + $0x48] sm:$0xf] %vm3348, 0
        %6440 = vst.msk [vmem:[#allocation6 + $0x4c] sm:$0x1] %vm1470, 0
        %v6443 = vrot.slane %v6419, 4
        %v6444 = vrot.slane %v6420, 4
        %v6447 = vpack.c.bf16 %v6419, %v6419
        %v6448 = vpack.c.bf16 %v6443, %v6443
        %v6449 = vpack.c.bf16 %v6420, %v6420
        %v6450 = vpack.c.bf16 %v6444, %v6444
        %v6452 = vshrl.u32 %v6447, 16
        %v6454 = vrot.slane %v6452, 7
        %v6455 = vshll.u32 %v6447, 16
        %v6457 = vor.u32 %v6454, %v6455
        %v6459 = vshrl.u32 %v6448, 16
        %v6461 = vrot.slane %v6459, 7
        %v6462 = vshll.u32 %v6448, 16
        %v6464 = vor.u32 %v6461, %v6462
        %v6466 = vshrl.u32 %v6449, 16
        %v6468 = vrot.slane %v6466, 7
        %v6469 = vshll.u32 %v6449, 16
        %v6471 = vor.u32 %v6468, %v6469
        %v6473 = vshrl.u32 %v6450, 16
        %v6475 = vrot.slane %v6473, 7
        %v6476 = vshll.u32 %v6450, 16
        %v6478 = vor.u32 %v6475, %v6476
        %vm6483 = vcmask 124928
        %vm6484 = vsmask.f32 2306
        %vm6485 = vmand %vm6483, %vm6484
        %v6486 = vld [vmem:[%s3457] sm:$0x7]
        %v6487 = vsel %vm6485, %v6457, %v6486
        %6488 = vst [vmem:[%s3457] sm:$0x7] %v6487
        %v6489 = vld [vmem:[%s3457 + $0x8] sm:$0x7]
        %v6490 = vsel %vm6485, %v6464, %v6489
        %6491 = vst [vmem:[%s3457 + $0x8] sm:$0x7] %v6490
        %v6492 = vld [vmem:[%s3457 + $0x10] sm:$0x7]
        %v6493 = vsel %vm6485, %v6471, %v6492
        %6494 = vst [vmem:[%s3457 + $0x10] sm:$0x7] %v6493
        %v6495 = vld [vmem:[%s3457 + $0x18] sm:$0x7]
        %v6496 = vsel %vm6485, %v6478, %v6495
        %6497 = vst [vmem:[%s3457 + $0x18] sm:$0x7] %v6496
        %v6498 = vld [vmem:[#allocation6] sm:$0x3]
        %v6499 = vld [vmem:[#allocation6 + $0x8] sm:$0x3]
        %v6500 = vld [vmem:[#allocation6 + $0x10] sm:$0x3]
        %v6501 = vld [vmem:[#allocation6 + $0x18] sm:$0x3]
        %6503 = vst [vmem:[#allocation1] ss:$2 sm:$0xff] %v6498
        %s6505 = scalar_lea.vmem [#allocation1], 1
        %6506 = vst [vmem:[%s6505] ss:$2 sm:$0xff] %v6499
        %s6508 = scalar_lea.vmem [#allocation1], 16
        %6509 = vst [vmem:[%s6508] ss:$2 sm:$0xff] %v6500
        %s6511 = scalar_lea.vmem [#allocation1], 17
        %6512 = vst [vmem:[%s6511] ss:$2 sm:$0xff] %v6501
        %v6513 = vld.sshfl [vmem:[#allocation1] sm:$0xff pattern:$0x75643120]
        %v6514 = vld.sshfl [vmem:[#allocation1 + $0x10] sm:$0xff pattern:$0x75643120]
        %6517 = vst.msk [vmem:[#allocation7] sm:$0xf] %vm3348, %v6513
        %6518 = vst.msk [vmem:[#allocation7 + $0x8] sm:$0xf] %vm3348, %v6514
        %v6519 = vld [vmem:[#allocation6] sm:$0x7]
        %v6520 = vld [vmem:[#allocation6 + $0x8] sm:$0x7]
        %v6521 = vld [vmem:[#allocation6 + $0x10] sm:$0x7]
        %v6522 = vld [vmem:[#allocation6 + $0x18] sm:$0x7]
        %v6527 = vrot.slane %v6519, 2
        %v6528 = vrot.slane %v6520, 2
        %v6529 = vrot.slane %v6521, 2
        %v6530 = vrot.slane %v6522, 2
        %v6533 = vsel %vm608, %v6519, %v6527
        %vm6534 = vcmask 1043458
        %v6535 = vsel %vm6534, %v6519, %v6527
        %v6537 = vrot.slane %v6535, 2
        %v6540 = vsel %vm608, %v6520, %v6528
        %v6541 = vsel %vm6534, %v6520, %v6528
        %v6543 = vrot.slane %v6541, 2
        %v6546 = vsel %vm608, %v6521, %v6529
        %v6547 = vsel %vm6534, %v6521, %v6529
        %v6549 = vrot.slane %v6547, 2
        %v6552 = vsel %vm608, %v6522, %v6530
        %v6553 = vsel %vm6534, %v6522, %v6530
        %v6555 = vrot.slane %v6553, 2
        %vm6556 = vsmask.f32 1280
        %vm6557 = vsmask.f32 3336
        %vm6558 = vmor %vm6556, %vm6557
        %vm6559 = vsmask.f32 5392
        %vm6560 = vmor %vm6558, %vm6559
        %vm6561 = vsmask.f32 7448
        %vm6562 = vmor %vm6560, %vm6561
        %v6563 = vshrl.u32 %v6533, 16
        %v6565 = vrot.slane %v6563, 6
        %v6566 = vshll.u32 %v6533, 16
        %v6568 = vrot.slane %v6566, 7
        %v6569 = vor.u32 %v6565, %v6568
        %v6570 = vrot.slane %v6569, 2
        %v6572 = vshll.u32 %v6537, 16
        %v6574 = vrot.slane %v6572, 7
        %v6575 = vsel %vm6562, %v6570, %v6574
        %v6576 = vshrl.u32 %v6540, 16
        %v6578 = vrot.slane %v6576, 6
        %v6579 = vshll.u32 %v6540, 16
        %v6581 = vrot.slane %v6579, 7
        %v6582 = vor.u32 %v6578, %v6581
        %v6583 = vrot.slane %v6582, 2
        %v6585 = vshll.u32 %v6543, 16
        %v6587 = vrot.slane %v6585, 7
        %v6588 = vsel %vm6562, %v6583, %v6587
        %v6589 = vshrl.u32 %v6546, 16
        %v6591 = vrot.slane %v6589, 6
        %v6592 = vshll.u32 %v6546, 16
        %v6594 = vrot.slane %v6592, 7
        %v6595 = vor.u32 %v6591, %v6594
        %v6596 = vrot.slane %v6595, 2
        %v6598 = vshll.u32 %v6549, 16
        %v6600 = vrot.slane %v6598, 7
        %v6601 = vsel %vm6562, %v6596, %v6600
        %v6602 = vshrl.u32 %v6552, 16
        %v6604 = vrot.slane %v6602, 6
        %v6605 = vshll.u32 %v6552, 16
        %v6607 = vrot.slane %v6605, 7
        %v6608 = vor.u32 %v6604, %v6607
        %v6609 = vrot.slane %v6608, 2
        %v6611 = vshll.u32 %v6555, 16
        %v6613 = vrot.slane %v6611, 7
        %v6614 = vsel %vm6562, %v6609, %v6613
        %6616 = vst [vmem:[#allocation1] ss:$2 sm:$0xff] %v6575
        %s6618 = scalar_lea.vmem [#allocation1], 1
        %6619 = vst [vmem:[%s6618] ss:$2 sm:$0xff] %v6588
        %s6621 = scalar_lea.vmem [#allocation1], 16
        %6622 = vst [vmem:[%s6621] ss:$2 sm:$0xff] %v6601
        %s6624 = scalar_lea.vmem [#allocation1], 17
        %6625 = vst [vmem:[%s6624] ss:$2 sm:$0xff] %v6614
        %v6626 = vld.sshfl [vmem:[#allocation1] sm:$0xff pattern:$0x75643120]
        %v6628 = vld.sshfl [vmem:[#allocation1 + $0x10] sm:$0xff pattern:$0x75643120]
        %6630 = vrot.lane.b32.xlu0 %v6626, 16
        %v6631 = vpop.permute.xlu0 %6630
        %6632 = vrot.lane.b32.xlu0 %v6628, 16
        %v6633 = vpop.permute.xlu0 %6632
        %6636 = vst.msk [vmem:[#allocation7] sm:$0xf] %vm3683, %v6631
        %6637 = vst.msk [vmem:[#allocation7 + $0x8] sm:$0xf] %vm3683, %v6633
        %v6638 = vld [vmem:[#allocation6] sm:$0x6]
        %v6639 = vld [vmem:[#allocation6 + $0x8] sm:$0x6]
        %v6640 = vld [vmem:[#allocation6 + $0x10] sm:$0x6]
        %v6641 = vld [vmem:[#allocation6 + $0x18] sm:$0x6]
        %v6646 = vrot.slane %v6638, 2
        %v6647 = vrot.slane %v6639, 2
        %v6648 = vrot.slane %v6640, 2
        %v6649 = vrot.slane %v6641, 2
        %v6652 = vsel %vm608, %v6638, %v6646
        %v6654 = vsel %vm6534, %v6638, %v6646
        %v6656 = vrot.slane %v6654, 2
        %v6659 = vsel %vm608, %v6639, %v6647
        %v6661 = vsel %vm6534, %v6639, %v6647
        %v6663 = vrot.slane %v6661, 2
        %v6666 = vsel %vm608, %v6640, %v6648
        %v6668 = vsel %vm6534, %v6640, %v6648
        %v6670 = vrot.slane %v6668, 2
        %v6673 = vsel %vm608, %v6641, %v6649
        %v6675 = vsel %vm6534, %v6641, %v6649
        %v6677 = vrot.slane %v6675, 2
        %vm6678 = vcmask 1040384
        %vm6679 = vcmask 1042434
        %vm6680 = vmor %vm6678, %vm6679
        %vm6681 = vcmask 1044484
        %vm6682 = vmor %vm6680, %vm6681
        %vm6683 = vcmask 1046534
        %vm6684 = vmor %vm6682, %vm6683
        %v6685 = vrot.slane %v6652, 7
        %v6686 = vrot.slane %v6685, 2
        %v6687 = vrot.slane %v6656, 7
        %v6688 = vsel %vm6684, %v6686, %v6687
        %v6689 = vrot.slane %v6659, 7
        %v6690 = vrot.slane %v6689, 2
        %v6691 = vrot.slane %v6663, 7
        %v6692 = vsel %vm6684, %v6690, %v6691
        %v6693 = vrot.slane %v6666, 7
        %v6694 = vrot.slane %v6693, 2
        %v6695 = vrot.slane %v6670, 7
        %v6696 = vsel %vm6684, %v6694, %v6695
        %v6697 = vrot.slane %v6673, 7
        %v6698 = vrot.slane %v6697, 2
        %v6699 = vrot.slane %v6677, 7
        %v6700 = vsel %vm6684, %v6698, %v6699
        %6702 = vst [vmem:[#allocation1] ss:$2 sm:$0xff] %v6688
        %s6704 = scalar_lea.vmem [#allocation1], 1
        %6705 = vst [vmem:[%s6704] ss:$2 sm:$0xff] %v6692
        %s6707 = scalar_lea.vmem [#allocation1], 16
        %6708 = vst [vmem:[%s6707] ss:$2 sm:$0xff] %v6696
        %s6710 = scalar_lea.vmem [#allocation1], 17
        %6711 = vst [vmem:[%s6710] ss:$2 sm:$0xff] %v6700
        %v6712 = vld.sshfl [vmem:[#allocation1] sm:$0xff pattern:$0x75643120]
        %v6714 = vld.sshfl [vmem:[#allocation1 + $0x10] sm:$0xff pattern:$0x75643120]
        %6716 = vrot.lane.b32.xlu0 %v6712, 32
        %v6717 = vpop.permute.xlu0 %6716
        %6718 = vrot.lane.b32.xlu0 %v6714, 32
        %v6719 = vpop.permute.xlu0 %6718
        %6722 = vst.msk [vmem:[#allocation7] sm:$0xf] %vm3783, %v6717
        %6723 = vst.msk [vmem:[#allocation7 + $0x8] sm:$0xf] %vm3783, %v6719
        %v6724 = vld [vmem:[%s3457] sm:$0x3]
        %v6725 = vld [vmem:[%s3457 + $0x8] sm:$0x3]
        %v6726 = vld [vmem:[%s3457 + $0x10] sm:$0x3]
        %v6727 = vld [vmem:[%s3457 + $0x18] sm:$0x3]
        %6729 = vst [vmem:[#allocation1] ss:$2 sm:$0xff] %v6724
        %s6731 = scalar_lea.vmem [#allocation1], 1
        %6732 = vst [vmem:[%s6731] ss:$2 sm:$0xff] %v6725
        %s6734 = scalar_lea.vmem [#allocation1], 16
        %6735 = vst [vmem:[%s6734] ss:$2 sm:$0xff] %v6726
        %s6737 = scalar_lea.vmem [#allocation1], 17
        %6738 = vst [vmem:[%s6737] ss:$2 sm:$0xff] %v6727
        %v6739 = vld.sshfl [vmem:[#allocation1] sm:$0xff pattern:$0x75643120]
        %v6741 = vld.sshfl [vmem:[#allocation1 + $0x10] sm:$0xff pattern:$0x75643120]
        %6743 = vrot.lane.b32.xlu0 %v6739, 48
        %v6744 = vpop.permute.xlu0 %6743
        %6745 = vrot.lane.b32.xlu0 %v6741, 48
        %v6746 = vpop.permute.xlu0 %6745
        %6749 = vst.msk [vmem:[#allocation7] sm:$0xf] %vm3832, %v6744
        %6750 = vst.msk [vmem:[#allocation7 + $0x8] sm:$0xf] %vm3832, %v6746
        %v6751 = vld [vmem:[%s3457] sm:$0x7]
        %v6752 = vld [vmem:[%s3457 + $0x8] sm:$0x7]
        %v6753 = vld [vmem:[%s3457 + $0x10] sm:$0x7]
        %v6754 = vld [vmem:[%s3457 + $0x18] sm:$0x7]
        %v6759 = vrot.slane %v6751, 2
        %v6760 = vrot.slane %v6752, 2
        %v6761 = vrot.slane %v6753, 2
        %v6762 = vrot.slane %v6754, 2
        %v6765 = vsel %vm608, %v6751, %v6759
        %v6766 = vsel %vm6534, %v6751, %v6759
        %v6768 = vrot.slane %v6766, 2
        %v6771 = vsel %vm608, %v6752, %v6760
        %v6772 = vsel %vm6534, %v6752, %v6760
        %v6774 = vrot.slane %v6772, 2
        %v6777 = vsel %vm608, %v6753, %v6761
        %v6778 = vsel %vm6534, %v6753, %v6761
        %v6780 = vrot.slane %v6778, 2
        %v6783 = vsel %vm608, %v6754, %v6762
        %v6784 = vsel %vm6534, %v6754, %v6762
        %v6786 = vrot.slane %v6784, 2
        %v6787 = vshrl.u32 %v6765, 16
        %v6789 = vrot.slane %v6787, 6
        %v6790 = vshll.u32 %v6765, 16
        %v6792 = vrot.slane %v6790, 7
        %v6793 = vor.u32 %v6789, %v6792
        %v6794 = vrot.slane %v6793, 2
        %v6796 = vshll.u32 %v6768, 16
        %v6798 = vrot.slane %v6796, 7
        %v6799 = vsel %vm6562, %v6794, %v6798
        %v6800 = vshrl.u32 %v6771, 16
        %v6802 = vrot.slane %v6800, 6
        %v6803 = vshll.u32 %v6771, 16
        %v6805 = vrot.slane %v6803, 7
        %v6806 = vor.u32 %v6802, %v6805
        %v6807 = vrot.slane %v6806, 2
        %v6809 = vshll.u32 %v6774, 16
        %v6811 = vrot.slane %v6809, 7
        %v6812 = vsel %vm6562, %v6807, %v6811
        %v6813 = vshrl.u32 %v6777, 16
        %v6815 = vrot.slane %v6813, 6
        %v6816 = vshll.u32 %v6777, 16
        %v6818 = vrot.slane %v6816, 7
        %v6819 = vor.u32 %v6815, %v6818
        %v6820 = vrot.slane %v6819, 2
        %v6822 = vshll.u32 %v6780, 16
        %v6824 = vrot.slane %v6822, 7
        %v6825 = vsel %vm6562, %v6820, %v6824
        %v6826 = vshrl.u32 %v6783, 16
        %v6828 = vrot.slane %v6826, 6
        %v6829 = vshll.u32 %v6783, 16
        %v6831 = vrot.slane %v6829, 7
        %v6832 = vor.u32 %v6828, %v6831
        %v6833 = vrot.slane %v6832, 2
        %v6835 = vshll.u32 %v6786, 16
        %v6837 = vrot.slane %v6835, 7
        %v6838 = vsel %vm6562, %v6833, %v6837
        %6840 = vst [vmem:[#allocation1] ss:$2 sm:$0xff] %v6799
        %s6842 = scalar_lea.vmem [#allocation1], 1
        %6843 = vst [vmem:[%s6842] ss:$2 sm:$0xff] %v6812
        %s6845 = scalar_lea.vmem [#allocation1], 16
        %6846 = vst [vmem:[%s6845] ss:$2 sm:$0xff] %v6825
        %s6848 = scalar_lea.vmem [#allocation1], 17
        %6849 = vst [vmem:[%s6848] ss:$2 sm:$0xff] %v6838
        %v6850 = vld.sshfl [vmem:[#allocation1] sm:$0xff pattern:$0x75643120]
        %v6852 = vld.sshfl [vmem:[#allocation1 + $0x10] sm:$0xff pattern:$0x75643120]
        %6854 = vrot.lane.b32.xlu0 %v6850, 64
        %v6855 = vpop.permute.xlu0 %6854
        %6856 = vrot.lane.b32.xlu0 %v6852, 64
        %v6857 = vpop.permute.xlu0 %6856
        %6860 = vst.msk [vmem:[#allocation7] sm:$0xf] %vm3993, %v6855
        %6861 = vst.msk [vmem:[#allocation7 + $0x8] sm:$0xf] %vm3993, %v6857
        %v6862 = vld [vmem:[%s3457] sm:$0x6]
        %v6863 = vld [vmem:[%s3457 + $0x8] sm:$0x6]
        %v6864 = vld [vmem:[%s3457 + $0x10] sm:$0x6]
        %v6865 = vld [vmem:[%s3457 + $0x18] sm:$0x6]
        %v6870 = vrot.slane %v6862, 2
        %v6871 = vrot.slane %v6863, 2
        %v6872 = vrot.slane %v6864, 2
        %v6873 = vrot.slane %v6865, 2
        %v6876 = vsel %vm608, %v6862, %v6870
        %v6878 = vsel %vm6534, %v6862, %v6870
        %v6880 = vrot.slane %v6878, 2
        %v6883 = vsel %vm608, %v6863, %v6871
        %v6885 = vsel %vm6534, %v6863, %v6871
        %v6887 = vrot.slane %v6885, 2
        %v6890 = vsel %vm608, %v6864, %v6872
        %v6892 = vsel %vm6534, %v6864, %v6872
        %v6894 = vrot.slane %v6892, 2
        %v6897 = vsel %vm608, %v6865, %v6873
        %v6899 = vsel %vm6534, %v6865, %v6873
        %v6901 = vrot.slane %v6899, 2
        %v6902 = vrot.slane %v6876, 7
        %v6903 = vrot.slane %v6902, 2
        %v6904 = vrot.slane %v6880, 7
        %v6905 = vsel %vm6684, %v6903, %v6904
        %v6906 = vrot.slane %v6883, 7
        %v6907 = vrot.slane %v6906, 2
        %v6908 = vrot.slane %v6887, 7
        %v6909 = vsel %vm6684, %v6907, %v6908
        %v6910 = vrot.slane %v6890, 7
        %v6911 = vrot.slane %v6910, 2
        %v6912 = vrot.slane %v6894, 7
        %v6913 = vsel %vm6684, %v6911, %v6912
        %v6914 = vrot.slane %v6897, 7
        %v6915 = vrot.slane %v6914, 2
        %v6916 = vrot.slane %v6901, 7
        %v6917 = vsel %vm6684, %v6915, %v6916
        %6919 = vst [vmem:[#allocation1] ss:$2 sm:$0xff] %v6905
        %s6921 = scalar_lea.vmem [#allocation1], 1
        %6922 = vst [vmem:[%s6921] ss:$2 sm:$0xff] %v6909
        %s6924 = scalar_lea.vmem [#allocation1], 16
        %6925 = vst [vmem:[%s6924] ss:$2 sm:$0xff] %v6913
        %s6927 = scalar_lea.vmem [#allocation1], 17
        %6928 = vst [vmem:[%s6927] ss:$2 sm:$0xff] %v6917
        %v6929 = vld.sshfl [vmem:[#allocation1] sm:$0xff pattern:$0x75643120]
        %v6931 = vld.sshfl [vmem:[#allocation1 + $0x10] sm:$0xff pattern:$0x75643120]
        %6933 = vrot.lane.b32.xlu0 %v6929, 80
        %v6934 = vpop.permute.xlu0 %6933
        %6935 = vrot.lane.b32.xlu0 %v6931, 80
        %v6936 = vpop.permute.xlu0 %6935
        %6939 = vst.msk [vmem:[#allocation7] sm:$0xf] %vm4090, %v6934
        %6940 = vst.msk [vmem:[#allocation7 + $0x8] sm:$0xf] %vm4090, %v6936
        %v6941 = vld [vmem:[%s4099] sm:$0x3]
        %v6942 = vld [vmem:[%s4099 + $0x8] sm:$0x3]
        %v6943 = vld [vmem:[%s4099 + $0x10] sm:$0x3]
        %v6944 = vld [vmem:[%s4099 + $0x18] sm:$0x3]
        %6946 = vst [vmem:[#allocation1] ss:$2 sm:$0xff] %v6941
        %s6948 = scalar_lea.vmem [#allocation1], 1
        %6949 = vst [vmem:[%s6948] ss:$2 sm:$0xff] %v6942
        %s6951 = scalar_lea.vmem [#allocation1], 16
        %6952 = vst [vmem:[%s6951] ss:$2 sm:$0xff] %v6943
        %s6954 = scalar_lea.vmem [#allocation1], 17
        %6955 = vst [vmem:[%s6954] ss:$2 sm:$0xff] %v6944
        %v6956 = vld.sshfl [vmem:[#allocation1] sm:$0xff pattern:$0x75643120]
        %v6958 = vld.sshfl [vmem:[#allocation1 + $0x10] sm:$0xff pattern:$0x75643120]
        %6960 = vrot.lane.b32.xlu0 %v6956, 96
        %v6961 = vpop.permute.xlu0 %6960
        %6962 = vrot.lane.b32.xlu0 %v6958, 96
        %v6963 = vpop.permute.xlu0 %6962
        %6966 = vst.msk [vmem:[#allocation7] sm:$0xf] %vm4140, %v6961
        %6967 = vst.msk [vmem:[#allocation7 + $0x8] sm:$0xf] %vm4140, %v6963
        %v6968 = vld [vmem:[%s4099] sm:$0x7]
        %v6969 = vld [vmem:[%s4099 + $0x8] sm:$0x7]
        %v6970 = vld [vmem:[%s4099 + $0x10] sm:$0x7]
        %v6971 = vld [vmem:[%s4099 + $0x18] sm:$0x7]
        %v6976 = vrot.slane %v6968, 2
        %v6977 = vrot.slane %v6969, 2
        %v6978 = vrot.slane %v6970, 2
        %v6979 = vrot.slane %v6971, 2
        %v6982 = vsel %vm608, %v6968, %v6976
        %v6983 = vsel %vm6534, %v6968, %v6976
        %v6985 = vrot.slane %v6983, 2
        %v6988 = vsel %vm608, %v6969, %v6977
        %v6989 = vsel %vm6534, %v6969, %v6977
        %v6991 = vrot.slane %v6989, 2
        %v6994 = vsel %vm608, %v6970, %v6978
        %v6995 = vsel %vm6534, %v6970, %v6978
        %v6997 = vrot.slane %v6995, 2
        %v7000 = vsel %vm608, %v6971, %v6979
        %v7001 = vsel %vm6534, %v6971, %v6979
        %v7003 = vrot.slane %v7001, 2
        %v7004 = vshrl.u32 %v6982, 16
        %v7006 = vrot.slane %v7004, 6
        %v7007 = vshll.u32 %v6982, 16
        %v7009 = vrot.slane %v7007, 7
        %v7010 = vor.u32 %v7006, %v7009
        %v7011 = vrot.slane %v7010, 2
        %v7013 = vshll.u32 %v6985, 16
        %v7015 = vrot.slane %v7013, 7
        %v7016 = vsel %vm6562, %v7011, %v7015
        %v7017 = vshrl.u32 %v6988, 16
        %v7019 = vrot.slane %v7017, 6
        %v7020 = vshll.u32 %v6988, 16
        %v7022 = vrot.slane %v7020, 7
        %v7023 = vor.u32 %v7019, %v7022
        %v7024 = vrot.slane %v7023, 2
        %v7026 = vshll.u32 %v6991, 16
        %v7028 = vrot.slane %v7026, 7
        %v7029 = vsel %vm6562, %v7024, %v7028
        %v7030 = vshrl.u32 %v6994, 16
        %v7032 = vrot.slane %v7030, 6
        %v7033 = vshll.u32 %v6994, 16
        %v7035 = vrot.slane %v7033, 7
        %v7036 = vor.u32 %v7032, %v7035
        %v7037 = vrot.slane %v7036, 2
        %v7039 = vshll.u32 %v6997, 16
        %v7041 = vrot.slane %v7039, 7
        %v7042 = vsel %vm6562, %v7037, %v7041
        %v7043 = vshrl.u32 %v7000, 16
        %v7045 = vrot.slane %v7043, 6
        %v7046 = vshll.u32 %v7000, 16
        %v7048 = vrot.slane %v7046, 7
        %v7049 = vor.u32 %v7045, %v7048
        %v7050 = vrot.slane %v7049, 2
        %v7052 = vshll.u32 %v7003, 16
        %v7054 = vrot.slane %v7052, 7
        %v7055 = vsel %vm6562, %v7050, %v7054
        %7057 = vst [vmem:[#allocation1] ss:$2 sm:$0xff] %v7016
        %s7059 = scalar_lea.vmem [#allocation1], 1
        %7060 = vst [vmem:[%s7059] ss:$2 sm:$0xff] %v7029
        %s7062 = scalar_lea.vmem [#allocation1], 16
        %7063 = vst [vmem:[%s7062] ss:$2 sm:$0xff] %v7042
        %s7065 = scalar_lea.vmem [#allocation1], 17
        %7066 = vst [vmem:[%s7065] ss:$2 sm:$0xff] %v7055
        %v7067 = vld.sshfl [vmem:[#allocation1] sm:$0xff pattern:$0x75643120]
        %v7069 = vld.sshfl [vmem:[#allocation1 + $0x10] sm:$0xff pattern:$0x75643120]
        %7071 = vrot.lane.b32.xlu0 %v7067, 112
        %v7072 = vpop.permute.xlu0 %7071
        %7073 = vrot.lane.b32.xlu0 %v7069, 112
        %v7074 = vpop.permute.xlu0 %7073
        %7077 = vst.msk [vmem:[#allocation7] sm:$0xf] %vm4301, %v7072
        %7078 = vst.msk [vmem:[#allocation7 + $0x8] sm:$0xf] %vm4301, %v7074
        %v7079 = vld [vmem:[%s4099] sm:$0x6]
        %v7080 = vld [vmem:[%s4099 + $0x8] sm:$0x6]
        %v7081 = vld [vmem:[%s4099 + $0x10] sm:$0x6]
        %v7082 = vld [vmem:[%s4099 + $0x18] sm:$0x6]
        %v7087 = vrot.slane %v7079, 2
        %v7088 = vrot.slane %v7080, 2
        %v7089 = vrot.slane %v7081, 2
        %v7090 = vrot.slane %v7082, 2
        %v7093 = vsel %vm608, %v7079, %v7087
        %v7095 = vsel %vm6534, %v7079, %v7087
        %v7097 = vrot.slane %v7095, 2
        %v7100 = vsel %vm608, %v7080, %v7088
        %v7102 = vsel %vm6534, %v7080, %v7088
        %v7104 = vrot.slane %v7102, 2
        %v7107 = vsel %vm608, %v7081, %v7089
        %v7109 = vsel %vm6534, %v7081, %v7089
        %v7111 = vrot.slane %v7109, 2
        %v7114 = vsel %vm608, %v7082, %v7090
        %v7116 = vsel %vm6534, %v7082, %v7090
        %v7118 = vrot.slane %v7116, 2
        %v7119 = vrot.slane %v7093, 7
        %v7120 = vrot.slane %v7119, 2
        %v7121 = vrot.slane %v7097, 7
        %v7122 = vsel %vm6684, %v7120, %v7121
        %v7123 = vrot.slane %v7100, 7
        %v7124 = vrot.slane %v7123, 2
        %v7125 = vrot.slane %v7104, 7
        %v7126 = vsel %vm6684, %v7124, %v7125
        %v7127 = vrot.slane %v7107, 7
        %v7128 = vrot.slane %v7127, 2
        %v7129 = vrot.slane %v7111, 7
        %v7130 = vsel %vm6684, %v7128, %v7129
        %v7131 = vrot.slane %v7114, 7
        %v7132 = vrot.slane %v7131, 2
        %v7133 = vrot.slane %v7118, 7
        %v7134 = vsel %vm6684, %v7132, %v7133
        %7136 = vst [vmem:[#allocation1] ss:$2 sm:$0xff] %v7122
        %s7138 = scalar_lea.vmem [#allocation1], 1
        %7139 = vst [vmem:[%s7138] ss:$2 sm:$0xff] %v7126
        %s7141 = scalar_lea.vmem [#allocation1], 16
        %7142 = vst [vmem:[%s7141] ss:$2 sm:$0xff] %v7130
        %s7144 = scalar_lea.vmem [#allocation1], 17
        %7145 = vst [vmem:[%s7144] ss:$2 sm:$0xff] %v7134
        %v7146 = vld.sshfl [vmem:[#allocation1] sm:$0xff pattern:$0x75643120]
        %v7147 = vld.sshfl [vmem:[#allocation1 + $0x10] sm:$0xff pattern:$0x75643120]
        %7150 = vst.msk [vmem:[#allocation7 + $0x4] sm:$0xf] %vm3348, %v7146
        %7151 = vst.msk [vmem:[#allocation7 + $0xc] sm:$0xf] %vm3348, %v7147
        %v7152 = vld [vmem:[#allocation7] sm:$0xff]
        %v7153 = vld [vmem:[#allocation7 + $0x8] sm:$0xff]
        %s7154 = scalar_lea.vmem %s4, 144
        %v7155 = vld [vmem:[%s7154] sm:$0xf]
        %v7156 = vld [vmem:[%s7154 + $0x4] sm:$0xf]
        %v7157 = vld [vmem:[%s7154 + $0x8] sm:$0xf]
        %v7158 = vld [vmem:[%s7154 + $0xc] sm:$0xf]
        %v7159 = vld [vmem:[%s7154 + $0x10] sm:$0xf]
        %v7160 = vld [vmem:[%s7154 + $0x14] sm:$0xf]
        %v7161 = vld [vmem:[%s7154 + $0x18] sm:$0xf]
        %v7162 = vld [vmem:[%s7154 + $0x1c] sm:$0xf]
        %v7163 = vld [vmem:[%s7154 + $0x20] sm:$0xf]
        %v7164 = vld [vmem:[%s7154 + $0x24] sm:$0xf]
        %v7165 = vld [vmem:[%s7154 + $0x28] sm:$0xf]
        %v7166 = vld [vmem:[%s7154 + $0x2c] sm:$0xf]
        %v7167 = vld [vmem:[%s7154 + $0x30] sm:$0xf]
        %v7168 = vld [vmem:[%s7154 + $0x34] sm:$0xf]
        %v7169 = vld [vmem:[%s7154 + $0x38] sm:$0xf]
        %v7170 = vld [vmem:[%s7154 + $0x3c] sm:$0xf]
        %v7171 = vld [vmem:[%s7154 + $0x40] sm:$0xf]
        %v7172 = vld [vmem:[%s7154 + $0x44] sm:$0xf]
        %v7175 = vunpack.c.l.b16 %v7152
        %v7176 = vunpack.c.h.b16 %v7152
        %v7177 = vunpack.c.l.b16 %v7153
        %v7178 = vunpack.c.h.b16 %v7153
        %v7179 = vpack.c.b16 %v7177, %v7175
        %v7180 = vpack.c.b16 %v7178, %v7176
        %v7200 = vunpack.c.l.b16 %v7155
        %v7201 = vunpack.c.l.b16 %v7156
        %v7202 = vunpack.c.l.b16 %v7157
        %v7203 = vunpack.c.l.b16 %v7158
        %v7204 = vunpack.c.l.b16 %v7159
        %v7205 = vunpack.c.l.b16 %v7160
        %v7206 = vunpack.c.l.b16 %v7161
        %v7207 = vunpack.c.l.b16 %v7162
        %v7208 = vunpack.c.l.b16 %v7163
        %v7209 = vunpack.c.l.b16 %v7164
        %v7210 = vunpack.c.l.b16 %v7165
        %v7211 = vunpack.c.l.b16 %v7166
        %v7212 = vunpack.c.l.b16 %v7167
        %v7213 = vunpack.c.l.b16 %v7168
        %v7214 = vunpack.c.l.b16 %v7169
        %v7215 = vunpack.c.l.b16 %v7170
        %v7216 = vunpack.c.l.b16 %v7171
        %v7217 = vunpack.c.l.b16 %v7172
        %v7218 = vpack.c.b16 %v7201, %v7200
        %v7219 = vpack.c.b16 %v7203, %v7202
        %v7220 = vpack.c.b16 %v7205, %v7204
        %v7221 = vpack.c.b16 %v7207, %v7206
        %v7222 = vpack.c.b16 %v7209, %v7208
        %v7223 = vpack.c.b16 %v7211, %v7210
        %v7224 = vpack.c.b16 %v7213, %v7212
        %v7225 = vpack.c.b16 %v7215, %v7214
        %v7226 = vpack.c.b16 %v7217, %v7216
        %v7237 = vsel %vm3212, %v7180, 0
        %7239 = vmatpush.bf16.msra.mxu0 %v7225
        %7240 = vmatpush.bf16.msra.mxu0 %v7224
        %7241 = vmatpush.bf16.msra.mxu0 %v7223
        %7242 = vmatpush.bf16.msra.mxu0 %v7222
        %7243 = vmatpush.bf16.msra.mxu0 %v7221
        %7244 = vmatpush.bf16.msra.mxu0 %v7220
        %7245 = vmatpush.bf16.msra.mxu0 %v7219
        %7246 = vmatpush.bf16.msra.mxu0 %v7218
        %7247 = vmatmul.bf16.gmra.mxu0 %v7179
        %v7248 = vpop.f32.mrf.mxu0
        %v7249 = vadd.f32 0.0, %v7248
        %v7250 = vpop.f32.mrf.mxu0
        %v7251 = vadd.f32 0.0, %v7250
        %7252 = vdwg.mxu0
        %7253 = vmatpush.bf16.msra.mxu0 0
        %7254 = vmatpush.bf16.msra.mxu0 0
        %7255 = vmatpush.bf16.msra.mxu0 0
        %7256 = vmatpush.bf16.msra.mxu0 0
        %7257 = vmatpush.bf16.msra.mxu0 0
        %7258 = vmatpush.bf16.msra.mxu0 0
        %7259 = vmatpush.bf16.msra.mxu0 0
        %7260 = vmatpush.bf16.msra.mxu0 %v7226
        %7261 = vmatmul.bf16.gmra.mxu0 %v7237
        %v7262 = vpop.f32.mrf.mxu0
        %v7263 = vadd.f32 %v7249, %v7262
        %v7264 = vpop.f32.mrf.mxu0
        %v7265 = vadd.f32 %v7251, %v7264
        %7266 = vdwg.mxu0
        %7269 = vrot.lane.b32.xlu0 %v7263, 16
        %v7270 = vpop.permute.xlu0 %7269
        %7271 = vrot.lane.b32.xlu0 %v7265, 16
        %v7272 = vpop.permute.xlu0 %7271
        %7275 = vst.msk [vmem:[#allocation5] sm:$0xff] %vm4608, %v7270
        %7276 = vst.msk [vmem:[#allocation5 + $0x8] sm:$0xff] %vm4608, %v7272
        %s7277 = scalar_lea.vmem %s2, 16
        %v7278 = vld [vmem:[%s7277] sm:$0x1]
        %v7279 = vld [vmem:[%s7277 + $0x1] sm:$0x1]
        %v7280 = vld [vmem:[#allocation5] sm:$0xff]
        %v7281 = vld [vmem:[#allocation5 + $0x8] sm:$0xff]
        %v7282 = vperm.slane %v7278, 0
        %v7283 = vmul.f32 %v7280, %v7282
        %v7284 = vmul.f32 %v7281, %v7282
        %v7285 = vperm.slane %v7279, 0
        %v7286 = vadd.f32 %v7283, %v7285
        %v7287 = vadd.f32 %v7284, %v7285
        %v7288 = vmax.f32 %v7286, 0.0
        %v7289 = vmax.f32 %v7287, 0.0
        %v7290 = vpack.c.bf16 %v7289, %v7288
        %s7291 = scalar_lea.vmem %s3, 48
        %v7292 = vld [vmem:[%s7291] sm:$0xf]
        %v7293 = vld [vmem:[%s7291 + $0x4] sm:$0xf]
        %v7294 = vld [vmem:[%s7291 + $0x8] sm:$0xf]
        %v7295 = vld [vmem:[%s7291 + $0xc] sm:$0xf]
        %v7300 = vunpack.c.l.b16 %v7292
        %v7301 = vunpack.c.l.b16 %v7293
        %v7302 = vunpack.c.l.b16 %v7294
        %v7303 = vunpack.c.l.b16 %v7295
        %v7304 = vpack.c.b16 %v7301, %v7300
        %v7305 = vpack.c.b16 %v7303, %v7302
        %v7309 = vsel %vm3012, %v7290, 0
        %7311 = vmatpush.bf16.msra.mxu0 0
        %7312 = vmatpush.bf16.msra.mxu0 0
        %7313 = vmatpush.bf16.msra.mxu0 0
        %7314 = vmatpush.bf16.msra.mxu0 0
        %7315 = vmatpush.bf16.msra.mxu0 0
        %7316 = vmatpush.bf16.msra.mxu0 0
        %7317 = vmatpush.bf16.msra.mxu0 %v7305
        %7318 = vmatpush.bf16.msra.mxu0 %v7304
        %7319 = vmatmul.bf16.gmra.mxu0 %v7309
        %v7320 = vpop.f32.mrf.mxu0
        %v7321 = vadd.f32 0.0, %v7320
        %v7322 = vpop.f32.mrf.mxu0
        %v7323 = vadd.f32 0.0, %v7322
        %7324 = vdwg.mxu0
        %s7325 = scalar_lea.vmem %s2, 18
        %v7326 = vld [vmem:[%s7325] sm:$0x1]
        %v7327 = vld [vmem:[%s7325 + $0x1] sm:$0x1]
        %v7328 = vperm.slane %v7326, 0
        %v7329 = vmul.f32 %v7321, %v7328
        %v7330 = vmul.f32 %v7323, %v7328
        %v7331 = vperm.slane %v7327, 0
        %v7332 = vadd.f32 %v7329, %v7331
        %v7333 = vadd.f32 %v7330, %v7331
        %v7334 = vmax.f32 %v7332, 0.0
        %v7335 = vmax.f32 %v7333, 0.0
        %7336 = vst.msk [vmem:[#allocation6] sm:$0xf] %vm3348, 0
        %7337 = vst.msk [vmem:[#allocation6 + $0x4] sm:$0x1] %vm1470, 0
        %7338 = vst.msk [vmem:[#allocation6 + $0x8] sm:$0xf] %vm3348, 0
        %7339 = vst.msk [vmem:[#allocation6 + $0xc] sm:$0x1] %vm1470, 0
        %7340 = vst.msk [vmem:[#allocation6 + $0x10] sm:$0xf] %vm3348, 0
        %7341 = vst.msk [vmem:[#allocation6 + $0x14] sm:$0x1] %vm1470, 0
        %7342 = vst.msk [vmem:[#allocation6 + $0x18] sm:$0xf] %vm3348, 0
        %7343 = vst.msk [vmem:[#allocation6 + $0x1c] sm:$0x1] %vm1470, 0
        %7344 = vst.msk [vmem:[#allocation6 + $0x20] sm:$0xf] %vm3348, 0
        %7345 = vst.msk [vmem:[#allocation6 + $0x24] sm:$0x1] %vm1470, 0
        %7346 = vst.msk [vmem:[#allocation6 + $0x28] sm:$0xf] %vm3348, 0
        %7347 = vst.msk [vmem:[#allocation6 + $0x2c] sm:$0x1] %vm1470, 0
        %7348 = vst.msk [vmem:[#allocation6 + $0x30] sm:$0xf] %vm3348, 0
        %7349 = vst.msk [vmem:[#allocation6 + $0x34] sm:$0x1] %vm1470, 0
        %7350 = vst.msk [vmem:[#allocation6 + $0x38] sm:$0xf] %vm3348, 0
        %7351 = vst.msk [vmem:[#allocation6 + $0x3c] sm:$0x1] %vm1470, 0
        %7352 = vst.msk [vmem:[#allocation6 + $0x40] sm:$0xf] %vm3348, 0
        %7353 = vst.msk [vmem:[#allocation6 + $0x44] sm:$0x1] %vm1470, 0
        %7354 = vst.msk [vmem:[#allocation6 + $0x48] sm:$0xf] %vm3348, 0
        %7355 = vst.msk [vmem:[#allocation6 + $0x4c] sm:$0x1] %vm1470, 0
        %v7358 = vrot.slane %v7334, 4
        %v7359 = vrot.slane %v7335, 4
        %v7362 = vpack.c.bf16 %v7334, %v7334
        %v7363 = vpack.c.bf16 %v7358, %v7358
        %v7364 = vpack.c.bf16 %v7335, %v7335
        %v7365 = vpack.c.bf16 %v7359, %v7359
        %v7367 = vshrl.u32 %v7362, 16
        %v7369 = vrot.slane %v7367, 7
        %v7370 = vshll.u32 %v7362, 16
        %v7372 = vor.u32 %v7369, %v7370
        %v7374 = vshrl.u32 %v7363, 16
        %v7376 = vrot.slane %v7374, 7
        %v7377 = vshll.u32 %v7363, 16
        %v7379 = vor.u32 %v7376, %v7377
        %v7381 = vshrl.u32 %v7364, 16
        %v7383 = vrot.slane %v7381, 7
        %v7384 = vshll.u32 %v7364, 16
        %v7386 = vor.u32 %v7383, %v7384
        %v7388 = vshrl.u32 %v7365, 16
        %v7390 = vrot.slane %v7388, 7
        %v7391 = vshll.u32 %v7365, 16
        %v7393 = vor.u32 %v7390, %v7391
        %v7398 = vld [vmem:[%s3457] sm:$0x7]
        %v7399 = vsel %vm6485, %v7372, %v7398
        %7400 = vst [vmem:[%s3457] sm:$0x7] %v7399
        %v7401 = vld [vmem:[%s3457 + $0x8] sm:$0x7]
        %v7402 = vsel %vm6485, %v7379, %v7401
        %7403 = vst [vmem:[%s3457 + $0x8] sm:$0x7] %v7402
        %v7404 = vld [vmem:[%s3457 + $0x10] sm:$0x7]
        %v7405 = vsel %vm6485, %v7386, %v7404
        %7406 = vst [vmem:[%s3457 + $0x10] sm:$0x7] %v7405
        %v7407 = vld [vmem:[%s3457 + $0x18] sm:$0x7]
        %v7408 = vsel %vm6485, %v7393, %v7407
        %7409 = vst [vmem:[%s3457 + $0x18] sm:$0x7] %v7408
        %v7410 = vld [vmem:[#allocation6] sm:$0x3]
        %v7411 = vld [vmem:[#allocation6 + $0x8] sm:$0x3]
        %v7412 = vld [vmem:[#allocation6 + $0x10] sm:$0x3]
        %v7413 = vld [vmem:[#allocation6 + $0x18] sm:$0x3]
        %7415 = vst [vmem:[#allocation1] ss:$2 sm:$0xff] %v7410
        %s7417 = scalar_lea.vmem [#allocation1], 1
        %7418 = vst [vmem:[%s7417] ss:$2 sm:$0xff] %v7411
        %s7420 = scalar_lea.vmem [#allocation1], 16
        %7421 = vst [vmem:[%s7420] ss:$2 sm:$0xff] %v7412
        %s7423 = scalar_lea.vmem [#allocation1], 17
        %7424 = vst [vmem:[%s7423] ss:$2 sm:$0xff] %v7413
        %v7425 = vld.sshfl [vmem:[#allocation1] sm:$0xff pattern:$0x75643120]
        %v7426 = vld.sshfl [vmem:[#allocation1 + $0x10] sm:$0xff pattern:$0x75643120]
        %7429 = vst.msk [vmem:[#allocation7] sm:$0xf] %vm3348, %v7425
        %7430 = vst.msk [vmem:[#allocation7 + $0x8] sm:$0xf] %vm3348, %v7426
        %v7431 = vld [vmem:[#allocation6] sm:$0x7]
        %v7432 = vld [vmem:[#allocation6 + $0x8] sm:$0x7]
        %v7433 = vld [vmem:[#allocation6 + $0x10] sm:$0x7]
        %v7434 = vld [vmem:[#allocation6 + $0x18] sm:$0x7]
        %v7439 = vrot.slane %v7431, 2
        %v7440 = vrot.slane %v7432, 2
        %v7441 = vrot.slane %v7433, 2
        %v7442 = vrot.slane %v7434, 2
        %v7445 = vsel %vm608, %v7431, %v7439
        %v7446 = vsel %vm6534, %v7431, %v7439
        %v7448 = vrot.slane %v7446, 2
        %v7451 = vsel %vm608, %v7432, %v7440
        %v7452 = vsel %vm6534, %v7432, %v7440
        %v7454 = vrot.slane %v7452, 2
        %v7457 = vsel %vm608, %v7433, %v7441
        %v7458 = vsel %vm6534, %v7433, %v7441
        %v7460 = vrot.slane %v7458, 2
        %v7463 = vsel %vm608, %v7434, %v7442
        %v7464 = vsel %vm6534, %v7434, %v7442
        %v7466 = vrot.slane %v7464, 2
        %v7467 = vshrl.u32 %v7445, 16
        %v7469 = vrot.slane %v7467, 6
        %v7470 = vshll.u32 %v7445, 16
        %v7472 = vrot.slane %v7470, 7
        %v7473 = vor.u32 %v7469, %v7472
        %v7474 = vrot.slane %v7473, 2
        %v7476 = vshll.u32 %v7448, 16
        %v7478 = vrot.slane %v7476, 7
        %v7479 = vsel %vm6562, %v7474, %v7478
        %v7480 = vshrl.u32 %v7451, 16
        %v7482 = vrot.slane %v7480, 6
        %v7483 = vshll.u32 %v7451, 16
        %v7485 = vrot.slane %v7483, 7
        %v7486 = vor.u32 %v7482, %v7485
        %v7487 = vrot.slane %v7486, 2
        %v7489 = vshll.u32 %v7454, 16
        %v7491 = vrot.slane %v7489, 7
        %v7492 = vsel %vm6562, %v7487, %v7491
        %v7493 = vshrl.u32 %v7457, 16
        %v7495 = vrot.slane %v7493, 6
        %v7496 = vshll.u32 %v7457, 16
        %v7498 = vrot.slane %v7496, 7
        %v7499 = vor.u32 %v7495, %v7498
        %v7500 = vrot.slane %v7499, 2
        %v7502 = vshll.u32 %v7460, 16
        %v7504 = vrot.slane %v7502, 7
        %v7505 = vsel %vm6562, %v7500, %v7504
        %v7506 = vshrl.u32 %v7463, 16
        %v7508 = vrot.slane %v7506, 6
        %v7509 = vshll.u32 %v7463, 16
        %v7511 = vrot.slane %v7509, 7
        %v7512 = vor.u32 %v7508, %v7511
        %v7513 = vrot.slane %v7512, 2
        %v7515 = vshll.u32 %v7466, 16
        %v7517 = vrot.slane %v7515, 7
        %v7518 = vsel %vm6562, %v7513, %v7517
        %7520 = vst [vmem:[#allocation1] ss:$2 sm:$0xff] %v7479
        %s7522 = scalar_lea.vmem [#allocation1], 1
        %7523 = vst [vmem:[%s7522] ss:$2 sm:$0xff] %v7492
        %s7525 = scalar_lea.vmem [#allocation1], 16
        %7526 = vst [vmem:[%s7525] ss:$2 sm:$0xff] %v7505
        %s7528 = scalar_lea.vmem [#allocation1], 17
        %7529 = vst [vmem:[%s7528] ss:$2 sm:$0xff] %v7518
        %v7530 = vld.sshfl [vmem:[#allocation1] sm:$0xff pattern:$0x75643120]
        %v7532 = vld.sshfl [vmem:[#allocation1 + $0x10] sm:$0xff pattern:$0x75643120]
        %7534 = vrot.lane.b32.xlu0 %v7530, 16
        %v7535 = vpop.permute.xlu0 %7534
        %7536 = vrot.lane.b32.xlu0 %v7532, 16
        %v7537 = vpop.permute.xlu0 %7536
        %7540 = vst.msk [vmem:[#allocation7] sm:$0xf] %vm3683, %v7535
        %7541 = vst.msk [vmem:[#allocation7 + $0x8] sm:$0xf] %vm3683, %v7537
        %v7542 = vld [vmem:[#allocation6] sm:$0x6]
        %v7543 = vld [vmem:[#allocation6 + $0x8] sm:$0x6]
        %v7544 = vld [vmem:[#allocation6 + $0x10] sm:$0x6]
        %v7545 = vld [vmem:[#allocation6 + $0x18] sm:$0x6]
        %v7550 = vrot.slane %v7542, 2
        %v7551 = vrot.slane %v7543, 2
        %v7552 = vrot.slane %v7544, 2
        %v7553 = vrot.slane %v7545, 2
        %v7556 = vsel %vm608, %v7542, %v7550
        %v7558 = vsel %vm6534, %v7542, %v7550
        %v7560 = vrot.slane %v7558, 2
        %v7563 = vsel %vm608, %v7543, %v7551
        %v7565 = vsel %vm6534, %v7543, %v7551
        %v7567 = vrot.slane %v7565, 2
        %v7570 = vsel %vm608, %v7544, %v7552
        %v7572 = vsel %vm6534, %v7544, %v7552
        %v7574 = vrot.slane %v7572, 2
        %v7577 = vsel %vm608, %v7545, %v7553
        %v7579 = vsel %vm6534, %v7545, %v7553
        %v7581 = vrot.slane %v7579, 2
        %v7582 = vrot.slane %v7556, 7
        %v7583 = vrot.slane %v7582, 2
        %v7584 = vrot.slane %v7560, 7
        %v7585 = vsel %vm6684, %v7583, %v7584
        %v7586 = vrot.slane %v7563, 7
        %v7587 = vrot.slane %v7586, 2
        %v7588 = vrot.slane %v7567, 7
        %v7589 = vsel %vm6684, %v7587, %v7588
        %v7590 = vrot.slane %v7570, 7
        %v7591 = vrot.slane %v7590, 2
        %v7592 = vrot.slane %v7574, 7
        %v7593 = vsel %vm6684, %v7591, %v7592
        %v7594 = vrot.slane %v7577, 7
        %v7595 = vrot.slane %v7594, 2
        %v7596 = vrot.slane %v7581, 7
        %v7597 = vsel %vm6684, %v7595, %v7596
        %7599 = vst [vmem:[#allocation1] ss:$2 sm:$0xff] %v7585
        %s7601 = scalar_lea.vmem [#allocation1], 1
        %7602 = vst [vmem:[%s7601] ss:$2 sm:$0xff] %v7589
        %s7604 = scalar_lea.vmem [#allocation1], 16
        %7605 = vst [vmem:[%s7604] ss:$2 sm:$0xff] %v7593
        %s7607 = scalar_lea.vmem [#allocation1], 17
        %7608 = vst [vmem:[%s7607] ss:$2 sm:$0xff] %v7597
        %v7609 = vld.sshfl [vmem:[#allocation1] sm:$0xff pattern:$0x75643120]
        %v7611 = vld.sshfl [vmem:[#allocation1 + $0x10] sm:$0xff pattern:$0x75643120]
        %7613 = vrot.lane.b32.xlu0 %v7609, 32
        %v7614 = vpop.permute.xlu0 %7613
        %7615 = vrot.lane.b32.xlu0 %v7611, 32
        %v7616 = vpop.permute.xlu0 %7615
        %7619 = vst.msk [vmem:[#allocation7] sm:$0xf] %vm3783, %v7614
        %7620 = vst.msk [vmem:[#allocation7 + $0x8] sm:$0xf] %vm3783, %v7616
        %v7621 = vld [vmem:[%s3457] sm:$0x3]
        %v7622 = vld [vmem:[%s3457 + $0x8] sm:$0x3]
        %v7623 = vld [vmem:[%s3457 + $0x10] sm:$0x3]
        %v7624 = vld [vmem:[%s3457 + $0x18] sm:$0x3]
        %7626 = vst [vmem:[#allocation1] ss:$2 sm:$0xff] %v7621
        %s7628 = scalar_lea.vmem [#allocation1], 1
        %7629 = vst [vmem:[%s7628] ss:$2 sm:$0xff] %v7622
        %s7631 = scalar_lea.vmem [#allocation1], 16
        %7632 = vst [vmem:[%s7631] ss:$2 sm:$0xff] %v7623
        %s7634 = scalar_lea.vmem [#allocation1], 17
        %7635 = vst [vmem:[%s7634] ss:$2 sm:$0xff] %v7624
        %v7636 = vld.sshfl [vmem:[#allocation1] sm:$0xff pattern:$0x75643120]
        %v7638 = vld.sshfl [vmem:[#allocation1 + $0x10] sm:$0xff pattern:$0x75643120]
        %7640 = vrot.lane.b32.xlu0 %v7636, 48
        %v7641 = vpop.permute.xlu0 %7640
        %7642 = vrot.lane.b32.xlu0 %v7638, 48
        %v7643 = vpop.permute.xlu0 %7642
        %7646 = vst.msk [vmem:[#allocation7] sm:$0xf] %vm3832, %v7641
        %7647 = vst.msk [vmem:[#allocation7 + $0x8] sm:$0xf] %vm3832, %v7643
        %v7648 = vld [vmem:[%s3457] sm:$0x7]
        %v7649 = vld [vmem:[%s3457 + $0x8] sm:$0x7]
        %v7650 = vld [vmem:[%s3457 + $0x10] sm:$0x7]
        %v7651 = vld [vmem:[%s3457 + $0x18] sm:$0x7]
        %v7656 = vrot.slane %v7648, 2
        %v7657 = vrot.slane %v7649, 2
        %v7658 = vrot.slane %v7650, 2
        %v7659 = vrot.slane %v7651, 2
        %v7662 = vsel %vm608, %v7648, %v7656
        %v7663 = vsel %vm6534, %v7648, %v7656
        %v7665 = vrot.slane %v7663, 2
        %v7668 = vsel %vm608, %v7649, %v7657
        %v7669 = vsel %vm6534, %v7649, %v7657
        %v7671 = vrot.slane %v7669, 2
        %v7674 = vsel %vm608, %v7650, %v7658
        %v7675 = vsel %vm6534, %v7650, %v7658
        %v7677 = vrot.slane %v7675, 2
        %v7680 = vsel %vm608, %v7651, %v7659
        %v7681 = vsel %vm6534, %v7651, %v7659
        %v7683 = vrot.slane %v7681, 2
        %v7684 = vshrl.u32 %v7662, 16
        %v7686 = vrot.slane %v7684, 6
        %v7687 = vshll.u32 %v7662, 16
        %v7689 = vrot.slane %v7687, 7
        %v7690 = vor.u32 %v7686, %v7689
        %v7691 = vrot.slane %v7690, 2
        %v7693 = vshll.u32 %v7665, 16
        %v7695 = vrot.slane %v7693, 7
        %v7696 = vsel %vm6562, %v7691, %v7695
        %v7697 = vshrl.u32 %v7668, 16
        %v7699 = vrot.slane %v7697, 6
        %v7700 = vshll.u32 %v7668, 16
        %v7702 = vrot.slane %v7700, 7
        %v7703 = vor.u32 %v7699, %v7702
        %v7704 = vrot.slane %v7703, 2
        %v7706 = vshll.u32 %v7671, 16
        %v7708 = vrot.slane %v7706, 7
        %v7709 = vsel %vm6562, %v7704, %v7708
        %v7710 = vshrl.u32 %v7674, 16
        %v7712 = vrot.slane %v7710, 6
        %v7713 = vshll.u32 %v7674, 16
        %v7715 = vrot.slane %v7713, 7
        %v7716 = vor.u32 %v7712, %v7715
        %v7717 = vrot.slane %v7716, 2
        %v7719 = vshll.u32 %v7677, 16
        %v7721 = vrot.slane %v7719, 7
        %v7722 = vsel %vm6562, %v7717, %v7721
        %v7723 = vshrl.u32 %v7680, 16
        %v7725 = vrot.slane %v7723, 6
        %v7726 = vshll.u32 %v7680, 16
        %v7728 = vrot.slane %v7726, 7
        %v7729 = vor.u32 %v7725, %v7728
        %v7730 = vrot.slane %v7729, 2
        %v7732 = vshll.u32 %v7683, 16
        %v7734 = vrot.slane %v7732, 7
        %v7735 = vsel %vm6562, %v7730, %v7734
        %7737 = vst [vmem:[#allocation1] ss:$2 sm:$0xff] %v7696
        %s7739 = scalar_lea.vmem [#allocation1], 1
        %7740 = vst [vmem:[%s7739] ss:$2 sm:$0xff] %v7709
        %s7742 = scalar_lea.vmem [#allocation1], 16
        %7743 = vst [vmem:[%s7742] ss:$2 sm:$0xff] %v7722
        %s7745 = scalar_lea.vmem [#allocation1], 17
        %7746 = vst [vmem:[%s7745] ss:$2 sm:$0xff] %v7735
        %v7747 = vld.sshfl [vmem:[#allocation1] sm:$0xff pattern:$0x75643120]
        %v7749 = vld.sshfl [vmem:[#allocation1 + $0x10] sm:$0xff pattern:$0x75643120]
        %7751 = vrot.lane.b32.xlu0 %v7747, 64
        %v7752 = vpop.permute.xlu0 %7751
        %7753 = vrot.lane.b32.xlu0 %v7749, 64
        %v7754 = vpop.permute.xlu0 %7753
        %7757 = vst.msk [vmem:[#allocation7] sm:$0xf] %vm3993, %v7752
        %7758 = vst.msk [vmem:[#allocation7 + $0x8] sm:$0xf] %vm3993, %v7754
        %v7759 = vld [vmem:[%s3457] sm:$0x6]
        %v7760 = vld [vmem:[%s3457 + $0x8] sm:$0x6]
        %v7761 = vld [vmem:[%s3457 + $0x10] sm:$0x6]
        %v7762 = vld [vmem:[%s3457 + $0x18] sm:$0x6]
        %v7767 = vrot.slane %v7759, 2
        %v7768 = vrot.slane %v7760, 2
        %v7769 = vrot.slane %v7761, 2
        %v7770 = vrot.slane %v7762, 2
        %v7773 = vsel %vm608, %v7759, %v7767
        %v7775 = vsel %vm6534, %v7759, %v7767
        %v7777 = vrot.slane %v7775, 2
        %v7780 = vsel %vm608, %v7760, %v7768
        %v7782 = vsel %vm6534, %v7760, %v7768
        %v7784 = vrot.slane %v7782, 2
        %v7787 = vsel %vm608, %v7761, %v7769
        %v7789 = vsel %vm6534, %v7761, %v7769
        %v7791 = vrot.slane %v7789, 2
        %v7794 = vsel %vm608, %v7762, %v7770
        %v7796 = vsel %vm6534, %v7762, %v7770
        %v7798 = vrot.slane %v7796, 2
        %v7799 = vrot.slane %v7773, 7
        %v7800 = vrot.slane %v7799, 2
        %v7801 = vrot.slane %v7777, 7
        %v7802 = vsel %vm6684, %v7800, %v7801
        %v7803 = vrot.slane %v7780, 7
        %v7804 = vrot.slane %v7803, 2
        %v7805 = vrot.slane %v7784, 7
        %v7806 = vsel %vm6684, %v7804, %v7805
        %v7807 = vrot.slane %v7787, 7
        %v7808 = vrot.slane %v7807, 2
        %v7809 = vrot.slane %v7791, 7
        %v7810 = vsel %vm6684, %v7808, %v7809
        %v7811 = vrot.slane %v7794, 7
        %v7812 = vrot.slane %v7811, 2
        %v7813 = vrot.slane %v7798, 7
        %v7814 = vsel %vm6684, %v7812, %v7813
        %7816 = vst [vmem:[#allocation1] ss:$2 sm:$0xff] %v7802
        %s7818 = scalar_lea.vmem [#allocation1], 1
        %7819 = vst [vmem:[%s7818] ss:$2 sm:$0xff] %v7806
        %s7821 = scalar_lea.vmem [#allocation1], 16
        %7822 = vst [vmem:[%s7821] ss:$2 sm:$0xff] %v7810
        %s7824 = scalar_lea.vmem [#allocation1], 17
        %7825 = vst [vmem:[%s7824] ss:$2 sm:$0xff] %v7814
        %v7826 = vld.sshfl [vmem:[#allocation1] sm:$0xff pattern:$0x75643120]
        %v7828 = vld.sshfl [vmem:[#allocation1 + $0x10] sm:$0xff pattern:$0x75643120]
        %7830 = vrot.lane.b32.xlu0 %v7826, 80
        %v7831 = vpop.permute.xlu0 %7830
        %7832 = vrot.lane.b32.xlu0 %v7828, 80
        %v7833 = vpop.permute.xlu0 %7832
        %7836 = vst.msk [vmem:[#allocation7] sm:$0xf] %vm4090, %v7831
        %7837 = vst.msk [vmem:[#allocation7 + $0x8] sm:$0xf] %vm4090, %v7833
        %v7838 = vld [vmem:[%s4099] sm:$0x3]
        %v7839 = vld [vmem:[%s4099 + $0x8] sm:$0x3]
        %v7840 = vld [vmem:[%s4099 + $0x10] sm:$0x3]
        %v7841 = vld [vmem:[%s4099 + $0x18] sm:$0x3]
        %7843 = vst [vmem:[#allocation1] ss:$2 sm:$0xff] %v7838
        %s7845 = scalar_lea.vmem [#allocation1], 1
        %7846 = vst [vmem:[%s7845] ss:$2 sm:$0xff] %v7839
        %s7848 = scalar_lea.vmem [#allocation1], 16
        %7849 = vst [vmem:[%s7848] ss:$2 sm:$0xff] %v7840
        %s7851 = scalar_lea.vmem [#allocation1], 17
        %7852 = vst [vmem:[%s7851] ss:$2 sm:$0xff] %v7841
        %v7853 = vld.sshfl [vmem:[#allocation1] sm:$0xff pattern:$0x75643120]
        %v7855 = vld.sshfl [vmem:[#allocation1 + $0x10] sm:$0xff pattern:$0x75643120]
        %7857 = vrot.lane.b32.xlu0 %v7853, 96
        %v7858 = vpop.permute.xlu0 %7857
        %7859 = vrot.lane.b32.xlu0 %v7855, 96
        %v7860 = vpop.permute.xlu0 %7859
        %7863 = vst.msk [vmem:[#allocation7] sm:$0xf] %vm4140, %v7858
        %7864 = vst.msk [vmem:[#allocation7 + $0x8] sm:$0xf] %vm4140, %v7860
        %v7865 = vld [vmem:[%s4099] sm:$0x7]
        %v7866 = vld [vmem:[%s4099 + $0x8] sm:$0x7]
        %v7867 = vld [vmem:[%s4099 + $0x10] sm:$0x7]
        %v7868 = vld [vmem:[%s4099 + $0x18] sm:$0x7]
        %v7873 = vrot.slane %v7865, 2
        %v7874 = vrot.slane %v7866, 2
        %v7875 = vrot.slane %v7867, 2
        %v7876 = vrot.slane %v7868, 2
        %v7879 = vsel %vm608, %v7865, %v7873
        %v7880 = vsel %vm6534, %v7865, %v7873
        %v7882 = vrot.slane %v7880, 2
        %v7885 = vsel %vm608, %v7866, %v7874
        %v7886 = vsel %vm6534, %v7866, %v7874
        %v7888 = vrot.slane %v7886, 2
        %v7891 = vsel %vm608, %v7867, %v7875
        %v7892 = vsel %vm6534, %v7867, %v7875
        %v7894 = vrot.slane %v7892, 2
        %v7897 = vsel %vm608, %v7868, %v7876
        %v7898 = vsel %vm6534, %v7868, %v7876
        %v7900 = vrot.slane %v7898, 2
        %v7901 = vshrl.u32 %v7879, 16
        %v7903 = vrot.slane %v7901, 6
        %v7904 = vshll.u32 %v7879, 16
        %v7906 = vrot.slane %v7904, 7
        %v7907 = vor.u32 %v7903, %v7906
        %v7908 = vrot.slane %v7907, 2
        %v7910 = vshll.u32 %v7882, 16
        %v7912 = vrot.slane %v7910, 7
        %v7913 = vsel %vm6562, %v7908, %v7912
        %v7914 = vshrl.u32 %v7885, 16
        %v7916 = vrot.slane %v7914, 6
        %v7917 = vshll.u32 %v7885, 16
        %v7919 = vrot.slane %v7917, 7
        %v7920 = vor.u32 %v7916, %v7919
        %v7921 = vrot.slane %v7920, 2
        %v7923 = vshll.u32 %v7888, 16
        %v7925 = vrot.slane %v7923, 7
        %v7926 = vsel %vm6562, %v7921, %v7925
        %v7927 = vshrl.u32 %v7891, 16
        %v7929 = vrot.slane %v7927, 6
        %v7930 = vshll.u32 %v7891, 16
        %v7932 = vrot.slane %v7930, 7
        %v7933 = vor.u32 %v7929, %v7932
        %v7934 = vrot.slane %v7933, 2
        %v7936 = vshll.u32 %v7894, 16
        %v7938 = vrot.slane %v7936, 7
        %v7939 = vsel %vm6562, %v7934, %v7938
        %v7940 = vshrl.u32 %v7897, 16
        %v7942 = vrot.slane %v7940, 6
        %v7943 = vshll.u32 %v7897, 16
        %v7945 = vrot.slane %v7943, 7
        %v7946 = vor.u32 %v7942, %v7945
        %v7947 = vrot.slane %v7946, 2
        %v7949 = vshll.u32 %v7900, 16
        %v7951 = vrot.slane %v7949, 7
        %v7952 = vsel %vm6562, %v7947, %v7951
        %7954 = vst [vmem:[#allocation1] ss:$2 sm:$0xff] %v7913
        %s7956 = scalar_lea.vmem [#allocation1], 1
        %7957 = vst [vmem:[%s7956] ss:$2 sm:$0xff] %v7926
        %s7959 = scalar_lea.vmem [#allocation1], 16
        %7960 = vst [vmem:[%s7959] ss:$2 sm:$0xff] %v7939
        %s7962 = scalar_lea.vmem [#allocation1], 17
        %7963 = vst [vmem:[%s7962] ss:$2 sm:$0xff] %v7952
        %v7964 = vld.sshfl [vmem:[#allocation1] sm:$0xff pattern:$0x75643120]
        %v7966 = vld.sshfl [vmem:[#allocation1 + $0x10] sm:$0xff pattern:$0x75643120]
        %7968 = vrot.lane.b32.xlu0 %v7964, 112
        %v7969 = vpop.permute.xlu0 %7968
        %7970 = vrot.lane.b32.xlu0 %v7966, 112
        %v7971 = vpop.permute.xlu0 %7970
        %7974 = vst.msk [vmem:[#allocation7] sm:$0xf] %vm4301, %v7969
        %7975 = vst.msk [vmem:[#allocation7 + $0x8] sm:$0xf] %vm4301, %v7971
        %v7976 = vld [vmem:[%s4099] sm:$0x6]
        %v7977 = vld [vmem:[%s4099 + $0x8] sm:$0x6]
        %v7978 = vld [vmem:[%s4099 + $0x10] sm:$0x6]
        %v7979 = vld [vmem:[%s4099 + $0x18] sm:$0x6]
        %v7984 = vrot.slane %v7976, 2
        %v7985 = vrot.slane %v7977, 2
        %v7986 = vrot.slane %v7978, 2
        %v7987 = vrot.slane %v7979, 2
        %v7990 = vsel %vm608, %v7976, %v7984
        %v7992 = vsel %vm6534, %v7976, %v7984
        %v7994 = vrot.slane %v7992, 2
        %v7997 = vsel %vm608, %v7977, %v7985
        %v7999 = vsel %vm6534, %v7977, %v7985
        %v8001 = vrot.slane %v7999, 2
        %v8004 = vsel %vm608, %v7978, %v7986
        %v8006 = vsel %vm6534, %v7978, %v7986
        %v8008 = vrot.slane %v8006, 2
        %v8011 = vsel %vm608, %v7979, %v7987
        %v8013 = vsel %vm6534, %v7979, %v7987
        %v8015 = vrot.slane %v8013, 2
        %v8016 = vrot.slane %v7990, 7
        %v8017 = vrot.slane %v8016, 2
        %v8018 = vrot.slane %v7994, 7
        %v8019 = vsel %vm6684, %v8017, %v8018
        %v8020 = vrot.slane %v7997, 7
        %v8021 = vrot.slane %v8020, 2
        %v8022 = vrot.slane %v8001, 7
        %v8023 = vsel %vm6684, %v8021, %v8022
        %v8024 = vrot.slane %v8004, 7
        %v8025 = vrot.slane %v8024, 2
        %v8026 = vrot.slane %v8008, 7
        %v8027 = vsel %vm6684, %v8025, %v8026
        %v8028 = vrot.slane %v8011, 7
        %v8029 = vrot.slane %v8028, 2
        %v8030 = vrot.slane %v8015, 7
        %v8031 = vsel %vm6684, %v8029, %v8030
        %8033 = vst [vmem:[#allocation1] ss:$2 sm:$0xff] %v8019
        %s8035 = scalar_lea.vmem [#allocation1], 1
        %8036 = vst [vmem:[%s8035] ss:$2 sm:$0xff] %v8023
        %s8038 = scalar_lea.vmem [#allocation1], 16
        %8039 = vst [vmem:[%s8038] ss:$2 sm:$0xff] %v8027
        %s8041 = scalar_lea.vmem [#allocation1], 17
        %8042 = vst [vmem:[%s8041] ss:$2 sm:$0xff] %v8031
        %v8043 = vld.sshfl [vmem:[#allocation1] sm:$0xff pattern:$0x75643120]
        %v8044 = vld.sshfl [vmem:[#allocation1 + $0x10] sm:$0xff pattern:$0x75643120]
        %8047 = vst.msk [vmem:[#allocation7 + $0x4] sm:$0xf] %vm3348, %v8043
        %8048 = vst.msk [vmem:[#allocation7 + $0xc] sm:$0xf] %vm3348, %v8044
        %v8049 = vld [vmem:[#allocation7] sm:$0xff]
        %v8050 = vld [vmem:[#allocation7 + $0x8] sm:$0xff]
        %s8051 = scalar_lea.vmem %s4, 216
        %v8052 = vld [vmem:[%s8051] sm:$0xf]
        %v8053 = vld [vmem:[%s8051 + $0x4] sm:$0xf]
        %v8054 = vld [vmem:[%s8051 + $0x8] sm:$0xf]
        %v8055 = vld [vmem:[%s8051 + $0xc] sm:$0xf]
        %v8056 = vld [vmem:[%s8051 + $0x10] sm:$0xf]
        %v8057 = vld [vmem:[%s8051 + $0x14] sm:$0xf]
        %v8058 = vld [vmem:[%s8051 + $0x18] sm:$0xf]
        %v8059 = vld [vmem:[%s8051 + $0x1c] sm:$0xf]
        %v8060 = vld [vmem:[%s8051 + $0x20] sm:$0xf]
        %v8061 = vld [vmem:[%s8051 + $0x24] sm:$0xf]
        %v8062 = vld [vmem:[%s8051 + $0x28] sm:$0xf]
        %v8063 = vld [vmem:[%s8051 + $0x2c] sm:$0xf]
        %v8064 = vld [vmem:[%s8051 + $0x30] sm:$0xf]
        %v8065 = vld [vmem:[%s8051 + $0x34] sm:$0xf]
        %v8066 = vld [vmem:[%s8051 + $0x38] sm:$0xf]
        %v8067 = vld [vmem:[%s8051 + $0x3c] sm:$0xf]
        %v8068 = vld [vmem:[%s8051 + $0x40] sm:$0xf]
        %v8069 = vld [vmem:[%s8051 + $0x44] sm:$0xf]
        %v8072 = vunpack.c.l.b16 %v8049
        %v8073 = vunpack.c.h.b16 %v8049
        %v8074 = vunpack.c.l.b16 %v8050
        %v8075 = vunpack.c.h.b16 %v8050
        %v8076 = vpack.c.b16 %v8074, %v8072
        %v8077 = vpack.c.b16 %v8075, %v8073
        %v8097 = vunpack.c.l.b16 %v8052
        %v8098 = vunpack.c.l.b16 %v8053
        %v8099 = vunpack.c.l.b16 %v8054
        %v8100 = vunpack.c.l.b16 %v8055
        %v8101 = vunpack.c.l.b16 %v8056
        %v8102 = vunpack.c.l.b16 %v8057
        %v8103 = vunpack.c.l.b16 %v8058
        %v8104 = vunpack.c.l.b16 %v8059
        %v8105 = vunpack.c.l.b16 %v8060
        %v8106 = vunpack.c.l.b16 %v8061
        %v8107 = vunpack.c.l.b16 %v8062
        %v8108 = vunpack.c.l.b16 %v8063
        %v8109 = vunpack.c.l.b16 %v8064
        %v8110 = vunpack.c.l.b16 %v8065
        %v8111 = vunpack.c.l.b16 %v8066
        %v8112 = vunpack.c.l.b16 %v8067
        %v8113 = vunpack.c.l.b16 %v8068
        %v8114 = vunpack.c.l.b16 %v8069
        %v8115 = vpack.c.b16 %v8098, %v8097
        %v8116 = vpack.c.b16 %v8100, %v8099
        %v8117 = vpack.c.b16 %v8102, %v8101
        %v8118 = vpack.c.b16 %v8104, %v8103
        %v8119 = vpack.c.b16 %v8106, %v8105
        %v8120 = vpack.c.b16 %v8108, %v8107
        %v8121 = vpack.c.b16 %v8110, %v8109
        %v8122 = vpack.c.b16 %v8112, %v8111
        %v8123 = vpack.c.b16 %v8114, %v8113
        %v8134 = vsel %vm3212, %v8077, 0
        %8136 = vmatpush.bf16.msra.mxu0 %v8122
        %8137 = vmatpush.bf16.msra.mxu0 %v8121
        %8138 = vmatpush.bf16.msra.mxu0 %v8120
        %8139 = vmatpush.bf16.msra.mxu0 %v8119
        %8140 = vmatpush.bf16.msra.mxu0 %v8118
        %8141 = vmatpush.bf16.msra.mxu0 %v8117
        %8142 = vmatpush.bf16.msra.mxu0 %v8116
        %8143 = vmatpush.bf16.msra.mxu0 %v8115
        %8144 = vmatmul.bf16.gmra.mxu0 %v8076
        %v8145 = vpop.f32.mrf.mxu0
        %v8146 = vadd.f32 0.0, %v8145
        %v8147 = vpop.f32.mrf.mxu0
        %v8148 = vadd.f32 0.0, %v8147
        %8149 = vdwg.mxu0
        %8150 = vmatpush.bf16.msra.mxu0 0
        %8151 = vmatpush.bf16.msra.mxu0 0
        %8152 = vmatpush.bf16.msra.mxu0 0
        %8153 = vmatpush.bf16.msra.mxu0 0
        %8154 = vmatpush.bf16.msra.mxu0 0
        %8155 = vmatpush.bf16.msra.mxu0 0
        %8156 = vmatpush.bf16.msra.mxu0 0
        %8157 = vmatpush.bf16.msra.mxu0 %v8123
        %8158 = vmatmul.bf16.gmra.mxu0 %v8134
        %v8159 = vpop.f32.mrf.mxu0
        %v8160 = vadd.f32 %v8146, %v8159
        %v8161 = vpop.f32.mrf.mxu0
        %v8162 = vadd.f32 %v8148, %v8161
        %8163 = vdwg.mxu0
        %8166 = vrot.lane.b32.xlu0 %v8160, 24
        %v8167 = vpop.permute.xlu0 %8166
        %8168 = vrot.lane.b32.xlu0 %v8162, 24
        %v8169 = vpop.permute.xlu0 %8168
        %8172 = vst.msk [vmem:[#allocation5] sm:$0xff] %vm5984, %v8167
        %8173 = vst.msk [vmem:[#allocation5 + $0x8] sm:$0xff] %vm5984, %v8169
        %s8174 = scalar_lea.vmem %s2, 20
        %v8175 = vld [vmem:[%s8174] sm:$0x1]
        %v8176 = vld [vmem:[%s8174 + $0x1] sm:$0x1]
        %v8177 = vld [vmem:[#allocation5] sm:$0xff]
        %v8178 = vld [vmem:[#allocation5 + $0x8] sm:$0xff]
        %v8179 = vperm.slane %v8175, 0
        %v8180 = vmul.f32 %v8177, %v8179
        %v8181 = vmul.f32 %v8178, %v8179
        %v8182 = vperm.slane %v8176, 0
        %v8183 = vadd.f32 %v8180, %v8182
        %v8184 = vadd.f32 %v8181, %v8182
        %v8185 = vmax.f32 %v8183, 0.0
        %v8186 = vmax.f32 %v8184, 0.0
        %v8187 = vsel %vm3012, %v8185, 0.0
        %v8188 = vsel %vm3012, %v8186, 0.0
        %v8189 = vadd.f32 %v8187, %v8188
        %v8190 = vrot.slane %v8189, 4
        %v8191 = vadd.f32 %v8189, %v8190
        %v8192 = vrot.slane %v8191, 2
        %v8193 = vadd.f32 %v8191, %v8192
        %v8194 = vrot.slane %v8193, 1
        %v8195 = vadd.f32 %v8193, %v8194
        %v8196 = vrcp.pop 16.0
        %v8197 = vmul.f32 16.0, %v8196
        %v8198 = vsub.f32 1.0, %v8197
        %v8199 = vmul.f32 %v8196, %v8198
        %v8200 = vadd.f32 %v8196, %v8199
        %vm8201 = vweird.f32 %v8196
        %v8202 = vsel %vm8201, %v8196, %v8200
        %v8203 = vmul.f32 %v8195, %v8202
        %v8204 = vld [vmem:[%s6] sm:$0xff]
        %v8205 = vld [vmem:[%s6 + $0x8] sm:$0xff]
        %v8206 = vld [vmem:[%s6 + $0x10] sm:$0xff]
        %v8207 = vld [vmem:[%s6 + $0x18] sm:$0xff]
        %v8208 = vld [vmem:[%s7] sm:$0x1]
        %v8210 = vsel %vm3012, %v8203, 0
        %8212 = vmatpush.msra.mxu0 0.0
        %8213 = vmatpush.msra.mxu0 0.0
        %8214 = vmatpush.msra.mxu0 0.0
        %8215 = vmatpush.msra.mxu0 0.0
        %8216 = vmatpush.msra.mxu0 0.0
        %8217 = vmatpush.msra.mxu0 0.0
        %8218 = vmatpush.msra.mxu0 0.0
        %8219 = vmatpush.msra.mxu0 0.0
        %8220 = vmatpush.msra.mxu0 0.0
        %8221 = vmatpush.msra.mxu0 0.0
        %8222 = vmatpush.msra.mxu0 0.0
        %8223 = vmatpush.msra.mxu0 0.0
        %8224 = vmatpush.msra.mxu0 %v8207
        %8225 = vmatpush.msra.mxu0 %v8206
        %8226 = vmatpush.msra.mxu0 %v8205
        %8227 = vmatpush.msra.mxu0 %v8204
        %8228 = vmatmul.f32.gmra.mxu0 %v8210
        %v8229 = vpop.f32.mrf.mxu0
        %v8230 = vadd.f32 %v8208, %v8229
        %8231 = vdwg.mxu0
        %vm8232 = vcmask 73728
        %8233 = vst.msk [vmem:[%s297] sm:$0x1] %vm8232, %v8230
        %s8234 = sand.u32 %s203, 1
        %s8235 = scalar_lea.sflag [#allocation10], %s8234
        %s8236 = sand.u32 %s203, 1
        %s8237 = scalar_lea.vmem [#allocation9], %s8236
        // Predicated region
        $region53: #{densenet_forward.1} parent=51 // pred_check
          %p8238 = pneg %p213
        $region54: #{densenet_forward.1} parent=51 // pred_check_branch
          %8240 = sbr.rel (%p8238) target = $region56
        $region55: #{densenet_forward.1} parent=51 // pred_region
          %8242 = vsyncadd %s8235, 0
          %s8243 = scalar_lea.hbm %s8, %s22
          %s8245 = sshll.u32 %s8237, 4
          %s8246 = int_to_ptr.vmem [resolvable:$true] %s8245
          %s8247 = sshll.u32 %s8243, 4
          %s8248 = int_to_ptr.hbm [resolvable:$true] %s8247
          %8250 = dma.vmem_to_hbm [thread:$0]  %s8246, 16, %s8248, %s8235
        $region56: #{densenet_forward.1} parent=51 // pred_fallthru
          _
      $region52: #{densenet_forward.1} parent=5 // pred_fallthru
        _
      %p8251 = scmp.le.s32.totalorder 2, %s17
      // Predicated region
      $region57: #{densenet_forward.1} parent=5 // pred_check
        %p8252 = pneg %p8251
      $region58: #{densenet_forward.1} parent=5 // pred_check_branch
        %8254 = sbr.rel (%p8252) target = $region60
      $region59: #{densenet_forward.1} parent=5 // pred_region
        %s8255 = ssub.s32 %s17, 2
        // Predicated region
        $region61: #{densenet_forward.1} parent=59 // pred_check
          %p8256 = pneg %p219
        $region62: #{densenet_forward.1} parent=59 // pred_check_branch
          %8258 = sbr.rel (%p8256) target = $region64
        $region63: #{densenet_forward.1} parent=59 // pred_region
          %s8259 = sand.u32 %s204, 1
          %s8260 = scalar_lea.sflag [#allocation10], %s8259
          %s8261 = sand.u32 %s204, 1
          %s8262 = scalar_lea.vmem [#allocation9], %s8261
          %8264 = dma.done %s8260, 16
        $region64: #{densenet_forward.1} parent=59 // pred_fallthru
          _
      $region60: #{densenet_forward.1} parent=5 // pred_fallthru
        _
    $region6: #{densenet_forward.1} parent=1 // loop_footer
      %s21 = sadd.s32 1, %s17
    $region7: #{densenet_forward.1} parent=1 // loop_footer_branch
      %16 = sbr.rel target = $region3
    $region8: #{densenet_forward.1} parent=1 // loop_exit
      _
    %8265 = vsyncpa [#allocation10], 1
    %s8266 = scalar_lea.sflag [#allocation10], 1
    %8267 = vsyncpa %s8266, 1

</llo_original>
